<compile_context>
chip_gen: v7x
topology: tpu7x:2x2x1
jax: 0.10.0
libtpu: 0.0.40
codegen_flags: <defaults>
</compile_context>

<pallas_src>
import math

import jax
import jax.numpy as jnp
from jax import lax
from jax.experimental import pallas as pl
from jax.experimental.pallas import tpu as pltpu


# ---------------------------------------------------------------------------
# Fused kernel: conv1 + BN1 + pool + ReLU + conv2 + BN2 + pool + ReLU
# ---------------------------------------------------------------------------
def _fused_kernel(pe_ref, po_ref, w1_ref, b1_ref, w2_ref, b2_ref, o_ref, h1_ref):
    # pe_ref/po_ref : (Bt, 288, 128) bf16  im2col patches at even / odd output cols
    # w1_ref        : (128, 128)     bf16  folded conv1 weights  (K=75 pad, C=64 pad)
    # b1_ref        : (1, 128)       f32   folded conv1 bias (+BN)
    # w2_ref        : (25, 128, 128) bf16  folded conv2 weights per (kh,kw) tap
    # b2_ref        : (1, 128)       f32   folded conv2 bias (+BN)
    # o_ref         : (Bt, 4, 4, 128) f32  pooled+ReLU output, channels on lanes
    # h1_ref        : (Bt, 12, 12, 128) f32 scratch: stage-1 output (in VMEM)
    Bt = pe_ref.shape[0]
    CP = w1_ref.shape[1]          # 128 padded channel lanes

    # ---------------- stage 1: conv1 + BN + maxpool(2) + ReLU ----------------
    # Horizontal pool half == elementwise max of the even-col / odd-col matmuls.
    for s in range(Bt):
        de = jnp.dot(pe_ref[s], w1_ref[...], preferred_element_type=jnp.float32)
        do = jnp.dot(po_ref[s], w1_ref[...], preferred_element_type=jnp.float32)
        cm = jnp.maximum(de, do) + b1_ref[...]              # (288,128), row = i*12 + jp
        cm3 = cm.reshape(12, 24, CP)                        # (ip, [i even | i odd], ch)
        v = jnp.maximum(cm3[:, 0:12, :], cm3[:, 12:24, :])  # vertical pool half
        h1_ref[s] = jnp.maximum(v, 0.0)                     # ReLU -> (12, 12, 128)

    # --------- stage 2: conv2 as 25 shifted-window matmuls (all samples) ------
    acc = jnp.zeros((Bt * 64, CP), jnp.float32)
    for k in range(25):
        kh, kw = divmod(k, 5)
        win = h1_ref[:, kh:kh + 8, kw:kw + 8, :]            # (Bt, 8, 8, 128)
        win = win.reshape(Bt * 64, CP).astype(jnp.bfloat16)
        acc = acc + jnp.dot(win, w2_ref[k], preferred_element_type=jnp.float32)

    # -------------- stage 2 epilogue: bias + maxpool(2) + ReLU ----------------
    for s in range(Bt):
        t2 = acc[s * 64:(s + 1) * 64, :] + b2_ref[...]      # (64,128), row = oh*8 + ow
        t3 = t2.reshape(4, 16, CP)                          # (ohp, [oh even: ow | oh odd: ow], ch)
        rm = jnp.maximum(t3[:, 0:8, :], t3[:, 8:16, :])     # (4, 8, 128) = (ohp, ow, ch)
        for owp in range(4):
            col = jnp.maximum(rm[:, 2 * owp, :], rm[:, 2 * owp + 1, :])   # (4, 128)
            o_ref[s, :, owp] = jnp.maximum(col, 0.0)        # ReLU, (ohp, ch)


# ---------------------------------------------------------------------------
# Host-side glue: im2col (pure gather) + weight folding / padding
# ---------------------------------------------------------------------------
def _im2col(x_nchw, K):
    """(B, C, H, W) -> (B, Ho, Wo, C*K*K); feature order ci*K*K + kh*K + kw."""
    B, C, H, W = x_nchw.shape
    Ho, Wo = H - K + 1, W - K + 1
    cols = []
    for kh in range(K):
        for kw in range(K):
            cols.append(x_nchw[:, :, kh:kh + Ho, kw:kw + Wo])
    pat = jnp.stack(cols, axis=2)                 # (B, C, K*K, Ho, Wo)
    pat = pat.reshape(B, C * K * K, Ho, Wo)
    return jnp.transpose(pat, (0, 2, 3, 1))       # (B, Ho, Wo, C*K*K)


def _pick_block(B):
    for bt in (4, 2, 1):
        if B % bt == 0:
            return bt
    return 1


def feature_extractor_mnist(x, params):
    (w1, b1, scale1, shift1, w2, b2, scale2, shift2) = params
    B = x.shape[0]
    C1, C2, K = 64, 50, 5
    F1 = 3 * K * K                                # 75
    CP = 128                                      # padded lane width

    # stage-1 im2col, split by output-column parity (folds the horizontal half
    # of the 2x2 max-pool into an elementwise max of two matmuls in-kernel).
    pat = _im2col(x, K)                           # (B, 24, 24, 75)

    def prep(p):
        p = p.reshape(B, 288, F1)
        p = jnp.pad(p, ((0, 0), (0, 0), (0, CP - F1)))
        return p.astype(jnp.bfloat16)

    p_even = prep(pat[:, :, 0::2, :])
    p_odd = prep(pat[:, :, 1::2, :])

    # Fold BatchNorm (eval) into conv weights / bias, pad to 128, cast bf16.
    w1m = w1.reshape(C1, F1).T * scale1[None, :]                       # (75, 64)
    w1p = jnp.zeros((CP, CP), jnp.float32).at[:F1, :C1].set(w1m).astype(jnp.bfloat16)
    b1p = jnp.zeros((1, CP), jnp.float32).at[0, :C1].set(b1 * scale1 + shift1)

    w2t = jnp.transpose(w2, (2, 3, 1, 0)).reshape(K * K, C1, C2)       # (25, 64, 50)
    w2t = w2t * scale2[None, None, :]
    w2p = jnp.zeros((K * K, CP, CP), jnp.float32).at[:, :C1, :C2].set(w2t).astype(jnp.bfloat16)
    b2p = jnp.zeros((1, CP), jnp.float32).at[0, :C2].set(b2 * scale2 + shift2)

    Bt = _pick_block(B)

    out = pl.pallas_call(
        _fused_kernel,
        out_shape=jax.ShapeDtypeStruct((B, 4, 4, CP), jnp.float32),
        grid_spec=pltpu.PrefetchScalarGridSpec(
            num_scalar_prefetch=0,
            grid=(B // Bt,),
            in_specs=[
                pl.BlockSpec((Bt, 288, CP), lambda g: (g, 0, 0)),
                pl.BlockSpec((Bt, 288, CP), lambda g: (g, 0, 0)),
                pl.BlockSpec((CP, CP), lambda g: (0, 0)),
                pl.BlockSpec((1, CP), lambda g: (0, 0)),
                pl.BlockSpec((K * K, CP, CP), lambda g: (0, 0, 0)),
                pl.BlockSpec((1, CP), lambda g: (0, 0)),
            ],
            out_specs=pl.BlockSpec((Bt, 4, 4, CP), lambda g: (g, 0, 0, 0)),
            scratch_shapes=[pltpu.VMEM((Bt, 12, 12, CP), jnp.float32)],
        ),
        compiler_params=pltpu.CompilerParams(
            dimension_semantics=("parallel",)),
    )(p_even, p_odd, w1p, b1p, w2p, b2p)

    # PyTorch Flatten on NCHW (B, 50, 4, 4): channel-major feature order.
    return jnp.transpose(out[..., :C2], (0, 3, 1, 2)).reshape(B, 16 * C2)


# ---------------------------------------------------------------------------
# Pure-JAX reference with the same numerics (bf16 operands, f32 accumulation,
# BatchNorm folded into weights) for the correctness check.
# ---------------------------------------------------------------------------
def _reference(x, params):
    (w1, b1, scale1, shift1, w2, b2, scale2, shift2) = params

    def block(y, w, b, sc, sh):
        wf = w * sc[:, None, None, None]
        bf = b * sc + sh
        y = lax.conv_general_dilated(
            y.astype(jnp.bfloat16), wf.astype(jnp.bfloat16), (1, 1), 'VALID',
            dimension_numbers=('NCHW', 'OIHW', 'NCHW'),
            preferred_element_type=jnp.float32)
        y = y + bf[None, :, None, None]
        y = lax.reduce_window(y, -jnp.inf, lax.max,
                              (1, 1, 2, 2), (1, 1, 2, 2), 'VALID')
        return jnp.maximum(y, 0.0)

    y = block(x, w1, b1, scale1, shift1)
    y = block(y, w2, b2, scale2, shift2)
    return y.reshape(x.shape[0], -1)


# ---------------------------------------------------------------------------
def _init_params(key):
    ks = jax.random.split(key, 12)
    eps = 1e-5

    def bn(kg, kb, km, kv, c):
        gamma = 1.0 + 0.1 * jax.random.normal(kg, (c,), jnp.float32)
        beta = 0.1 * jax.random.normal(kb, (c,), jnp.float32)
        mean = 0.1 * jax.random.normal(km, (c,), jnp.float32)
        var = jax.random.uniform(kv, (c,), jnp.float32, 0.5, 1.5)
        scale = gamma / jnp.sqrt(var + eps)
        shift = beta - mean * scale
        return scale, shift

    w1 = jax.random.normal(ks[0], (64, 3, 5, 5), jnp.float32) / math.sqrt(3 * 25)
    b1 = 0.1 * jax.random.normal(ks[1], (64,), jnp.float32)
    scale1, shift1 = bn(ks[2], ks[3], ks[4], ks[5], 64)

    w2 = jax.random.normal(ks[6], (50, 64, 5, 5), jnp.float32) / math.sqrt(64 * 25)
    b2 = 0.1 * jax.random.normal(ks[7], (50,), jnp.float32)
    scale2, shift2 = bn(ks[8], ks[9], ks[10], ks[11], 50)

    return (w1, b1, scale1, shift1, w2, b2, scale2, shift2)


if __name__ == "__main__":
    key = jax.random.PRNGKey(0)
    kx, kp = jax.random.split(key)

    # MNIST-style 3x28x28 input (num_features=800 implies 28x28 spatial)
    x = jax.random.normal(kx, (2, 3, 28, 28), jnp.float32)
    params = _init_params(kp)

    fwd = jax.jit(feature_extractor_mnist)
    out = jax.block_until_ready(fwd(x, params))

    ref = jax.block_until_ready(_reference(x, params))
    assert out.shape == (2, 800), out.shape
    max_err = float(jnp.max(jnp.abs(out - ref)))
    assert jnp.allclose(out, ref, atol=5e-3, rtol=5e-3), max_err

    print("KERNEL_OK")
</pallas_src>

<mosaic_0001>
module attributes {stable_mosaic.version = 11 : i64} {
  func.func @_fused_kernel(%arg0: i32, %arg1: memref<2x288x128xbf16, #tpu.memory_space<vmem>>, %arg2: memref<2x288x128xbf16, #tpu.memory_space<vmem>>, %arg3: memref<128x128xbf16, #tpu.memory_space<vmem>>, %arg4: memref<1x128xf32, #tpu.memory_space<vmem>>, %arg5: memref<25x128x128xbf16, #tpu.memory_space<vmem>>, %arg6: memref<1x128xf32, #tpu.memory_space<vmem>>, %arg7: memref<2x4x4x128xf32, #tpu.memory_space<vmem>>, %arg8: memref<2x12x12x128xf32, #tpu.memory_space<vmem>>) attributes {dimension_semantics = [#tpu.dimension_semantics<parallel>], iteration_bounds = array<i64: 1>, scalar_prefetch = 0 : i64, scratch_operands = 1 : i64, tpu.core_type = #tpu.core_type<tc>, window_params = [{transform_indices = @transform_0, window_bounds = array<i64: 2, 288, 128>}, {transform_indices = @transform_1, window_bounds = array<i64: 2, 288, 128>}, {pipeline_mode = #tpu.pipeline_mode<synchronous>, transform_indices = @transform_2, window_bounds = array<i64: 128, 128>}, {pipeline_mode = #tpu.pipeline_mode<synchronous>, transform_indices = @transform_3, window_bounds = array<i64: 1, 128>}, {pipeline_mode = #tpu.pipeline_mode<synchronous>, transform_indices = @transform_4, window_bounds = array<i64: 25, 128, 128>}, {pipeline_mode = #tpu.pipeline_mode<synchronous>, transform_indices = @transform_5, window_bounds = array<i64: 1, 128>}, {transform_indices = @transform_6, window_bounds = array<i64: 2, 4, 4, 128>}]} {
    %c0 = arith.constant 0 : index
    %c0_0 = arith.constant 0 : index
    %c0_1 = arith.constant 0 : index
    %0 = vector.load %arg1[%c0, %c0_0, %c0_1] : memref<2x288x128xbf16, #tpu.memory_space<vmem>>, vector<1x288x128xbf16>
    %1 = vector.shape_cast %0 : vector<1x288x128xbf16> to vector<288x128xbf16>
    %c0_2 = arith.constant 0 : index
    %c0_3 = arith.constant 0 : index
    %2 = vector.load %arg3[%c0_2, %c0_3] : memref<128x128xbf16, #tpu.memory_space<vmem>>, vector<128x128xbf16>
    %cst = arith.constant dense<0.000000e+00> : vector<288x128xf32>
    %3 = tpu.matmul %1, %2, %cst {dimension_numbers = #tpu.dot_dimension_numbers<[1], [0], [0], [1], [0, 0, 1, 1], [], []>} : vector<288x128xbf16>, vector<128x128xbf16>, vector<288x128xf32> -> vector<288x128xf32>
    %c0_4 = arith.constant 0 : index
    %c0_5 = arith.constant 0 : index
    %c0_6 = arith.constant 0 : index
    %4 = vector.load %arg2[%c0_4, %c0_5, %c0_6] : memref<2x288x128xbf16, #tpu.memory_space<vmem>>, vector<1x288x128xbf16>
    %5 = vector.shape_cast %4 : vector<1x288x128xbf16> to vector<288x128xbf16>
    %c0_7 = arith.constant 0 : index
    %c0_8 = arith.constant 0 : index
    %6 = vector.load %arg3[%c0_7, %c0_8] : memref<128x128xbf16, #tpu.memory_space<vmem>>, vector<128x128xbf16>
    %cst_9 = arith.constant dense<0.000000e+00> : vector<288x128xf32>
    %7 = tpu.matmul %5, %6, %cst_9 {dimension_numbers = #tpu.dot_dimension_numbers<[1], [0], [0], [1], [0, 0, 1, 1], [], []>} : vector<288x128xbf16>, vector<128x128xbf16>, vector<288x128xf32> -> vector<288x128xf32>
    %8 = arith.maximumf %3, %7 : vector<288x128xf32>
    %c0_10 = arith.constant 0 : index
    %c0_11 = arith.constant 0 : index
    %9 = vector.load %arg4[%c0_10, %c0_11] : memref<1x128xf32, #tpu.memory_space<vmem>>, vector<1x128xf32>
    %10 = vector.broadcast %9 : vector<1x128xf32> to vector<288x128xf32>
    %11 = arith.addf %8, %10 : vector<288x128xf32>
    %12 = vector.shape_cast %11 : vector<288x128xf32> to vector<12x24x128xf32>
    %13 = vector.extract_strided_slice %12 {offsets = [0, 0, 0], sizes = [12, 12, 128], strides = [1, 1, 1]} : vector<12x24x128xf32> to vector<12x12x128xf32>
    %14 = vector.extract_strided_slice %12 {offsets = [0, 12, 0], sizes = [12, 12, 128], strides = [1, 1, 1]} : vector<12x24x128xf32> to vector<12x12x128xf32>
    %15 = arith.maximumf %13, %14 : vector<12x12x128xf32>
    %cst_12 = arith.constant 0.000000e+00 : f32
    %16 = vector.broadcast %cst_12 : f32 to vector<12x12x128xf32>
    %17 = arith.maximumf %15, %16 : vector<12x12x128xf32>
    %c0_13 = arith.constant 0 : index
    %c0_14 = arith.constant 0 : index
    %c0_15 = arith.constant 0 : index
    %c0_16 = arith.constant 0 : index
    %18 = vector.load %arg8[%c0_13, %c0_14, %c0_15, %c0_16] : memref<2x12x12x128xf32, #tpu.memory_space<vmem>>, vector<1x12x12x128xf32>
    %19 = vector.shape_cast %18 : vector<1x12x12x128xf32> to vector<12x12x128xf32>
    %20 = vector.shape_cast %17 : vector<12x12x128xf32> to vector<1x12x12x128xf32>
    tpu.vector_store %arg8[%c0_13, %c0_14, %c0_15, %c0_16], %20 {strides = array<i32>} : memref<2x12x12x128xf32, #tpu.memory_space<vmem>>, vector<1x12x12x128xf32>,
    %c1 = arith.constant 1 : index
    %c0_17 = arith.constant 0 : index
    %c0_18 = arith.constant 0 : index
    %21 = vector.load %arg1[%c1, %c0_17, %c0_18] : memref<2x288x128xbf16, #tpu.memory_space<vmem>>, vector<1x288x128xbf16>
    %22 = vector.shape_cast %21 : vector<1x288x128xbf16> to vector<288x128xbf16>
    %c0_19 = arith.constant 0 : index
    %c0_20 = arith.constant 0 : index
    %23 = vector.load %arg3[%c0_19, %c0_20] : memref<128x128xbf16, #tpu.memory_space<vmem>>, vector<128x128xbf16>
    %cst_21 = arith.constant dense<0.000000e+00> : vector<288x128xf32>
    %24 = tpu.matmul %22, %23, %cst_21 {dimension_numbers = #tpu.dot_dimension_numbers<[1], [0], [0], [1], [0, 0, 1, 1], [], []>} : vector<288x128xbf16>, vector<128x128xbf16>, vector<288x128xf32> -> vector<288x128xf32>
    %c1_22 = arith.constant 1 : index
    %c0_23 = arith.constant 0 : index
    %c0_24 = arith.constant 0 : index
    %25 = vector.load %arg2[%c1_22, %c0_23, %c0_24] : memref<2x288x128xbf16, #tpu.memory_space<vmem>>, vector<1x288x128xbf16>
    %26 = vector.shape_cast %25 : vector<1x288x128xbf16> to vector<288x128xbf16>
    %c0_25 = arith.constant 0 : index
    %c0_26 = arith.constant 0 : index
    %27 = vector.load %arg3[%c0_25, %c0_26] : memref<128x128xbf16, #tpu.memory_space<vmem>>, vector<128x128xbf16>
    %cst_27 = arith.constant dense<0.000000e+00> : vector<288x128xf32>
    %28 = tpu.matmul %26, %27, %cst_27 {dimension_numbers = #tpu.dot_dimension_numbers<[1], [0], [0], [1], [0, 0, 1, 1], [], []>} : vector<288x128xbf16>, vector<128x128xbf16>, vector<288x128xf32> -> vector<288x128xf32>
    %29 = arith.maximumf %24, %28 : vector<288x128xf32>
    %c0_28 = arith.constant 0 : index
    %c0_29 = arith.constant 0 : index
    %30 = vector.load %arg4[%c0_28, %c0_29] : memref<1x128xf32, #tpu.memory_space<vmem>>, vector<1x128xf32>
    %31 = vector.broadcast %30 : vector<1x128xf32> to vector<288x128xf32>
    %32 = arith.addf %29, %31 : vector<288x128xf32>
    %33 = vector.shape_cast %32 : vector<288x128xf32> to vector<12x24x128xf32>
    %34 = vector.extract_strided_slice %33 {offsets = [0, 0, 0], sizes = [12, 12, 128], strides = [1, 1, 1]} : vector<12x24x128xf32> to vector<12x12x128xf32>
    %35 = vector.extract_strided_slice %33 {offsets = [0, 12, 0], sizes = [12, 12, 128], strides = [1, 1, 1]} : vector<12x24x128xf32> to vector<12x12x128xf32>
    %36 = arith.maximumf %34, %35 : vector<12x12x128xf32>
    %cst_30 = arith.constant 0.000000e+00 : f32
    %37 = vector.broadcast %cst_30 : f32 to vector<12x12x128xf32>
    %38 = arith.maximumf %36, %37 : vector<12x12x128xf32>
    %c1_31 = arith.constant 1 : index
    %c0_32 = arith.constant 0 : index
    %c0_33 = arith.constant 0 : index
    %c0_34 = arith.constant 0 : index
    %39 = vector.load %arg8[%c1_31, %c0_32, %c0_33, %c0_34] : memref<2x12x12x128xf32, #tpu.memory_space<vmem>>, vector<1x12x12x128xf32>
    %40 = vector.shape_cast %39 : vector<1x12x12x128xf32> to vector<12x12x128xf32>
    %41 = vector.shape_cast %38 : vector<12x12x128xf32> to vector<1x12x12x128xf32>
    tpu.vector_store %arg8[%c1_31, %c0_32, %c0_33, %c0_34], %41 {strides = array<i32>} : memref<2x12x12x128xf32, #tpu.memory_space<vmem>>, vector<1x12x12x128xf32>,
    %cst_35 = arith.constant 0.000000e+00 : f32
    %42 = vector.broadcast %cst_35 : f32 to vector<128x128xf32>
    %c0_36 = arith.constant 0 : index
    %c0_37 = arith.constant 0 : index
    %c0_38 = arith.constant 0 : index
    %c0_39 = arith.constant 0 : index
    %43 = vector.load %arg8[%c0_36, %c0_37, %c0_38, %c0_39] : memref<2x12x12x128xf32, #tpu.memory_space<vmem>>, vector<2x8x8x128xf32>
    %44 = vector.shape_cast %43 : vector<2x8x8x128xf32> to vector<128x128xf32>
    %45 = arith.truncf %44 : vector<128x128xf32> to vector<128x128xbf16>
    %c0_40 = arith.constant 0 : index
    %c0_41 = arith.constant 0 : index
    %c0_42 = arith.constant 0 : index
    %46 = vector.load %arg5[%c0_40, %c0_41, %c0_42] : memref<25x128x128xbf16, #tpu.memory_space<vmem>>, vector<1x128x128xbf16>
    %47 = vector.shape_cast %46 : vector<1x128x128xbf16> to vector<128x128xbf16>
    %cst_43 = arith.constant dense<0.000000e+00> : vector<128x128xf32>
    %48 = tpu.matmul %45, %47, %cst_43 {dimension_numbers = #tpu.dot_dimension_numbers<[1], [0], [0], [1], [0, 0, 1, 1], [], []>} : vector<128x128xbf16>, vector<128x128xbf16>, vector<128x128xf32> -> vector<128x128xf32>
    %49 = arith.addf %42, %48 : vector<128x128xf32>
    %c0_44 = arith.constant 0 : index
    %c0_45 = arith.constant 0 : index
    %c1_46 = arith.constant 1 : index
    %c0_47 = arith.constant 0 : index
    %50 = vector.load %arg8[%c0_44, %c0_45, %c1_46, %c0_47] : memref<2x12x12x128xf32, #tpu.memory_space<vmem>>, vector<2x8x8x128xf32>
    %51 = vector.shape_cast %50 : vector<2x8x8x128xf32> to vector<128x128xf32>
    %52 = arith.truncf %51 : vector<128x128xf32> to vector<128x128xbf16>
    %c1_48 = arith.constant 1 : index
    %c0_49 = arith.constant 0 : index
    %c0_50 = arith.constant 0 : index
    %53 = vector.load %arg5[%c1_48, %c0_49, %c0_50] : memref<25x128x128xbf16, #tpu.memory_space<vmem>>, vector<1x128x128xbf16>
    %54 = vector.shape_cast %53 : vector<1x128x128xbf16> to vector<128x128xbf16>
    %cst_51 = arith.constant dense<0.000000e+00> : vector<128x128xf32>
    %55 = tpu.matmul %52, %54, %cst_51 {dimension_numbers = #tpu.dot_dimension_numbers<[1], [0], [0], [1], [0, 0, 1, 1], [], []>} : vector<128x128xbf16>, vector<128x128xbf16>, vector<128x128xf32> -> vector<128x128xf32>
    %56 = arith.addf %49, %55 : vector<128x128xf32>
    %c0_52 = arith.constant 0 : index
    %c0_53 = arith.constant 0 : index
    %c2 = arith.constant 2 : index
    %c0_54 = arith.constant 0 : index
    %57 = vector.load %arg8[%c0_52, %c0_53, %c2, %c0_54] : memref<2x12x12x128xf32, #tpu.memory_space<vmem>>, vector<2x8x8x128xf32>
    %58 = vector.shape_cast %57 : vector<2x8x8x128xf32> to vector<128x128xf32>
    %59 = arith.truncf %58 : vector<128x128xf32> to vector<128x128xbf16>
    %c2_55 = arith.constant 2 : index
    %c0_56 = arith.constant 0 : index
    %c0_57 = arith.constant 0 : index
    %60 = vector.load %arg5[%c2_55, %c0_56, %c0_57] : memref<25x128x128xbf16, #tpu.memory_space<vmem>>, vector<1x128x128xbf16>
    %61 = vector.shape_cast %60 : vector<1x128x128xbf16> to vector<128x128xbf16>
    %cst_58 = arith.constant dense<0.000000e+00> : vector<128x128xf32>
    %62 = tpu.matmul %59, %61, %cst_58 {dimension_numbers = #tpu.dot_dimension_numbers<[1], [0], [0], [1], [0, 0, 1, 1], [], []>} : vector<128x128xbf16>, vector<128x128xbf16>, vector<128x128xf32> -> vector<128x128xf32>
    %63 = arith.addf %56, %62 : vector<128x128xf32>
    %c0_59 = arith.constant 0 : index
    %c0_60 = arith.constant 0 : index
    %c3 = arith.constant 3 : index
    %c0_61 = arith.constant 0 : index
    %64 = vector.load %arg8[%c0_59, %c0_60, %c3, %c0_61] : memref<2x12x12x128xf32, #tpu.memory_space<vmem>>, vector<2x8x8x128xf32>
    %65 = vector.shape_cast %64 : vector<2x8x8x128xf32> to vector<128x128xf32>
    %66 = arith.truncf %65 : vector<128x128xf32> to vector<128x128xbf16>
    %c3_62 = arith.constant 3 : index
    %c0_63 = arith.constant 0 : index
    %c0_64 = arith.constant 0 : index
    %67 = vector.load %arg5[%c3_62, %c0_63, %c0_64] : memref<25x128x128xbf16, #tpu.memory_space<vmem>>, vector<1x128x128xbf16>
    %68 = vector.shape_cast %67 : vector<1x128x128xbf16> to vector<128x128xbf16>
    %cst_65 = arith.constant dense<0.000000e+00> : vector<128x128xf32>
    %69 = tpu.matmul %66, %68, %cst_65 {dimension_numbers = #tpu.dot_dimension_numbers<[1], [0], [0], [1], [0, 0, 1, 1], [], []>} : vector<128x128xbf16>, vector<128x128xbf16>, vector<128x128xf32> -> vector<128x128xf32>
    %70 = arith.addf %63, %69 : vector<128x128xf32>
    %c0_66 = arith.constant 0 : index
    %c0_67 = arith.constant 0 : index
    %c4 = arith.constant 4 : index
    %c0_68 = arith.constant 0 : index
    %71 = vector.load %arg8[%c0_66, %c0_67, %c4, %c0_68] : memref<2x12x12x128xf32, #tpu.memory_space<vmem>>, vector<2x8x8x128xf32>
    %72 = vector.shape_cast %71 : vector<2x8x8x128xf32> to vector<128x128xf32>
    %73 = arith.truncf %72 : vector<128x128xf32> to vector<128x128xbf16>
    %c4_69 = arith.constant 4 : index
    %c0_70 = arith.constant 0 : index
    %c0_71 = arith.constant 0 : index
    %74 = vector.load %arg5[%c4_69, %c0_70, %c0_71] : memref<25x128x128xbf16, #tpu.memory_space<vmem>>, vector<1x128x128xbf16>
    %75 = vector.shape_cast %74 : vector<1x128x128xbf16> to vector<128x128xbf16>
    %cst_72 = arith.constant dense<0.000000e+00> : vector<128x128xf32>
    %76 = tpu.matmul %73, %75, %cst_72 {dimension_numbers = #tpu.dot_dimension_numbers<[1], [0], [0], [1], [0, 0, 1, 1], [], []>} : vector<128x128xbf16>, vector<128x128xbf16>, vector<128x128xf32> -> vector<128x128xf32>
    %77 = arith.addf %70, %76 : vector<128x128xf32>
    %c0_73 = arith.constant 0 : index
    %c1_74 = arith.constant 1 : index
    %c0_75 = arith.constant 0 : index
    %c0_76 = arith.constant 0 : index
    %78 = vector.load %arg8[%c0_73, %c1_74, %c0_75, %c0_76] : memref<2x12x12x128xf32, #tpu.memory_space<vmem>>, vector<2x8x8x128xf32>
    %79 = vector.shape_cast %78 : vector<2x8x8x128xf32> to vector<128x128xf32>
    %80 = arith.truncf %79 : vector<128x128xf32> to vector<128x128xbf16>
    %c5 = arith.constant 5 : index
    %c0_77 = arith.constant 0 : index
    %c0_78 = arith.constant 0 : index
    %81 = vector.load %arg5[%c5, %c0_77, %c0_78] : memref<25x128x128xbf16, #tpu.memory_space<vmem>>, vector<1x128x128xbf16>
    %82 = vector.shape_cast %81 : vector<1x128x128xbf16> to vector<128x128xbf16>
    %cst_79 = arith.constant dense<0.000000e+00> : vector<128x128xf32>
    %83 = tpu.matmul %80, %82, %cst_79 {dimension_numbers = #tpu.dot_dimension_numbers<[1], [0], [0], [1], [0, 0, 1, 1], [], []>} : vector<128x128xbf16>, vector<128x128xbf16>, vector<128x128xf32> -> vector<128x128xf32>
    %84 = arith.addf %77, %83 : vector<128x128xf32>
    %c0_80 = arith.constant 0 : index
    %c1_81 = arith.constant 1 : index
    %c1_82 = arith.constant 1 : index
    %c0_83 = arith.constant 0 : index
    %85 = vector.load %arg8[%c0_80, %c1_81, %c1_82, %c0_83] : memref<2x12x12x128xf32, #tpu.memory_space<vmem>>, vector<2x8x8x128xf32>
    %86 = vector.shape_cast %85 : vector<2x8x8x128xf32> to vector<128x128xf32>
    %87 = arith.truncf %86 : vector<128x128xf32> to vector<128x128xbf16>
    %c6 = arith.constant 6 : index
    %c0_84 = arith.constant 0 : index
    %c0_85 = arith.constant 0 : index
    %88 = vector.load %arg5[%c6, %c0_84, %c0_85] : memref<25x128x128xbf16, #tpu.memory_space<vmem>>, vector<1x128x128xbf16>
    %89 = vector.shape_cast %88 : vector<1x128x128xbf16> to vector<128x128xbf16>
    %cst_86 = arith.constant dense<0.000000e+00> : vector<128x128xf32>
    %90 = tpu.matmul %87, %89, %cst_86 {dimension_numbers = #tpu.dot_dimension_numbers<[1], [0], [0], [1], [0, 0, 1, 1], [], []>} : vector<128x128xbf16>, vector<128x128xbf16>, vector<128x128xf32> -> vector<128x128xf32>
    %91 = arith.addf %84, %90 : vector<128x128xf32>
    %c0_87 = arith.constant 0 : index
    %c1_88 = arith.constant 1 : index
    %c2_89 = arith.constant 2 : index
    %c0_90 = arith.constant 0 : index
    %92 = vector.load %arg8[%c0_87, %c1_88, %c2_89, %c0_90] : memref<2x12x12x128xf32, #tpu.memory_space<vmem>>, vector<2x8x8x128xf32>
    %93 = vector.shape_cast %92 : vector<2x8x8x128xf32> to vector<128x128xf32>
    %94 = arith.truncf %93 : vector<128x128xf32> to vector<128x128xbf16>
    %c7 = arith.constant 7 : index
    %c0_91 = arith.constant 0 : index
    %c0_92 = arith.constant 0 : index
    %95 = vector.load %arg5[%c7, %c0_91, %c0_92] : memref<25x128x128xbf16, #tpu.memory_space<vmem>>, vector<1x128x128xbf16>
    %96 = vector.shape_cast %95 : vector<1x128x128xbf16> to vector<128x128xbf16>
    %cst_93 = arith.constant dense<0.000000e+00> : vector<128x128xf32>
    %97 = tpu.matmul %94, %96, %cst_93 {dimension_numbers = #tpu.dot_dimension_numbers<[1], [0], [0], [1], [0, 0, 1, 1], [], []>} : vector<128x128xbf16>, vector<128x128xbf16>, vector<128x128xf32> -> vector<128x128xf32>
    %98 = arith.addf %91, %97 : vector<128x128xf32>
    %c0_94 = arith.constant 0 : index
    %c1_95 = arith.constant 1 : index
    %c3_96 = arith.constant 3 : index
    %c0_97 = arith.constant 0 : index
    %99 = vector.load %arg8[%c0_94, %c1_95, %c3_96, %c0_97] : memref<2x12x12x128xf32, #tpu.memory_space<vmem>>, vector<2x8x8x128xf32>
    %100 = vector.shape_cast %99 : vector<2x8x8x128xf32> to vector<128x128xf32>
    %101 = arith.truncf %100 : vector<128x128xf32> to vector<128x128xbf16>
    %c8 = arith.constant 8 : index
    %c0_98 = arith.constant 0 : index
    %c0_99 = arith.constant 0 : index
    %102 = vector.load %arg5[%c8, %c0_98, %c0_99] : memref<25x128x128xbf16, #tpu.memory_space<vmem>>, vector<1x128x128xbf16>
    %103 = vector.shape_cast %102 : vector<1x128x128xbf16> to vector<128x128xbf16>
    %cst_100 = arith.constant dense<0.000000e+00> : vector<128x128xf32>
    %104 = tpu.matmul %101, %103, %cst_100 {dimension_numbers = #tpu.dot_dimension_numbers<[1], [0], [0], [1], [0, 0, 1, 1], [], []>} : vector<128x128xbf16>, vector<128x128xbf16>, vector<128x128xf32> -> vector<128x128xf32>
    %105 = arith.addf %98, %104 : vector<128x128xf32>
    %c0_101 = arith.constant 0 : index
    %c1_102 = arith.constant 1 : index
    %c4_103 = arith.constant 4 : index
    %c0_104 = arith.constant 0 : index
    %106 = vector.load %arg8[%c0_101, %c1_102, %c4_103, %c0_104] : memref<2x12x12x128xf32, #tpu.memory_space<vmem>>, vector<2x8x8x128xf32>
    %107 = vector.shape_cast %106 : vector<2x8x8x128xf32> to vector<128x128xf32>
    %108 = arith.truncf %107 : vector<128x128xf32> to vector<128x128xbf16>
    %c9 = arith.constant 9 : index
    %c0_105 = arith.constant 0 : index
    %c0_106 = arith.constant 0 : index
    %109 = vector.load %arg5[%c9, %c0_105, %c0_106] : memref<25x128x128xbf16, #tpu.memory_space<vmem>>, vector<1x128x128xbf16>
    %110 = vector.shape_cast %109 : vector<1x128x128xbf16> to vector<128x128xbf16>
    %cst_107 = arith.constant dense<0.000000e+00> : vector<128x128xf32>
    %111 = tpu.matmul %108, %110, %cst_107 {dimension_numbers = #tpu.dot_dimension_numbers<[1], [0], [0], [1], [0, 0, 1, 1], [], []>} : vector<128x128xbf16>, vector<128x128xbf16>, vector<128x128xf32> -> vector<128x128xf32>
    %112 = arith.addf %105, %111 : vector<128x128xf32>
    %c0_108 = arith.constant 0 : index
    %c2_109 = arith.constant 2 : index
    %c0_110 = arith.constant 0 : index
    %c0_111 = arith.constant 0 : index
    %113 = vector.load %arg8[%c0_108, %c2_109, %c0_110, %c0_111] : memref<2x12x12x128xf32, #tpu.memory_space<vmem>>, vector<2x8x8x128xf32>
    %114 = vector.shape_cast %113 : vector<2x8x8x128xf32> to vector<128x128xf32>
    %115 = arith.truncf %114 : vector<128x128xf32> to vector<128x128xbf16>
    %c10 = arith.constant 10 : index
    %c0_112 = arith.constant 0 : index
    %c0_113 = arith.constant 0 : index
    %116 = vector.load %arg5[%c10, %c0_112, %c0_113] : memref<25x128x128xbf16, #tpu.memory_space<vmem>>, vector<1x128x128xbf16>
    %117 = vector.shape_cast %116 : vector<1x128x128xbf16> to vector<128x128xbf16>
    %cst_114 = arith.constant dense<0.000000e+00> : vector<128x128xf32>
    %118 = tpu.matmul %115, %117, %cst_114 {dimension_numbers = #tpu.dot_dimension_numbers<[1], [0], [0], [1], [0, 0, 1, 1], [], []>} : vector<128x128xbf16>, vector<128x128xbf16>, vector<128x128xf32> -> vector<128x128xf32>
    %119 = arith.addf %112, %118 : vector<128x128xf32>
    %c0_115 = arith.constant 0 : index
    %c2_116 = arith.constant 2 : index
    %c1_117 = arith.constant 1 : index
    %c0_118 = arith.constant 0 : index
    %120 = vector.load %arg8[%c0_115, %c2_116, %c1_117, %c0_118] : memref<2x12x12x128xf32, #tpu.memory_space<vmem>>, vector<2x8x8x128xf32>
    %121 = vector.shape_cast %120 : vector<2x8x8x128xf32> to vector<128x128xf32>
    %122 = arith.truncf %121 : vector<128x128xf32> to vector<128x128xbf16>
    %c11 = arith.constant 11 : index
    %c0_119 = arith.constant 0 : index
    %c0_120 = arith.constant 0 : index
    %123 = vector.load %arg5[%c11, %c0_119, %c0_120] : memref<25x128x128xbf16, #tpu.memory_space<vmem>>, vector<1x128x128xbf16>
    %124 = vector.shape_cast %123 : vector<1x128x128xbf16> to vector<128x128xbf16>
    %cst_121 = arith.constant dense<0.000000e+00> : vector<128x128xf32>
    %125 = tpu.matmul %122, %124, %cst_121 {dimension_numbers = #tpu.dot_dimension_numbers<[1], [0], [0], [1], [0, 0, 1, 1], [], []>} : vector<128x128xbf16>, vector<128x128xbf16>, vector<128x128xf32> -> vector<128x128xf32>
    %126 = arith.addf %119, %125 : vector<128x128xf32>
    %c0_122 = arith.constant 0 : index
    %c2_123 = arith.constant 2 : index
    %c2_124 = arith.constant 2 : index
    %c0_125 = arith.constant 0 : index
    %127 = vector.load %arg8[%c0_122, %c2_123, %c2_124, %c0_125] : memref<2x12x12x128xf32, #tpu.memory_space<vmem>>, vector<2x8x8x128xf32>
    %128 = vector.shape_cast %127 : vector<2x8x8x128xf32> to vector<128x128xf32>
    %129 = arith.truncf %128 : vector<128x128xf32> to vector<128x128xbf16>
    %c12 = arith.constant 12 : index
    %c0_126 = arith.constant 0 : index
    %c0_127 = arith.constant 0 : index
    %130 = vector.load %arg5[%c12, %c0_126, %c0_127] : memref<25x128x128xbf16, #tpu.memory_space<vmem>>, vector<1x128x128xbf16>
    %131 = vector.shape_cast %130 : vector<1x128x128xbf16> to vector<128x128xbf16>
    %cst_128 = arith.constant dense<0.000000e+00> : vector<128x128xf32>
    %132 = tpu.matmul %129, %131, %cst_128 {dimension_numbers = #tpu.dot_dimension_numbers<[1], [0], [0], [1], [0, 0, 1, 1], [], []>} : vector<128x128xbf16>, vector<128x128xbf16>, vector<128x128xf32> -> vector<128x128xf32>
    %133 = arith.addf %126, %132 : vector<128x128xf32>
    %c0_129 = arith.constant 0 : index
    %c2_130 = arith.constant 2 : index
    %c3_131 = arith.constant 3 : index
    %c0_132 = arith.constant 0 : index
    %134 = vector.load %arg8[%c0_129, %c2_130, %c3_131, %c0_132] : memref<2x12x12x128xf32, #tpu.memory_space<vmem>>, vector<2x8x8x128xf32>
    %135 = vector.shape_cast %134 : vector<2x8x8x128xf32> to vector<128x128xf32>
    %136 = arith.truncf %135 : vector<128x128xf32> to vector<128x128xbf16>
    %c13 = arith.constant 13 : index
    %c0_133 = arith.constant 0 : index
    %c0_134 = arith.constant 0 : index
    %137 = vector.load %arg5[%c13, %c0_133, %c0_134] : memref<25x128x128xbf16, #tpu.memory_space<vmem>>, vector<1x128x128xbf16>
    %138 = vector.shape_cast %137 : vector<1x128x128xbf16> to vector<128x128xbf16>
    %cst_135 = arith.constant dense<0.000000e+00> : vector<128x128xf32>
    %139 = tpu.matmul %136, %138, %cst_135 {dimension_numbers = #tpu.dot_dimension_numbers<[1], [0], [0], [1], [0, 0, 1, 1], [], []>} : vector<128x128xbf16>, vector<128x128xbf16>, vector<128x128xf32> -> vector<128x128xf32>
    %140 = arith.addf %133, %139 : vector<128x128xf32>
    %c0_136 = arith.constant 0 : index
    %c2_137 = arith.constant 2 : index
    %c4_138 = arith.constant 4 : index
    %c0_139 = arith.constant 0 : index
    %141 = vector.load %arg8[%c0_136, %c2_137, %c4_138, %c0_139] : memref<2x12x12x128xf32, #tpu.memory_space<vmem>>, vector<2x8x8x128xf32>
    %142 = vector.shape_cast %141 : vector<2x8x8x128xf32> to vector<128x128xf32>
    %143 = arith.truncf %142 : vector<128x128xf32> to vector<128x128xbf16>
    %c14 = arith.constant 14 : index
    %c0_140 = arith.constant 0 : index
    %c0_141 = arith.constant 0 : index
    %144 = vector.load %arg5[%c14, %c0_140, %c0_141] : memref<25x128x128xbf16, #tpu.memory_space<vmem>>, vector<1x128x128xbf16>
    %145 = vector.shape_cast %144 : vector<1x128x128xbf16> to vector<128x128xbf16>
    %cst_142 = arith.constant dense<0.000000e+00> : vector<128x128xf32>
    %146 = tpu.matmul %143, %145, %cst_142 {dimension_numbers = #tpu.dot_dimension_numbers<[1], [0], [0], [1], [0, 0, 1, 1], [], []>} : vector<128x128xbf16>, vector<128x128xbf16>, vector<128x128xf32> -> vector<128x128xf32>
    %147 = arith.addf %140, %146 : vector<128x128xf32>
    %c0_143 = arith.constant 0 : index
    %c3_144 = arith.constant 3 : index
    %c0_145 = arith.constant 0 : index
    %c0_146 = arith.constant 0 : index
    %148 = vector.load %arg8[%c0_143, %c3_144, %c0_145, %c0_146] : memref<2x12x12x128xf32, #tpu.memory_space<vmem>>, vector<2x8x8x128xf32>
    %149 = vector.shape_cast %148 : vector<2x8x8x128xf32> to vector<128x128xf32>
    %150 = arith.truncf %149 : vector<128x128xf32> to vector<128x128xbf16>
    %c15 = arith.constant 15 : index
    %c0_147 = arith.constant 0 : index
    %c0_148 = arith.constant 0 : index
    %151 = vector.load %arg5[%c15, %c0_147, %c0_148] : memref<25x128x128xbf16, #tpu.memory_space<vmem>>, vector<1x128x128xbf16>
    %152 = vector.shape_cast %151 : vector<1x128x128xbf16> to vector<128x128xbf16>
    %cst_149 = arith.constant dense<0.000000e+00> : vector<128x128xf32>
    %153 = tpu.matmul %150, %152, %cst_149 {dimension_numbers = #tpu.dot_dimension_numbers<[1], [0], [0], [1], [0, 0, 1, 1], [], []>} : vector<128x128xbf16>, vector<128x128xbf16>, vector<128x128xf32> -> vector<128x128xf32>
    %154 = arith.addf %147, %153 : vector<128x128xf32>
    %c0_150 = arith.constant 0 : index
    %c3_151 = arith.constant 3 : index
    %c1_152 = arith.constant 1 : index
    %c0_153 = arith.constant 0 : index
    %155 = vector.load %arg8[%c0_150, %c3_151, %c1_152, %c0_153] : memref<2x12x12x128xf32, #tpu.memory_space<vmem>>, vector<2x8x8x128xf32>
    %156 = vector.shape_cast %155 : vector<2x8x8x128xf32> to vector<128x128xf32>
    %157 = arith.truncf %156 : vector<128x128xf32> to vector<128x128xbf16>
    %c16 = arith.constant 16 : index
    %c0_154 = arith.constant 0 : index
    %c0_155 = arith.constant 0 : index
    %158 = vector.load %arg5[%c16, %c0_154, %c0_155] : memref<25x128x128xbf16, #tpu.memory_space<vmem>>, vector<1x128x128xbf16>
    %159 = vector.shape_cast %158 : vector<1x128x128xbf16> to vector<128x128xbf16>
    %cst_156 = arith.constant dense<0.000000e+00> : vector<128x128xf32>
    %160 = tpu.matmul %157, %159, %cst_156 {dimension_numbers = #tpu.dot_dimension_numbers<[1], [0], [0], [1], [0, 0, 1, 1], [], []>} : vector<128x128xbf16>, vector<128x128xbf16>, vector<128x128xf32> -> vector<128x128xf32>
    %161 = arith.addf %154, %160 : vector<128x128xf32>
    %c0_157 = arith.constant 0 : index
    %c3_158 = arith.constant 3 : index
    %c2_159 = arith.constant 2 : index
    %c0_160 = arith.constant 0 : index
    %162 = vector.load %arg8[%c0_157, %c3_158, %c2_159, %c0_160] : memref<2x12x12x128xf32, #tpu.memory_space<vmem>>, vector<2x8x8x128xf32>
    %163 = vector.shape_cast %162 : vector<2x8x8x128xf32> to vector<128x128xf32>
    %164 = arith.truncf %163 : vector<128x128xf32> to vector<128x128xbf16>
    %c17 = arith.constant 17 : index
    %c0_161 = arith.constant 0 : index
    %c0_162 = arith.constant 0 : index
    %165 = vector.load %arg5[%c17, %c0_161, %c0_162] : memref<25x128x128xbf16, #tpu.memory_space<vmem>>, vector<1x128x128xbf16>
    %166 = vector.shape_cast %165 : vector<1x128x128xbf16> to vector<128x128xbf16>
    %cst_163 = arith.constant dense<0.000000e+00> : vector<128x128xf32>
    %167 = tpu.matmul %164, %166, %cst_163 {dimension_numbers = #tpu.dot_dimension_numbers<[1], [0], [0], [1], [0, 0, 1, 1], [], []>} : vector<128x128xbf16>, vector<128x128xbf16>, vector<128x128xf32> -> vector<128x128xf32>
    %168 = arith.addf %161, %167 : vector<128x128xf32>
    %c0_164 = arith.constant 0 : index
    %c3_165 = arith.constant 3 : index
    %c3_166 = arith.constant 3 : index
    %c0_167 = arith.constant 0 : index
    %169 = vector.load %arg8[%c0_164, %c3_165, %c3_166, %c0_167] : memref<2x12x12x128xf32, #tpu.memory_space<vmem>>, vector<2x8x8x128xf32>
    %170 = vector.shape_cast %169 : vector<2x8x8x128xf32> to vector<128x128xf32>
    %171 = arith.truncf %170 : vector<128x128xf32> to vector<128x128xbf16>
    %c18 = arith.constant 18 : index
    %c0_168 = arith.constant 0 : index
    %c0_169 = arith.constant 0 : index
    %172 = vector.load %arg5[%c18, %c0_168, %c0_169] : memref<25x128x128xbf16, #tpu.memory_space<vmem>>, vector<1x128x128xbf16>
    %173 = vector.shape_cast %172 : vector<1x128x128xbf16> to vector<128x128xbf16>
    %cst_170 = arith.constant dense<0.000000e+00> : vector<128x128xf32>
    %174 = tpu.matmul %171, %173, %cst_170 {dimension_numbers = #tpu.dot_dimension_numbers<[1], [0], [0], [1], [0, 0, 1, 1], [], []>} : vector<128x128xbf16>, vector<128x128xbf16>, vector<128x128xf32> -> vector<128x128xf32>
    %175 = arith.addf %168, %174 : vector<128x128xf32>
    %c0_171 = arith.constant 0 : index
    %c3_172 = arith.constant 3 : index
    %c4_173 = arith.constant 4 : index
    %c0_174 = arith.constant 0 : index
    %176 = vector.load %arg8[%c0_171, %c3_172, %c4_173, %c0_174] : memref<2x12x12x128xf32, #tpu.memory_space<vmem>>, vector<2x8x8x128xf32>
    %177 = vector.shape_cast %176 : vector<2x8x8x128xf32> to vector<128x128xf32>
    %178 = arith.truncf %177 : vector<128x128xf32> to vector<128x128xbf16>
    %c19 = arith.constant 19 : index
    %c0_175 = arith.constant 0 : index
    %c0_176 = arith.constant 0 : index
    %179 = vector.load %arg5[%c19, %c0_175, %c0_176] : memref<25x128x128xbf16, #tpu.memory_space<vmem>>, vector<1x128x128xbf16>
    %180 = vector.shape_cast %179 : vector<1x128x128xbf16> to vector<128x128xbf16>
    %cst_177 = arith.constant dense<0.000000e+00> : vector<128x128xf32>
    %181 = tpu.matmul %178, %180, %cst_177 {dimension_numbers = #tpu.dot_dimension_numbers<[1], [0], [0], [1], [0, 0, 1, 1], [], []>} : vector<128x128xbf16>, vector<128x128xbf16>, vector<128x128xf32> -> vector<128x128xf32>
    %182 = arith.addf %175, %181 : vector<128x128xf32>
    %c0_178 = arith.constant 0 : index
    %c4_179 = arith.constant 4 : index
    %c0_180 = arith.constant 0 : index
    %c0_181 = arith.constant 0 : index
    %183 = vector.load %arg8[%c0_178, %c4_179, %c0_180, %c0_181] : memref<2x12x12x128xf32, #tpu.memory_space<vmem>>, vector<2x8x8x128xf32>
    %184 = vector.shape_cast %183 : vector<2x8x8x128xf32> to vector<128x128xf32>
    %185 = arith.truncf %184 : vector<128x128xf32> to vector<128x128xbf16>
    %c20 = arith.constant 20 : index
    %c0_182 = arith.constant 0 : index
    %c0_183 = arith.constant 0 : index
    %186 = vector.load %arg5[%c20, %c0_182, %c0_183] : memref<25x128x128xbf16, #tpu.memory_space<vmem>>, vector<1x128x128xbf16>
    %187 = vector.shape_cast %186 : vector<1x128x128xbf16> to vector<128x128xbf16>
    %cst_184 = arith.constant dense<0.000000e+00> : vector<128x128xf32>
    %188 = tpu.matmul %185, %187, %cst_184 {dimension_numbers = #tpu.dot_dimension_numbers<[1], [0], [0], [1], [0, 0, 1, 1], [], []>} : vector<128x128xbf16>, vector<128x128xbf16>, vector<128x128xf32> -> vector<128x128xf32>
    %189 = arith.addf %182, %188 : vector<128x128xf32>
    %c0_185 = arith.constant 0 : index
    %c4_186 = arith.constant 4 : index
    %c1_187 = arith.constant 1 : index
    %c0_188 = arith.constant 0 : index
    %190 = vector.load %arg8[%c0_185, %c4_186, %c1_187, %c0_188] : memref<2x12x12x128xf32, #tpu.memory_space<vmem>>, vector<2x8x8x128xf32>
    %191 = vector.shape_cast %190 : vector<2x8x8x128xf32> to vector<128x128xf32>
    %192 = arith.truncf %191 : vector<128x128xf32> to vector<128x128xbf16>
    %c21 = arith.constant 21 : index
    %c0_189 = arith.constant 0 : index
    %c0_190 = arith.constant 0 : index
    %193 = vector.load %arg5[%c21, %c0_189, %c0_190] : memref<25x128x128xbf16, #tpu.memory_space<vmem>>, vector<1x128x128xbf16>
    %194 = vector.shape_cast %193 : vector<1x128x128xbf16> to vector<128x128xbf16>
    %cst_191 = arith.constant dense<0.000000e+00> : vector<128x128xf32>
    %195 = tpu.matmul %192, %194, %cst_191 {dimension_numbers = #tpu.dot_dimension_numbers<[1], [0], [0], [1], [0, 0, 1, 1], [], []>} : vector<128x128xbf16>, vector<128x128xbf16>, vector<128x128xf32> -> vector<128x128xf32>
    %196 = arith.addf %189, %195 : vector<128x128xf32>
    %c0_192 = arith.constant 0 : index
    %c4_193 = arith.constant 4 : index
    %c2_194 = arith.constant 2 : index
    %c0_195 = arith.constant 0 : index
    %197 = vector.load %arg8[%c0_192, %c4_193, %c2_194, %c0_195] : memref<2x12x12x128xf32, #tpu.memory_space<vmem>>, vector<2x8x8x128xf32>
    %198 = vector.shape_cast %197 : vector<2x8x8x128xf32> to vector<128x128xf32>
    %199 = arith.truncf %198 : vector<128x128xf32> to vector<128x128xbf16>
    %c22 = arith.constant 22 : index
    %c0_196 = arith.constant 0 : index
    %c0_197 = arith.constant 0 : index
    %200 = vector.load %arg5[%c22, %c0_196, %c0_197] : memref<25x128x128xbf16, #tpu.memory_space<vmem>>, vector<1x128x128xbf16>
    %201 = vector.shape_cast %200 : vector<1x128x128xbf16> to vector<128x128xbf16>
    %cst_198 = arith.constant dense<0.000000e+00> : vector<128x128xf32>
    %202 = tpu.matmul %199, %201, %cst_198 {dimension_numbers = #tpu.dot_dimension_numbers<[1], [0], [0], [1], [0, 0, 1, 1], [], []>} : vector<128x128xbf16>, vector<128x128xbf16>, vector<128x128xf32> -> vector<128x128xf32>
    %203 = arith.addf %196, %202 : vector<128x128xf32>
    %c0_199 = arith.constant 0 : index
    %c4_200 = arith.constant 4 : index
    %c3_201 = arith.constant 3 : index
    %c0_202 = arith.constant 0 : index
    %204 = vector.load %arg8[%c0_199, %c4_200, %c3_201, %c0_202] : memref<2x12x12x128xf32, #tpu.memory_space<vmem>>, vector<2x8x8x128xf32>
    %205 = vector.shape_cast %204 : vector<2x8x8x128xf32> to vector<128x128xf32>
    %206 = arith.truncf %205 : vector<128x128xf32> to vector<128x128xbf16>
    %c23 = arith.constant 23 : index
    %c0_203 = arith.constant 0 : index
    %c0_204 = arith.constant 0 : index
    %207 = vector.load %arg5[%c23, %c0_203, %c0_204] : memref<25x128x128xbf16, #tpu.memory_space<vmem>>, vector<1x128x128xbf16>
    %208 = vector.shape_cast %207 : vector<1x128x128xbf16> to vector<128x128xbf16>
    %cst_205 = arith.constant dense<0.000000e+00> : vector<128x128xf32>
    %209 = tpu.matmul %206, %208, %cst_205 {dimension_numbers = #tpu.dot_dimension_numbers<[1], [0], [0], [1], [0, 0, 1, 1], [], []>} : vector<128x128xbf16>, vector<128x128xbf16>, vector<128x128xf32> -> vector<128x128xf32>
    %210 = arith.addf %203, %209 : vector<128x128xf32>
    %c0_206 = arith.constant 0 : index
    %c4_207 = arith.constant 4 : index
    %c4_208 = arith.constant 4 : index
    %c0_209 = arith.constant 0 : index
    %211 = vector.load %arg8[%c0_206, %c4_207, %c4_208, %c0_209] : memref<2x12x12x128xf32, #tpu.memory_space<vmem>>, vector<2x8x8x128xf32>
    %212 = vector.shape_cast %211 : vector<2x8x8x128xf32> to vector<128x128xf32>
    %213 = arith.truncf %212 : vector<128x128xf32> to vector<128x128xbf16>
    %c24 = arith.constant 24 : index
    %c0_210 = arith.constant 0 : index
    %c0_211 = arith.constant 0 : index
    %214 = vector.load %arg5[%c24, %c0_210, %c0_211] : memref<25x128x128xbf16, #tpu.memory_space<vmem>>, vector<1x128x128xbf16>
    %215 = vector.shape_cast %214 : vector<1x128x128xbf16> to vector<128x128xbf16>
    %cst_212 = arith.constant dense<0.000000e+00> : vector<128x128xf32>
    %216 = tpu.matmul %213, %215, %cst_212 {dimension_numbers = #tpu.dot_dimension_numbers<[1], [0], [0], [1], [0, 0, 1, 1], [], []>} : vector<128x128xbf16>, vector<128x128xbf16>, vector<128x128xf32> -> vector<128x128xf32>
    %217 = arith.addf %210, %216 : vector<128x128xf32>
    %218 = vector.extract_strided_slice %217 {offsets = [0, 0], sizes = [64, 128], strides = [1, 1]} : vector<128x128xf32> to vector<64x128xf32>
    %c0_213 = arith.constant 0 : index
    %c0_214 = arith.constant 0 : index
    %219 = vector.load %arg6[%c0_213, %c0_214] : memref<1x128xf32, #tpu.memory_space<vmem>>, vector<1x128xf32>
    %220 = vector.broadcast %219 : vector<1x128xf32> to vector<64x128xf32>
    %221 = arith.addf %218, %220 : vector<64x128xf32>
    %222 = vector.shape_cast %221 : vector<64x128xf32> to vector<4x16x128xf32>
    %223 = vector.extract_strided_slice %222 {offsets = [0, 0, 0], sizes = [4, 8, 128], strides = [1, 1, 1]} : vector<4x16x128xf32> to vector<4x8x128xf32>
    %224 = vector.extract_strided_slice %222 {offsets = [0, 8, 0], sizes = [4, 8, 128], strides = [1, 1, 1]} : vector<4x16x128xf32> to vector<4x8x128xf32>
    %225 = arith.maximumf %223, %224 : vector<4x8x128xf32>
    %226 = vector.extract_strided_slice %225 {offsets = [0, 0, 0], sizes = [4, 1, 128], strides = [1, 1, 1]} : vector<4x8x128xf32> to vector<4x1x128xf32>
    %227 = vector.shape_cast %226 : vector<4x1x128xf32> to vector<4x128xf32>
    %228 = vector.extract_strided_slice %225 {offsets = [0, 1, 0], sizes = [4, 1, 128], strides = [1, 1, 1]} : vector<4x8x128xf32> to vector<4x1x128xf32>
    %229 = vector.shape_cast %228 : vector<4x1x128xf32> to vector<4x128xf32>
    %230 = arith.maximumf %227, %229 : vector<4x128xf32>
    %cst_215 = arith.constant 0.000000e+00 : f32
    %231 = vector.broadcast %cst_215 : f32 to vector<4x128xf32>
    %232 = arith.maximumf %230, %231 : vector<4x128xf32>
    %c0_216 = arith.constant 0 : index
    %c0_217 = arith.constant 0 : index
    %c0_218 = arith.constant 0 : index
    %c0_219 = arith.constant 0 : index
    %233 = vector.load %arg7[%c0_216, %c0_217, %c0_218, %c0_219] : memref<2x4x4x128xf32, #tpu.memory_space<vmem>>, vector<1x4x1x128xf32>
    %234 = vector.shape_cast %233 : vector<1x4x1x128xf32> to vector<4x128xf32>
    %235 = vector.shape_cast %232 : vector<4x128xf32> to vector<1x4x1x128xf32>
    tpu.vector_store %arg7[%c0_216, %c0_217, %c0_218, %c0_219], %235 {strides = array<i32>} : memref<2x4x4x128xf32, #tpu.memory_space<vmem>>, vector<1x4x1x128xf32>,
    %236 = vector.extract_strided_slice %225 {offsets = [0, 2, 0], sizes = [4, 1, 128], strides = [1, 1, 1]} : vector<4x8x128xf32> to vector<4x1x128xf32>
    %237 = vector.shape_cast %236 : vector<4x1x128xf32> to vector<4x128xf32>
    %238 = vector.extract_strided_slice %225 {offsets = [0, 3, 0], sizes = [4, 1, 128], strides = [1, 1, 1]} : vector<4x8x128xf32> to vector<4x1x128xf32>
    %239 = vector.shape_cast %238 : vector<4x1x128xf32> to vector<4x128xf32>
    %240 = arith.maximumf %237, %239 : vector<4x128xf32>
    %cst_220 = arith.constant 0.000000e+00 : f32
    %241 = vector.broadcast %cst_220 : f32 to vector<4x128xf32>
    %242 = arith.maximumf %240, %241 : vector<4x128xf32>
    %c0_221 = arith.constant 0 : index
    %c0_222 = arith.constant 0 : index
    %c1_223 = arith.constant 1 : index
    %c0_224 = arith.constant 0 : index
    %243 = vector.load %arg7[%c0_221, %c0_222, %c1_223, %c0_224] : memref<2x4x4x128xf32, #tpu.memory_space<vmem>>, vector<1x4x1x128xf32>
    %244 = vector.shape_cast %243 : vector<1x4x1x128xf32> to vector<4x128xf32>
    %245 = vector.shape_cast %242 : vector<4x128xf32> to vector<1x4x1x128xf32>
    tpu.vector_store %arg7[%c0_221, %c0_222, %c1_223, %c0_224], %245 {strides = array<i32>} : memref<2x4x4x128xf32, #tpu.memory_space<vmem>>, vector<1x4x1x128xf32>,
    %246 = vector.extract_strided_slice %225 {offsets = [0, 4, 0], sizes = [4, 1, 128], strides = [1, 1, 1]} : vector<4x8x128xf32> to vector<4x1x128xf32>
    %247 = vector.shape_cast %246 : vector<4x1x128xf32> to vector<4x128xf32>
    %248 = vector.extract_strided_slice %225 {offsets = [0, 5, 0], sizes = [4, 1, 128], strides = [1, 1, 1]} : vector<4x8x128xf32> to vector<4x1x128xf32>
    %249 = vector.shape_cast %248 : vector<4x1x128xf32> to vector<4x128xf32>
    %250 = arith.maximumf %247, %249 : vector<4x128xf32>
    %cst_225 = arith.constant 0.000000e+00 : f32
    %251 = vector.broadcast %cst_225 : f32 to vector<4x128xf32>
    %252 = arith.maximumf %250, %251 : vector<4x128xf32>
    %c0_226 = arith.constant 0 : index
    %c0_227 = arith.constant 0 : index
    %c2_228 = arith.constant 2 : index
    %c0_229 = arith.constant 0 : index
    %253 = vector.load %arg7[%c0_226, %c0_227, %c2_228, %c0_229] : memref<2x4x4x128xf32, #tpu.memory_space<vmem>>, vector<1x4x1x128xf32>
    %254 = vector.shape_cast %253 : vector<1x4x1x128xf32> to vector<4x128xf32>
    %255 = vector.shape_cast %252 : vector<4x128xf32> to vector<1x4x1x128xf32>
    tpu.vector_store %arg7[%c0_226, %c0_227, %c2_228, %c0_229], %255 {strides = array<i32>} : memref<2x4x4x128xf32, #tpu.memory_space<vmem>>, vector<1x4x1x128xf32>,
    %256 = vector.extract_strided_slice %225 {offsets = [0, 6, 0], sizes = [4, 1, 128], strides = [1, 1, 1]} : vector<4x8x128xf32> to vector<4x1x128xf32>
    %257 = vector.shape_cast %256 : vector<4x1x128xf32> to vector<4x128xf32>
    %258 = vector.extract_strided_slice %225 {offsets = [0, 7, 0], sizes = [4, 1, 128], strides = [1, 1, 1]} : vector<4x8x128xf32> to vector<4x1x128xf32>
    %259 = vector.shape_cast %258 : vector<4x1x128xf32> to vector<4x128xf32>
    %260 = arith.maximumf %257, %259 : vector<4x128xf32>
    %cst_230 = arith.constant 0.000000e+00 : f32
    %261 = vector.broadcast %cst_230 : f32 to vector<4x128xf32>
    %262 = arith.maximumf %260, %261 : vector<4x128xf32>
    %c0_231 = arith.constant 0 : index
    %c0_232 = arith.constant 0 : index
    %c3_233 = arith.constant 3 : index
    %c0_234 = arith.constant 0 : index
    %263 = vector.load %arg7[%c0_231, %c0_232, %c3_233, %c0_234] : memref<2x4x4x128xf32, #tpu.memory_space<vmem>>, vector<1x4x1x128xf32>
    %264 = vector.shape_cast %263 : vector<1x4x1x128xf32> to vector<4x128xf32>
    %265 = vector.shape_cast %262 : vector<4x128xf32> to vector<1x4x1x128xf32>
    tpu.vector_store %arg7[%c0_231, %c0_232, %c3_233, %c0_234], %265 {strides = array<i32>} : memref<2x4x4x128xf32, #tpu.memory_space<vmem>>, vector<1x4x1x128xf32>,
    %266 = vector.extract_strided_slice %217 {offsets = [64, 0], sizes = [64, 128], strides = [1, 1]} : vector<128x128xf32> to vector<64x128xf32>
    %c0_235 = arith.constant 0 : index
    %c0_236 = arith.constant 0 : index
    %267 = vector.load %arg6[%c0_235, %c0_236] : memref<1x128xf32, #tpu.memory_space<vmem>>, vector<1x128xf32>
    %268 = vector.broadcast %267 : vector<1x128xf32> to vector<64x128xf32>
    %269 = arith.addf %266, %268 : vector<64x128xf32>
    %270 = vector.shape_cast %269 : vector<64x128xf32> to vector<4x16x128xf32>
    %271 = vector.extract_strided_slice %270 {offsets = [0, 0, 0], sizes = [4, 8, 128], strides = [1, 1, 1]} : vector<4x16x128xf32> to vector<4x8x128xf32>
    %272 = vector.extract_strided_slice %270 {offsets = [0, 8, 0], sizes = [4, 8, 128], strides = [1, 1, 1]} : vector<4x16x128xf32> to vector<4x8x128xf32>
    %273 = arith.maximumf %271, %272 : vector<4x8x128xf32>
    %274 = vector.extract_strided_slice %273 {offsets = [0, 0, 0], sizes = [4, 1, 128], strides = [1, 1, 1]} : vector<4x8x128xf32> to vector<4x1x128xf32>
    %275 = vector.shape_cast %274 : vector<4x1x128xf32> to vector<4x128xf32>
    %276 = vector.extract_strided_slice %273 {offsets = [0, 1, 0], sizes = [4, 1, 128], strides = [1, 1, 1]} : vector<4x8x128xf32> to vector<4x1x128xf32>
    %277 = vector.shape_cast %276 : vector<4x1x128xf32> to vector<4x128xf32>
    %278 = arith.maximumf %275, %277 : vector<4x128xf32>
    %cst_237 = arith.constant 0.000000e+00 : f32
    %279 = vector.broadcast %cst_237 : f32 to vector<4x128xf32>
    %280 = arith.maximumf %278, %279 : vector<4x128xf32>
    %c1_238 = arith.constant 1 : index
    %c0_239 = arith.constant 0 : index
    %c0_240 = arith.constant 0 : index
    %c0_241 = arith.constant 0 : index
    %281 = vector.load %arg7[%c1_238, %c0_239, %c0_240, %c0_241] : memref<2x4x4x128xf32, #tpu.memory_space<vmem>>, vector<1x4x1x128xf32>
    %282 = vector.shape_cast %281 : vector<1x4x1x128xf32> to vector<4x128xf32>
    %283 = vector.shape_cast %280 : vector<4x128xf32> to vector<1x4x1x128xf32>
    tpu.vector_store %arg7[%c1_238, %c0_239, %c0_240, %c0_241], %283 {strides = array<i32>} : memref<2x4x4x128xf32, #tpu.memory_space<vmem>>, vector<1x4x1x128xf32>,
    %284 = vector.extract_strided_slice %273 {offsets = [0, 2, 0], sizes = [4, 1, 128], strides = [1, 1, 1]} : vector<4x8x128xf32> to vector<4x1x128xf32>
    %285 = vector.shape_cast %284 : vector<4x1x128xf32> to vector<4x128xf32>
    %286 = vector.extract_strided_slice %273 {offsets = [0, 3, 0], sizes = [4, 1, 128], strides = [1, 1, 1]} : vector<4x8x128xf32> to vector<4x1x128xf32>
    %287 = vector.shape_cast %286 : vector<4x1x128xf32> to vector<4x128xf32>
    %288 = arith.maximumf %285, %287 : vector<4x128xf32>
    %cst_242 = arith.constant 0.000000e+00 : f32
    %289 = vector.broadcast %cst_242 : f32 to vector<4x128xf32>
    %290 = arith.maximumf %288, %289 : vector<4x128xf32>
    %c1_243 = arith.constant 1 : index
    %c0_244 = arith.constant 0 : index
    %c1_245 = arith.constant 1 : index
    %c0_246 = arith.constant 0 : index
    %291 = vector.load %arg7[%c1_243, %c0_244, %c1_245, %c0_246] : memref<2x4x4x128xf32, #tpu.memory_space<vmem>>, vector<1x4x1x128xf32>
    %292 = vector.shape_cast %291 : vector<1x4x1x128xf32> to vector<4x128xf32>
    %293 = vector.shape_cast %290 : vector<4x128xf32> to vector<1x4x1x128xf32>
    tpu.vector_store %arg7[%c1_243, %c0_244, %c1_245, %c0_246], %293 {strides = array<i32>} : memref<2x4x4x128xf32, #tpu.memory_space<vmem>>, vector<1x4x1x128xf32>,
    %294 = vector.extract_strided_slice %273 {offsets = [0, 4, 0], sizes = [4, 1, 128], strides = [1, 1, 1]} : vector<4x8x128xf32> to vector<4x1x128xf32>
    %295 = vector.shape_cast %294 : vector<4x1x128xf32> to vector<4x128xf32>
    %296 = vector.extract_strided_slice %273 {offsets = [0, 5, 0], sizes = [4, 1, 128], strides = [1, 1, 1]} : vector<4x8x128xf32> to vector<4x1x128xf32>
    %297 = vector.shape_cast %296 : vector<4x1x128xf32> to vector<4x128xf32>
    %298 = arith.maximumf %295, %297 : vector<4x128xf32>
    %cst_247 = arith.constant 0.000000e+00 : f32
    %299 = vector.broadcast %cst_247 : f32 to vector<4x128xf32>
    %300 = arith.maximumf %298, %299 : vector<4x128xf32>
    %c1_248 = arith.constant 1 : index
    %c0_249 = arith.constant 0 : index
    %c2_250 = arith.constant 2 : index
    %c0_251 = arith.constant 0 : index
    %301 = vector.load %arg7[%c1_248, %c0_249, %c2_250, %c0_251] : memref<2x4x4x128xf32, #tpu.memory_space<vmem>>, vector<1x4x1x128xf32>
    %302 = vector.shape_cast %301 : vector<1x4x1x128xf32> to vector<4x128xf32>
    %303 = vector.shape_cast %300 : vector<4x128xf32> to vector<1x4x1x128xf32>
    tpu.vector_store %arg7[%c1_248, %c0_249, %c2_250, %c0_251], %303 {strides = array<i32>} : memref<2x4x4x128xf32, #tpu.memory_space<vmem>>, vector<1x4x1x128xf32>,
    %304 = vector.extract_strided_slice %273 {offsets = [0, 6, 0], sizes = [4, 1, 128], strides = [1, 1, 1]} : vector<4x8x128xf32> to vector<4x1x128xf32>
    %305 = vector.shape_cast %304 : vector<4x1x128xf32> to vector<4x128xf32>
    %306 = vector.extract_strided_slice %273 {offsets = [0, 7, 0], sizes = [4, 1, 128], strides = [1, 1, 1]} : vector<4x8x128xf32> to vector<4x1x128xf32>
    %307 = vector.shape_cast %306 : vector<4x1x128xf32> to vector<4x128xf32>
    %308 = arith.maximumf %305, %307 : vector<4x128xf32>
    %cst_252 = arith.constant 0.000000e+00 : f32
    %309 = vector.broadcast %cst_252 : f32 to vector<4x128xf32>
    %310 = arith.maximumf %308, %309 : vector<4x128xf32>
    %c1_253 = arith.constant 1 : index
    %c0_254 = arith.constant 0 : index
    %c3_255 = arith.constant 3 : index
    %c0_256 = arith.constant 0 : index
    %311 = vector.load %arg7[%c1_253, %c0_254, %c3_255, %c0_256] : memref<2x4x4x128xf32, #tpu.memory_space<vmem>>, vector<1x4x1x128xf32>
    %312 = vector.shape_cast %311 : vector<1x4x1x128xf32> to vector<4x128xf32>
    %313 = vector.shape_cast %310 : vector<4x128xf32> to vector<1x4x1x128xf32>
    tpu.vector_store %arg7[%c1_253, %c0_254, %c3_255, %c0_256], %313 {strides = array<i32>} : memref<2x4x4x128xf32, #tpu.memory_space<vmem>>, vector<1x4x1x128xf32>,
    return
  }
  func.func @transform_0(%arg0: i32) -> (i32, i32, i32) {
    %c0_i32 = arith.constant 0 : i32
    %c0_i32_0 = arith.constant 0 : i32
    %c0_i32_1 = arith.constant 0 : i32
    return %arg0, %c0_i32, %c0_i32_0 : i32, i32, i32
  }
  func.func @transform_1(%arg0: i32) -> (i32, i32, i32) {
    %c0_i32 = arith.constant 0 : i32
    %c0_i32_0 = arith.constant 0 : i32
    %c0_i32_1 = arith.constant 0 : i32
    return %arg0, %c0_i32, %c0_i32_0 : i32, i32, i32
  }
  func.func @transform_2(%arg0: i32) -> (i32, i32) {
    %c0_i32 = arith.constant 0 : i32
    %c0_i32_0 = arith.constant 0 : i32
    %c0_i32_1 = arith.constant 0 : i32
    return %c0_i32, %c0_i32_0 : i32, i32
  }
  func.func @transform_3(%arg0: i32) -> (i32, i32) {
    %c0_i32 = arith.constant 0 : i32
    %c0_i32_0 = arith.constant 0 : i32
    %c0_i32_1 = arith.constant 0 : i32
    return %c0_i32, %c0_i32_0 : i32, i32
  }
  func.func @transform_4(%arg0: i32) -> (i32, i32, i32) {
    %c0_i32 = arith.constant 0 : i32
    %c0_i32_0 = arith.constant 0 : i32
    %c0_i32_1 = arith.constant 0 : i32
    %c0_i32_2 = arith.constant 0 : i32
    return %c0_i32, %c0_i32_0, %c0_i32_1 : i32, i32, i32
  }
  func.func @transform_5(%arg0: i32) -> (i32, i32) {
    %c0_i32 = arith.constant 0 : i32
    %c0_i32_0 = arith.constant 0 : i32
    %c0_i32_1 = arith.constant 0 : i32
    return %c0_i32, %c0_i32_0 : i32, i32
  }
  func.func @transform_6(%arg0: i32) -> (i32, i32, i32, i32) {
    %c0_i32 = arith.constant 0 : i32
    %c0_i32_0 = arith.constant 0 : i32
    %c0_i32_1 = arith.constant 0 : i32
    %c0_i32_2 = arith.constant 0 : i32
    return %arg0, %c0_i32, %c0_i32_0, %c0_i32_1 : i32, i32, i32, i32
  }
}

</mosaic_0001>

<llo_original>
// kernel: feature_extractor_mnist.1
$region0: #{feature_extractor_mnist.1}
  #allocation0 [shape = 'u32[]', space=smem, size = 0x4, offset = 0x4, fixed_abs, tag = 'smem constant byte address 0x4 - core index']
  #allocation1 [shape = 'u32[144,128]{1,0:T(1,128)}', space=vmem, size = 0x12000, scoped, tag = 'internal scratch']
  #allocation2 [shape = 'f32[2,12,12,128]{3,2,1,0:T(8,128)}', space=vmem, size = 0x30000, scoped, tag = 'scratch operand']
  %s0 = inlined_call_operand.vmem [shape: bf16[2,288,128], index: 0, kind: input, shape index: {}]
  %s1 = inlined_call_operand.vmem [shape: bf16[2,288,128], index: 1, kind: input, shape index: {}]
  %s2 = inlined_call_operand.vmem [shape: bf16[128,128], index: 2, kind: input, shape index: {}]
  %s3 = inlined_call_operand.vmem [shape: f32[1,128], index: 3, kind: input, shape index: {}]
  %s4 = inlined_call_operand.vmem [shape: bf16[25,128,128], index: 4, kind: input, shape index: {}]
  %s5 = inlined_call_operand.vmem [shape: f32[1,128], index: 5, kind: input, shape index: {}]
  %s6 = inlined_call_operand.vmem [shape: f32[2,4,4,128], index: 6, kind: output, shape index: {}]
  %s7 = sld [smem:[#allocation0]]
  $region34: #{feature_extractor_mnist.1} parent=0
    _
  %s9 = ssub.s32 1, %s7
  %s10 = scalar_select 0, %s9, %s7
  // Predicated region
  $region2: #{feature_extractor_mnist.1} parent=0 // pred_check
    _
  $region3: #{feature_extractor_mnist.1} parent=0 // pred_check_branch
    %12 = sbr.rel (0) target = $region5
  $region4: #{feature_extractor_mnist.1} parent=0 // pred_region
    _
  $region5: #{feature_extractor_mnist.1} parent=0 // pred_fallthru
    _
  // Predicated region
  $region6: #{feature_extractor_mnist.1} parent=0 // pred_check
    _
  $region7: #{feature_extractor_mnist.1} parent=0 // pred_check_branch
    %14 = sbr.rel (0) target = $region9
  $region8: #{feature_extractor_mnist.1} parent=0 // pred_region
    _
  $region9: #{feature_extractor_mnist.1} parent=0 // pred_fallthru
    _
  // Predicated region
  $region10: #{feature_extractor_mnist.1} parent=0 // pred_check
    _
  $region11: #{feature_extractor_mnist.1} parent=0 // pred_check_branch
    %16 = sbr.rel (0) target = $region13
  $region12: #{feature_extractor_mnist.1} parent=0 // pred_region
    _
  $region13: #{feature_extractor_mnist.1} parent=0 // pred_fallthru
    _
  // Predicated region
  $region14: #{feature_extractor_mnist.1} parent=0 // pred_check
    _
  $region15: #{feature_extractor_mnist.1} parent=0 // pred_check_branch
    %18 = sbr.rel (0) target = $region17
  $region16: #{feature_extractor_mnist.1} parent=0 // pred_region
    _
  $region17: #{feature_extractor_mnist.1} parent=0 // pred_fallthru
    _
  // Predicated region
  $region18: #{feature_extractor_mnist.1} parent=0 // pred_check
    _
  $region19: #{feature_extractor_mnist.1} parent=0 // pred_check_branch
    %20 = sbr.rel (0) target = $region21
  $region20: #{feature_extractor_mnist.1} parent=0 // pred_region
    _
  $region21: #{feature_extractor_mnist.1} parent=0 // pred_fallthru
    _
  // Predicated region
  $region22: #{feature_extractor_mnist.1} parent=0 // pred_check
    _
  $region23: #{feature_extractor_mnist.1} parent=0 // pred_check_branch
    %22 = sbr.rel (0) target = $region25
  $region24: #{feature_extractor_mnist.1} parent=0 // pred_region
    _
  $region25: #{feature_extractor_mnist.1} parent=0 // pred_fallthru
    _
  %v24 = vld [vmem:[%s0] sm:$0xf]
  %v25 = vld [vmem:[%s0 + $0x4] sm:$0xf]
  %v26 = vld [vmem:[%s0 + $0x8] sm:$0xf]
  %v27 = vld [vmem:[%s0 + $0xc] sm:$0xf]
  %v28 = vld [vmem:[%s0 + $0x10] sm:$0xf]
  %v29 = vld [vmem:[%s0 + $0x14] sm:$0xf]
  %v30 = vld [vmem:[%s0 + $0x18] sm:$0xf]
  %v31 = vld [vmem:[%s0 + $0x1c] sm:$0xf]
  %v32 = vld [vmem:[%s0 + $0x20] sm:$0xf]
  %v33 = vld [vmem:[%s0 + $0x24] sm:$0xf]
  %v34 = vld [vmem:[%s0 + $0x28] sm:$0xf]
  %v35 = vld [vmem:[%s0 + $0x2c] sm:$0xf]
  %v36 = vld [vmem:[%s0 + $0x30] sm:$0xf]
  %v37 = vld [vmem:[%s0 + $0x34] sm:$0xf]
  %v38 = vld [vmem:[%s0 + $0x38] sm:$0xf]
  %v39 = vld [vmem:[%s0 + $0x3c] sm:$0xf]
  %v40 = vld [vmem:[%s0 + $0x40] sm:$0xf]
  %v41 = vld [vmem:[%s0 + $0x44] sm:$0xf]
  %v42 = vld [vmem:[%s0 + $0x48] sm:$0xf]
  %v43 = vld [vmem:[%s0 + $0x4c] sm:$0xf]
  %v44 = vld [vmem:[%s0 + $0x50] sm:$0xf]
  %v45 = vld [vmem:[%s0 + $0x54] sm:$0xf]
  %v46 = vld [vmem:[%s0 + $0x58] sm:$0xf]
  %v47 = vld [vmem:[%s0 + $0x5c] sm:$0xf]
  %v48 = vld [vmem:[%s0 + $0x60] sm:$0xf]
  %v49 = vld [vmem:[%s0 + $0x64] sm:$0xf]
  %v50 = vld [vmem:[%s0 + $0x68] sm:$0xf]
  %v51 = vld [vmem:[%s0 + $0x6c] sm:$0xf]
  %v52 = vld [vmem:[%s0 + $0x70] sm:$0xf]
  %v53 = vld [vmem:[%s0 + $0x74] sm:$0xf]
  %v54 = vld [vmem:[%s0 + $0x78] sm:$0xf]
  %v55 = vld [vmem:[%s0 + $0x7c] sm:$0xf]
  %v56 = vld [vmem:[%s0 + $0x80] sm:$0xf]
  %v57 = vld [vmem:[%s0 + $0x84] sm:$0xf]
  %v58 = vld [vmem:[%s0 + $0x88] sm:$0xf]
  %v59 = vld [vmem:[%s0 + $0x8c] sm:$0xf]
  %v60 = vld [vmem:[%s2] sm:$0xf]
  %v61 = vld [vmem:[%s2 + $0x4] sm:$0xf]
  %v62 = vld [vmem:[%s2 + $0x8] sm:$0xf]
  %v63 = vld [vmem:[%s2 + $0xc] sm:$0xf]
  %v64 = vld [vmem:[%s2 + $0x10] sm:$0xf]
  %v65 = vld [vmem:[%s2 + $0x14] sm:$0xf]
  %v66 = vld [vmem:[%s2 + $0x18] sm:$0xf]
  %v67 = vld [vmem:[%s2 + $0x1c] sm:$0xf]
  %v68 = vld [vmem:[%s2 + $0x20] sm:$0xf]
  %v69 = vld [vmem:[%s2 + $0x24] sm:$0xf]
  %v70 = vld [vmem:[%s2 + $0x28] sm:$0xf]
  %v71 = vld [vmem:[%s2 + $0x2c] sm:$0xf]
  %v72 = vld [vmem:[%s2 + $0x30] sm:$0xf]
  %v73 = vld [vmem:[%s2 + $0x34] sm:$0xf]
  %v74 = vld [vmem:[%s2 + $0x38] sm:$0xf]
  %v75 = vld [vmem:[%s2 + $0x3c] sm:$0xf]
  %v112 = vunpack.c.l.b16 %v24
  %v113 = vunpack.c.l.b16 %v25
  %v114 = vunpack.c.l.b16 %v26
  %v115 = vunpack.c.l.b16 %v27
  %v116 = vunpack.c.l.b16 %v28
  %v117 = vunpack.c.l.b16 %v29
  %v118 = vunpack.c.l.b16 %v30
  %v119 = vunpack.c.l.b16 %v31
  %v120 = vunpack.c.l.b16 %v32
  %v121 = vunpack.c.l.b16 %v33
  %v122 = vunpack.c.l.b16 %v34
  %v123 = vunpack.c.l.b16 %v35
  %v124 = vunpack.c.l.b16 %v36
  %v125 = vunpack.c.l.b16 %v37
  %v126 = vunpack.c.l.b16 %v38
  %v127 = vunpack.c.l.b16 %v39
  %v128 = vunpack.c.l.b16 %v40
  %v129 = vunpack.c.l.b16 %v41
  %v130 = vunpack.c.l.b16 %v42
  %v131 = vunpack.c.l.b16 %v43
  %v132 = vunpack.c.l.b16 %v44
  %v133 = vunpack.c.l.b16 %v45
  %v134 = vunpack.c.l.b16 %v46
  %v135 = vunpack.c.l.b16 %v47
  %v136 = vunpack.c.l.b16 %v48
  %v137 = vunpack.c.l.b16 %v49
  %v138 = vunpack.c.l.b16 %v50
  %v139 = vunpack.c.l.b16 %v51
  %v140 = vunpack.c.l.b16 %v52
  %v141 = vunpack.c.l.b16 %v53
  %v142 = vunpack.c.l.b16 %v54
  %v143 = vunpack.c.l.b16 %v55
  %v144 = vunpack.c.l.b16 %v56
  %v145 = vunpack.c.l.b16 %v57
  %v146 = vunpack.c.l.b16 %v58
  %v147 = vunpack.c.l.b16 %v59
  %v148 = vpack.c.b16 %v113, %v112
  %v149 = vpack.c.b16 %v115, %v114
  %v150 = vpack.c.b16 %v117, %v116
  %v151 = vpack.c.b16 %v119, %v118
  %v152 = vpack.c.b16 %v121, %v120
  %v153 = vpack.c.b16 %v123, %v122
  %v154 = vpack.c.b16 %v125, %v124
  %v155 = vpack.c.b16 %v127, %v126
  %v156 = vpack.c.b16 %v129, %v128
  %v157 = vpack.c.b16 %v131, %v130
  %v158 = vpack.c.b16 %v133, %v132
  %v159 = vpack.c.b16 %v135, %v134
  %v160 = vpack.c.b16 %v137, %v136
  %v161 = vpack.c.b16 %v139, %v138
  %v162 = vpack.c.b16 %v141, %v140
  %v163 = vpack.c.b16 %v143, %v142
  %v164 = vpack.c.b16 %v145, %v144
  %v165 = vpack.c.b16 %v147, %v146
  %v200 = vunpack.c.l.b16 %v60
  %v201 = vunpack.c.l.b16 %v61
  %v202 = vunpack.c.l.b16 %v62
  %v203 = vunpack.c.l.b16 %v63
  %v204 = vunpack.c.l.b16 %v64
  %v205 = vunpack.c.l.b16 %v65
  %v206 = vunpack.c.l.b16 %v66
  %v207 = vunpack.c.l.b16 %v67
  %v208 = vunpack.c.l.b16 %v68
  %v209 = vunpack.c.l.b16 %v69
  %v210 = vunpack.c.l.b16 %v70
  %v211 = vunpack.c.l.b16 %v71
  %v212 = vunpack.c.l.b16 %v72
  %v213 = vunpack.c.l.b16 %v73
  %v214 = vunpack.c.l.b16 %v74
  %v215 = vunpack.c.l.b16 %v75
  %v216 = vpack.c.b16 %v201, %v200
  %v217 = vpack.c.b16 %v203, %v202
  %v218 = vpack.c.b16 %v205, %v204
  %v219 = vpack.c.b16 %v207, %v206
  %v220 = vpack.c.b16 %v209, %v208
  %v221 = vpack.c.b16 %v211, %v210
  %v222 = vpack.c.b16 %v213, %v212
  %v223 = vpack.c.b16 %v215, %v214
  %232 = vmatprep.subr.bf16.mxu0 0
  %233 = vmatpush1.bf16.msra.mxu0 %v216
  %234 = vmatprep.subr.bf16.mxu0 0
  %235 = vmatpush1.bf16.msra.mxu0 %v217
  %236 = vmatprep.subr.bf16.mxu0 0
  %237 = vmatpush1.bf16.msra.mxu0 %v218
  %238 = vmatprep.subr.bf16.mxu0 0
  %239 = vmatpush1.bf16.msra.mxu0 %v219
  %240 = vmatprep.subr.bf16.mxu0 0
  %241 = vmatpush1.bf16.msra.mxu0 %v220
  %242 = vmatprep.subr.bf16.mxu0 0
  %243 = vmatpush1.bf16.msra.mxu0 %v221
  %244 = vmatprep.subr.bf16.mxu0 0
  %245 = vmatpush1.bf16.msra.mxu0 %v222
  %246 = vmatprep.subr.bf16.mxu0 0
  %247 = vmatpush1.bf16.msra.mxu0 %v223
  %248 = vmatprep.subr.bf16.mxu0 0
  %249 = vmatpush1.bf16.msra.mxu0 0
  %250 = vmatprep.subr.bf16.mxu0 0
  %251 = vmatpush1.bf16.msra.mxu0 0
  %252 = vmatprep.subr.bf16.mxu0 0
  %253 = vmatpush1.bf16.msra.mxu0 0
  %254 = vmatprep.subr.bf16.mxu0 0
  %255 = vmatpush1.bf16.msra.mxu0 0
  %256 = vmatprep.subr.bf16.mxu0 0
  %257 = vmatpush1.bf16.msra.mxu0 0
  %258 = vmatprep.subr.bf16.mxu0 0
  %259 = vmatpush1.bf16.msra.mxu0 0
  %260 = vmatprep.subr.bf16.mxu0 0
  %261 = vmatpush1.bf16.msra.mxu0 0
  %262 = vmatprep.subr.bf16.mxu0 0
  %263 = vmatpush1.bf16.msra.mxu0 0
  %264 = vmatprep.mubr.bf16.mxu0 0
  %265 = vmatmul.mubr.bf16.gmra.mrb[0].mxu0 %v148
  %v266 = vpop.f32.mrb[0].mxu0
  %v267 = vadd.f32 0.0, %v266
  %v268 = vpop.f32.mrb[0].mxu0
  %v269 = vpop.f32.mrb[0].mxu0
  %v270 = vadd.f32 0.0, %v269
  %v271 = vpop.f32.mrb[0].mxu0
  %272 = vmatprep.mubr.bf16.mxu0 0
  %273 = vmatmul.mubr.bf16.gmra.mrb[0].mxu0 %v149
  %v274 = vpop.f32.mrb[0].mxu0
  %v275 = vadd.f32 0.0, %v274
  %v276 = vpop.f32.mrb[0].mxu0
  %v277 = vpop.f32.mrb[0].mxu0
  %v278 = vadd.f32 0.0, %v277
  %v279 = vpop.f32.mrb[0].mxu0
  %280 = vmatprep.mubr.bf16.mxu0 0
  %281 = vmatmul.mubr.bf16.gmra.mrb[0].mxu0 %v150
  %v282 = vpop.f32.mrb[0].mxu0
  %v283 = vadd.f32 0.0, %v282
  %v284 = vpop.f32.mrb[0].mxu0
  %v285 = vpop.f32.mrb[0].mxu0
  %v286 = vadd.f32 0.0, %v285
  %v287 = vpop.f32.mrb[0].mxu0
  %288 = vmatprep.mubr.bf16.mxu0 0
  %289 = vmatmul.mubr.bf16.gmra.mrb[0].mxu0 %v151
  %v290 = vpop.f32.mrb[0].mxu0
  %v291 = vadd.f32 0.0, %v290
  %v292 = vpop.f32.mrb[0].mxu0
  %v293 = vpop.f32.mrb[0].mxu0
  %v294 = vadd.f32 0.0, %v293
  %v295 = vpop.f32.mrb[0].mxu0
  %296 = vmatprep.mubr.bf16.mxu0 0
  %297 = vmatmul.mubr.bf16.gmra.mrb[0].mxu0 %v152
  %v298 = vpop.f32.mrb[0].mxu0
  %v299 = vadd.f32 0.0, %v298
  %v300 = vpop.f32.mrb[0].mxu0
  %v301 = vpop.f32.mrb[0].mxu0
  %v302 = vadd.f32 0.0, %v301
  %v303 = vpop.f32.mrb[0].mxu0
  %304 = vmatprep.mubr.bf16.mxu0 0
  %305 = vmatmul.mubr.bf16.gmra.mrb[0].mxu0 %v153
  %v306 = vpop.f32.mrb[0].mxu0
  %v307 = vadd.f32 0.0, %v306
  %v308 = vpop.f32.mrb[0].mxu0
  %v309 = vpop.f32.mrb[0].mxu0
  %v310 = vadd.f32 0.0, %v309
  %v311 = vpop.f32.mrb[0].mxu0
  %312 = vmatprep.mubr.bf16.mxu0 0
  %313 = vmatmul.mubr.bf16.gmra.mrb[0].mxu0 %v154
  %v314 = vpop.f32.mrb[0].mxu0
  %v315 = vadd.f32 0.0, %v314
  %v316 = vpop.f32.mrb[0].mxu0
  %v317 = vpop.f32.mrb[0].mxu0
  %v318 = vadd.f32 0.0, %v317
  %v319 = vpop.f32.mrb[0].mxu0
  %320 = vmatprep.mubr.bf16.mxu0 0
  %321 = vmatmul.mubr.bf16.gmra.mrb[0].mxu0 %v155
  %v322 = vpop.f32.mrb[0].mxu0
  %v323 = vadd.f32 0.0, %v322
  %v324 = vpop.f32.mrb[0].mxu0
  %v325 = vpop.f32.mrb[0].mxu0
  %v326 = vadd.f32 0.0, %v325
  %v327 = vpop.f32.mrb[0].mxu0
  %328 = vmatprep.mubr.bf16.mxu0 0
  %329 = vmatmul.mubr.bf16.gmra.mrb[0].mxu0 %v156
  %v330 = vpop.f32.mrb[0].mxu0
  %v331 = vadd.f32 0.0, %v330
  %v332 = vpop.f32.mrb[0].mxu0
  %v333 = vpop.f32.mrb[0].mxu0
  %v334 = vadd.f32 0.0, %v333
  %v335 = vpop.f32.mrb[0].mxu0
  %336 = vmatprep.mubr.bf16.mxu0 0
  %337 = vmatmul.mubr.bf16.gmra.mrb[0].mxu0 %v157
  %v338 = vpop.f32.mrb[0].mxu0
  %v339 = vadd.f32 0.0, %v338
  %v340 = vpop.f32.mrb[0].mxu0
  %v341 = vpop.f32.mrb[0].mxu0
  %v342 = vadd.f32 0.0, %v341
  %v343 = vpop.f32.mrb[0].mxu0
  %344 = vmatprep.mubr.bf16.mxu0 0
  %345 = vmatmul.mubr.bf16.gmra.mrb[0].mxu0 %v158
  %v346 = vpop.f32.mrb[0].mxu0
  %v347 = vadd.f32 0.0, %v346
  %v348 = vpop.f32.mrb[0].mxu0
  %v349 = vpop.f32.mrb[0].mxu0
  %v350 = vadd.f32 0.0, %v349
  %v351 = vpop.f32.mrb[0].mxu0
  %352 = vmatprep.mubr.bf16.mxu0 0
  %353 = vmatmul.mubr.bf16.gmra.mrb[0].mxu0 %v159
  %v354 = vpop.f32.mrb[0].mxu0
  %v355 = vadd.f32 0.0, %v354
  %v356 = vpop.f32.mrb[0].mxu0
  %v357 = vpop.f32.mrb[0].mxu0
  %v358 = vadd.f32 0.0, %v357
  %v359 = vpop.f32.mrb[0].mxu0
  %360 = vmatprep.mubr.bf16.mxu0 0
  %361 = vmatmul.mubr.bf16.gmra.mrb[0].mxu0 %v160
  %v362 = vpop.f32.mrb[0].mxu0
  %v363 = vadd.f32 0.0, %v362
  %v364 = vpop.f32.mrb[0].mxu0
  %v365 = vpop.f32.mrb[0].mxu0
  %v366 = vadd.f32 0.0, %v365
  %v367 = vpop.f32.mrb[0].mxu0
  %368 = vmatprep.mubr.bf16.mxu0 0
  %369 = vmatmul.mubr.bf16.gmra.mrb[0].mxu0 %v161
  %v370 = vpop.f32.mrb[0].mxu0
  %v371 = vadd.f32 0.0, %v370
  %v372 = vpop.f32.mrb[0].mxu0
  %v373 = vpop.f32.mrb[0].mxu0
  %v374 = vadd.f32 0.0, %v373
  %v375 = vpop.f32.mrb[0].mxu0
  %376 = vmatprep.mubr.bf16.mxu0 0
  %377 = vmatmul.mubr.bf16.gmra.mrb[0].mxu0 %v162
  %v378 = vpop.f32.mrb[0].mxu0
  %v379 = vadd.f32 0.0, %v378
  %v380 = vpop.f32.mrb[0].mxu0
  %v381 = vpop.f32.mrb[0].mxu0
  %v382 = vadd.f32 0.0, %v381
  %v383 = vpop.f32.mrb[0].mxu0
  %384 = vmatprep.mubr.bf16.mxu0 0
  %385 = vmatmul.mubr.bf16.gmra.mrb[0].mxu0 %v163
  %v386 = vpop.f32.mrb[0].mxu0
  %v387 = vadd.f32 0.0, %v386
  %v388 = vpop.f32.mrb[0].mxu0
  %v389 = vpop.f32.mrb[0].mxu0
  %v390 = vadd.f32 0.0, %v389
  %v391 = vpop.f32.mrb[0].mxu0
  %392 = vmatprep.mubr.bf16.mxu0 0
  %393 = vmatmul.mubr.bf16.gmra.mrb[0].mxu0 %v164
  %v394 = vpop.f32.mrb[0].mxu0
  %v395 = vadd.f32 0.0, %v394
  %v396 = vpop.f32.mrb[0].mxu0
  %v397 = vpop.f32.mrb[0].mxu0
  %v398 = vadd.f32 0.0, %v397
  %v399 = vpop.f32.mrb[0].mxu0
  %400 = vmatprep.mubr.bf16.mxu0 0
  %401 = vmatmul.mubr.bf16.gmra.mrb[0].mxu0 %v165
  %v402 = vpop.f32.mrb[0].mxu0
  %v403 = vadd.f32 0.0, %v402
  %v404 = vpop.f32.mrb[0].mxu0
  %v405 = vpop.f32.mrb[0].mxu0
  %v406 = vadd.f32 0.0, %v405
  %v407 = vpop.f32.mrb[0].mxu0
  %408 = vdwg.mxu0
  %v409 = vld [vmem:[%s1] sm:$0xf]
  %v410 = vld [vmem:[%s1 + $0x4] sm:$0xf]
  %v411 = vld [vmem:[%s1 + $0x8] sm:$0xf]
  %v412 = vld [vmem:[%s1 + $0xc] sm:$0xf]
  %v413 = vld [vmem:[%s1 + $0x10] sm:$0xf]
  %v414 = vld [vmem:[%s1 + $0x14] sm:$0xf]
  %v415 = vld [vmem:[%s1 + $0x18] sm:$0xf]
  %v416 = vld [vmem:[%s1 + $0x1c] sm:$0xf]
  %v417 = vld [vmem:[%s1 + $0x20] sm:$0xf]
  %v418 = vld [vmem:[%s1 + $0x24] sm:$0xf]
  %v419 = vld [vmem:[%s1 + $0x28] sm:$0xf]
  %v420 = vld [vmem:[%s1 + $0x2c] sm:$0xf]
  %v421 = vld [vmem:[%s1 + $0x30] sm:$0xf]
  %v422 = vld [vmem:[%s1 + $0x34] sm:$0xf]
  %v423 = vld [vmem:[%s1 + $0x38] sm:$0xf]
  %v424 = vld [vmem:[%s1 + $0x3c] sm:$0xf]
  %v425 = vld [vmem:[%s1 + $0x40] sm:$0xf]
  %v426 = vld [vmem:[%s1 + $0x44] sm:$0xf]
  %v427 = vld [vmem:[%s1 + $0x48] sm:$0xf]
  %v428 = vld [vmem:[%s1 + $0x4c] sm:$0xf]
  %v429 = vld [vmem:[%s1 + $0x50] sm:$0xf]
  %v430 = vld [vmem:[%s1 + $0x54] sm:$0xf]
  %v431 = vld [vmem:[%s1 + $0x58] sm:$0xf]
  %v432 = vld [vmem:[%s1 + $0x5c] sm:$0xf]
  %v433 = vld [vmem:[%s1 + $0x60] sm:$0xf]
  %v434 = vld [vmem:[%s1 + $0x64] sm:$0xf]
  %v435 = vld [vmem:[%s1 + $0x68] sm:$0xf]
  %v436 = vld [vmem:[%s1 + $0x6c] sm:$0xf]
  %v437 = vld [vmem:[%s1 + $0x70] sm:$0xf]
  %v438 = vld [vmem:[%s1 + $0x74] sm:$0xf]
  %v439 = vld [vmem:[%s1 + $0x78] sm:$0xf]
  %v440 = vld [vmem:[%s1 + $0x7c] sm:$0xf]
  %v441 = vld [vmem:[%s1 + $0x80] sm:$0xf]
  %v442 = vld [vmem:[%s1 + $0x84] sm:$0xf]
  %v443 = vld [vmem:[%s1 + $0x88] sm:$0xf]
  %v444 = vld [vmem:[%s1 + $0x8c] sm:$0xf]
  %v481 = vunpack.c.l.b16 %v409
  %v482 = vunpack.c.l.b16 %v410
  %v483 = vunpack.c.l.b16 %v411
  %v484 = vunpack.c.l.b16 %v412
  %v485 = vunpack.c.l.b16 %v413
  %v486 = vunpack.c.l.b16 %v414
  %v487 = vunpack.c.l.b16 %v415
  %v488 = vunpack.c.l.b16 %v416
  %v489 = vunpack.c.l.b16 %v417
  %v490 = vunpack.c.l.b16 %v418
  %v491 = vunpack.c.l.b16 %v419
  %v492 = vunpack.c.l.b16 %v420
  %v493 = vunpack.c.l.b16 %v421
  %v494 = vunpack.c.l.b16 %v422
  %v495 = vunpack.c.l.b16 %v423
  %v496 = vunpack.c.l.b16 %v424
  %v497 = vunpack.c.l.b16 %v425
  %v498 = vunpack.c.l.b16 %v426
  %v499 = vunpack.c.l.b16 %v427
  %v500 = vunpack.c.l.b16 %v428
  %v501 = vunpack.c.l.b16 %v429
  %v502 = vunpack.c.l.b16 %v430
  %v503 = vunpack.c.l.b16 %v431
  %v504 = vunpack.c.l.b16 %v432
  %v505 = vunpack.c.l.b16 %v433
  %v506 = vunpack.c.l.b16 %v434
  %v507 = vunpack.c.l.b16 %v435
  %v508 = vunpack.c.l.b16 %v436
  %v509 = vunpack.c.l.b16 %v437
  %v510 = vunpack.c.l.b16 %v438
  %v511 = vunpack.c.l.b16 %v439
  %v512 = vunpack.c.l.b16 %v440
  %v513 = vunpack.c.l.b16 %v441
  %v514 = vunpack.c.l.b16 %v442
  %v515 = vunpack.c.l.b16 %v443
  %v516 = vunpack.c.l.b16 %v444
  %v517 = vpack.c.b16 %v482, %v481
  %v518 = vpack.c.b16 %v484, %v483
  %v519 = vpack.c.b16 %v486, %v485
  %v520 = vpack.c.b16 %v488, %v487
  %v521 = vpack.c.b16 %v490, %v489
  %v522 = vpack.c.b16 %v492, %v491
  %v523 = vpack.c.b16 %v494, %v493
  %v524 = vpack.c.b16 %v496, %v495
  %v525 = vpack.c.b16 %v498, %v497
  %v526 = vpack.c.b16 %v500, %v499
  %v527 = vpack.c.b16 %v502, %v501
  %v528 = vpack.c.b16 %v504, %v503
  %v529 = vpack.c.b16 %v506, %v505
  %v530 = vpack.c.b16 %v508, %v507
  %v531 = vpack.c.b16 %v510, %v509
  %v532 = vpack.c.b16 %v512, %v511
  %v533 = vpack.c.b16 %v514, %v513
  %v534 = vpack.c.b16 %v516, %v515
  %553 = vmatprep.subr.bf16.mxu0 0
  %554 = vmatpush1.bf16.msra.mxu0 %v216
  %555 = vmatprep.subr.bf16.mxu0 0
  %556 = vmatpush1.bf16.msra.mxu0 %v217
  %557 = vmatprep.subr.bf16.mxu0 0
  %558 = vmatpush1.bf16.msra.mxu0 %v218
  %559 = vmatprep.subr.bf16.mxu0 0
  %560 = vmatpush1.bf16.msra.mxu0 %v219
  %561 = vmatprep.subr.bf16.mxu0 0
  %562 = vmatpush1.bf16.msra.mxu0 %v220
  %563 = vmatprep.subr.bf16.mxu0 0
  %564 = vmatpush1.bf16.msra.mxu0 %v221
  %565 = vmatprep.subr.bf16.mxu0 0
  %566 = vmatpush1.bf16.msra.mxu0 %v222
  %567 = vmatprep.subr.bf16.mxu0 0
  %568 = vmatpush1.bf16.msra.mxu0 %v223
  %569 = vmatprep.subr.bf16.mxu0 0
  %570 = vmatpush1.bf16.msra.mxu0 0
  %571 = vmatprep.subr.bf16.mxu0 0
  %572 = vmatpush1.bf16.msra.mxu0 0
  %573 = vmatprep.subr.bf16.mxu0 0
  %574 = vmatpush1.bf16.msra.mxu0 0
  %575 = vmatprep.subr.bf16.mxu0 0
  %576 = vmatpush1.bf16.msra.mxu0 0
  %577 = vmatprep.subr.bf16.mxu0 0
  %578 = vmatpush1.bf16.msra.mxu0 0
  %579 = vmatprep.subr.bf16.mxu0 0
  %580 = vmatpush1.bf16.msra.mxu0 0
  %581 = vmatprep.subr.bf16.mxu0 0
  %582 = vmatpush1.bf16.msra.mxu0 0
  %583 = vmatprep.subr.bf16.mxu0 0
  %584 = vmatpush1.bf16.msra.mxu0 0
  %585 = vmatprep.mubr.bf16.mxu0 0
  %586 = vmatmul.mubr.bf16.gmra.mrb[0].mxu0 %v517
  %v587 = vpop.f32.mrb[0].mxu0
  %v588 = vadd.f32 0.0, %v587
  %v589 = vpop.f32.mrb[0].mxu0
  %v590 = vpop.f32.mrb[0].mxu0
  %v591 = vadd.f32 0.0, %v590
  %v592 = vpop.f32.mrb[0].mxu0
  %593 = vmatprep.mubr.bf16.mxu0 0
  %594 = vmatmul.mubr.bf16.gmra.mrb[0].mxu0 %v518
  %v595 = vpop.f32.mrb[0].mxu0
  %v596 = vadd.f32 0.0, %v595
  %v597 = vpop.f32.mrb[0].mxu0
  %v598 = vpop.f32.mrb[0].mxu0
  %v599 = vadd.f32 0.0, %v598
  %v600 = vpop.f32.mrb[0].mxu0
  %601 = vmatprep.mubr.bf16.mxu0 0
  %602 = vmatmul.mubr.bf16.gmra.mrb[0].mxu0 %v519
  %v603 = vpop.f32.mrb[0].mxu0
  %v604 = vadd.f32 0.0, %v603
  %v605 = vpop.f32.mrb[0].mxu0
  %v606 = vpop.f32.mrb[0].mxu0
  %v607 = vadd.f32 0.0, %v606
  %v608 = vpop.f32.mrb[0].mxu0
  %609 = vmatprep.mubr.bf16.mxu0 0
  %610 = vmatmul.mubr.bf16.gmra.mrb[0].mxu0 %v520
  %v611 = vpop.f32.mrb[0].mxu0
  %v612 = vadd.f32 0.0, %v611
  %v613 = vpop.f32.mrb[0].mxu0
  %v614 = vpop.f32.mrb[0].mxu0
  %v615 = vadd.f32 0.0, %v614
  %v616 = vpop.f32.mrb[0].mxu0
  %617 = vmatprep.mubr.bf16.mxu0 0
  %618 = vmatmul.mubr.bf16.gmra.mrb[0].mxu0 %v521
  %v619 = vpop.f32.mrb[0].mxu0
  %v620 = vadd.f32 0.0, %v619
  %v621 = vpop.f32.mrb[0].mxu0
  %v622 = vpop.f32.mrb[0].mxu0
  %v623 = vadd.f32 0.0, %v622
  %v624 = vpop.f32.mrb[0].mxu0
  %625 = vmatprep.mubr.bf16.mxu0 0
  %626 = vmatmul.mubr.bf16.gmra.mrb[0].mxu0 %v522
  %v627 = vpop.f32.mrb[0].mxu0
  %v628 = vadd.f32 0.0, %v627
  %v629 = vpop.f32.mrb[0].mxu0
  %v630 = vpop.f32.mrb[0].mxu0
  %v631 = vadd.f32 0.0, %v630
  %v632 = vpop.f32.mrb[0].mxu0
  %633 = vmatprep.mubr.bf16.mxu0 0
  %634 = vmatmul.mubr.bf16.gmra.mrb[0].mxu0 %v523
  %v635 = vpop.f32.mrb[0].mxu0
  %v636 = vadd.f32 0.0, %v635
  %v637 = vpop.f32.mrb[0].mxu0
  %v638 = vpop.f32.mrb[0].mxu0
  %v639 = vadd.f32 0.0, %v638
  %v640 = vpop.f32.mrb[0].mxu0
  %641 = vmatprep.mubr.bf16.mxu0 0
  %642 = vmatmul.mubr.bf16.gmra.mrb[0].mxu0 %v524
  %v643 = vpop.f32.mrb[0].mxu0
  %v644 = vadd.f32 0.0, %v643
  %v645 = vpop.f32.mrb[0].mxu0
  %v646 = vpop.f32.mrb[0].mxu0
  %v647 = vadd.f32 0.0, %v646
  %v648 = vpop.f32.mrb[0].mxu0
  %649 = vmatprep.mubr.bf16.mxu0 0
  %650 = vmatmul.mubr.bf16.gmra.mrb[0].mxu0 %v525
  %v651 = vpop.f32.mrb[0].mxu0
  %v652 = vadd.f32 0.0, %v651
  %v653 = vpop.f32.mrb[0].mxu0
  %v654 = vpop.f32.mrb[0].mxu0
  %v655 = vadd.f32 0.0, %v654
  %v656 = vpop.f32.mrb[0].mxu0
  %657 = vmatprep.mubr.bf16.mxu0 0
  %658 = vmatmul.mubr.bf16.gmra.mrb[0].mxu0 %v526
  %v659 = vpop.f32.mrb[0].mxu0
  %v660 = vadd.f32 0.0, %v659
  %v661 = vpop.f32.mrb[0].mxu0
  %v662 = vpop.f32.mrb[0].mxu0
  %v663 = vadd.f32 0.0, %v662
  %v664 = vpop.f32.mrb[0].mxu0
  %665 = vmatprep.mubr.bf16.mxu0 0
  %666 = vmatmul.mubr.bf16.gmra.mrb[0].mxu0 %v527
  %v667 = vpop.f32.mrb[0].mxu0
  %v668 = vadd.f32 0.0, %v667
  %v669 = vpop.f32.mrb[0].mxu0
  %v670 = vpop.f32.mrb[0].mxu0
  %v671 = vadd.f32 0.0, %v670
  %v672 = vpop.f32.mrb[0].mxu0
  %673 = vmatprep.mubr.bf16.mxu0 0
  %674 = vmatmul.mubr.bf16.gmra.mrb[0].mxu0 %v528
  %v675 = vpop.f32.mrb[0].mxu0
  %v676 = vadd.f32 0.0, %v675
  %v677 = vpop.f32.mrb[0].mxu0
  %v678 = vpop.f32.mrb[0].mxu0
  %v679 = vadd.f32 0.0, %v678
  %v680 = vpop.f32.mrb[0].mxu0
  %681 = vmatprep.mubr.bf16.mxu0 0
  %682 = vmatmul.mubr.bf16.gmra.mrb[0].mxu0 %v529
  %v683 = vpop.f32.mrb[0].mxu0
  %v684 = vadd.f32 0.0, %v683
  %v685 = vpop.f32.mrb[0].mxu0
  %v686 = vpop.f32.mrb[0].mxu0
  %v687 = vadd.f32 0.0, %v686
  %v688 = vpop.f32.mrb[0].mxu0
  %689 = vmatprep.mubr.bf16.mxu0 0
  %690 = vmatmul.mubr.bf16.gmra.mrb[0].mxu0 %v530
  %v691 = vpop.f32.mrb[0].mxu0
  %v692 = vadd.f32 0.0, %v691
  %v693 = vpop.f32.mrb[0].mxu0
  %v694 = vpop.f32.mrb[0].mxu0
  %v695 = vadd.f32 0.0, %v694
  %v696 = vpop.f32.mrb[0].mxu0
  %697 = vmatprep.mubr.bf16.mxu0 0
  %698 = vmatmul.mubr.bf16.gmra.mrb[0].mxu0 %v531
  %v699 = vpop.f32.mrb[0].mxu0
  %v700 = vadd.f32 0.0, %v699
  %v701 = vpop.f32.mrb[0].mxu0
  %v702 = vpop.f32.mrb[0].mxu0
  %v703 = vadd.f32 0.0, %v702
  %v704 = vpop.f32.mrb[0].mxu0
  %705 = vmatprep.mubr.bf16.mxu0 0
  %706 = vmatmul.mubr.bf16.gmra.mrb[0].mxu0 %v532
  %v707 = vpop.f32.mrb[0].mxu0
  %v708 = vadd.f32 0.0, %v707
  %v709 = vpop.f32.mrb[0].mxu0
  %v710 = vpop.f32.mrb[0].mxu0
  %v711 = vadd.f32 0.0, %v710
  %v712 = vpop.f32.mrb[0].mxu0
  %713 = vmatprep.mubr.bf16.mxu0 0
  %714 = vmatmul.mubr.bf16.gmra.mrb[0].mxu0 %v533
  %v715 = vpop.f32.mrb[0].mxu0
  %v716 = vadd.f32 0.0, %v715
  %v717 = vpop.f32.mrb[0].mxu0
  %v718 = vpop.f32.mrb[0].mxu0
  %v719 = vadd.f32 0.0, %v718
  %v720 = vpop.f32.mrb[0].mxu0
  %721 = vmatprep.mubr.bf16.mxu0 0
  %722 = vmatmul.mubr.bf16.gmra.mrb[0].mxu0 %v534
  %v723 = vpop.f32.mrb[0].mxu0
  %v724 = vadd.f32 0.0, %v723
  %v725 = vpop.f32.mrb[0].mxu0
  %v726 = vpop.f32.mrb[0].mxu0
  %v727 = vadd.f32 0.0, %v726
  %v728 = vpop.f32.mrb[0].mxu0
  %729 = vdwg.mxu0
  %v730 = vmax.f32 %v267, %v588
  %v731 = vmax.f32 %v270, %v591
  %v732 = vmax.f32 %v275, %v596
  %v733 = vmax.f32 %v278, %v599
  %v734 = vmax.f32 %v283, %v604
  %v735 = vmax.f32 %v286, %v607
  %v736 = vmax.f32 %v291, %v612
  %v737 = vmax.f32 %v294, %v615
  %v738 = vmax.f32 %v299, %v620
  %v739 = vmax.f32 %v302, %v623
  %v740 = vmax.f32 %v307, %v628
  %v741 = vmax.f32 %v310, %v631
  %v742 = vmax.f32 %v315, %v636
  %v743 = vmax.f32 %v318, %v639
  %v744 = vmax.f32 %v323, %v644
  %v745 = vmax.f32 %v326, %v647
  %v746 = vmax.f32 %v331, %v652
  %v747 = vmax.f32 %v334, %v655
  %v748 = vmax.f32 %v339, %v660
  %v749 = vmax.f32 %v342, %v663
  %v750 = vmax.f32 %v347, %v668
  %v751 = vmax.f32 %v350, %v671
  %v752 = vmax.f32 %v355, %v676
  %v753 = vmax.f32 %v358, %v679
  %v754 = vmax.f32 %v363, %v684
  %v755 = vmax.f32 %v366, %v687
  %v756 = vmax.f32 %v371, %v692
  %v757 = vmax.f32 %v374, %v695
  %v758 = vmax.f32 %v379, %v700
  %v759 = vmax.f32 %v382, %v703
  %v760 = vmax.f32 %v387, %v708
  %v761 = vmax.f32 %v390, %v711
  %v762 = vmax.f32 %v395, %v716
  %v763 = vmax.f32 %v398, %v719
  %v764 = vmax.f32 %v403, %v724
  %v765 = vmax.f32 %v406, %v727
  %v766 = vld [vmem:[%s3] sm:$0x1]
  %v768 = vlaneseq
  %v769 = vshrl.u32 %v768, 7
  %v770 = vsub.s32 0, %v769
  %v771 = vrot.slane %v766, %v770
  %v773 = vadd.f32 %v730, %v771
  %v774 = vadd.f32 %v731, %v771
  %v775 = vadd.f32 %v732, %v771
  %v776 = vadd.f32 %v733, %v771
  %v777 = vadd.f32 %v734, %v771
  %v778 = vadd.f32 %v735, %v771
  %v779 = vadd.f32 %v736, %v771
  %v780 = vadd.f32 %v737, %v771
  %v781 = vadd.f32 %v738, %v771
  %v782 = vadd.f32 %v739, %v771
  %v783 = vadd.f32 %v740, %v771
  %v784 = vadd.f32 %v741, %v771
  %v785 = vadd.f32 %v742, %v771
  %v786 = vadd.f32 %v743, %v771
  %v787 = vadd.f32 %v744, %v771
  %v788 = vadd.f32 %v745, %v771
  %v789 = vadd.f32 %v746, %v771
  %v790 = vadd.f32 %v747, %v771
  %v791 = vadd.f32 %v748, %v771
  %v792 = vadd.f32 %v749, %v771
  %v793 = vadd.f32 %v750, %v771
  %v794 = vadd.f32 %v751, %v771
  %v795 = vadd.f32 %v752, %v771
  %v796 = vadd.f32 %v753, %v771
  %v797 = vadd.f32 %v754, %v771
  %v798 = vadd.f32 %v755, %v771
  %v799 = vadd.f32 %v756, %v771
  %v800 = vadd.f32 %v757, %v771
  %v801 = vadd.f32 %v758, %v771
  %v802 = vadd.f32 %v759, %v771
  %v803 = vadd.f32 %v760, %v771
  %v804 = vadd.f32 %v761, %v771
  %v805 = vadd.f32 %v762, %v771
  %v806 = vadd.f32 %v763, %v771
  %v807 = vadd.f32 %v764, %v771
  %v808 = vadd.f32 %v765, %v771
  %vm833 = vcmask 1043456
  %v834 = vrot.slane %v774, 4
  %v835 = vrot.slane %v775, 4
  %v836 = vsel %vm833, %v834, %v835
  %v837 = vrot.slane %v777, 4
  %v838 = vrot.slane %v778, 4
  %v839 = vsel %vm833, %v837, %v838
  %v840 = vrot.slane %v780, 4
  %v841 = vrot.slane %v781, 4
  %v842 = vsel %vm833, %v840, %v841
  %v843 = vrot.slane %v783, 4
  %v844 = vrot.slane %v784, 4
  %v845 = vsel %vm833, %v843, %v844
  %v846 = vrot.slane %v786, 4
  %v847 = vrot.slane %v787, 4
  %v848 = vsel %vm833, %v846, %v847
  %v849 = vrot.slane %v789, 4
  %v850 = vrot.slane %v790, 4
  %v851 = vsel %vm833, %v849, %v850
  %v852 = vrot.slane %v792, 4
  %v853 = vrot.slane %v793, 4
  %v854 = vsel %vm833, %v852, %v853
  %v855 = vrot.slane %v795, 4
  %v856 = vrot.slane %v796, 4
  %v857 = vsel %vm833, %v855, %v856
  %v858 = vrot.slane %v798, 4
  %v859 = vrot.slane %v799, 4
  %v860 = vsel %vm833, %v858, %v859
  %v861 = vrot.slane %v801, 4
  %v862 = vrot.slane %v802, 4
  %v863 = vsel %vm833, %v861, %v862
  %v864 = vrot.slane %v804, 4
  %v865 = vrot.slane %v805, 4
  %v866 = vsel %vm833, %v864, %v865
  %v867 = vrot.slane %v807, 4
  %v868 = vrot.slane %v808, 4
  %v869 = vsel %vm833, %v867, %v868
  %v894 = vmax.f32 %v773, %v836
  %v895 = vmax.f32 %v774, %v835
  %v896 = vmax.f32 %v776, %v839
  %v897 = vmax.f32 %v777, %v838
  %v898 = vmax.f32 %v779, %v842
  %v899 = vmax.f32 %v780, %v841
  %v900 = vmax.f32 %v782, %v845
  %v901 = vmax.f32 %v783, %v844
  %v902 = vmax.f32 %v785, %v848
  %v903 = vmax.f32 %v786, %v847
  %v904 = vmax.f32 %v788, %v851
  %v905 = vmax.f32 %v789, %v850
  %v906 = vmax.f32 %v791, %v854
  %v907 = vmax.f32 %v792, %v853
  %v908 = vmax.f32 %v794, %v857
  %v909 = vmax.f32 %v795, %v856
  %v910 = vmax.f32 %v797, %v860
  %v911 = vmax.f32 %v798, %v859
  %v912 = vmax.f32 %v800, %v863
  %v913 = vmax.f32 %v801, %v862
  %v914 = vmax.f32 %v803, %v866
  %v915 = vmax.f32 %v804, %v865
  %v916 = vmax.f32 %v806, %v869
  %v917 = vmax.f32 %v807, %v868
  %v918 = vmax.f32 %v894, 0.0
  %v919 = vmax.f32 %v895, 0.0
  %v920 = vmax.f32 %v896, 0.0
  %v921 = vmax.f32 %v897, 0.0
  %v922 = vmax.f32 %v898, 0.0
  %v923 = vmax.f32 %v899, 0.0
  %v924 = vmax.f32 %v900, 0.0
  %v925 = vmax.f32 %v901, 0.0
  %v926 = vmax.f32 %v902, 0.0
  %v927 = vmax.f32 %v903, 0.0
  %v928 = vmax.f32 %v904, 0.0
  %v929 = vmax.f32 %v905, 0.0
  %v930 = vmax.f32 %v906, 0.0
  %v931 = vmax.f32 %v907, 0.0
  %v932 = vmax.f32 %v908, 0.0
  %v933 = vmax.f32 %v909, 0.0
  %v934 = vmax.f32 %v910, 0.0
  %v935 = vmax.f32 %v911, 0.0
  %v936 = vmax.f32 %v912, 0.0
  %v937 = vmax.f32 %v913, 0.0
  %v938 = vmax.f32 %v914, 0.0
  %v939 = vmax.f32 %v915, 0.0
  %v940 = vmax.f32 %v916, 0.0
  %v941 = vmax.f32 %v917, 0.0
  %942 = vst [vmem:[#allocation2] sm:$0xff] %v918
  %943 = vst [vmem:[#allocation2 + $0x8] sm:$0xf] %v919
  %944 = vst [vmem:[#allocation2 + $0x10] sm:$0xff] %v920
  %945 = vst [vmem:[#allocation2 + $0x18] sm:$0xf] %v921
  %946 = vst [vmem:[#allocation2 + $0x20] sm:$0xff] %v922
  %947 = vst [vmem:[#allocation2 + $0x28] sm:$0xf] %v923
  %948 = vst [vmem:[#allocation2 + $0x30] sm:$0xff] %v924
  %949 = vst [vmem:[#allocation2 + $0x38] sm:$0xf] %v925
  %950 = vst [vmem:[#allocation2 + $0x40] sm:$0xff] %v926
  %951 = vst [vmem:[#allocation2 + $0x48] sm:$0xf] %v927
  %952 = vst [vmem:[#allocation2 + $0x50] sm:$0xff] %v928
  %953 = vst [vmem:[#allocation2 + $0x58] sm:$0xf] %v929
  %954 = vst [vmem:[#allocation2 + $0x60] sm:$0xff] %v930
  %955 = vst [vmem:[#allocation2 + $0x68] sm:$0xf] %v931
  %956 = vst [vmem:[#allocation2 + $0x70] sm:$0xff] %v932
  %957 = vst [vmem:[#allocation2 + $0x78] sm:$0xf] %v933
  %958 = vst [vmem:[#allocation2 + $0x80] sm:$0xff] %v934
  %959 = vst [vmem:[#allocation2 + $0x88] sm:$0xf] %v935
  %960 = vst [vmem:[#allocation2 + $0x90] sm:$0xff] %v936
  %961 = vst [vmem:[#allocation2 + $0x98] sm:$0xf] %v937
  %962 = vst [vmem:[#allocation2 + $0xa0] sm:$0xff] %v938
  %963 = vst [vmem:[#allocation2 + $0xa8] sm:$0xf] %v939
  %964 = vst [vmem:[#allocation2 + $0xb0] sm:$0xff] %v940
  %965 = vst [vmem:[#allocation2 + $0xb8] sm:$0xf] %v941
  %s966 = scalar_lea.vmem %s0, 144
  %v967 = vld [vmem:[%s966] sm:$0xf]
  %v968 = vld [vmem:[%s966 + $0x4] sm:$0xf]
  %v969 = vld [vmem:[%s966 + $0x8] sm:$0xf]
  %v970 = vld [vmem:[%s966 + $0xc] sm:$0xf]
  %v971 = vld [vmem:[%s966 + $0x10] sm:$0xf]
  %v972 = vld [vmem:[%s966 + $0x14] sm:$0xf]
  %v973 = vld [vmem:[%s966 + $0x18] sm:$0xf]
  %v974 = vld [vmem:[%s966 + $0x1c] sm:$0xf]
  %v975 = vld [vmem:[%s966 + $0x20] sm:$0xf]
  %v976 = vld [vmem:[%s966 + $0x24] sm:$0xf]
  %v977 = vld [vmem:[%s966 + $0x28] sm:$0xf]
  %v978 = vld [vmem:[%s966 + $0x2c] sm:$0xf]
  %v979 = vld [vmem:[%s966 + $0x30] sm:$0xf]
  %v980 = vld [vmem:[%s966 + $0x34] sm:$0xf]
  %v981 = vld [vmem:[%s966 + $0x38] sm:$0xf]
  %v982 = vld [vmem:[%s966 + $0x3c] sm:$0xf]
  %v983 = vld [vmem:[%s966 + $0x40] sm:$0xf]
  %v984 = vld [vmem:[%s966 + $0x44] sm:$0xf]
  %v985 = vld [vmem:[%s966 + $0x48] sm:$0xf]
  %v986 = vld [vmem:[%s966 + $0x4c] sm:$0xf]
  %v987 = vld [vmem:[%s966 + $0x50] sm:$0xf]
  %v988 = vld [vmem:[%s966 + $0x54] sm:$0xf]
  %v989 = vld [vmem:[%s966 + $0x58] sm:$0xf]
  %v990 = vld [vmem:[%s966 + $0x5c] sm:$0xf]
  %v991 = vld [vmem:[%s966 + $0x60] sm:$0xf]
  %v992 = vld [vmem:[%s966 + $0x64] sm:$0xf]
  %v993 = vld [vmem:[%s966 + $0x68] sm:$0xf]
  %v994 = vld [vmem:[%s966 + $0x6c] sm:$0xf]
  %v995 = vld [vmem:[%s966 + $0x70] sm:$0xf]
  %v996 = vld [vmem:[%s966 + $0x74] sm:$0xf]
  %v997 = vld [vmem:[%s966 + $0x78] sm:$0xf]
  %v998 = vld [vmem:[%s966 + $0x7c] sm:$0xf]
  %v999 = vld [vmem:[%s966 + $0x80] sm:$0xf]
  %v1000 = vld [vmem:[%s966 + $0x84] sm:$0xf]
  %v1001 = vld [vmem:[%s966 + $0x88] sm:$0xf]
  %v1002 = vld [vmem:[%s966 + $0x8c] sm:$0xf]
  %v1003 = vld [vmem:[%s2] sm:$0xf]
  %v1004 = vld [vmem:[%s2 + $0x4] sm:$0xf]
  %v1005 = vld [vmem:[%s2 + $0x8] sm:$0xf]
  %v1006 = vld [vmem:[%s2 + $0xc] sm:$0xf]
  %v1007 = vld [vmem:[%s2 + $0x10] sm:$0xf]
  %v1008 = vld [vmem:[%s2 + $0x14] sm:$0xf]
  %v1009 = vld [vmem:[%s2 + $0x18] sm:$0xf]
  %v1010 = vld [vmem:[%s2 + $0x1c] sm:$0xf]
  %v1011 = vld [vmem:[%s2 + $0x20] sm:$0xf]
  %v1012 = vld [vmem:[%s2 + $0x24] sm:$0xf]
  %v1013 = vld [vmem:[%s2 + $0x28] sm:$0xf]
  %v1014 = vld [vmem:[%s2 + $0x2c] sm:$0xf]
  %v1015 = vld [vmem:[%s2 + $0x30] sm:$0xf]
  %v1016 = vld [vmem:[%s2 + $0x34] sm:$0xf]
  %v1017 = vld [vmem:[%s2 + $0x38] sm:$0xf]
  %v1018 = vld [vmem:[%s2 + $0x3c] sm:$0xf]
  %v1055 = vunpack.c.l.b16 %v967
  %v1056 = vunpack.c.l.b16 %v968
  %v1057 = vunpack.c.l.b16 %v969
  %v1058 = vunpack.c.l.b16 %v970
  %v1059 = vunpack.c.l.b16 %v971
  %v1060 = vunpack.c.l.b16 %v972
  %v1061 = vunpack.c.l.b16 %v973
  %v1062 = vunpack.c.l.b16 %v974
  %v1063 = vunpack.c.l.b16 %v975
  %v1064 = vunpack.c.l.b16 %v976
  %v1065 = vunpack.c.l.b16 %v977
  %v1066 = vunpack.c.l.b16 %v978
  %v1067 = vunpack.c.l.b16 %v979
  %v1068 = vunpack.c.l.b16 %v980
  %v1069 = vunpack.c.l.b16 %v981
  %v1070 = vunpack.c.l.b16 %v982
  %v1071 = vunpack.c.l.b16 %v983
  %v1072 = vunpack.c.l.b16 %v984
  %v1073 = vunpack.c.l.b16 %v985
  %v1074 = vunpack.c.l.b16 %v986
  %v1075 = vunpack.c.l.b16 %v987
  %v1076 = vunpack.c.l.b16 %v988
  %v1077 = vunpack.c.l.b16 %v989
  %v1078 = vunpack.c.l.b16 %v990
  %v1079 = vunpack.c.l.b16 %v991
  %v1080 = vunpack.c.l.b16 %v992
  %v1081 = vunpack.c.l.b16 %v993
  %v1082 = vunpack.c.l.b16 %v994
  %v1083 = vunpack.c.l.b16 %v995
  %v1084 = vunpack.c.l.b16 %v996
  %v1085 = vunpack.c.l.b16 %v997
  %v1086 = vunpack.c.l.b16 %v998
  %v1087 = vunpack.c.l.b16 %v999
  %v1088 = vunpack.c.l.b16 %v1000
  %v1089 = vunpack.c.l.b16 %v1001
  %v1090 = vunpack.c.l.b16 %v1002
  %v1091 = vpack.c.b16 %v1056, %v1055
  %v1092 = vpack.c.b16 %v1058, %v1057
  %v1093 = vpack.c.b16 %v1060, %v1059
  %v1094 = vpack.c.b16 %v1062, %v1061
  %v1095 = vpack.c.b16 %v1064, %v1063
  %v1096 = vpack.c.b16 %v1066, %v1065
  %v1097 = vpack.c.b16 %v1068, %v1067
  %v1098 = vpack.c.b16 %v1070, %v1069
  %v1099 = vpack.c.b16 %v1072, %v1071
  %v1100 = vpack.c.b16 %v1074, %v1073
  %v1101 = vpack.c.b16 %v1076, %v1075
  %v1102 = vpack.c.b16 %v1078, %v1077
  %v1103 = vpack.c.b16 %v1080, %v1079
  %v1104 = vpack.c.b16 %v1082, %v1081
  %v1105 = vpack.c.b16 %v1084, %v1083
  %v1106 = vpack.c.b16 %v1086, %v1085
  %v1107 = vpack.c.b16 %v1088, %v1087
  %v1108 = vpack.c.b16 %v1090, %v1089
  %v1143 = vunpack.c.l.b16 %v1003
  %v1144 = vunpack.c.l.b16 %v1004
  %v1145 = vunpack.c.l.b16 %v1005
  %v1146 = vunpack.c.l.b16 %v1006
  %v1147 = vunpack.c.l.b16 %v1007
  %v1148 = vunpack.c.l.b16 %v1008
  %v1149 = vunpack.c.l.b16 %v1009
  %v1150 = vunpack.c.l.b16 %v1010
  %v1151 = vunpack.c.l.b16 %v1011
  %v1152 = vunpack.c.l.b16 %v1012
  %v1153 = vunpack.c.l.b16 %v1013
  %v1154 = vunpack.c.l.b16 %v1014
  %v1155 = vunpack.c.l.b16 %v1015
  %v1156 = vunpack.c.l.b16 %v1016
  %v1157 = vunpack.c.l.b16 %v1017
  %v1158 = vunpack.c.l.b16 %v1018
  %v1159 = vpack.c.b16 %v1144, %v1143
  %v1160 = vpack.c.b16 %v1146, %v1145
  %v1161 = vpack.c.b16 %v1148, %v1147
  %v1162 = vpack.c.b16 %v1150, %v1149
  %v1163 = vpack.c.b16 %v1152, %v1151
  %v1164 = vpack.c.b16 %v1154, %v1153
  %v1165 = vpack.c.b16 %v1156, %v1155
  %v1166 = vpack.c.b16 %v1158, %v1157
  %1175 = vmatprep.subr.bf16.mxu0 0
  %1176 = vmatpush1.bf16.msra.mxu0 %v1159
  %1177 = vmatprep.subr.bf16.mxu0 0
  %1178 = vmatpush1.bf16.msra.mxu0 %v1160
  %1179 = vmatprep.subr.bf16.mxu0 0
  %1180 = vmatpush1.bf16.msra.mxu0 %v1161
  %1181 = vmatprep.subr.bf16.mxu0 0
  %1182 = vmatpush1.bf16.msra.mxu0 %v1162
  %1183 = vmatprep.subr.bf16.mxu0 0
  %1184 = vmatpush1.bf16.msra.mxu0 %v1163
  %1185 = vmatprep.subr.bf16.mxu0 0
  %1186 = vmatpush1.bf16.msra.mxu0 %v1164
  %1187 = vmatprep.subr.bf16.mxu0 0
  %1188 = vmatpush1.bf16.msra.mxu0 %v1165
  %1189 = vmatprep.subr.bf16.mxu0 0
  %1190 = vmatpush1.bf16.msra.mxu0 %v1166
  %1191 = vmatprep.subr.bf16.mxu0 0
  %1192 = vmatpush1.bf16.msra.mxu0 0
  %1193 = vmatprep.subr.bf16.mxu0 0
  %1194 = vmatpush1.bf16.msra.mxu0 0
  %1195 = vmatprep.subr.bf16.mxu0 0
  %1196 = vmatpush1.bf16.msra.mxu0 0
  %1197 = vmatprep.subr.bf16.mxu0 0
  %1198 = vmatpush1.bf16.msra.mxu0 0
  %1199 = vmatprep.subr.bf16.mxu0 0
  %1200 = vmatpush1.bf16.msra.mxu0 0
  %1201 = vmatprep.subr.bf16.mxu0 0
  %1202 = vmatpush1.bf16.msra.mxu0 0
  %1203 = vmatprep.subr.bf16.mxu0 0
  %1204 = vmatpush1.bf16.msra.mxu0 0
  %1205 = vmatprep.subr.bf16.mxu0 0
  %1206 = vmatpush1.bf16.msra.mxu0 0
  %1207 = vmatprep.mubr.bf16.mxu0 0
  %1208 = vmatmul.mubr.bf16.gmra.mrb[0].mxu0 %v1091
  %v1209 = vpop.f32.mrb[0].mxu0
  %v1210 = vadd.f32 0.0, %v1209
  %v1211 = vpop.f32.mrb[0].mxu0
  %v1212 = vpop.f32.mrb[0].mxu0
  %v1213 = vadd.f32 0.0, %v1212
  %v1214 = vpop.f32.mrb[0].mxu0
  %1215 = vmatprep.mubr.bf16.mxu0 0
  %1216 = vmatmul.mubr.bf16.gmra.mrb[0].mxu0 %v1092
  %v1217 = vpop.f32.mrb[0].mxu0
  %v1218 = vadd.f32 0.0, %v1217
  %v1219 = vpop.f32.mrb[0].mxu0
  %v1220 = vpop.f32.mrb[0].mxu0
  %v1221 = vadd.f32 0.0, %v1220
  %v1222 = vpop.f32.mrb[0].mxu0
  %1223 = vmatprep.mubr.bf16.mxu0 0
  %1224 = vmatmul.mubr.bf16.gmra.mrb[0].mxu0 %v1093
  %v1225 = vpop.f32.mrb[0].mxu0
  %v1226 = vadd.f32 0.0, %v1225
  %v1227 = vpop.f32.mrb[0].mxu0
  %v1228 = vpop.f32.mrb[0].mxu0
  %v1229 = vadd.f32 0.0, %v1228
  %v1230 = vpop.f32.mrb[0].mxu0
  %1231 = vmatprep.mubr.bf16.mxu0 0
  %1232 = vmatmul.mubr.bf16.gmra.mrb[0].mxu0 %v1094
  %v1233 = vpop.f32.mrb[0].mxu0
  %v1234 = vadd.f32 0.0, %v1233
  %v1235 = vpop.f32.mrb[0].mxu0
  %v1236 = vpop.f32.mrb[0].mxu0
  %v1237 = vadd.f32 0.0, %v1236
  %v1238 = vpop.f32.mrb[0].mxu0
  %1239 = vmatprep.mubr.bf16.mxu0 0
  %1240 = vmatmul.mubr.bf16.gmra.mrb[0].mxu0 %v1095
  %v1241 = vpop.f32.mrb[0].mxu0
  %v1242 = vadd.f32 0.0, %v1241
  %v1243 = vpop.f32.mrb[0].mxu0
  %v1244 = vpop.f32.mrb[0].mxu0
  %v1245 = vadd.f32 0.0, %v1244
  %v1246 = vpop.f32.mrb[0].mxu0
  %1247 = vmatprep.mubr.bf16.mxu0 0
  %1248 = vmatmul.mubr.bf16.gmra.mrb[0].mxu0 %v1096
  %v1249 = vpop.f32.mrb[0].mxu0
  %v1250 = vadd.f32 0.0, %v1249
  %v1251 = vpop.f32.mrb[0].mxu0
  %v1252 = vpop.f32.mrb[0].mxu0
  %v1253 = vadd.f32 0.0, %v1252
  %v1254 = vpop.f32.mrb[0].mxu0
  %1255 = vmatprep.mubr.bf16.mxu0 0
  %1256 = vmatmul.mubr.bf16.gmra.mrb[0].mxu0 %v1097
  %v1257 = vpop.f32.mrb[0].mxu0
  %v1258 = vadd.f32 0.0, %v1257
  %v1259 = vpop.f32.mrb[0].mxu0
  %v1260 = vpop.f32.mrb[0].mxu0
  %v1261 = vadd.f32 0.0, %v1260
  %v1262 = vpop.f32.mrb[0].mxu0
  %1263 = vmatprep.mubr.bf16.mxu0 0
  %1264 = vmatmul.mubr.bf16.gmra.mrb[0].mxu0 %v1098
  %v1265 = vpop.f32.mrb[0].mxu0
  %v1266 = vadd.f32 0.0, %v1265
  %v1267 = vpop.f32.mrb[0].mxu0
  %v1268 = vpop.f32.mrb[0].mxu0
  %v1269 = vadd.f32 0.0, %v1268
  %v1270 = vpop.f32.mrb[0].mxu0
  %1271 = vmatprep.mubr.bf16.mxu0 0
  %1272 = vmatmul.mubr.bf16.gmra.mrb[0].mxu0 %v1099
  %v1273 = vpop.f32.mrb[0].mxu0
  %v1274 = vadd.f32 0.0, %v1273
  %v1275 = vpop.f32.mrb[0].mxu0
  %v1276 = vpop.f32.mrb[0].mxu0
  %v1277 = vadd.f32 0.0, %v1276
  %v1278 = vpop.f32.mrb[0].mxu0
  %1279 = vmatprep.mubr.bf16.mxu0 0
  %1280 = vmatmul.mubr.bf16.gmra.mrb[0].mxu0 %v1100
  %v1281 = vpop.f32.mrb[0].mxu0
  %v1282 = vadd.f32 0.0, %v1281
  %v1283 = vpop.f32.mrb[0].mxu0
  %v1284 = vpop.f32.mrb[0].mxu0
  %v1285 = vadd.f32 0.0, %v1284
  %v1286 = vpop.f32.mrb[0].mxu0
  %1287 = vmatprep.mubr.bf16.mxu0 0
  %1288 = vmatmul.mubr.bf16.gmra.mrb[0].mxu0 %v1101
  %v1289 = vpop.f32.mrb[0].mxu0
  %v1290 = vadd.f32 0.0, %v1289
  %v1291 = vpop.f32.mrb[0].mxu0
  %v1292 = vpop.f32.mrb[0].mxu0
  %v1293 = vadd.f32 0.0, %v1292
  %v1294 = vpop.f32.mrb[0].mxu0
  %1295 = vmatprep.mubr.bf16.mxu0 0
  %1296 = vmatmul.mubr.bf16.gmra.mrb[0].mxu0 %v1102
  %v1297 = vpop.f32.mrb[0].mxu0
  %v1298 = vadd.f32 0.0, %v1297
  %v1299 = vpop.f32.mrb[0].mxu0
  %v1300 = vpop.f32.mrb[0].mxu0
  %v1301 = vadd.f32 0.0, %v1300
  %v1302 = vpop.f32.mrb[0].mxu0
  %1303 = vmatprep.mubr.bf16.mxu0 0
  %1304 = vmatmul.mubr.bf16.gmra.mrb[0].mxu0 %v1103
  %v1305 = vpop.f32.mrb[0].mxu0
  %v1306 = vadd.f32 0.0, %v1305
  %v1307 = vpop.f32.mrb[0].mxu0
  %v1308 = vpop.f32.mrb[0].mxu0
  %v1309 = vadd.f32 0.0, %v1308
  %v1310 = vpop.f32.mrb[0].mxu0
  %1311 = vmatprep.mubr.bf16.mxu0 0
  %1312 = vmatmul.mubr.bf16.gmra.mrb[0].mxu0 %v1104
  %v1313 = vpop.f32.mrb[0].mxu0
  %v1314 = vadd.f32 0.0, %v1313
  %v1315 = vpop.f32.mrb[0].mxu0
  %v1316 = vpop.f32.mrb[0].mxu0
  %v1317 = vadd.f32 0.0, %v1316
  %v1318 = vpop.f32.mrb[0].mxu0
  %1319 = vmatprep.mubr.bf16.mxu0 0
  %1320 = vmatmul.mubr.bf16.gmra.mrb[0].mxu0 %v1105
  %v1321 = vpop.f32.mrb[0].mxu0
  %v1322 = vadd.f32 0.0, %v1321
  %v1323 = vpop.f32.mrb[0].mxu0
  %v1324 = vpop.f32.mrb[0].mxu0
  %v1325 = vadd.f32 0.0, %v1324
  %v1326 = vpop.f32.mrb[0].mxu0
  %1327 = vmatprep.mubr.bf16.mxu0 0
  %1328 = vmatmul.mubr.bf16.gmra.mrb[0].mxu0 %v1106
  %v1329 = vpop.f32.mrb[0].mxu0
  %v1330 = vadd.f32 0.0, %v1329
  %v1331 = vpop.f32.mrb[0].mxu0
  %v1332 = vpop.f32.mrb[0].mxu0
  %v1333 = vadd.f32 0.0, %v1332
  %v1334 = vpop.f32.mrb[0].mxu0
  %1335 = vmatprep.mubr.bf16.mxu0 0
  %1336 = vmatmul.mubr.bf16.gmra.mrb[0].mxu0 %v1107
  %v1337 = vpop.f32.mrb[0].mxu0
  %v1338 = vadd.f32 0.0, %v1337
  %v1339 = vpop.f32.mrb[0].mxu0
  %v1340 = vpop.f32.mrb[0].mxu0
  %v1341 = vadd.f32 0.0, %v1340
  %v1342 = vpop.f32.mrb[0].mxu0
  %1343 = vmatprep.mubr.bf16.mxu0 0
  %1344 = vmatmul.mubr.bf16.gmra.mrb[0].mxu0 %v1108
  %v1345 = vpop.f32.mrb[0].mxu0
  %v1346 = vadd.f32 0.0, %v1345
  %v1347 = vpop.f32.mrb[0].mxu0
  %v1348 = vpop.f32.mrb[0].mxu0
  %v1349 = vadd.f32 0.0, %v1348
  %v1350 = vpop.f32.mrb[0].mxu0
  %1351 = vdwg.mxu0
  %s1352 = scalar_lea.vmem %s1, 144
  %v1353 = vld [vmem:[%s1352] sm:$0xf]
  %v1354 = vld [vmem:[%s1352 + $0x4] sm:$0xf]
  %v1355 = vld [vmem:[%s1352 + $0x8] sm:$0xf]
  %v1356 = vld [vmem:[%s1352 + $0xc] sm:$0xf]
  %v1357 = vld [vmem:[%s1352 + $0x10] sm:$0xf]
  %v1358 = vld [vmem:[%s1352 + $0x14] sm:$0xf]
  %v1359 = vld [vmem:[%s1352 + $0x18] sm:$0xf]
  %v1360 = vld [vmem:[%s1352 + $0x1c] sm:$0xf]
  %v1361 = vld [vmem:[%s1352 + $0x20] sm:$0xf]
  %v1362 = vld [vmem:[%s1352 + $0x24] sm:$0xf]
  %v1363 = vld [vmem:[%s1352 + $0x28] sm:$0xf]
  %v1364 = vld [vmem:[%s1352 + $0x2c] sm:$0xf]
  %v1365 = vld [vmem:[%s1352 + $0x30] sm:$0xf]
  %v1366 = vld [vmem:[%s1352 + $0x34] sm:$0xf]
  %v1367 = vld [vmem:[%s1352 + $0x38] sm:$0xf]
  %v1368 = vld [vmem:[%s1352 + $0x3c] sm:$0xf]
  %v1369 = vld [vmem:[%s1352 + $0x40] sm:$0xf]
  %v1370 = vld [vmem:[%s1352 + $0x44] sm:$0xf]
  %v1371 = vld [vmem:[%s1352 + $0x48] sm:$0xf]
  %v1372 = vld [vmem:[%s1352 + $0x4c] sm:$0xf]
  %v1373 = vld [vmem:[%s1352 + $0x50] sm:$0xf]
  %v1374 = vld [vmem:[%s1352 + $0x54] sm:$0xf]
  %v1375 = vld [vmem:[%s1352 + $0x58] sm:$0xf]
  %v1376 = vld [vmem:[%s1352 + $0x5c] sm:$0xf]
  %v1377 = vld [vmem:[%s1352 + $0x60] sm:$0xf]
  %v1378 = vld [vmem:[%s1352 + $0x64] sm:$0xf]
  %v1379 = vld [vmem:[%s1352 + $0x68] sm:$0xf]
  %v1380 = vld [vmem:[%s1352 + $0x6c] sm:$0xf]
  %v1381 = vld [vmem:[%s1352 + $0x70] sm:$0xf]
  %v1382 = vld [vmem:[%s1352 + $0x74] sm:$0xf]
  %v1383 = vld [vmem:[%s1352 + $0x78] sm:$0xf]
  %v1384 = vld [vmem:[%s1352 + $0x7c] sm:$0xf]
  %v1385 = vld [vmem:[%s1352 + $0x80] sm:$0xf]
  %v1386 = vld [vmem:[%s1352 + $0x84] sm:$0xf]
  %v1387 = vld [vmem:[%s1352 + $0x88] sm:$0xf]
  %v1388 = vld [vmem:[%s1352 + $0x8c] sm:$0xf]
  %v1425 = vunpack.c.l.b16 %v1353
  %v1426 = vunpack.c.l.b16 %v1354
  %v1427 = vunpack.c.l.b16 %v1355
  %v1428 = vunpack.c.l.b16 %v1356
  %v1429 = vunpack.c.l.b16 %v1357
  %v1430 = vunpack.c.l.b16 %v1358
  %v1431 = vunpack.c.l.b16 %v1359
  %v1432 = vunpack.c.l.b16 %v1360
  %v1433 = vunpack.c.l.b16 %v1361
  %v1434 = vunpack.c.l.b16 %v1362
  %v1435 = vunpack.c.l.b16 %v1363
  %v1436 = vunpack.c.l.b16 %v1364
  %v1437 = vunpack.c.l.b16 %v1365
  %v1438 = vunpack.c.l.b16 %v1366
  %v1439 = vunpack.c.l.b16 %v1367
  %v1440 = vunpack.c.l.b16 %v1368
  %v1441 = vunpack.c.l.b16 %v1369
  %v1442 = vunpack.c.l.b16 %v1370
  %v1443 = vunpack.c.l.b16 %v1371
  %v1444 = vunpack.c.l.b16 %v1372
  %v1445 = vunpack.c.l.b16 %v1373
  %v1446 = vunpack.c.l.b16 %v1374
  %v1447 = vunpack.c.l.b16 %v1375
  %v1448 = vunpack.c.l.b16 %v1376
  %v1449 = vunpack.c.l.b16 %v1377
  %v1450 = vunpack.c.l.b16 %v1378
  %v1451 = vunpack.c.l.b16 %v1379
  %v1452 = vunpack.c.l.b16 %v1380
  %v1453 = vunpack.c.l.b16 %v1381
  %v1454 = vunpack.c.l.b16 %v1382
  %v1455 = vunpack.c.l.b16 %v1383
  %v1456 = vunpack.c.l.b16 %v1384
  %v1457 = vunpack.c.l.b16 %v1385
  %v1458 = vunpack.c.l.b16 %v1386
  %v1459 = vunpack.c.l.b16 %v1387
  %v1460 = vunpack.c.l.b16 %v1388
  %v1461 = vpack.c.b16 %v1426, %v1425
  %v1462 = vpack.c.b16 %v1428, %v1427
  %v1463 = vpack.c.b16 %v1430, %v1429
  %v1464 = vpack.c.b16 %v1432, %v1431
  %v1465 = vpack.c.b16 %v1434, %v1433
  %v1466 = vpack.c.b16 %v1436, %v1435
  %v1467 = vpack.c.b16 %v1438, %v1437
  %v1468 = vpack.c.b16 %v1440, %v1439
  %v1469 = vpack.c.b16 %v1442, %v1441
  %v1470 = vpack.c.b16 %v1444, %v1443
  %v1471 = vpack.c.b16 %v1446, %v1445
  %v1472 = vpack.c.b16 %v1448, %v1447
  %v1473 = vpack.c.b16 %v1450, %v1449
  %v1474 = vpack.c.b16 %v1452, %v1451
  %v1475 = vpack.c.b16 %v1454, %v1453
  %v1476 = vpack.c.b16 %v1456, %v1455
  %v1477 = vpack.c.b16 %v1458, %v1457
  %v1478 = vpack.c.b16 %v1460, %v1459
  %1497 = vmatprep.subr.bf16.mxu0 0
  %1498 = vmatpush1.bf16.msra.mxu0 %v1159
  %1499 = vmatprep.subr.bf16.mxu0 0
  %1500 = vmatpush1.bf16.msra.mxu0 %v1160
  %1501 = vmatprep.subr.bf16.mxu0 0
  %1502 = vmatpush1.bf16.msra.mxu0 %v1161
  %1503 = vmatprep.subr.bf16.mxu0 0
  %1504 = vmatpush1.bf16.msra.mxu0 %v1162
  %1505 = vmatprep.subr.bf16.mxu0 0
  %1506 = vmatpush1.bf16.msra.mxu0 %v1163
  %1507 = vmatprep.subr.bf16.mxu0 0
  %1508 = vmatpush1.bf16.msra.mxu0 %v1164
  %1509 = vmatprep.subr.bf16.mxu0 0
  %1510 = vmatpush1.bf16.msra.mxu0 %v1165
  %1511 = vmatprep.subr.bf16.mxu0 0
  %1512 = vmatpush1.bf16.msra.mxu0 %v1166
  %1513 = vmatprep.subr.bf16.mxu0 0
  %1514 = vmatpush1.bf16.msra.mxu0 0
  %1515 = vmatprep.subr.bf16.mxu0 0
  %1516 = vmatpush1.bf16.msra.mxu0 0
  %1517 = vmatprep.subr.bf16.mxu0 0
  %1518 = vmatpush1.bf16.msra.mxu0 0
  %1519 = vmatprep.subr.bf16.mxu0 0
  %1520 = vmatpush1.bf16.msra.mxu0 0
  %1521 = vmatprep.subr.bf16.mxu0 0
  %1522 = vmatpush1.bf16.msra.mxu0 0
  %1523 = vmatprep.subr.bf16.mxu0 0
  %1524 = vmatpush1.bf16.msra.mxu0 0
  %1525 = vmatprep.subr.bf16.mxu0 0
  %1526 = vmatpush1.bf16.msra.mxu0 0
  %1527 = vmatprep.subr.bf16.mxu0 0
  %1528 = vmatpush1.bf16.msra.mxu0 0
  %1529 = vmatprep.mubr.bf16.mxu0 0
  %1530 = vmatmul.mubr.bf16.gmra.mrb[0].mxu0 %v1461
  %v1531 = vpop.f32.mrb[0].mxu0
  %v1532 = vadd.f32 0.0, %v1531
  %v1533 = vpop.f32.mrb[0].mxu0
  %v1534 = vpop.f32.mrb[0].mxu0
  %v1535 = vadd.f32 0.0, %v1534
  %v1536 = vpop.f32.mrb[0].mxu0
  %1537 = vmatprep.mubr.bf16.mxu0 0
  %1538 = vmatmul.mubr.bf16.gmra.mrb[0].mxu0 %v1462
  %v1539 = vpop.f32.mrb[0].mxu0
  %v1540 = vadd.f32 0.0, %v1539
  %v1541 = vpop.f32.mrb[0].mxu0
  %v1542 = vpop.f32.mrb[0].mxu0
  %v1543 = vadd.f32 0.0, %v1542
  %v1544 = vpop.f32.mrb[0].mxu0
  %1545 = vmatprep.mubr.bf16.mxu0 0
  %1546 = vmatmul.mubr.bf16.gmra.mrb[0].mxu0 %v1463
  %v1547 = vpop.f32.mrb[0].mxu0
  %v1548 = vadd.f32 0.0, %v1547
  %v1549 = vpop.f32.mrb[0].mxu0
  %v1550 = vpop.f32.mrb[0].mxu0
  %v1551 = vadd.f32 0.0, %v1550
  %v1552 = vpop.f32.mrb[0].mxu0
  %1553 = vmatprep.mubr.bf16.mxu0 0
  %1554 = vmatmul.mubr.bf16.gmra.mrb[0].mxu0 %v1464
  %v1555 = vpop.f32.mrb[0].mxu0
  %v1556 = vadd.f32 0.0, %v1555
  %v1557 = vpop.f32.mrb[0].mxu0
  %v1558 = vpop.f32.mrb[0].mxu0
  %v1559 = vadd.f32 0.0, %v1558
  %v1560 = vpop.f32.mrb[0].mxu0
  %1561 = vmatprep.mubr.bf16.mxu0 0
  %1562 = vmatmul.mubr.bf16.gmra.mrb[0].mxu0 %v1465
  %v1563 = vpop.f32.mrb[0].mxu0
  %v1564 = vadd.f32 0.0, %v1563
  %v1565 = vpop.f32.mrb[0].mxu0
  %v1566 = vpop.f32.mrb[0].mxu0
  %v1567 = vadd.f32 0.0, %v1566
  %v1568 = vpop.f32.mrb[0].mxu0
  %1569 = vmatprep.mubr.bf16.mxu0 0
  %1570 = vmatmul.mubr.bf16.gmra.mrb[0].mxu0 %v1466
  %v1571 = vpop.f32.mrb[0].mxu0
  %v1572 = vadd.f32 0.0, %v1571
  %v1573 = vpop.f32.mrb[0].mxu0
  %v1574 = vpop.f32.mrb[0].mxu0
  %v1575 = vadd.f32 0.0, %v1574
  %v1576 = vpop.f32.mrb[0].mxu0
  %1577 = vmatprep.mubr.bf16.mxu0 0
  %1578 = vmatmul.mubr.bf16.gmra.mrb[0].mxu0 %v1467
  %v1579 = vpop.f32.mrb[0].mxu0
  %v1580 = vadd.f32 0.0, %v1579
  %v1581 = vpop.f32.mrb[0].mxu0
  %v1582 = vpop.f32.mrb[0].mxu0
  %v1583 = vadd.f32 0.0, %v1582
  %v1584 = vpop.f32.mrb[0].mxu0
  %1585 = vmatprep.mubr.bf16.mxu0 0
  %1586 = vmatmul.mubr.bf16.gmra.mrb[0].mxu0 %v1468
  %v1587 = vpop.f32.mrb[0].mxu0
  %v1588 = vadd.f32 0.0, %v1587
  %v1589 = vpop.f32.mrb[0].mxu0
  %v1590 = vpop.f32.mrb[0].mxu0
  %v1591 = vadd.f32 0.0, %v1590
  %v1592 = vpop.f32.mrb[0].mxu0
  %1593 = vmatprep.mubr.bf16.mxu0 0
  %1594 = vmatmul.mubr.bf16.gmra.mrb[0].mxu0 %v1469
  %v1595 = vpop.f32.mrb[0].mxu0
  %v1596 = vadd.f32 0.0, %v1595
  %v1597 = vpop.f32.mrb[0].mxu0
  %v1598 = vpop.f32.mrb[0].mxu0
  %v1599 = vadd.f32 0.0, %v1598
  %v1600 = vpop.f32.mrb[0].mxu0
  %1601 = vmatprep.mubr.bf16.mxu0 0
  %1602 = vmatmul.mubr.bf16.gmra.mrb[0].mxu0 %v1470
  %v1603 = vpop.f32.mrb[0].mxu0
  %v1604 = vadd.f32 0.0, %v1603
  %v1605 = vpop.f32.mrb[0].mxu0
  %v1606 = vpop.f32.mrb[0].mxu0
  %v1607 = vadd.f32 0.0, %v1606
  %v1608 = vpop.f32.mrb[0].mxu0
  %1609 = vmatprep.mubr.bf16.mxu0 0
  %1610 = vmatmul.mubr.bf16.gmra.mrb[0].mxu0 %v1471
  %v1611 = vpop.f32.mrb[0].mxu0
  %v1612 = vadd.f32 0.0, %v1611
  %v1613 = vpop.f32.mrb[0].mxu0
  %v1614 = vpop.f32.mrb[0].mxu0
  %v1615 = vadd.f32 0.0, %v1614
  %v1616 = vpop.f32.mrb[0].mxu0
  %1617 = vmatprep.mubr.bf16.mxu0 0
  %1618 = vmatmul.mubr.bf16.gmra.mrb[0].mxu0 %v1472
  %v1619 = vpop.f32.mrb[0].mxu0
  %v1620 = vadd.f32 0.0, %v1619
  %v1621 = vpop.f32.mrb[0].mxu0
  %v1622 = vpop.f32.mrb[0].mxu0
  %v1623 = vadd.f32 0.0, %v1622
  %v1624 = vpop.f32.mrb[0].mxu0
  %1625 = vmatprep.mubr.bf16.mxu0 0
  %1626 = vmatmul.mubr.bf16.gmra.mrb[0].mxu0 %v1473
  %v1627 = vpop.f32.mrb[0].mxu0
  %v1628 = vadd.f32 0.0, %v1627
  %v1629 = vpop.f32.mrb[0].mxu0
  %v1630 = vpop.f32.mrb[0].mxu0
  %v1631 = vadd.f32 0.0, %v1630
  %v1632 = vpop.f32.mrb[0].mxu0
  %1633 = vmatprep.mubr.bf16.mxu0 0
  %1634 = vmatmul.mubr.bf16.gmra.mrb[0].mxu0 %v1474
  %v1635 = vpop.f32.mrb[0].mxu0
  %v1636 = vadd.f32 0.0, %v1635
  %v1637 = vpop.f32.mrb[0].mxu0
  %v1638 = vpop.f32.mrb[0].mxu0
  %v1639 = vadd.f32 0.0, %v1638
  %v1640 = vpop.f32.mrb[0].mxu0
  %1641 = vmatprep.mubr.bf16.mxu0 0
  %1642 = vmatmul.mubr.bf16.gmra.mrb[0].mxu0 %v1475
  %v1643 = vpop.f32.mrb[0].mxu0
  %v1644 = vadd.f32 0.0, %v1643
  %v1645 = vpop.f32.mrb[0].mxu0
  %v1646 = vpop.f32.mrb[0].mxu0
  %v1647 = vadd.f32 0.0, %v1646
  %v1648 = vpop.f32.mrb[0].mxu0
  %1649 = vmatprep.mubr.bf16.mxu0 0
  %1650 = vmatmul.mubr.bf16.gmra.mrb[0].mxu0 %v1476
  %v1651 = vpop.f32.mrb[0].mxu0
  %v1652 = vadd.f32 0.0, %v1651
  %v1653 = vpop.f32.mrb[0].mxu0
  %v1654 = vpop.f32.mrb[0].mxu0
  %v1655 = vadd.f32 0.0, %v1654
  %v1656 = vpop.f32.mrb[0].mxu0
  %1657 = vmatprep.mubr.bf16.mxu0 0
  %1658 = vmatmul.mubr.bf16.gmra.mrb[0].mxu0 %v1477
  %v1659 = vpop.f32.mrb[0].mxu0
  %v1660 = vadd.f32 0.0, %v1659
  %v1661 = vpop.f32.mrb[0].mxu0
  %v1662 = vpop.f32.mrb[0].mxu0
  %v1663 = vadd.f32 0.0, %v1662
  %v1664 = vpop.f32.mrb[0].mxu0
  %1665 = vmatprep.mubr.bf16.mxu0 0
  %1666 = vmatmul.mubr.bf16.gmra.mrb[0].mxu0 %v1478
  %v1667 = vpop.f32.mrb[0].mxu0
  %v1668 = vadd.f32 0.0, %v1667
  %v1669 = vpop.f32.mrb[0].mxu0
  %v1670 = vpop.f32.mrb[0].mxu0
  %v1671 = vadd.f32 0.0, %v1670
  %v1672 = vpop.f32.mrb[0].mxu0
  %1673 = vdwg.mxu0
  %v1674 = vmax.f32 %v1210, %v1532
  %v1675 = vmax.f32 %v1213, %v1535
  %v1676 = vmax.f32 %v1218, %v1540
  %v1677 = vmax.f32 %v1221, %v1543
  %v1678 = vmax.f32 %v1226, %v1548
  %v1679 = vmax.f32 %v1229, %v1551
  %v1680 = vmax.f32 %v1234, %v1556
  %v1681 = vmax.f32 %v1237, %v1559
  %v1682 = vmax.f32 %v1242, %v1564
  %v1683 = vmax.f32 %v1245, %v1567
  %v1684 = vmax.f32 %v1250, %v1572
  %v1685 = vmax.f32 %v1253, %v1575
  %v1686 = vmax.f32 %v1258, %v1580
  %v1687 = vmax.f32 %v1261, %v1583
  %v1688 = vmax.f32 %v1266, %v1588
  %v1689 = vmax.f32 %v1269, %v1591
  %v1690 = vmax.f32 %v1274, %v1596
  %v1691 = vmax.f32 %v1277, %v1599
  %v1692 = vmax.f32 %v1282, %v1604
  %v1693 = vmax.f32 %v1285, %v1607
  %v1694 = vmax.f32 %v1290, %v1612
  %v1695 = vmax.f32 %v1293, %v1615
  %v1696 = vmax.f32 %v1298, %v1620
  %v1697 = vmax.f32 %v1301, %v1623
  %v1698 = vmax.f32 %v1306, %v1628
  %v1699 = vmax.f32 %v1309, %v1631
  %v1700 = vmax.f32 %v1314, %v1636
  %v1701 = vmax.f32 %v1317, %v1639
  %v1702 = vmax.f32 %v1322, %v1644
  %v1703 = vmax.f32 %v1325, %v1647
  %v1704 = vmax.f32 %v1330, %v1652
  %v1705 = vmax.f32 %v1333, %v1655
  %v1706 = vmax.f32 %v1338, %v1660
  %v1707 = vmax.f32 %v1341, %v1663
  %v1708 = vmax.f32 %v1346, %v1668
  %v1709 = vmax.f32 %v1349, %v1671
  %v1710 = vld [vmem:[%s3] sm:$0x1]
  %v1712 = vlaneseq
  %v1713 = vshrl.u32 %v1712, 7
  %v1714 = vsub.s32 0, %v1713
  %v1715 = vrot.slane %v1710, %v1714
  %v1717 = vadd.f32 %v1674, %v1715
  %v1718 = vadd.f32 %v1675, %v1715
  %v1719 = vadd.f32 %v1676, %v1715
  %v1720 = vadd.f32 %v1677, %v1715
  %v1721 = vadd.f32 %v1678, %v1715
  %v1722 = vadd.f32 %v1679, %v1715
  %v1723 = vadd.f32 %v1680, %v1715
  %v1724 = vadd.f32 %v1681, %v1715
  %v1725 = vadd.f32 %v1682, %v1715
  %v1726 = vadd.f32 %v1683, %v1715
  %v1727 = vadd.f32 %v1684, %v1715
  %v1728 = vadd.f32 %v1685, %v1715
  %v1729 = vadd.f32 %v1686, %v1715
  %v1730 = vadd.f32 %v1687, %v1715
  %v1731 = vadd.f32 %v1688, %v1715
  %v1732 = vadd.f32 %v1689, %v1715
  %v1733 = vadd.f32 %v1690, %v1715
  %v1734 = vadd.f32 %v1691, %v1715
  %v1735 = vadd.f32 %v1692, %v1715
  %v1736 = vadd.f32 %v1693, %v1715
  %v1737 = vadd.f32 %v1694, %v1715
  %v1738 = vadd.f32 %v1695, %v1715
  %v1739 = vadd.f32 %v1696, %v1715
  %v1740 = vadd.f32 %v1697, %v1715
  %v1741 = vadd.f32 %v1698, %v1715
  %v1742 = vadd.f32 %v1699, %v1715
  %v1743 = vadd.f32 %v1700, %v1715
  %v1744 = vadd.f32 %v1701, %v1715
  %v1745 = vadd.f32 %v1702, %v1715
  %v1746 = vadd.f32 %v1703, %v1715
  %v1747 = vadd.f32 %v1704, %v1715
  %v1748 = vadd.f32 %v1705, %v1715
  %v1749 = vadd.f32 %v1706, %v1715
  %v1750 = vadd.f32 %v1707, %v1715
  %v1751 = vadd.f32 %v1708, %v1715
  %v1752 = vadd.f32 %v1709, %v1715
  %v1777 = vrot.slane %v1718, 4
  %v1778 = vrot.slane %v1719, 4
  %v1779 = vsel %vm833, %v1777, %v1778
  %v1780 = vrot.slane %v1721, 4
  %v1781 = vrot.slane %v1722, 4
  %v1782 = vsel %vm833, %v1780, %v1781
  %v1783 = vrot.slane %v1724, 4
  %v1784 = vrot.slane %v1725, 4
  %v1785 = vsel %vm833, %v1783, %v1784
  %v1786 = vrot.slane %v1727, 4
  %v1787 = vrot.slane %v1728, 4
  %v1788 = vsel %vm833, %v1786, %v1787
  %v1789 = vrot.slane %v1730, 4
  %v1790 = vrot.slane %v1731, 4
  %v1791 = vsel %vm833, %v1789, %v1790
  %v1792 = vrot.slane %v1733, 4
  %v1793 = vrot.slane %v1734, 4
  %v1794 = vsel %vm833, %v1792, %v1793
  %v1795 = vrot.slane %v1736, 4
  %v1796 = vrot.slane %v1737, 4
  %v1797 = vsel %vm833, %v1795, %v1796
  %v1798 = vrot.slane %v1739, 4
  %v1799 = vrot.slane %v1740, 4
  %v1800 = vsel %vm833, %v1798, %v1799
  %v1801 = vrot.slane %v1742, 4
  %v1802 = vrot.slane %v1743, 4
  %v1803 = vsel %vm833, %v1801, %v1802
  %v1804 = vrot.slane %v1745, 4
  %v1805 = vrot.slane %v1746, 4
  %v1806 = vsel %vm833, %v1804, %v1805
  %v1807 = vrot.slane %v1748, 4
  %v1808 = vrot.slane %v1749, 4
  %v1809 = vsel %vm833, %v1807, %v1808
  %v1810 = vrot.slane %v1751, 4
  %v1811 = vrot.slane %v1752, 4
  %v1812 = vsel %vm833, %v1810, %v1811
  %v1837 = vmax.f32 %v1717, %v1779
  %v1838 = vmax.f32 %v1718, %v1778
  %v1839 = vmax.f32 %v1720, %v1782
  %v1840 = vmax.f32 %v1721, %v1781
  %v1841 = vmax.f32 %v1723, %v1785
  %v1842 = vmax.f32 %v1724, %v1784
  %v1843 = vmax.f32 %v1726, %v1788
  %v1844 = vmax.f32 %v1727, %v1787
  %v1845 = vmax.f32 %v1729, %v1791
  %v1846 = vmax.f32 %v1730, %v1790
  %v1847 = vmax.f32 %v1732, %v1794
  %v1848 = vmax.f32 %v1733, %v1793
  %v1849 = vmax.f32 %v1735, %v1797
  %v1850 = vmax.f32 %v1736, %v1796
  %v1851 = vmax.f32 %v1738, %v1800
  %v1852 = vmax.f32 %v1739, %v1799
  %v1853 = vmax.f32 %v1741, %v1803
  %v1854 = vmax.f32 %v1742, %v1802
  %v1855 = vmax.f32 %v1744, %v1806
  %v1856 = vmax.f32 %v1745, %v1805
  %v1857 = vmax.f32 %v1747, %v1809
  %v1858 = vmax.f32 %v1748, %v1808
  %v1859 = vmax.f32 %v1750, %v1812
  %v1860 = vmax.f32 %v1751, %v1811
  %v1861 = vmax.f32 %v1837, 0.0
  %v1862 = vmax.f32 %v1838, 0.0
  %v1863 = vmax.f32 %v1839, 0.0
  %v1864 = vmax.f32 %v1840, 0.0
  %v1865 = vmax.f32 %v1841, 0.0
  %v1866 = vmax.f32 %v1842, 0.0
  %v1867 = vmax.f32 %v1843, 0.0
  %v1868 = vmax.f32 %v1844, 0.0
  %v1869 = vmax.f32 %v1845, 0.0
  %v1870 = vmax.f32 %v1846, 0.0
  %v1871 = vmax.f32 %v1847, 0.0
  %v1872 = vmax.f32 %v1848, 0.0
  %v1873 = vmax.f32 %v1849, 0.0
  %v1874 = vmax.f32 %v1850, 0.0
  %v1875 = vmax.f32 %v1851, 0.0
  %v1876 = vmax.f32 %v1852, 0.0
  %v1877 = vmax.f32 %v1853, 0.0
  %v1878 = vmax.f32 %v1854, 0.0
  %v1879 = vmax.f32 %v1855, 0.0
  %v1880 = vmax.f32 %v1856, 0.0
  %v1881 = vmax.f32 %v1857, 0.0
  %v1882 = vmax.f32 %v1858, 0.0
  %v1883 = vmax.f32 %v1859, 0.0
  %v1884 = vmax.f32 %v1860, 0.0
  %s1885 = scalar_lea.vmem [#allocation2], 192
  %1886 = vst [vmem:[%s1885] sm:$0xff] %v1861
  %1887 = vst [vmem:[%s1885 + $0x8] sm:$0xf] %v1862
  %1888 = vst [vmem:[%s1885 + $0x10] sm:$0xff] %v1863
  %1889 = vst [vmem:[%s1885 + $0x18] sm:$0xf] %v1864
  %1890 = vst [vmem:[%s1885 + $0x20] sm:$0xff] %v1865
  %1891 = vst [vmem:[%s1885 + $0x28] sm:$0xf] %v1866
  %1892 = vst [vmem:[%s1885 + $0x30] sm:$0xff] %v1867
  %1893 = vst [vmem:[%s1885 + $0x38] sm:$0xf] %v1868
  %1894 = vst [vmem:[%s1885 + $0x40] sm:$0xff] %v1869
  %1895 = vst [vmem:[%s1885 + $0x48] sm:$0xf] %v1870
  %1896 = vst [vmem:[%s1885 + $0x50] sm:$0xff] %v1871
  %1897 = vst [vmem:[%s1885 + $0x58] sm:$0xf] %v1872
  %1898 = vst [vmem:[%s1885 + $0x60] sm:$0xff] %v1873
  %1899 = vst [vmem:[%s1885 + $0x68] sm:$0xf] %v1874
  %1900 = vst [vmem:[%s1885 + $0x70] sm:$0xff] %v1875
  %1901 = vst [vmem:[%s1885 + $0x78] sm:$0xf] %v1876
  %1902 = vst [vmem:[%s1885 + $0x80] sm:$0xff] %v1877
  %1903 = vst [vmem:[%s1885 + $0x88] sm:$0xf] %v1878
  %1904 = vst [vmem:[%s1885 + $0x90] sm:$0xff] %v1879
  %1905 = vst [vmem:[%s1885 + $0x98] sm:$0xf] %v1880
  %1906 = vst [vmem:[%s1885 + $0xa0] sm:$0xff] %v1881
  %1907 = vst [vmem:[%s1885 + $0xa8] sm:$0xf] %v1882
  %1908 = vst [vmem:[%s1885 + $0xb0] sm:$0xff] %v1883
  %1909 = vst [vmem:[%s1885 + $0xb8] sm:$0xf] %v1884
  %v1910 = vld [vmem:[#allocation2] sm:$0xff]
  %v1911 = vld [vmem:[#allocation2 + $0x10] sm:$0xff]
  %v1912 = vld [vmem:[#allocation2 + $0x20] sm:$0xff]
  %v1913 = vld [vmem:[#allocation2 + $0x30] sm:$0xff]
  %v1914 = vld [vmem:[#allocation2 + $0x40] sm:$0xff]
  %v1915 = vld [vmem:[#allocation2 + $0x50] sm:$0xff]
  %v1916 = vld [vmem:[#allocation2 + $0x60] sm:$0xff]
  %v1917 = vld [vmem:[#allocation2 + $0x70] sm:$0xff]
  %v1918 = vld [vmem:[#allocation2 + $0xc0] sm:$0xff]
  %v1919 = vld [vmem:[#allocation2 + $0xd0] sm:$0xff]
  %v1920 = vld [vmem:[#allocation2 + $0xe0] sm:$0xff]
  %v1921 = vld [vmem:[#allocation2 + $0xf0] sm:$0xff]
  %v1922 = vld [vmem:[#allocation2 + $0x100] sm:$0xff]
  %v1923 = vld [vmem:[#allocation2 + $0x110] sm:$0xff]
  %v1924 = vld [vmem:[#allocation2 + $0x120] sm:$0xff]
  %v1925 = vld [vmem:[#allocation2 + $0x130] sm:$0xff]
  %v1926 = vpack.c.bf16 %v1911, %v1910
  %v1927 = vpack.c.bf16 %v1913, %v1912
  %v1928 = vpack.c.bf16 %v1915, %v1914
  %v1929 = vpack.c.bf16 %v1917, %v1916
  %v1930 = vpack.c.bf16 %v1919, %v1918
  %v1931 = vpack.c.bf16 %v1921, %v1920
  %v1932 = vpack.c.bf16 %v1923, %v1922
  %v1933 = vpack.c.bf16 %v1925, %v1924
  %v1934 = vld [vmem:[%s4] sm:$0xf]
  %v1935 = vld [vmem:[%s4 + $0x4] sm:$0xf]
  %v1936 = vld [vmem:[%s4 + $0x8] sm:$0xf]
  %v1937 = vld [vmem:[%s4 + $0xc] sm:$0xf]
  %v1938 = vld [vmem:[%s4 + $0x10] sm:$0xf]
  %v1939 = vld [vmem:[%s4 + $0x14] sm:$0xf]
  %v1940 = vld [vmem:[%s4 + $0x18] sm:$0xf]
  %v1941 = vld [vmem:[%s4 + $0x1c] sm:$0xf]
  %v1942 = vld [vmem:[%s4 + $0x20] sm:$0xf]
  %v1943 = vld [vmem:[%s4 + $0x24] sm:$0xf]
  %v1944 = vld [vmem:[%s4 + $0x28] sm:$0xf]
  %v1945 = vld [vmem:[%s4 + $0x2c] sm:$0xf]
  %v1946 = vld [vmem:[%s4 + $0x30] sm:$0xf]
  %v1947 = vld [vmem:[%s4 + $0x34] sm:$0xf]
  %v1948 = vld [vmem:[%s4 + $0x38] sm:$0xf]
  %v1949 = vld [vmem:[%s4 + $0x3c] sm:$0xf]
  %v1950 = vld [vmem:[#allocation2 + $0x1] sm:$0xff]
  %v1951 = vld [vmem:[#allocation2 + $0x11] sm:$0xff]
  %v1952 = vld [vmem:[#allocation2 + $0x21] sm:$0xff]
  %v1953 = vld [vmem:[#allocation2 + $0x31] sm:$0xff]
  %v1954 = vld [vmem:[#allocation2 + $0x41] sm:$0xff]
  %v1955 = vld [vmem:[#allocation2 + $0x51] sm:$0xff]
  %v1956 = vld [vmem:[#allocation2 + $0x61] sm:$0xff]
  %v1957 = vld [vmem:[#allocation2 + $0x71] sm:$0xff]
  %v1958 = vld [vmem:[#allocation2 + $0xc1] sm:$0xff]
  %v1959 = vld [vmem:[#allocation2 + $0xd1] sm:$0xff]
  %v1960 = vld [vmem:[#allocation2 + $0xe1] sm:$0xff]
  %v1961 = vld [vmem:[#allocation2 + $0xf1] sm:$0xff]
  %v1962 = vld [vmem:[#allocation2 + $0x101] sm:$0xff]
  %v1963 = vld [vmem:[#allocation2 + $0x111] sm:$0xff]
  %v1964 = vld [vmem:[#allocation2 + $0x121] sm:$0xff]
  %v1965 = vld [vmem:[#allocation2 + $0x131] sm:$0xff]
  %v1966 = vpack.c.bf16 %v1951, %v1950
  %v1967 = vpack.c.bf16 %v1953, %v1952
  %v1968 = vpack.c.bf16 %v1955, %v1954
  %v1969 = vpack.c.bf16 %v1957, %v1956
  %v1970 = vpack.c.bf16 %v1959, %v1958
  %v1971 = vpack.c.bf16 %v1961, %v1960
  %v1972 = vpack.c.bf16 %v1963, %v1962
  %v1973 = vpack.c.bf16 %v1965, %v1964
  %s1974 = scalar_lea.vmem %s4, 64
  %v1975 = vld [vmem:[%s1974] sm:$0xf]
  %v1976 = vld [vmem:[%s1974 + $0x4] sm:$0xf]
  %v1977 = vld [vmem:[%s1974 + $0x8] sm:$0xf]
  %v1978 = vld [vmem:[%s1974 + $0xc] sm:$0xf]
  %v1979 = vld [vmem:[%s1974 + $0x10] sm:$0xf]
  %v1980 = vld [vmem:[%s1974 + $0x14] sm:$0xf]
  %v1981 = vld [vmem:[%s1974 + $0x18] sm:$0xf]
  %v1982 = vld [vmem:[%s1974 + $0x1c] sm:$0xf]
  %v1983 = vld [vmem:[%s1974 + $0x20] sm:$0xf]
  %v1984 = vld [vmem:[%s1974 + $0x24] sm:$0xf]
  %v1985 = vld [vmem:[%s1974 + $0x28] sm:$0xf]
  %v1986 = vld [vmem:[%s1974 + $0x2c] sm:$0xf]
  %v1987 = vld [vmem:[%s1974 + $0x30] sm:$0xf]
  %v1988 = vld [vmem:[%s1974 + $0x34] sm:$0xf]
  %v1989 = vld [vmem:[%s1974 + $0x38] sm:$0xf]
  %v1990 = vld [vmem:[%s1974 + $0x3c] sm:$0xf]
  %v2007 = vunpack.c.l.b16 %v1975
  %v2008 = vunpack.c.l.b16 %v1976
  %v2009 = vunpack.c.l.b16 %v1977
  %v2010 = vunpack.c.l.b16 %v1978
  %v2011 = vunpack.c.l.b16 %v1979
  %v2012 = vunpack.c.l.b16 %v1980
  %v2013 = vunpack.c.l.b16 %v1981
  %v2014 = vunpack.c.l.b16 %v1982
  %v2015 = vunpack.c.l.b16 %v1983
  %v2016 = vunpack.c.l.b16 %v1984
  %v2017 = vunpack.c.l.b16 %v1985
  %v2018 = vunpack.c.l.b16 %v1986
  %v2019 = vunpack.c.l.b16 %v1987
  %v2020 = vunpack.c.l.b16 %v1988
  %v2021 = vunpack.c.l.b16 %v1989
  %v2022 = vunpack.c.l.b16 %v1990
  %v2023 = vpack.c.b16 %v2008, %v2007
  %v2024 = vpack.c.b16 %v2010, %v2009
  %v2025 = vpack.c.b16 %v2012, %v2011
  %v2026 = vpack.c.b16 %v2014, %v2013
  %v2027 = vpack.c.b16 %v2016, %v2015
  %v2028 = vpack.c.b16 %v2018, %v2017
  %v2029 = vpack.c.b16 %v2020, %v2019
  %v2030 = vpack.c.b16 %v2022, %v2021
  %2039 = vmatprep.subr.bf16.mxu0 0
  %2040 = vmatpush1.bf16.msra.mxu0 %v2023
  %2041 = vmatprep.subr.bf16.mxu0 0
  %2042 = vmatpush1.bf16.msra.mxu0 %v2024
  %2043 = vmatprep.subr.bf16.mxu0 0
  %2044 = vmatpush1.bf16.msra.mxu0 %v2025
  %2045 = vmatprep.subr.bf16.mxu0 0
  %2046 = vmatpush1.bf16.msra.mxu0 %v2026
  %2047 = vmatprep.subr.bf16.mxu0 0
  %2048 = vmatpush1.bf16.msra.mxu0 %v2027
  %2049 = vmatprep.subr.bf16.mxu0 0
  %2050 = vmatpush1.bf16.msra.mxu0 %v2028
  %2051 = vmatprep.subr.bf16.mxu0 0
  %2052 = vmatpush1.bf16.msra.mxu0 %v2029
  %2053 = vmatprep.subr.bf16.mxu0 0
  %2054 = vmatpush1.bf16.msra.mxu0 %v2030
  %2055 = vmatprep.subr.bf16.mxu0 0
  %2056 = vmatpush1.bf16.msra.mxu0 0
  %2057 = vmatprep.subr.bf16.mxu0 0
  %2058 = vmatpush1.bf16.msra.mxu0 0
  %2059 = vmatprep.subr.bf16.mxu0 0
  %2060 = vmatpush1.bf16.msra.mxu0 0
  %2061 = vmatprep.subr.bf16.mxu0 0
  %2062 = vmatpush1.bf16.msra.mxu0 0
  %2063 = vmatprep.subr.bf16.mxu0 0
  %2064 = vmatpush1.bf16.msra.mxu0 0
  %2065 = vmatprep.subr.bf16.mxu0 0
  %2066 = vmatpush1.bf16.msra.mxu0 0
  %2067 = vmatprep.subr.bf16.mxu0 0
  %2068 = vmatpush1.bf16.msra.mxu0 0
  %2069 = vmatprep.subr.bf16.mxu0 0
  %2070 = vmatpush1.bf16.msra.mxu0 0
  %2071 = vmatprep.mubr.bf16.mxu0 0
  %2072 = vmatmul.mubr.bf16.gmra.mrb[0].mxu0 %v1966
  %v2073 = vpop.f32.mrb[0].mxu0
  %v2074 = vadd.f32 0.0, %v2073
  %v2075 = vpop.f32.mrb[0].mxu0
  %v2076 = vpop.f32.mrb[0].mxu0
  %v2077 = vadd.f32 0.0, %v2076
  %v2078 = vpop.f32.mrb[0].mxu0
  %2079 = vmatprep.mubr.bf16.mxu0 0
  %2080 = vmatmul.mubr.bf16.gmra.mrb[0].mxu0 %v1967
  %v2081 = vpop.f32.mrb[0].mxu0
  %v2082 = vadd.f32 0.0, %v2081
  %v2083 = vpop.f32.mrb[0].mxu0
  %v2084 = vpop.f32.mrb[0].mxu0
  %v2085 = vadd.f32 0.0, %v2084
  %v2086 = vpop.f32.mrb[0].mxu0
  %2087 = vmatprep.mubr.bf16.mxu0 0
  %2088 = vmatmul.mubr.bf16.gmra.mrb[0].mxu0 %v1968
  %v2089 = vpop.f32.mrb[0].mxu0
  %v2090 = vadd.f32 0.0, %v2089
  %v2091 = vpop.f32.mrb[0].mxu0
  %v2092 = vpop.f32.mrb[0].mxu0
  %v2093 = vadd.f32 0.0, %v2092
  %v2094 = vpop.f32.mrb[0].mxu0
  %2095 = vmatprep.mubr.bf16.mxu0 0
  %2096 = vmatmul.mubr.bf16.gmra.mrb[0].mxu0 %v1969
  %v2097 = vpop.f32.mrb[0].mxu0
  %v2098 = vadd.f32 0.0, %v2097
  %v2099 = vpop.f32.mrb[0].mxu0
  %v2100 = vpop.f32.mrb[0].mxu0
  %v2101 = vadd.f32 0.0, %v2100
  %v2102 = vpop.f32.mrb[0].mxu0
  %2103 = vmatprep.mubr.bf16.mxu0 0
  %2104 = vmatmul.mubr.bf16.gmra.mrb[0].mxu0 %v1970
  %v2105 = vpop.f32.mrb[0].mxu0
  %v2106 = vadd.f32 0.0, %v2105
  %v2107 = vpop.f32.mrb[0].mxu0
  %v2108 = vpop.f32.mrb[0].mxu0
  %v2109 = vadd.f32 0.0, %v2108
  %v2110 = vpop.f32.mrb[0].mxu0
  %2111 = vmatprep.mubr.bf16.mxu0 0
  %2112 = vmatmul.mubr.bf16.gmra.mrb[0].mxu0 %v1971
  %v2113 = vpop.f32.mrb[0].mxu0
  %v2114 = vadd.f32 0.0, %v2113
  %v2115 = vpop.f32.mrb[0].mxu0
  %v2116 = vpop.f32.mrb[0].mxu0
  %v2117 = vadd.f32 0.0, %v2116
  %v2118 = vpop.f32.mrb[0].mxu0
  %2119 = vmatprep.mubr.bf16.mxu0 0
  %2120 = vmatmul.mubr.bf16.gmra.mrb[0].mxu0 %v1972
  %v2121 = vpop.f32.mrb[0].mxu0
  %v2122 = vadd.f32 0.0, %v2121
  %v2123 = vpop.f32.mrb[0].mxu0
  %v2124 = vpop.f32.mrb[0].mxu0
  %v2125 = vadd.f32 0.0, %v2124
  %v2126 = vpop.f32.mrb[0].mxu0
  %2127 = vmatprep.mubr.bf16.mxu0 0
  %2128 = vmatmul.mubr.bf16.gmra.mrb[0].mxu0 %v1973
  %v2129 = vpop.f32.mrb[0].mxu0
  %v2130 = vadd.f32 0.0, %v2129
  %v2131 = vpop.f32.mrb[0].mxu0
  %v2132 = vpop.f32.mrb[0].mxu0
  %v2133 = vadd.f32 0.0, %v2132
  %v2134 = vpop.f32.mrb[0].mxu0
  %2135 = vdwg.mxu0
  %v2152 = vunpack.c.l.b16 %v1934
  %v2153 = vunpack.c.l.b16 %v1935
  %v2154 = vunpack.c.l.b16 %v1936
  %v2155 = vunpack.c.l.b16 %v1937
  %v2156 = vunpack.c.l.b16 %v1938
  %v2157 = vunpack.c.l.b16 %v1939
  %v2158 = vunpack.c.l.b16 %v1940
  %v2159 = vunpack.c.l.b16 %v1941
  %v2160 = vunpack.c.l.b16 %v1942
  %v2161 = vunpack.c.l.b16 %v1943
  %v2162 = vunpack.c.l.b16 %v1944
  %v2163 = vunpack.c.l.b16 %v1945
  %v2164 = vunpack.c.l.b16 %v1946
  %v2165 = vunpack.c.l.b16 %v1947
  %v2166 = vunpack.c.l.b16 %v1948
  %v2167 = vunpack.c.l.b16 %v1949
  %v2168 = vpack.c.b16 %v2153, %v2152
  %v2169 = vpack.c.b16 %v2155, %v2154
  %v2170 = vpack.c.b16 %v2157, %v2156
  %v2171 = vpack.c.b16 %v2159, %v2158
  %v2172 = vpack.c.b16 %v2161, %v2160
  %v2173 = vpack.c.b16 %v2163, %v2162
  %v2174 = vpack.c.b16 %v2165, %v2164
  %v2175 = vpack.c.b16 %v2167, %v2166
  %2184 = vmatprep.subr.bf16.mxu0 0
  %2185 = vmatpush1.bf16.msra.mxu0 %v2168
  %2186 = vmatprep.subr.bf16.mxu0 0
  %2187 = vmatpush1.bf16.msra.mxu0 %v2169
  %2188 = vmatprep.subr.bf16.mxu0 0
  %2189 = vmatpush1.bf16.msra.mxu0 %v2170
  %2190 = vmatprep.subr.bf16.mxu0 0
  %2191 = vmatpush1.bf16.msra.mxu0 %v2171
  %2192 = vmatprep.subr.bf16.mxu0 0
  %2193 = vmatpush1.bf16.msra.mxu0 %v2172
  %2194 = vmatprep.subr.bf16.mxu0 0
  %2195 = vmatpush1.bf16.msra.mxu0 %v2173
  %2196 = vmatprep.subr.bf16.mxu0 0
  %2197 = vmatpush1.bf16.msra.mxu0 %v2174
  %2198 = vmatprep.subr.bf16.mxu0 0
  %2199 = vmatpush1.bf16.msra.mxu0 %v2175
  %2200 = vmatprep.subr.bf16.mxu0 0
  %2201 = vmatpush1.bf16.msra.mxu0 0
  %2202 = vmatprep.subr.bf16.mxu0 0
  %2203 = vmatpush1.bf16.msra.mxu0 0
  %2204 = vmatprep.subr.bf16.mxu0 0
  %2205 = vmatpush1.bf16.msra.mxu0 0
  %2206 = vmatprep.subr.bf16.mxu0 0
  %2207 = vmatpush1.bf16.msra.mxu0 0
  %2208 = vmatprep.subr.bf16.mxu0 0
  %2209 = vmatpush1.bf16.msra.mxu0 0
  %2210 = vmatprep.subr.bf16.mxu0 0
  %2211 = vmatpush1.bf16.msra.mxu0 0
  %2212 = vmatprep.subr.bf16.mxu0 0
  %2213 = vmatpush1.bf16.msra.mxu0 0
  %2214 = vmatprep.subr.bf16.mxu0 0
  %2215 = vmatpush1.bf16.msra.mxu0 0
  %2216 = vmatprep.mubr.bf16.mxu0 0
  %2217 = vmatmul.mubr.bf16.gmra.mrb[0].mxu0 %v1926
  %v2218 = vpop.f32.mrb[0].mxu0
  %v2219 = vadd.f32 %v2074, %v2218
  %v2220 = vpop.f32.mrb[0].mxu0
  %v2221 = vpop.f32.mrb[0].mxu0
  %v2222 = vadd.f32 %v2077, %v2221
  %v2223 = vpop.f32.mrb[0].mxu0
  %2224 = vmatprep.mubr.bf16.mxu0 0
  %2225 = vmatmul.mubr.bf16.gmra.mrb[0].mxu0 %v1927
  %v2226 = vpop.f32.mrb[0].mxu0
  %v2227 = vadd.f32 %v2082, %v2226
  %v2228 = vpop.f32.mrb[0].mxu0
  %v2229 = vpop.f32.mrb[0].mxu0
  %v2230 = vadd.f32 %v2085, %v2229
  %v2231 = vpop.f32.mrb[0].mxu0
  %2232 = vmatprep.mubr.bf16.mxu0 0
  %2233 = vmatmul.mubr.bf16.gmra.mrb[0].mxu0 %v1928
  %v2234 = vpop.f32.mrb[0].mxu0
  %v2235 = vadd.f32 %v2090, %v2234
  %v2236 = vpop.f32.mrb[0].mxu0
  %v2237 = vpop.f32.mrb[0].mxu0
  %v2238 = vadd.f32 %v2093, %v2237
  %v2239 = vpop.f32.mrb[0].mxu0
  %2240 = vmatprep.mubr.bf16.mxu0 0
  %2241 = vmatmul.mubr.bf16.gmra.mrb[0].mxu0 %v1929
  %v2242 = vpop.f32.mrb[0].mxu0
  %v2243 = vadd.f32 %v2098, %v2242
  %v2244 = vpop.f32.mrb[0].mxu0
  %v2245 = vpop.f32.mrb[0].mxu0
  %v2246 = vadd.f32 %v2101, %v2245
  %v2247 = vpop.f32.mrb[0].mxu0
  %2248 = vmatprep.mubr.bf16.mxu0 0
  %2249 = vmatmul.mubr.bf16.gmra.mrb[0].mxu0 %v1930
  %v2250 = vpop.f32.mrb[0].mxu0
  %v2251 = vadd.f32 %v2106, %v2250
  %v2252 = vpop.f32.mrb[0].mxu0
  %v2253 = vpop.f32.mrb[0].mxu0
  %v2254 = vadd.f32 %v2109, %v2253
  %v2255 = vpop.f32.mrb[0].mxu0
  %2256 = vmatprep.mubr.bf16.mxu0 0
  %2257 = vmatmul.mubr.bf16.gmra.mrb[0].mxu0 %v1931
  %v2258 = vpop.f32.mrb[0].mxu0
  %v2259 = vadd.f32 %v2114, %v2258
  %v2260 = vpop.f32.mrb[0].mxu0
  %v2261 = vpop.f32.mrb[0].mxu0
  %v2262 = vadd.f32 %v2117, %v2261
  %v2263 = vpop.f32.mrb[0].mxu0
  %2264 = vmatprep.mubr.bf16.mxu0 0
  %2265 = vmatmul.mubr.bf16.gmra.mrb[0].mxu0 %v1932
  %v2266 = vpop.f32.mrb[0].mxu0
  %v2267 = vadd.f32 %v2122, %v2266
  %v2268 = vpop.f32.mrb[0].mxu0
  %v2269 = vpop.f32.mrb[0].mxu0
  %v2270 = vadd.f32 %v2125, %v2269
  %v2271 = vpop.f32.mrb[0].mxu0
  %2272 = vmatprep.mubr.bf16.mxu0 0
  %2273 = vmatmul.mubr.bf16.gmra.mrb[0].mxu0 %v1933
  %v2274 = vpop.f32.mrb[0].mxu0
  %v2275 = vadd.f32 %v2130, %v2274
  %v2276 = vpop.f32.mrb[0].mxu0
  %v2277 = vpop.f32.mrb[0].mxu0
  %v2278 = vadd.f32 %v2133, %v2277
  %v2279 = vpop.f32.mrb[0].mxu0
  %2280 = vdwg.mxu0
  %v2281 = vld [vmem:[#allocation2 + $0x2] sm:$0xff]
  %v2282 = vld [vmem:[#allocation2 + $0x12] sm:$0xff]
  %v2283 = vld [vmem:[#allocation2 + $0x22] sm:$0xff]
  %v2284 = vld [vmem:[#allocation2 + $0x32] sm:$0xff]
  %v2285 = vld [vmem:[#allocation2 + $0x42] sm:$0xff]
  %v2286 = vld [vmem:[#allocation2 + $0x52] sm:$0xff]
  %v2287 = vld [vmem:[#allocation2 + $0x62] sm:$0xff]
  %v2288 = vld [vmem:[#allocation2 + $0x72] sm:$0xff]
  %v2289 = vld [vmem:[#allocation2 + $0xc2] sm:$0xff]
  %v2290 = vld [vmem:[#allocation2 + $0xd2] sm:$0xff]
  %v2291 = vld [vmem:[#allocation2 + $0xe2] sm:$0xff]
  %v2292 = vld [vmem:[#allocation2 + $0xf2] sm:$0xff]
  %v2293 = vld [vmem:[#allocation2 + $0x102] sm:$0xff]
  %v2294 = vld [vmem:[#allocation2 + $0x112] sm:$0xff]
  %v2295 = vld [vmem:[#allocation2 + $0x122] sm:$0xff]
  %v2296 = vld [vmem:[#allocation2 + $0x132] sm:$0xff]
  %v2297 = vpack.c.bf16 %v2282, %v2281
  %v2298 = vpack.c.bf16 %v2284, %v2283
  %v2299 = vpack.c.bf16 %v2286, %v2285
  %v2300 = vpack.c.bf16 %v2288, %v2287
  %v2301 = vpack.c.bf16 %v2290, %v2289
  %v2302 = vpack.c.bf16 %v2292, %v2291
  %v2303 = vpack.c.bf16 %v2294, %v2293
  %v2304 = vpack.c.bf16 %v2296, %v2295
  %s2305 = scalar_lea.vmem %s4, 128
  %v2306 = vld [vmem:[%s2305] sm:$0xf]
  %v2307 = vld [vmem:[%s2305 + $0x4] sm:$0xf]
  %v2308 = vld [vmem:[%s2305 + $0x8] sm:$0xf]
  %v2309 = vld [vmem:[%s2305 + $0xc] sm:$0xf]
  %v2310 = vld [vmem:[%s2305 + $0x10] sm:$0xf]
  %v2311 = vld [vmem:[%s2305 + $0x14] sm:$0xf]
  %v2312 = vld [vmem:[%s2305 + $0x18] sm:$0xf]
  %v2313 = vld [vmem:[%s2305 + $0x1c] sm:$0xf]
  %v2314 = vld [vmem:[%s2305 + $0x20] sm:$0xf]
  %v2315 = vld [vmem:[%s2305 + $0x24] sm:$0xf]
  %v2316 = vld [vmem:[%s2305 + $0x28] sm:$0xf]
  %v2317 = vld [vmem:[%s2305 + $0x2c] sm:$0xf]
  %v2318 = vld [vmem:[%s2305 + $0x30] sm:$0xf]
  %v2319 = vld [vmem:[%s2305 + $0x34] sm:$0xf]
  %v2320 = vld [vmem:[%s2305 + $0x38] sm:$0xf]
  %v2321 = vld [vmem:[%s2305 + $0x3c] sm:$0xf]
  %v2338 = vunpack.c.l.b16 %v2306
  %v2339 = vunpack.c.l.b16 %v2307
  %v2340 = vunpack.c.l.b16 %v2308
  %v2341 = vunpack.c.l.b16 %v2309
  %v2342 = vunpack.c.l.b16 %v2310
  %v2343 = vunpack.c.l.b16 %v2311
  %v2344 = vunpack.c.l.b16 %v2312
  %v2345 = vunpack.c.l.b16 %v2313
  %v2346 = vunpack.c.l.b16 %v2314
  %v2347 = vunpack.c.l.b16 %v2315
  %v2348 = vunpack.c.l.b16 %v2316
  %v2349 = vunpack.c.l.b16 %v2317
  %v2350 = vunpack.c.l.b16 %v2318
  %v2351 = vunpack.c.l.b16 %v2319
  %v2352 = vunpack.c.l.b16 %v2320
  %v2353 = vunpack.c.l.b16 %v2321
  %v2354 = vpack.c.b16 %v2339, %v2338
  %v2355 = vpack.c.b16 %v2341, %v2340
  %v2356 = vpack.c.b16 %v2343, %v2342
  %v2357 = vpack.c.b16 %v2345, %v2344
  %v2358 = vpack.c.b16 %v2347, %v2346
  %v2359 = vpack.c.b16 %v2349, %v2348
  %v2360 = vpack.c.b16 %v2351, %v2350
  %v2361 = vpack.c.b16 %v2353, %v2352
  %2370 = vmatprep.subr.bf16.mxu0 0
  %2371 = vmatpush1.bf16.msra.mxu0 %v2354
  %2372 = vmatprep.subr.bf16.mxu0 0
  %2373 = vmatpush1.bf16.msra.mxu0 %v2355
  %2374 = vmatprep.subr.bf16.mxu0 0
  %2375 = vmatpush1.bf16.msra.mxu0 %v2356
  %2376 = vmatprep.subr.bf16.mxu0 0
  %2377 = vmatpush1.bf16.msra.mxu0 %v2357
  %2378 = vmatprep.subr.bf16.mxu0 0
  %2379 = vmatpush1.bf16.msra.mxu0 %v2358
  %2380 = vmatprep.subr.bf16.mxu0 0
  %2381 = vmatpush1.bf16.msra.mxu0 %v2359
  %2382 = vmatprep.subr.bf16.mxu0 0
  %2383 = vmatpush1.bf16.msra.mxu0 %v2360
  %2384 = vmatprep.subr.bf16.mxu0 0
  %2385 = vmatpush1.bf16.msra.mxu0 %v2361
  %2386 = vmatprep.subr.bf16.mxu0 0
  %2387 = vmatpush1.bf16.msra.mxu0 0
  %2388 = vmatprep.subr.bf16.mxu0 0
  %2389 = vmatpush1.bf16.msra.mxu0 0
  %2390 = vmatprep.subr.bf16.mxu0 0
  %2391 = vmatpush1.bf16.msra.mxu0 0
  %2392 = vmatprep.subr.bf16.mxu0 0
  %2393 = vmatpush1.bf16.msra.mxu0 0
  %2394 = vmatprep.subr.bf16.mxu0 0
  %2395 = vmatpush1.bf16.msra.mxu0 0
  %2396 = vmatprep.subr.bf16.mxu0 0
  %2397 = vmatpush1.bf16.msra.mxu0 0
  %2398 = vmatprep.subr.bf16.mxu0 0
  %2399 = vmatpush1.bf16.msra.mxu0 0
  %2400 = vmatprep.subr.bf16.mxu0 0
  %2401 = vmatpush1.bf16.msra.mxu0 0
  %2402 = vmatprep.mubr.bf16.mxu0 0
  %2403 = vmatmul.mubr.bf16.gmra.mrb[0].mxu0 %v2297
  %v2404 = vpop.f32.mrb[0].mxu0
  %v2405 = vadd.f32 0.0, %v2404
  %v2406 = vpop.f32.mrb[0].mxu0
  %v2407 = vpop.f32.mrb[0].mxu0
  %v2408 = vadd.f32 0.0, %v2407
  %v2409 = vpop.f32.mrb[0].mxu0
  %2410 = vmatprep.mubr.bf16.mxu0 0
  %2411 = vmatmul.mubr.bf16.gmra.mrb[0].mxu0 %v2298
  %v2412 = vpop.f32.mrb[0].mxu0
  %v2413 = vadd.f32 0.0, %v2412
  %v2414 = vpop.f32.mrb[0].mxu0
  %v2415 = vpop.f32.mrb[0].mxu0
  %v2416 = vadd.f32 0.0, %v2415
  %v2417 = vpop.f32.mrb[0].mxu0
  %2418 = vmatprep.mubr.bf16.mxu0 0
  %2419 = vmatmul.mubr.bf16.gmra.mrb[0].mxu0 %v2299
  %v2420 = vpop.f32.mrb[0].mxu0
  %v2421 = vadd.f32 0.0, %v2420
  %v2422 = vpop.f32.mrb[0].mxu0
  %v2423 = vpop.f32.mrb[0].mxu0
  %v2424 = vadd.f32 0.0, %v2423
  %v2425 = vpop.f32.mrb[0].mxu0
  %2426 = vmatprep.mubr.bf16.mxu0 0
  %2427 = vmatmul.mubr.bf16.gmra.mrb[0].mxu0 %v2300
  %v2428 = vpop.f32.mrb[0].mxu0
  %v2429 = vadd.f32 0.0, %v2428
  %v2430 = vpop.f32.mrb[0].mxu0
  %v2431 = vpop.f32.mrb[0].mxu0
  %v2432 = vadd.f32 0.0, %v2431
  %v2433 = vpop.f32.mrb[0].mxu0
  %2434 = vmatprep.mubr.bf16.mxu0 0
  %2435 = vmatmul.mubr.bf16.gmra.mrb[0].mxu0 %v2301
  %v2436 = vpop.f32.mrb[0].mxu0
  %v2437 = vadd.f32 0.0, %v2436
  %v2438 = vpop.f32.mrb[0].mxu0
  %v2439 = vpop.f32.mrb[0].mxu0
  %v2440 = vadd.f32 0.0, %v2439
  %v2441 = vpop.f32.mrb[0].mxu0
  %2442 = vmatprep.mubr.bf16.mxu0 0
  %2443 = vmatmul.mubr.bf16.gmra.mrb[0].mxu0 %v2302
  %v2444 = vpop.f32.mrb[0].mxu0
  %v2445 = vadd.f32 0.0, %v2444
  %v2446 = vpop.f32.mrb[0].mxu0
  %v2447 = vpop.f32.mrb[0].mxu0
  %v2448 = vadd.f32 0.0, %v2447
  %v2449 = vpop.f32.mrb[0].mxu0
  %2450 = vmatprep.mubr.bf16.mxu0 0
  %2451 = vmatmul.mubr.bf16.gmra.mrb[0].mxu0 %v2303
  %v2452 = vpop.f32.mrb[0].mxu0
  %v2453 = vadd.f32 0.0, %v2452
  %v2454 = vpop.f32.mrb[0].mxu0
  %v2455 = vpop.f32.mrb[0].mxu0
  %v2456 = vadd.f32 0.0, %v2455
  %v2457 = vpop.f32.mrb[0].mxu0
  %2458 = vmatprep.mubr.bf16.mxu0 0
  %2459 = vmatmul.mubr.bf16.gmra.mrb[0].mxu0 %v2304
  %v2460 = vpop.f32.mrb[0].mxu0
  %v2461 = vadd.f32 0.0, %v2460
  %v2462 = vpop.f32.mrb[0].mxu0
  %v2463 = vpop.f32.mrb[0].mxu0
  %v2464 = vadd.f32 0.0, %v2463
  %v2465 = vpop.f32.mrb[0].mxu0
  %2466 = vdwg.mxu0
  %v2467 = vadd.f32 %v2219, %v2405
  %v2468 = vadd.f32 %v2222, %v2408
  %v2469 = vadd.f32 %v2227, %v2413
  %v2470 = vadd.f32 %v2230, %v2416
  %v2471 = vadd.f32 %v2235, %v2421
  %v2472 = vadd.f32 %v2238, %v2424
  %v2473 = vadd.f32 %v2243, %v2429
  %v2474 = vadd.f32 %v2246, %v2432
  %v2475 = vadd.f32 %v2251, %v2437
  %v2476 = vadd.f32 %v2254, %v2440
  %v2477 = vadd.f32 %v2259, %v2445
  %v2478 = vadd.f32 %v2262, %v2448
  %v2479 = vadd.f32 %v2267, %v2453
  %v2480 = vadd.f32 %v2270, %v2456
  %v2481 = vadd.f32 %v2275, %v2461
  %v2482 = vadd.f32 %v2278, %v2464
  %v2483 = vld [vmem:[#allocation2 + $0x3] sm:$0xff]
  %v2484 = vld [vmem:[#allocation2 + $0x13] sm:$0xff]
  %v2485 = vld [vmem:[#allocation2 + $0x23] sm:$0xff]
  %v2486 = vld [vmem:[#allocation2 + $0x33] sm:$0xff]
  %v2487 = vld [vmem:[#allocation2 + $0x43] sm:$0xff]
  %v2488 = vld [vmem:[#allocation2 + $0x53] sm:$0xff]
  %v2489 = vld [vmem:[#allocation2 + $0x63] sm:$0xff]
  %v2490 = vld [vmem:[#allocation2 + $0x73] sm:$0xff]
  %v2491 = vld [vmem:[#allocation2 + $0xc3] sm:$0xff]
  %v2492 = vld [vmem:[#allocation2 + $0xd3] sm:$0xff]
  %v2493 = vld [vmem:[#allocation2 + $0xe3] sm:$0xff]
  %v2494 = vld [vmem:[#allocation2 + $0xf3] sm:$0xff]
  %v2495 = vld [vmem:[#allocation2 + $0x103] sm:$0xff]
  %v2496 = vld [vmem:[#allocation2 + $0x113] sm:$0xff]
  %v2497 = vld [vmem:[#allocation2 + $0x123] sm:$0xff]
  %v2498 = vld [vmem:[#allocation2 + $0x133] sm:$0xff]
  %v2499 = vpack.c.bf16 %v2484, %v2483
  %v2500 = vpack.c.bf16 %v2486, %v2485
  %v2501 = vpack.c.bf16 %v2488, %v2487
  %v2502 = vpack.c.bf16 %v2490, %v2489
  %v2503 = vpack.c.bf16 %v2492, %v2491
  %v2504 = vpack.c.bf16 %v2494, %v2493
  %v2505 = vpack.c.bf16 %v2496, %v2495
  %v2506 = vpack.c.bf16 %v2498, %v2497
  %s2507 = scalar_lea.vmem %s4, 192
  %v2508 = vld [vmem:[%s2507] sm:$0xf]
  %v2509 = vld [vmem:[%s2507 + $0x4] sm:$0xf]
  %v2510 = vld [vmem:[%s2507 + $0x8] sm:$0xf]
  %v2511 = vld [vmem:[%s2507 + $0xc] sm:$0xf]
  %v2512 = vld [vmem:[%s2507 + $0x10] sm:$0xf]
  %v2513 = vld [vmem:[%s2507 + $0x14] sm:$0xf]
  %v2514 = vld [vmem:[%s2507 + $0x18] sm:$0xf]
  %v2515 = vld [vmem:[%s2507 + $0x1c] sm:$0xf]
  %v2516 = vld [vmem:[%s2507 + $0x20] sm:$0xf]
  %v2517 = vld [vmem:[%s2507 + $0x24] sm:$0xf]
  %v2518 = vld [vmem:[%s2507 + $0x28] sm:$0xf]
  %v2519 = vld [vmem:[%s2507 + $0x2c] sm:$0xf]
  %v2520 = vld [vmem:[%s2507 + $0x30] sm:$0xf]
  %v2521 = vld [vmem:[%s2507 + $0x34] sm:$0xf]
  %v2522 = vld [vmem:[%s2507 + $0x38] sm:$0xf]
  %v2523 = vld [vmem:[%s2507 + $0x3c] sm:$0xf]
  %v2540 = vunpack.c.l.b16 %v2508
  %v2541 = vunpack.c.l.b16 %v2509
  %v2542 = vunpack.c.l.b16 %v2510
  %v2543 = vunpack.c.l.b16 %v2511
  %v2544 = vunpack.c.l.b16 %v2512
  %v2545 = vunpack.c.l.b16 %v2513
  %v2546 = vunpack.c.l.b16 %v2514
  %v2547 = vunpack.c.l.b16 %v2515
  %v2548 = vunpack.c.l.b16 %v2516
  %v2549 = vunpack.c.l.b16 %v2517
  %v2550 = vunpack.c.l.b16 %v2518
  %v2551 = vunpack.c.l.b16 %v2519
  %v2552 = vunpack.c.l.b16 %v2520
  %v2553 = vunpack.c.l.b16 %v2521
  %v2554 = vunpack.c.l.b16 %v2522
  %v2555 = vunpack.c.l.b16 %v2523
  %v2556 = vpack.c.b16 %v2541, %v2540
  %v2557 = vpack.c.b16 %v2543, %v2542
  %v2558 = vpack.c.b16 %v2545, %v2544
  %v2559 = vpack.c.b16 %v2547, %v2546
  %v2560 = vpack.c.b16 %v2549, %v2548
  %v2561 = vpack.c.b16 %v2551, %v2550
  %v2562 = vpack.c.b16 %v2553, %v2552
  %v2563 = vpack.c.b16 %v2555, %v2554
  %2572 = vmatprep.subr.bf16.mxu0 0
  %2573 = vmatpush1.bf16.msra.mxu0 %v2556
  %2574 = vmatprep.subr.bf16.mxu0 0
  %2575 = vmatpush1.bf16.msra.mxu0 %v2557
  %2576 = vmatprep.subr.bf16.mxu0 0
  %2577 = vmatpush1.bf16.msra.mxu0 %v2558
  %2578 = vmatprep.subr.bf16.mxu0 0
  %2579 = vmatpush1.bf16.msra.mxu0 %v2559
  %2580 = vmatprep.subr.bf16.mxu0 0
  %2581 = vmatpush1.bf16.msra.mxu0 %v2560
  %2582 = vmatprep.subr.bf16.mxu0 0
  %2583 = vmatpush1.bf16.msra.mxu0 %v2561
  %2584 = vmatprep.subr.bf16.mxu0 0
  %2585 = vmatpush1.bf16.msra.mxu0 %v2562
  %2586 = vmatprep.subr.bf16.mxu0 0
  %2587 = vmatpush1.bf16.msra.mxu0 %v2563
  %2588 = vmatprep.subr.bf16.mxu0 0
  %2589 = vmatpush1.bf16.msra.mxu0 0
  %2590 = vmatprep.subr.bf16.mxu0 0
  %2591 = vmatpush1.bf16.msra.mxu0 0
  %2592 = vmatprep.subr.bf16.mxu0 0
  %2593 = vmatpush1.bf16.msra.mxu0 0
  %2594 = vmatprep.subr.bf16.mxu0 0
  %2595 = vmatpush1.bf16.msra.mxu0 0
  %2596 = vmatprep.subr.bf16.mxu0 0
  %2597 = vmatpush1.bf16.msra.mxu0 0
  %2598 = vmatprep.subr.bf16.mxu0 0
  %2599 = vmatpush1.bf16.msra.mxu0 0
  %2600 = vmatprep.subr.bf16.mxu0 0
  %2601 = vmatpush1.bf16.msra.mxu0 0
  %2602 = vmatprep.subr.bf16.mxu0 0
  %2603 = vmatpush1.bf16.msra.mxu0 0
  %2604 = vmatprep.mubr.bf16.mxu0 0
  %2605 = vmatmul.mubr.bf16.gmra.mrb[0].mxu0 %v2499
  %v2606 = vpop.f32.mrb[0].mxu0
  %v2607 = vadd.f32 0.0, %v2606
  %v2608 = vpop.f32.mrb[0].mxu0
  %v2609 = vpop.f32.mrb[0].mxu0
  %v2610 = vadd.f32 0.0, %v2609
  %v2611 = vpop.f32.mrb[0].mxu0
  %2612 = vmatprep.mubr.bf16.mxu0 0
  %2613 = vmatmul.mubr.bf16.gmra.mrb[0].mxu0 %v2500
  %v2614 = vpop.f32.mrb[0].mxu0
  %v2615 = vadd.f32 0.0, %v2614
  %v2616 = vpop.f32.mrb[0].mxu0
  %v2617 = vpop.f32.mrb[0].mxu0
  %v2618 = vadd.f32 0.0, %v2617
  %v2619 = vpop.f32.mrb[0].mxu0
  %2620 = vmatprep.mubr.bf16.mxu0 0
  %2621 = vmatmul.mubr.bf16.gmra.mrb[0].mxu0 %v2501
  %v2622 = vpop.f32.mrb[0].mxu0
  %v2623 = vadd.f32 0.0, %v2622
  %v2624 = vpop.f32.mrb[0].mxu0
  %v2625 = vpop.f32.mrb[0].mxu0
  %v2626 = vadd.f32 0.0, %v2625
  %v2627 = vpop.f32.mrb[0].mxu0
  %2628 = vmatprep.mubr.bf16.mxu0 0
  %2629 = vmatmul.mubr.bf16.gmra.mrb[0].mxu0 %v2502
  %v2630 = vpop.f32.mrb[0].mxu0
  %v2631 = vadd.f32 0.0, %v2630
  %v2632 = vpop.f32.mrb[0].mxu0
  %v2633 = vpop.f32.mrb[0].mxu0
  %v2634 = vadd.f32 0.0, %v2633
  %v2635 = vpop.f32.mrb[0].mxu0
  %2636 = vmatprep.mubr.bf16.mxu0 0
  %2637 = vmatmul.mubr.bf16.gmra.mrb[0].mxu0 %v2503
  %v2638 = vpop.f32.mrb[0].mxu0
  %v2639 = vadd.f32 0.0, %v2638
  %v2640 = vpop.f32.mrb[0].mxu0
  %v2641 = vpop.f32.mrb[0].mxu0
  %v2642 = vadd.f32 0.0, %v2641
  %v2643 = vpop.f32.mrb[0].mxu0
  %2644 = vmatprep.mubr.bf16.mxu0 0
  %2645 = vmatmul.mubr.bf16.gmra.mrb[0].mxu0 %v2504
  %v2646 = vpop.f32.mrb[0].mxu0
  %v2647 = vadd.f32 0.0, %v2646
  %v2648 = vpop.f32.mrb[0].mxu0
  %v2649 = vpop.f32.mrb[0].mxu0
  %v2650 = vadd.f32 0.0, %v2649
  %v2651 = vpop.f32.mrb[0].mxu0
  %2652 = vmatprep.mubr.bf16.mxu0 0
  %2653 = vmatmul.mubr.bf16.gmra.mrb[0].mxu0 %v2505
  %v2654 = vpop.f32.mrb[0].mxu0
  %v2655 = vadd.f32 0.0, %v2654
  %v2656 = vpop.f32.mrb[0].mxu0
  %v2657 = vpop.f32.mrb[0].mxu0
  %v2658 = vadd.f32 0.0, %v2657
  %v2659 = vpop.f32.mrb[0].mxu0
  %2660 = vmatprep.mubr.bf16.mxu0 0
  %2661 = vmatmul.mubr.bf16.gmra.mrb[0].mxu0 %v2506
  %v2662 = vpop.f32.mrb[0].mxu0
  %v2663 = vadd.f32 0.0, %v2662
  %v2664 = vpop.f32.mrb[0].mxu0
  %v2665 = vpop.f32.mrb[0].mxu0
  %v2666 = vadd.f32 0.0, %v2665
  %v2667 = vpop.f32.mrb[0].mxu0
  %2668 = vdwg.mxu0
  %v2669 = vadd.f32 %v2467, %v2607
  %v2670 = vadd.f32 %v2468, %v2610
  %v2671 = vadd.f32 %v2469, %v2615
  %v2672 = vadd.f32 %v2470, %v2618
  %v2673 = vadd.f32 %v2471, %v2623
  %v2674 = vadd.f32 %v2472, %v2626
  %v2675 = vadd.f32 %v2473, %v2631
  %v2676 = vadd.f32 %v2474, %v2634
  %v2677 = vadd.f32 %v2475, %v2639
  %v2678 = vadd.f32 %v2476, %v2642
  %v2679 = vadd.f32 %v2477, %v2647
  %v2680 = vadd.f32 %v2478, %v2650
  %v2681 = vadd.f32 %v2479, %v2655
  %v2682 = vadd.f32 %v2480, %v2658
  %v2683 = vadd.f32 %v2481, %v2663
  %v2684 = vadd.f32 %v2482, %v2666
  %v2685 = vld [vmem:[#allocation2 + $0x4] sm:$0xff]
  %v2686 = vld [vmem:[#allocation2 + $0x14] sm:$0xff]
  %v2687 = vld [vmem:[#allocation2 + $0x24] sm:$0xff]
  %v2688 = vld [vmem:[#allocation2 + $0x34] sm:$0xff]
  %v2689 = vld [vmem:[#allocation2 + $0x44] sm:$0xff]
  %v2690 = vld [vmem:[#allocation2 + $0x54] sm:$0xff]
  %v2691 = vld [vmem:[#allocation2 + $0x64] sm:$0xff]
  %v2692 = vld [vmem:[#allocation2 + $0x74] sm:$0xff]
  %v2693 = vld [vmem:[#allocation2 + $0xc4] sm:$0xff]
  %v2694 = vld [vmem:[#allocation2 + $0xd4] sm:$0xff]
  %v2695 = vld [vmem:[#allocation2 + $0xe4] sm:$0xff]
  %v2696 = vld [vmem:[#allocation2 + $0xf4] sm:$0xff]
  %v2697 = vld [vmem:[#allocation2 + $0x104] sm:$0xff]
  %v2698 = vld [vmem:[#allocation2 + $0x114] sm:$0xff]
  %v2699 = vld [vmem:[#allocation2 + $0x124] sm:$0xff]
  %v2700 = vld [vmem:[#allocation2 + $0x134] sm:$0xff]
  %v2701 = vpack.c.bf16 %v2686, %v2685
  %v2702 = vpack.c.bf16 %v2688, %v2687
  %v2703 = vpack.c.bf16 %v2690, %v2689
  %v2704 = vpack.c.bf16 %v2692, %v2691
  %v2705 = vpack.c.bf16 %v2694, %v2693
  %v2706 = vpack.c.bf16 %v2696, %v2695
  %v2707 = vpack.c.bf16 %v2698, %v2697
  %v2708 = vpack.c.bf16 %v2700, %v2699
  %s2709 = scalar_lea.vmem %s4, 256
  %v2710 = vld [vmem:[%s2709] sm:$0xf]
  %v2711 = vld [vmem:[%s2709 + $0x4] sm:$0xf]
  %v2712 = vld [vmem:[%s2709 + $0x8] sm:$0xf]
  %v2713 = vld [vmem:[%s2709 + $0xc] sm:$0xf]
  %v2714 = vld [vmem:[%s2709 + $0x10] sm:$0xf]
  %v2715 = vld [vmem:[%s2709 + $0x14] sm:$0xf]
  %v2716 = vld [vmem:[%s2709 + $0x18] sm:$0xf]
  %v2717 = vld [vmem:[%s2709 + $0x1c] sm:$0xf]
  %v2718 = vld [vmem:[%s2709 + $0x20] sm:$0xf]
  %v2719 = vld [vmem:[%s2709 + $0x24] sm:$0xf]
  %v2720 = vld [vmem:[%s2709 + $0x28] sm:$0xf]
  %v2721 = vld [vmem:[%s2709 + $0x2c] sm:$0xf]
  %v2722 = vld [vmem:[%s2709 + $0x30] sm:$0xf]
  %v2723 = vld [vmem:[%s2709 + $0x34] sm:$0xf]
  %v2724 = vld [vmem:[%s2709 + $0x38] sm:$0xf]
  %v2725 = vld [vmem:[%s2709 + $0x3c] sm:$0xf]
  %v2742 = vunpack.c.l.b16 %v2710
  %v2743 = vunpack.c.l.b16 %v2711
  %v2744 = vunpack.c.l.b16 %v2712
  %v2745 = vunpack.c.l.b16 %v2713
  %v2746 = vunpack.c.l.b16 %v2714
  %v2747 = vunpack.c.l.b16 %v2715
  %v2748 = vunpack.c.l.b16 %v2716
  %v2749 = vunpack.c.l.b16 %v2717
  %v2750 = vunpack.c.l.b16 %v2718
  %v2751 = vunpack.c.l.b16 %v2719
  %v2752 = vunpack.c.l.b16 %v2720
  %v2753 = vunpack.c.l.b16 %v2721
  %v2754 = vunpack.c.l.b16 %v2722
  %v2755 = vunpack.c.l.b16 %v2723
  %v2756 = vunpack.c.l.b16 %v2724
  %v2757 = vunpack.c.l.b16 %v2725
  %v2758 = vpack.c.b16 %v2743, %v2742
  %v2759 = vpack.c.b16 %v2745, %v2744
  %v2760 = vpack.c.b16 %v2747, %v2746
  %v2761 = vpack.c.b16 %v2749, %v2748
  %v2762 = vpack.c.b16 %v2751, %v2750
  %v2763 = vpack.c.b16 %v2753, %v2752
  %v2764 = vpack.c.b16 %v2755, %v2754
  %v2765 = vpack.c.b16 %v2757, %v2756
  %2774 = vmatprep.subr.bf16.mxu0 0
  %2775 = vmatpush1.bf16.msra.mxu0 %v2758
  %2776 = vmatprep.subr.bf16.mxu0 0
  %2777 = vmatpush1.bf16.msra.mxu0 %v2759
  %2778 = vmatprep.subr.bf16.mxu0 0
  %2779 = vmatpush1.bf16.msra.mxu0 %v2760
  %2780 = vmatprep.subr.bf16.mxu0 0
  %2781 = vmatpush1.bf16.msra.mxu0 %v2761
  %2782 = vmatprep.subr.bf16.mxu0 0
  %2783 = vmatpush1.bf16.msra.mxu0 %v2762
  %2784 = vmatprep.subr.bf16.mxu0 0
  %2785 = vmatpush1.bf16.msra.mxu0 %v2763
  %2786 = vmatprep.subr.bf16.mxu0 0
  %2787 = vmatpush1.bf16.msra.mxu0 %v2764
  %2788 = vmatprep.subr.bf16.mxu0 0
  %2789 = vmatpush1.bf16.msra.mxu0 %v2765
  %2790 = vmatprep.subr.bf16.mxu0 0
  %2791 = vmatpush1.bf16.msra.mxu0 0
  %2792 = vmatprep.subr.bf16.mxu0 0
  %2793 = vmatpush1.bf16.msra.mxu0 0
  %2794 = vmatprep.subr.bf16.mxu0 0
  %2795 = vmatpush1.bf16.msra.mxu0 0
  %2796 = vmatprep.subr.bf16.mxu0 0
  %2797 = vmatpush1.bf16.msra.mxu0 0
  %2798 = vmatprep.subr.bf16.mxu0 0
  %2799 = vmatpush1.bf16.msra.mxu0 0
  %2800 = vmatprep.subr.bf16.mxu0 0
  %2801 = vmatpush1.bf16.msra.mxu0 0
  %2802 = vmatprep.subr.bf16.mxu0 0
  %2803 = vmatpush1.bf16.msra.mxu0 0
  %2804 = vmatprep.subr.bf16.mxu0 0
  %2805 = vmatpush1.bf16.msra.mxu0 0
  %2806 = vmatprep.mubr.bf16.mxu0 0
  %2807 = vmatmul.mubr.bf16.gmra.mrb[0].mxu0 %v2701
  %v2808 = vpop.f32.mrb[0].mxu0
  %v2809 = vadd.f32 0.0, %v2808
  %v2810 = vpop.f32.mrb[0].mxu0
  %v2811 = vpop.f32.mrb[0].mxu0
  %v2812 = vadd.f32 0.0, %v2811
  %v2813 = vpop.f32.mrb[0].mxu0
  %2814 = vmatprep.mubr.bf16.mxu0 0
  %2815 = vmatmul.mubr.bf16.gmra.mrb[0].mxu0 %v2702
  %v2816 = vpop.f32.mrb[0].mxu0
  %v2817 = vadd.f32 0.0, %v2816
  %v2818 = vpop.f32.mrb[0].mxu0
  %v2819 = vpop.f32.mrb[0].mxu0
  %v2820 = vadd.f32 0.0, %v2819
  %v2821 = vpop.f32.mrb[0].mxu0
  %2822 = vmatprep.mubr.bf16.mxu0 0
  %2823 = vmatmul.mubr.bf16.gmra.mrb[0].mxu0 %v2703
  %v2824 = vpop.f32.mrb[0].mxu0
  %v2825 = vadd.f32 0.0, %v2824
  %v2826 = vpop.f32.mrb[0].mxu0
  %v2827 = vpop.f32.mrb[0].mxu0
  %v2828 = vadd.f32 0.0, %v2827
  %v2829 = vpop.f32.mrb[0].mxu0
  %2830 = vmatprep.mubr.bf16.mxu0 0
  %2831 = vmatmul.mubr.bf16.gmra.mrb[0].mxu0 %v2704
  %v2832 = vpop.f32.mrb[0].mxu0
  %v2833 = vadd.f32 0.0, %v2832
  %v2834 = vpop.f32.mrb[0].mxu0
  %v2835 = vpop.f32.mrb[0].mxu0
  %v2836 = vadd.f32 0.0, %v2835
  %v2837 = vpop.f32.mrb[0].mxu0
  %2838 = vmatprep.mubr.bf16.mxu0 0
  %2839 = vmatmul.mubr.bf16.gmra.mrb[0].mxu0 %v2705
  %v2840 = vpop.f32.mrb[0].mxu0
  %v2841 = vadd.f32 0.0, %v2840
  %v2842 = vpop.f32.mrb[0].mxu0
  %v2843 = vpop.f32.mrb[0].mxu0
  %v2844 = vadd.f32 0.0, %v2843
  %v2845 = vpop.f32.mrb[0].mxu0
  %2846 = vmatprep.mubr.bf16.mxu0 0
  %2847 = vmatmul.mubr.bf16.gmra.mrb[0].mxu0 %v2706
  %v2848 = vpop.f32.mrb[0].mxu0
  %v2849 = vadd.f32 0.0, %v2848
  %v2850 = vpop.f32.mrb[0].mxu0
  %v2851 = vpop.f32.mrb[0].mxu0
  %v2852 = vadd.f32 0.0, %v2851
  %v2853 = vpop.f32.mrb[0].mxu0
  %2854 = vmatprep.mubr.bf16.mxu0 0
  %2855 = vmatmul.mubr.bf16.gmra.mrb[0].mxu0 %v2707
  %v2856 = vpop.f32.mrb[0].mxu0
  %v2857 = vadd.f32 0.0, %v2856
  %v2858 = vpop.f32.mrb[0].mxu0
  %v2859 = vpop.f32.mrb[0].mxu0
  %v2860 = vadd.f32 0.0, %v2859
  %v2861 = vpop.f32.mrb[0].mxu0
  %2862 = vmatprep.mubr.bf16.mxu0 0
  %2863 = vmatmul.mubr.bf16.gmra.mrb[0].mxu0 %v2708
  %v2864 = vpop.f32.mrb[0].mxu0
  %v2865 = vadd.f32 0.0, %v2864
  %v2866 = vpop.f32.mrb[0].mxu0
  %v2867 = vpop.f32.mrb[0].mxu0
  %v2868 = vadd.f32 0.0, %v2867
  %v2869 = vpop.f32.mrb[0].mxu0
  %2870 = vdwg.mxu0
  %v2871 = vadd.f32 %v2669, %v2809
  %v2872 = vadd.f32 %v2670, %v2812
  %v2873 = vadd.f32 %v2671, %v2817
  %v2874 = vadd.f32 %v2672, %v2820
  %v2875 = vadd.f32 %v2673, %v2825
  %v2876 = vadd.f32 %v2674, %v2828
  %v2877 = vadd.f32 %v2675, %v2833
  %v2878 = vadd.f32 %v2676, %v2836
  %v2879 = vadd.f32 %v2677, %v2841
  %v2880 = vadd.f32 %v2678, %v2844
  %v2881 = vadd.f32 %v2679, %v2849
  %v2882 = vadd.f32 %v2680, %v2852
  %v2883 = vadd.f32 %v2681, %v2857
  %v2884 = vadd.f32 %v2682, %v2860
  %v2885 = vadd.f32 %v2683, %v2865
  %v2886 = vadd.f32 %v2684, %v2868
  %s2887 = scalar_lea.vmem [#allocation2], 16
  %v2888 = vld [vmem:[%s2887] sm:$0xff]
  %v2889 = vld [vmem:[%s2887 + $0x10] sm:$0xff]
  %v2890 = vld [vmem:[%s2887 + $0x20] sm:$0xff]
  %v2891 = vld [vmem:[%s2887 + $0x30] sm:$0xff]
  %v2892 = vld [vmem:[%s2887 + $0x40] sm:$0xff]
  %v2893 = vld [vmem:[%s2887 + $0x50] sm:$0xff]
  %v2894 = vld [vmem:[%s2887 + $0x60] sm:$0xff]
  %v2895 = vld [vmem:[%s2887 + $0x70] sm:$0xff]
  %v2896 = vld [vmem:[%s2887 + $0xc0] sm:$0xff]
  %v2897 = vld [vmem:[%s2887 + $0xd0] sm:$0xff]
  %v2898 = vld [vmem:[%s2887 + $0xe0] sm:$0xff]
  %v2899 = vld [vmem:[%s2887 + $0xf0] sm:$0xff]
  %v2900 = vld [vmem:[%s2887 + $0x100] sm:$0xff]
  %v2901 = vld [vmem:[%s2887 + $0x110] sm:$0xff]
  %v2902 = vld [vmem:[%s2887 + $0x120] sm:$0xff]
  %v2903 = vld [vmem:[%s2887 + $0x130] sm:$0xff]
  %v2904 = vpack.c.bf16 %v2889, %v2888
  %v2905 = vpack.c.bf16 %v2891, %v2890
  %v2906 = vpack.c.bf16 %v2893, %v2892
  %v2907 = vpack.c.bf16 %v2895, %v2894
  %v2908 = vpack.c.bf16 %v2897, %v2896
  %v2909 = vpack.c.bf16 %v2899, %v2898
  %v2910 = vpack.c.bf16 %v2901, %v2900
  %v2911 = vpack.c.bf16 %v2903, %v2902
  %s2912 = scalar_lea.vmem %s4, 320
  %v2913 = vld [vmem:[%s2912] sm:$0xf]
  %v2914 = vld [vmem:[%s2912 + $0x4] sm:$0xf]
  %v2915 = vld [vmem:[%s2912 + $0x8] sm:$0xf]
  %v2916 = vld [vmem:[%s2912 + $0xc] sm:$0xf]
  %v2917 = vld [vmem:[%s2912 + $0x10] sm:$0xf]
  %v2918 = vld [vmem:[%s2912 + $0x14] sm:$0xf]
  %v2919 = vld [vmem:[%s2912 + $0x18] sm:$0xf]
  %v2920 = vld [vmem:[%s2912 + $0x1c] sm:$0xf]
  %v2921 = vld [vmem:[%s2912 + $0x20] sm:$0xf]
  %v2922 = vld [vmem:[%s2912 + $0x24] sm:$0xf]
  %v2923 = vld [vmem:[%s2912 + $0x28] sm:$0xf]
  %v2924 = vld [vmem:[%s2912 + $0x2c] sm:$0xf]
  %v2925 = vld [vmem:[%s2912 + $0x30] sm:$0xf]
  %v2926 = vld [vmem:[%s2912 + $0x34] sm:$0xf]
  %v2927 = vld [vmem:[%s2912 + $0x38] sm:$0xf]
  %v2928 = vld [vmem:[%s2912 + $0x3c] sm:$0xf]
  %v2945 = vunpack.c.l.b16 %v2913
  %v2946 = vunpack.c.l.b16 %v2914
  %v2947 = vunpack.c.l.b16 %v2915
  %v2948 = vunpack.c.l.b16 %v2916
  %v2949 = vunpack.c.l.b16 %v2917
  %v2950 = vunpack.c.l.b16 %v2918
  %v2951 = vunpack.c.l.b16 %v2919
  %v2952 = vunpack.c.l.b16 %v2920
  %v2953 = vunpack.c.l.b16 %v2921
  %v2954 = vunpack.c.l.b16 %v2922
  %v2955 = vunpack.c.l.b16 %v2923
  %v2956 = vunpack.c.l.b16 %v2924
  %v2957 = vunpack.c.l.b16 %v2925
  %v2958 = vunpack.c.l.b16 %v2926
  %v2959 = vunpack.c.l.b16 %v2927
  %v2960 = vunpack.c.l.b16 %v2928
  %v2961 = vpack.c.b16 %v2946, %v2945
  %v2962 = vpack.c.b16 %v2948, %v2947
  %v2963 = vpack.c.b16 %v2950, %v2949
  %v2964 = vpack.c.b16 %v2952, %v2951
  %v2965 = vpack.c.b16 %v2954, %v2953
  %v2966 = vpack.c.b16 %v2956, %v2955
  %v2967 = vpack.c.b16 %v2958, %v2957
  %v2968 = vpack.c.b16 %v2960, %v2959
  %2977 = vmatprep.subr.bf16.mxu0 0
  %2978 = vmatpush1.bf16.msra.mxu0 %v2961
  %2979 = vmatprep.subr.bf16.mxu0 0
  %2980 = vmatpush1.bf16.msra.mxu0 %v2962
  %2981 = vmatprep.subr.bf16.mxu0 0
  %2982 = vmatpush1.bf16.msra.mxu0 %v2963
  %2983 = vmatprep.subr.bf16.mxu0 0
  %2984 = vmatpush1.bf16.msra.mxu0 %v2964
  %2985 = vmatprep.subr.bf16.mxu0 0
  %2986 = vmatpush1.bf16.msra.mxu0 %v2965
  %2987 = vmatprep.subr.bf16.mxu0 0
  %2988 = vmatpush1.bf16.msra.mxu0 %v2966
  %2989 = vmatprep.subr.bf16.mxu0 0
  %2990 = vmatpush1.bf16.msra.mxu0 %v2967
  %2991 = vmatprep.subr.bf16.mxu0 0
  %2992 = vmatpush1.bf16.msra.mxu0 %v2968
  %2993 = vmatprep.subr.bf16.mxu0 0
  %2994 = vmatpush1.bf16.msra.mxu0 0
  %2995 = vmatprep.subr.bf16.mxu0 0
  %2996 = vmatpush1.bf16.msra.mxu0 0
  %2997 = vmatprep.subr.bf16.mxu0 0
  %2998 = vmatpush1.bf16.msra.mxu0 0
  %2999 = vmatprep.subr.bf16.mxu0 0
  %3000 = vmatpush1.bf16.msra.mxu0 0
  %3001 = vmatprep.subr.bf16.mxu0 0
  %3002 = vmatpush1.bf16.msra.mxu0 0
  %3003 = vmatprep.subr.bf16.mxu0 0
  %3004 = vmatpush1.bf16.msra.mxu0 0
  %3005 = vmatprep.subr.bf16.mxu0 0
  %3006 = vmatpush1.bf16.msra.mxu0 0
  %3007 = vmatprep.subr.bf16.mxu0 0
  %3008 = vmatpush1.bf16.msra.mxu0 0
  %3009 = vmatprep.mubr.bf16.mxu0 0
  %3010 = vmatmul.mubr.bf16.gmra.mrb[0].mxu0 %v2904
  %v3011 = vpop.f32.mrb[0].mxu0
  %v3012 = vadd.f32 0.0, %v3011
  %v3013 = vpop.f32.mrb[0].mxu0
  %v3014 = vpop.f32.mrb[0].mxu0
  %v3015 = vadd.f32 0.0, %v3014
  %v3016 = vpop.f32.mrb[0].mxu0
  %3017 = vmatprep.mubr.bf16.mxu0 0
  %3018 = vmatmul.mubr.bf16.gmra.mrb[0].mxu0 %v2905
  %v3019 = vpop.f32.mrb[0].mxu0
  %v3020 = vadd.f32 0.0, %v3019
  %v3021 = vpop.f32.mrb[0].mxu0
  %v3022 = vpop.f32.mrb[0].mxu0
  %v3023 = vadd.f32 0.0, %v3022
  %v3024 = vpop.f32.mrb[0].mxu0
  %3025 = vmatprep.mubr.bf16.mxu0 0
  %3026 = vmatmul.mubr.bf16.gmra.mrb[0].mxu0 %v2906
  %v3027 = vpop.f32.mrb[0].mxu0
  %v3028 = vadd.f32 0.0, %v3027
  %v3029 = vpop.f32.mrb[0].mxu0
  %v3030 = vpop.f32.mrb[0].mxu0
  %v3031 = vadd.f32 0.0, %v3030
  %v3032 = vpop.f32.mrb[0].mxu0
  %3033 = vmatprep.mubr.bf16.mxu0 0
  %3034 = vmatmul.mubr.bf16.gmra.mrb[0].mxu0 %v2907
  %v3035 = vpop.f32.mrb[0].mxu0
  %v3036 = vadd.f32 0.0, %v3035
  %v3037 = vpop.f32.mrb[0].mxu0
  %v3038 = vpop.f32.mrb[0].mxu0
  %v3039 = vadd.f32 0.0, %v3038
  %v3040 = vpop.f32.mrb[0].mxu0
  %3041 = vmatprep.mubr.bf16.mxu0 0
  %3042 = vmatmul.mubr.bf16.gmra.mrb[0].mxu0 %v2908
  %v3043 = vpop.f32.mrb[0].mxu0
  %v3044 = vadd.f32 0.0, %v3043
  %v3045 = vpop.f32.mrb[0].mxu0
  %v3046 = vpop.f32.mrb[0].mxu0
  %v3047 = vadd.f32 0.0, %v3046
  %v3048 = vpop.f32.mrb[0].mxu0
  %3049 = vmatprep.mubr.bf16.mxu0 0
  %3050 = vmatmul.mubr.bf16.gmra.mrb[0].mxu0 %v2909
  %v3051 = vpop.f32.mrb[0].mxu0
  %v3052 = vadd.f32 0.0, %v3051
  %v3053 = vpop.f32.mrb[0].mxu0
  %v3054 = vpop.f32.mrb[0].mxu0
  %v3055 = vadd.f32 0.0, %v3054
  %v3056 = vpop.f32.mrb[0].mxu0
  %3057 = vmatprep.mubr.bf16.mxu0 0
  %3058 = vmatmul.mubr.bf16.gmra.mrb[0].mxu0 %v2910
  %v3059 = vpop.f32.mrb[0].mxu0
  %v3060 = vadd.f32 0.0, %v3059
  %v3061 = vpop.f32.mrb[0].mxu0
  %v3062 = vpop.f32.mrb[0].mxu0
  %v3063 = vadd.f32 0.0, %v3062
  %v3064 = vpop.f32.mrb[0].mxu0
  %3065 = vmatprep.mubr.bf16.mxu0 0
  %3066 = vmatmul.mubr.bf16.gmra.mrb[0].mxu0 %v2911
  %v3067 = vpop.f32.mrb[0].mxu0
  %v3068 = vadd.f32 0.0, %v3067
  %v3069 = vpop.f32.mrb[0].mxu0
  %v3070 = vpop.f32.mrb[0].mxu0
  %v3071 = vadd.f32 0.0, %v3070
  %v3072 = vpop.f32.mrb[0].mxu0
  %3073 = vdwg.mxu0
  %v3074 = vadd.f32 %v2871, %v3012
  %v3075 = vadd.f32 %v2872, %v3015
  %v3076 = vadd.f32 %v2873, %v3020
  %v3077 = vadd.f32 %v2874, %v3023
  %v3078 = vadd.f32 %v2875, %v3028
  %v3079 = vadd.f32 %v2876, %v3031
  %v3080 = vadd.f32 %v2877, %v3036
  %v3081 = vadd.f32 %v2878, %v3039
  %v3082 = vadd.f32 %v2879, %v3044
  %v3083 = vadd.f32 %v2880, %v3047
  %v3084 = vadd.f32 %v2881, %v3052
  %v3085 = vadd.f32 %v2882, %v3055
  %v3086 = vadd.f32 %v2883, %v3060
  %v3087 = vadd.f32 %v2884, %v3063
  %v3088 = vadd.f32 %v2885, %v3068
  %v3089 = vadd.f32 %v2886, %v3071
  %v3090 = vld [vmem:[%s2887 + $0x1] sm:$0xff]
  %v3091 = vld [vmem:[%s2887 + $0x11] sm:$0xff]
  %v3092 = vld [vmem:[%s2887 + $0x21] sm:$0xff]
  %v3093 = vld [vmem:[%s2887 + $0x31] sm:$0xff]
  %v3094 = vld [vmem:[%s2887 + $0x41] sm:$0xff]
  %v3095 = vld [vmem:[%s2887 + $0x51] sm:$0xff]
  %v3096 = vld [vmem:[%s2887 + $0x61] sm:$0xff]
  %v3097 = vld [vmem:[%s2887 + $0x71] sm:$0xff]
  %v3098 = vld [vmem:[%s2887 + $0xc1] sm:$0xff]
  %v3099 = vld [vmem:[%s2887 + $0xd1] sm:$0xff]
  %v3100 = vld [vmem:[%s2887 + $0xe1] sm:$0xff]
  %v3101 = vld [vmem:[%s2887 + $0xf1] sm:$0xff]
  %v3102 = vld [vmem:[%s2887 + $0x101] sm:$0xff]
  %v3103 = vld [vmem:[%s2887 + $0x111] sm:$0xff]
  %v3104 = vld [vmem:[%s2887 + $0x121] sm:$0xff]
  %v3105 = vld [vmem:[%s2887 + $0x131] sm:$0xff]
  %v3106 = vpack.c.bf16 %v3091, %v3090
  %v3107 = vpack.c.bf16 %v3093, %v3092
  %v3108 = vpack.c.bf16 %v3095, %v3094
  %v3109 = vpack.c.bf16 %v3097, %v3096
  %v3110 = vpack.c.bf16 %v3099, %v3098
  %v3111 = vpack.c.bf16 %v3101, %v3100
  %v3112 = vpack.c.bf16 %v3103, %v3102
  %v3113 = vpack.c.bf16 %v3105, %v3104
  %s3114 = scalar_lea.vmem %s4, 384
  %v3115 = vld [vmem:[%s3114] sm:$0xf]
  %v3116 = vld [vmem:[%s3114 + $0x4] sm:$0xf]
  %v3117 = vld [vmem:[%s3114 + $0x8] sm:$0xf]
  %v3118 = vld [vmem:[%s3114 + $0xc] sm:$0xf]
  %v3119 = vld [vmem:[%s3114 + $0x10] sm:$0xf]
  %v3120 = vld [vmem:[%s3114 + $0x14] sm:$0xf]
  %v3121 = vld [vmem:[%s3114 + $0x18] sm:$0xf]
  %v3122 = vld [vmem:[%s3114 + $0x1c] sm:$0xf]
  %v3123 = vld [vmem:[%s3114 + $0x20] sm:$0xf]
  %v3124 = vld [vmem:[%s3114 + $0x24] sm:$0xf]
  %v3125 = vld [vmem:[%s3114 + $0x28] sm:$0xf]
  %v3126 = vld [vmem:[%s3114 + $0x2c] sm:$0xf]
  %v3127 = vld [vmem:[%s3114 + $0x30] sm:$0xf]
  %v3128 = vld [vmem:[%s3114 + $0x34] sm:$0xf]
  %v3129 = vld [vmem:[%s3114 + $0x38] sm:$0xf]
  %v3130 = vld [vmem:[%s3114 + $0x3c] sm:$0xf]
  %v3147 = vunpack.c.l.b16 %v3115
  %v3148 = vunpack.c.l.b16 %v3116
  %v3149 = vunpack.c.l.b16 %v3117
  %v3150 = vunpack.c.l.b16 %v3118
  %v3151 = vunpack.c.l.b16 %v3119
  %v3152 = vunpack.c.l.b16 %v3120
  %v3153 = vunpack.c.l.b16 %v3121
  %v3154 = vunpack.c.l.b16 %v3122
  %v3155 = vunpack.c.l.b16 %v3123
  %v3156 = vunpack.c.l.b16 %v3124
  %v3157 = vunpack.c.l.b16 %v3125
  %v3158 = vunpack.c.l.b16 %v3126
  %v3159 = vunpack.c.l.b16 %v3127
  %v3160 = vunpack.c.l.b16 %v3128
  %v3161 = vunpack.c.l.b16 %v3129
  %v3162 = vunpack.c.l.b16 %v3130
  %v3163 = vpack.c.b16 %v3148, %v3147
  %v3164 = vpack.c.b16 %v3150, %v3149
  %v3165 = vpack.c.b16 %v3152, %v3151
  %v3166 = vpack.c.b16 %v3154, %v3153
  %v3167 = vpack.c.b16 %v3156, %v3155
  %v3168 = vpack.c.b16 %v3158, %v3157
  %v3169 = vpack.c.b16 %v3160, %v3159
  %v3170 = vpack.c.b16 %v3162, %v3161
  %3179 = vmatprep.subr.bf16.mxu0 0
  %3180 = vmatpush1.bf16.msra.mxu0 %v3163
  %3181 = vmatprep.subr.bf16.mxu0 0
  %3182 = vmatpush1.bf16.msra.mxu0 %v3164
  %3183 = vmatprep.subr.bf16.mxu0 0
  %3184 = vmatpush1.bf16.msra.mxu0 %v3165
  %3185 = vmatprep.subr.bf16.mxu0 0
  %3186 = vmatpush1.bf16.msra.mxu0 %v3166
  %3187 = vmatprep.subr.bf16.mxu0 0
  %3188 = vmatpush1.bf16.msra.mxu0 %v3167
  %3189 = vmatprep.subr.bf16.mxu0 0
  %3190 = vmatpush1.bf16.msra.mxu0 %v3168
  %3191 = vmatprep.subr.bf16.mxu0 0
  %3192 = vmatpush1.bf16.msra.mxu0 %v3169
  %3193 = vmatprep.subr.bf16.mxu0 0
  %3194 = vmatpush1.bf16.msra.mxu0 %v3170
  %3195 = vmatprep.subr.bf16.mxu0 0
  %3196 = vmatpush1.bf16.msra.mxu0 0
  %3197 = vmatprep.subr.bf16.mxu0 0
  %3198 = vmatpush1.bf16.msra.mxu0 0
  %3199 = vmatprep.subr.bf16.mxu0 0
  %3200 = vmatpush1.bf16.msra.mxu0 0
  %3201 = vmatprep.subr.bf16.mxu0 0
  %3202 = vmatpush1.bf16.msra.mxu0 0
  %3203 = vmatprep.subr.bf16.mxu0 0
  %3204 = vmatpush1.bf16.msra.mxu0 0
  %3205 = vmatprep.subr.bf16.mxu0 0
  %3206 = vmatpush1.bf16.msra.mxu0 0
  %3207 = vmatprep.subr.bf16.mxu0 0
  %3208 = vmatpush1.bf16.msra.mxu0 0
  %3209 = vmatprep.subr.bf16.mxu0 0
  %3210 = vmatpush1.bf16.msra.mxu0 0
  %3211 = vmatprep.mubr.bf16.mxu0 0
  %3212 = vmatmul.mubr.bf16.gmra.mrb[0].mxu0 %v3106
  %v3213 = vpop.f32.mrb[0].mxu0
  %v3214 = vadd.f32 0.0, %v3213
  %v3215 = vpop.f32.mrb[0].mxu0
  %v3216 = vpop.f32.mrb[0].mxu0
  %v3217 = vadd.f32 0.0, %v3216
  %v3218 = vpop.f32.mrb[0].mxu0
  %3219 = vmatprep.mubr.bf16.mxu0 0
  %3220 = vmatmul.mubr.bf16.gmra.mrb[0].mxu0 %v3107
  %v3221 = vpop.f32.mrb[0].mxu0
  %v3222 = vadd.f32 0.0, %v3221
  %v3223 = vpop.f32.mrb[0].mxu0
  %v3224 = vpop.f32.mrb[0].mxu0
  %v3225 = vadd.f32 0.0, %v3224
  %v3226 = vpop.f32.mrb[0].mxu0
  %3227 = vmatprep.mubr.bf16.mxu0 0
  %3228 = vmatmul.mubr.bf16.gmra.mrb[0].mxu0 %v3108
  %v3229 = vpop.f32.mrb[0].mxu0
  %v3230 = vadd.f32 0.0, %v3229
  %v3231 = vpop.f32.mrb[0].mxu0
  %v3232 = vpop.f32.mrb[0].mxu0
  %v3233 = vadd.f32 0.0, %v3232
  %v3234 = vpop.f32.mrb[0].mxu0
  %3235 = vmatprep.mubr.bf16.mxu0 0
  %3236 = vmatmul.mubr.bf16.gmra.mrb[0].mxu0 %v3109
  %v3237 = vpop.f32.mrb[0].mxu0
  %v3238 = vadd.f32 0.0, %v3237
  %v3239 = vpop.f32.mrb[0].mxu0
  %v3240 = vpop.f32.mrb[0].mxu0
  %v3241 = vadd.f32 0.0, %v3240
  %v3242 = vpop.f32.mrb[0].mxu0
  %3243 = vmatprep.mubr.bf16.mxu0 0
  %3244 = vmatmul.mubr.bf16.gmra.mrb[0].mxu0 %v3110
  %v3245 = vpop.f32.mrb[0].mxu0
  %v3246 = vadd.f32 0.0, %v3245
  %v3247 = vpop.f32.mrb[0].mxu0
  %v3248 = vpop.f32.mrb[0].mxu0
  %v3249 = vadd.f32 0.0, %v3248
  %v3250 = vpop.f32.mrb[0].mxu0
  %3251 = vmatprep.mubr.bf16.mxu0 0
  %3252 = vmatmul.mubr.bf16.gmra.mrb[0].mxu0 %v3111
  %v3253 = vpop.f32.mrb[0].mxu0
  %v3254 = vadd.f32 0.0, %v3253
  %v3255 = vpop.f32.mrb[0].mxu0
  %v3256 = vpop.f32.mrb[0].mxu0
  %v3257 = vadd.f32 0.0, %v3256
  %v3258 = vpop.f32.mrb[0].mxu0
  %3259 = vmatprep.mubr.bf16.mxu0 0
  %3260 = vmatmul.mubr.bf16.gmra.mrb[0].mxu0 %v3112
  %v3261 = vpop.f32.mrb[0].mxu0
  %v3262 = vadd.f32 0.0, %v3261
  %v3263 = vpop.f32.mrb[0].mxu0
  %v3264 = vpop.f32.mrb[0].mxu0
  %v3265 = vadd.f32 0.0, %v3264
  %v3266 = vpop.f32.mrb[0].mxu0
  %3267 = vmatprep.mubr.bf16.mxu0 0
  %3268 = vmatmul.mubr.bf16.gmra.mrb[0].mxu0 %v3113
  %v3269 = vpop.f32.mrb[0].mxu0
  %v3270 = vadd.f32 0.0, %v3269
  %v3271 = vpop.f32.mrb[0].mxu0
  %v3272 = vpop.f32.mrb[0].mxu0
  %v3273 = vadd.f32 0.0, %v3272
  %v3274 = vpop.f32.mrb[0].mxu0
  %3275 = vdwg.mxu0
  %v3276 = vadd.f32 %v3074, %v3214
  %v3277 = vadd.f32 %v3075, %v3217
  %v3278 = vadd.f32 %v3076, %v3222
  %v3279 = vadd.f32 %v3077, %v3225
  %v3280 = vadd.f32 %v3078, %v3230
  %v3281 = vadd.f32 %v3079, %v3233
  %v3282 = vadd.f32 %v3080, %v3238
  %v3283 = vadd.f32 %v3081, %v3241
  %v3284 = vadd.f32 %v3082, %v3246
  %v3285 = vadd.f32 %v3083, %v3249
  %v3286 = vadd.f32 %v3084, %v3254
  %v3287 = vadd.f32 %v3085, %v3257
  %v3288 = vadd.f32 %v3086, %v3262
  %v3289 = vadd.f32 %v3087, %v3265
  %v3290 = vadd.f32 %v3088, %v3270
  %v3291 = vadd.f32 %v3089, %v3273
  %v3292 = vld [vmem:[%s2887 + $0x2] sm:$0xff]
  %v3293 = vld [vmem:[%s2887 + $0x12] sm:$0xff]
  %v3294 = vld [vmem:[%s2887 + $0x22] sm:$0xff]
  %v3295 = vld [vmem:[%s2887 + $0x32] sm:$0xff]
  %v3296 = vld [vmem:[%s2887 + $0x42] sm:$0xff]
  %v3297 = vld [vmem:[%s2887 + $0x52] sm:$0xff]
  %v3298 = vld [vmem:[%s2887 + $0x62] sm:$0xff]
  %v3299 = vld [vmem:[%s2887 + $0x72] sm:$0xff]
  %v3300 = vld [vmem:[%s2887 + $0xc2] sm:$0xff]
  %v3301 = vld [vmem:[%s2887 + $0xd2] sm:$0xff]
  %v3302 = vld [vmem:[%s2887 + $0xe2] sm:$0xff]
  %v3303 = vld [vmem:[%s2887 + $0xf2] sm:$0xff]
  %v3304 = vld [vmem:[%s2887 + $0x102] sm:$0xff]
  %v3305 = vld [vmem:[%s2887 + $0x112] sm:$0xff]
  %v3306 = vld [vmem:[%s2887 + $0x122] sm:$0xff]
  %v3307 = vld [vmem:[%s2887 + $0x132] sm:$0xff]
  %v3308 = vpack.c.bf16 %v3293, %v3292
  %v3309 = vpack.c.bf16 %v3295, %v3294
  %v3310 = vpack.c.bf16 %v3297, %v3296
  %v3311 = vpack.c.bf16 %v3299, %v3298
  %v3312 = vpack.c.bf16 %v3301, %v3300
  %v3313 = vpack.c.bf16 %v3303, %v3302
  %v3314 = vpack.c.bf16 %v3305, %v3304
  %v3315 = vpack.c.bf16 %v3307, %v3306
  %s3316 = scalar_lea.vmem %s4, 448
  %v3317 = vld [vmem:[%s3316] sm:$0xf]
  %v3318 = vld [vmem:[%s3316 + $0x4] sm:$0xf]
  %v3319 = vld [vmem:[%s3316 + $0x8] sm:$0xf]
  %v3320 = vld [vmem:[%s3316 + $0xc] sm:$0xf]
  %v3321 = vld [vmem:[%s3316 + $0x10] sm:$0xf]
  %v3322 = vld [vmem:[%s3316 + $0x14] sm:$0xf]
  %v3323 = vld [vmem:[%s3316 + $0x18] sm:$0xf]
  %v3324 = vld [vmem:[%s3316 + $0x1c] sm:$0xf]
  %v3325 = vld [vmem:[%s3316 + $0x20] sm:$0xf]
  %v3326 = vld [vmem:[%s3316 + $0x24] sm:$0xf]
  %v3327 = vld [vmem:[%s3316 + $0x28] sm:$0xf]
  %v3328 = vld [vmem:[%s3316 + $0x2c] sm:$0xf]
  %v3329 = vld [vmem:[%s3316 + $0x30] sm:$0xf]
  %v3330 = vld [vmem:[%s3316 + $0x34] sm:$0xf]
  %v3331 = vld [vmem:[%s3316 + $0x38] sm:$0xf]
  %v3332 = vld [vmem:[%s3316 + $0x3c] sm:$0xf]
  %v3349 = vunpack.c.l.b16 %v3317
  %v3350 = vunpack.c.l.b16 %v3318
  %v3351 = vunpack.c.l.b16 %v3319
  %v3352 = vunpack.c.l.b16 %v3320
  %v3353 = vunpack.c.l.b16 %v3321
  %v3354 = vunpack.c.l.b16 %v3322
  %v3355 = vunpack.c.l.b16 %v3323
  %v3356 = vunpack.c.l.b16 %v3324
  %v3357 = vunpack.c.l.b16 %v3325
  %v3358 = vunpack.c.l.b16 %v3326
  %v3359 = vunpack.c.l.b16 %v3327
  %v3360 = vunpack.c.l.b16 %v3328
  %v3361 = vunpack.c.l.b16 %v3329
  %v3362 = vunpack.c.l.b16 %v3330
  %v3363 = vunpack.c.l.b16 %v3331
  %v3364 = vunpack.c.l.b16 %v3332
  %v3365 = vpack.c.b16 %v3350, %v3349
  %v3366 = vpack.c.b16 %v3352, %v3351
  %v3367 = vpack.c.b16 %v3354, %v3353
  %v3368 = vpack.c.b16 %v3356, %v3355
  %v3369 = vpack.c.b16 %v3358, %v3357
  %v3370 = vpack.c.b16 %v3360, %v3359
  %v3371 = vpack.c.b16 %v3362, %v3361
  %v3372 = vpack.c.b16 %v3364, %v3363
  %3381 = vmatprep.subr.bf16.mxu0 0
  %3382 = vmatpush1.bf16.msra.mxu0 %v3365
  %3383 = vmatprep.subr.bf16.mxu0 0
  %3384 = vmatpush1.bf16.msra.mxu0 %v3366
  %3385 = vmatprep.subr.bf16.mxu0 0
  %3386 = vmatpush1.bf16.msra.mxu0 %v3367
  %3387 = vmatprep.subr.bf16.mxu0 0
  %3388 = vmatpush1.bf16.msra.mxu0 %v3368
  %3389 = vmatprep.subr.bf16.mxu0 0
  %3390 = vmatpush1.bf16.msra.mxu0 %v3369
  %3391 = vmatprep.subr.bf16.mxu0 0
  %3392 = vmatpush1.bf16.msra.mxu0 %v3370
  %3393 = vmatprep.subr.bf16.mxu0 0
  %3394 = vmatpush1.bf16.msra.mxu0 %v3371
  %3395 = vmatprep.subr.bf16.mxu0 0
  %3396 = vmatpush1.bf16.msra.mxu0 %v3372
  %3397 = vmatprep.subr.bf16.mxu0 0
  %3398 = vmatpush1.bf16.msra.mxu0 0
  %3399 = vmatprep.subr.bf16.mxu0 0
  %3400 = vmatpush1.bf16.msra.mxu0 0
  %3401 = vmatprep.subr.bf16.mxu0 0
  %3402 = vmatpush1.bf16.msra.mxu0 0
  %3403 = vmatprep.subr.bf16.mxu0 0
  %3404 = vmatpush1.bf16.msra.mxu0 0
  %3405 = vmatprep.subr.bf16.mxu0 0
  %3406 = vmatpush1.bf16.msra.mxu0 0
  %3407 = vmatprep.subr.bf16.mxu0 0
  %3408 = vmatpush1.bf16.msra.mxu0 0
  %3409 = vmatprep.subr.bf16.mxu0 0
  %3410 = vmatpush1.bf16.msra.mxu0 0
  %3411 = vmatprep.subr.bf16.mxu0 0
  %3412 = vmatpush1.bf16.msra.mxu0 0
  %3413 = vmatprep.mubr.bf16.mxu0 0
  %3414 = vmatmul.mubr.bf16.gmra.mrb[0].mxu0 %v3308
  %v3415 = vpop.f32.mrb[0].mxu0
  %v3416 = vadd.f32 0.0, %v3415
  %v3417 = vpop.f32.mrb[0].mxu0
  %v3418 = vpop.f32.mrb[0].mxu0
  %v3419 = vadd.f32 0.0, %v3418
  %v3420 = vpop.f32.mrb[0].mxu0
  %3421 = vmatprep.mubr.bf16.mxu0 0
  %3422 = vmatmul.mubr.bf16.gmra.mrb[0].mxu0 %v3309
  %v3423 = vpop.f32.mrb[0].mxu0
  %v3424 = vadd.f32 0.0, %v3423
  %v3425 = vpop.f32.mrb[0].mxu0
  %v3426 = vpop.f32.mrb[0].mxu0
  %v3427 = vadd.f32 0.0, %v3426
  %v3428 = vpop.f32.mrb[0].mxu0
  %3429 = vmatprep.mubr.bf16.mxu0 0
  %3430 = vmatmul.mubr.bf16.gmra.mrb[0].mxu0 %v3310
  %v3431 = vpop.f32.mrb[0].mxu0
  %v3432 = vadd.f32 0.0, %v3431
  %v3433 = vpop.f32.mrb[0].mxu0
  %v3434 = vpop.f32.mrb[0].mxu0
  %v3435 = vadd.f32 0.0, %v3434
  %v3436 = vpop.f32.mrb[0].mxu0
  %3437 = vmatprep.mubr.bf16.mxu0 0
  %3438 = vmatmul.mubr.bf16.gmra.mrb[0].mxu0 %v3311
  %v3439 = vpop.f32.mrb[0].mxu0
  %v3440 = vadd.f32 0.0, %v3439
  %v3441 = vpop.f32.mrb[0].mxu0
  %v3442 = vpop.f32.mrb[0].mxu0
  %v3443 = vadd.f32 0.0, %v3442
  %v3444 = vpop.f32.mrb[0].mxu0
  %3445 = vmatprep.mubr.bf16.mxu0 0
  %3446 = vmatmul.mubr.bf16.gmra.mrb[0].mxu0 %v3312
  %v3447 = vpop.f32.mrb[0].mxu0
  %v3448 = vadd.f32 0.0, %v3447
  %v3449 = vpop.f32.mrb[0].mxu0
  %v3450 = vpop.f32.mrb[0].mxu0
  %v3451 = vadd.f32 0.0, %v3450
  %v3452 = vpop.f32.mrb[0].mxu0
  %3453 = vmatprep.mubr.bf16.mxu0 0
  %3454 = vmatmul.mubr.bf16.gmra.mrb[0].mxu0 %v3313
  %v3455 = vpop.f32.mrb[0].mxu0
  %v3456 = vadd.f32 0.0, %v3455
  %v3457 = vpop.f32.mrb[0].mxu0
  %v3458 = vpop.f32.mrb[0].mxu0
  %v3459 = vadd.f32 0.0, %v3458
  %v3460 = vpop.f32.mrb[0].mxu0
  %3461 = vmatprep.mubr.bf16.mxu0 0
  %3462 = vmatmul.mubr.bf16.gmra.mrb[0].mxu0 %v3314
  %v3463 = vpop.f32.mrb[0].mxu0
  %v3464 = vadd.f32 0.0, %v3463
  %v3465 = vpop.f32.mrb[0].mxu0
  %v3466 = vpop.f32.mrb[0].mxu0
  %v3467 = vadd.f32 0.0, %v3466
  %v3468 = vpop.f32.mrb[0].mxu0
  %3469 = vmatprep.mubr.bf16.mxu0 0
  %3470 = vmatmul.mubr.bf16.gmra.mrb[0].mxu0 %v3315
  %v3471 = vpop.f32.mrb[0].mxu0
  %v3472 = vadd.f32 0.0, %v3471
  %v3473 = vpop.f32.mrb[0].mxu0
  %v3474 = vpop.f32.mrb[0].mxu0
  %v3475 = vadd.f32 0.0, %v3474
  %v3476 = vpop.f32.mrb[0].mxu0
  %3477 = vdwg.mxu0
  %v3478 = vadd.f32 %v3276, %v3416
  %v3479 = vadd.f32 %v3277, %v3419
  %v3480 = vadd.f32 %v3278, %v3424
  %v3481 = vadd.f32 %v3279, %v3427
  %v3482 = vadd.f32 %v3280, %v3432
  %v3483 = vadd.f32 %v3281, %v3435
  %v3484 = vadd.f32 %v3282, %v3440
  %v3485 = vadd.f32 %v3283, %v3443
  %v3486 = vadd.f32 %v3284, %v3448
  %v3487 = vadd.f32 %v3285, %v3451
  %v3488 = vadd.f32 %v3286, %v3456
  %v3489 = vadd.f32 %v3287, %v3459
  %v3490 = vadd.f32 %v3288, %v3464
  %v3491 = vadd.f32 %v3289, %v3467
  %v3492 = vadd.f32 %v3290, %v3472
  %v3493 = vadd.f32 %v3291, %v3475
  %v3494 = vld [vmem:[%s2887 + $0x3] sm:$0xff]
  %v3495 = vld [vmem:[%s2887 + $0x13] sm:$0xff]
  %v3496 = vld [vmem:[%s2887 + $0x23] sm:$0xff]
  %v3497 = vld [vmem:[%s2887 + $0x33] sm:$0xff]
  %v3498 = vld [vmem:[%s2887 + $0x43] sm:$0xff]
  %v3499 = vld [vmem:[%s2887 + $0x53] sm:$0xff]
  %v3500 = vld [vmem:[%s2887 + $0x63] sm:$0xff]
  %v3501 = vld [vmem:[%s2887 + $0x73] sm:$0xff]
  %v3502 = vld [vmem:[%s2887 + $0xc3] sm:$0xff]
  %v3503 = vld [vmem:[%s2887 + $0xd3] sm:$0xff]
  %v3504 = vld [vmem:[%s2887 + $0xe3] sm:$0xff]
  %v3505 = vld [vmem:[%s2887 + $0xf3] sm:$0xff]
  %v3506 = vld [vmem:[%s2887 + $0x103] sm:$0xff]
  %v3507 = vld [vmem:[%s2887 + $0x113] sm:$0xff]
  %v3508 = vld [vmem:[%s2887 + $0x123] sm:$0xff]
  %v3509 = vld [vmem:[%s2887 + $0x133] sm:$0xff]
  %v3510 = vpack.c.bf16 %v3495, %v3494
  %v3511 = vpack.c.bf16 %v3497, %v3496
  %v3512 = vpack.c.bf16 %v3499, %v3498
  %v3513 = vpack.c.bf16 %v3501, %v3500
  %v3514 = vpack.c.bf16 %v3503, %v3502
  %v3515 = vpack.c.bf16 %v3505, %v3504
  %v3516 = vpack.c.bf16 %v3507, %v3506
  %v3517 = vpack.c.bf16 %v3509, %v3508
  %s3518 = scalar_lea.vmem %s4, 512
  %v3519 = vld [vmem:[%s3518] sm:$0xf]
  %v3520 = vld [vmem:[%s3518 + $0x4] sm:$0xf]
  %v3521 = vld [vmem:[%s3518 + $0x8] sm:$0xf]
  %v3522 = vld [vmem:[%s3518 + $0xc] sm:$0xf]
  %v3523 = vld [vmem:[%s3518 + $0x10] sm:$0xf]
  %v3524 = vld [vmem:[%s3518 + $0x14] sm:$0xf]
  %v3525 = vld [vmem:[%s3518 + $0x18] sm:$0xf]
  %v3526 = vld [vmem:[%s3518 + $0x1c] sm:$0xf]
  %v3527 = vld [vmem:[%s3518 + $0x20] sm:$0xf]
  %v3528 = vld [vmem:[%s3518 + $0x24] sm:$0xf]
  %v3529 = vld [vmem:[%s3518 + $0x28] sm:$0xf]
  %v3530 = vld [vmem:[%s3518 + $0x2c] sm:$0xf]
  %v3531 = vld [vmem:[%s3518 + $0x30] sm:$0xf]
  %v3532 = vld [vmem:[%s3518 + $0x34] sm:$0xf]
  %v3533 = vld [vmem:[%s3518 + $0x38] sm:$0xf]
  %v3534 = vld [vmem:[%s3518 + $0x3c] sm:$0xf]
  %v3551 = vunpack.c.l.b16 %v3519
  %v3552 = vunpack.c.l.b16 %v3520
  %v3553 = vunpack.c.l.b16 %v3521
  %v3554 = vunpack.c.l.b16 %v3522
  %v3555 = vunpack.c.l.b16 %v3523
  %v3556 = vunpack.c.l.b16 %v3524
  %v3557 = vunpack.c.l.b16 %v3525
  %v3558 = vunpack.c.l.b16 %v3526
  %v3559 = vunpack.c.l.b16 %v3527
  %v3560 = vunpack.c.l.b16 %v3528
  %v3561 = vunpack.c.l.b16 %v3529
  %v3562 = vunpack.c.l.b16 %v3530
  %v3563 = vunpack.c.l.b16 %v3531
  %v3564 = vunpack.c.l.b16 %v3532
  %v3565 = vunpack.c.l.b16 %v3533
  %v3566 = vunpack.c.l.b16 %v3534
  %v3567 = vpack.c.b16 %v3552, %v3551
  %v3568 = vpack.c.b16 %v3554, %v3553
  %v3569 = vpack.c.b16 %v3556, %v3555
  %v3570 = vpack.c.b16 %v3558, %v3557
  %v3571 = vpack.c.b16 %v3560, %v3559
  %v3572 = vpack.c.b16 %v3562, %v3561
  %v3573 = vpack.c.b16 %v3564, %v3563
  %v3574 = vpack.c.b16 %v3566, %v3565
  %3583 = vmatprep.subr.bf16.mxu0 0
  %3584 = vmatpush1.bf16.msra.mxu0 %v3567
  %3585 = vmatprep.subr.bf16.mxu0 0
  %3586 = vmatpush1.bf16.msra.mxu0 %v3568
  %3587 = vmatprep.subr.bf16.mxu0 0
  %3588 = vmatpush1.bf16.msra.mxu0 %v3569
  %3589 = vmatprep.subr.bf16.mxu0 0
  %3590 = vmatpush1.bf16.msra.mxu0 %v3570
  %3591 = vmatprep.subr.bf16.mxu0 0
  %3592 = vmatpush1.bf16.msra.mxu0 %v3571
  %3593 = vmatprep.subr.bf16.mxu0 0
  %3594 = vmatpush1.bf16.msra.mxu0 %v3572
  %3595 = vmatprep.subr.bf16.mxu0 0
  %3596 = vmatpush1.bf16.msra.mxu0 %v3573
  %3597 = vmatprep.subr.bf16.mxu0 0
  %3598 = vmatpush1.bf16.msra.mxu0 %v3574
  %3599 = vmatprep.subr.bf16.mxu0 0
  %3600 = vmatpush1.bf16.msra.mxu0 0
  %3601 = vmatprep.subr.bf16.mxu0 0
  %3602 = vmatpush1.bf16.msra.mxu0 0
  %3603 = vmatprep.subr.bf16.mxu0 0
  %3604 = vmatpush1.bf16.msra.mxu0 0
  %3605 = vmatprep.subr.bf16.mxu0 0
  %3606 = vmatpush1.bf16.msra.mxu0 0
  %3607 = vmatprep.subr.bf16.mxu0 0
  %3608 = vmatpush1.bf16.msra.mxu0 0
  %3609 = vmatprep.subr.bf16.mxu0 0
  %3610 = vmatpush1.bf16.msra.mxu0 0
  %3611 = vmatprep.subr.bf16.mxu0 0
  %3612 = vmatpush1.bf16.msra.mxu0 0
  %3613 = vmatprep.subr.bf16.mxu0 0
  %3614 = vmatpush1.bf16.msra.mxu0 0
  %3615 = vmatprep.mubr.bf16.mxu0 0
  %3616 = vmatmul.mubr.bf16.gmra.mrb[0].mxu0 %v3510
  %v3617 = vpop.f32.mrb[0].mxu0
  %v3618 = vadd.f32 0.0, %v3617
  %v3619 = vpop.f32.mrb[0].mxu0
  %v3620 = vpop.f32.mrb[0].mxu0
  %v3621 = vadd.f32 0.0, %v3620
  %v3622 = vpop.f32.mrb[0].mxu0
  %3623 = vmatprep.mubr.bf16.mxu0 0
  %3624 = vmatmul.mubr.bf16.gmra.mrb[0].mxu0 %v3511
  %v3625 = vpop.f32.mrb[0].mxu0
  %v3626 = vadd.f32 0.0, %v3625
  %v3627 = vpop.f32.mrb[0].mxu0
  %v3628 = vpop.f32.mrb[0].mxu0
  %v3629 = vadd.f32 0.0, %v3628
  %v3630 = vpop.f32.mrb[0].mxu0
  %3631 = vmatprep.mubr.bf16.mxu0 0
  %3632 = vmatmul.mubr.bf16.gmra.mrb[0].mxu0 %v3512
  %v3633 = vpop.f32.mrb[0].mxu0
  %v3634 = vadd.f32 0.0, %v3633
  %v3635 = vpop.f32.mrb[0].mxu0
  %v3636 = vpop.f32.mrb[0].mxu0
  %v3637 = vadd.f32 0.0, %v3636
  %v3638 = vpop.f32.mrb[0].mxu0
  %3639 = vmatprep.mubr.bf16.mxu0 0
  %3640 = vmatmul.mubr.bf16.gmra.mrb[0].mxu0 %v3513
  %v3641 = vpop.f32.mrb[0].mxu0
  %v3642 = vadd.f32 0.0, %v3641
  %v3643 = vpop.f32.mrb[0].mxu0
  %v3644 = vpop.f32.mrb[0].mxu0
  %v3645 = vadd.f32 0.0, %v3644
  %v3646 = vpop.f32.mrb[0].mxu0
  %3647 = vmatprep.mubr.bf16.mxu0 0
  %3648 = vmatmul.mubr.bf16.gmra.mrb[0].mxu0 %v3514
  %v3649 = vpop.f32.mrb[0].mxu0
  %v3650 = vadd.f32 0.0, %v3649
  %v3651 = vpop.f32.mrb[0].mxu0
  %v3652 = vpop.f32.mrb[0].mxu0
  %v3653 = vadd.f32 0.0, %v3652
  %v3654 = vpop.f32.mrb[0].mxu0
  %3655 = vmatprep.mubr.bf16.mxu0 0
  %3656 = vmatmul.mubr.bf16.gmra.mrb[0].mxu0 %v3515
  %v3657 = vpop.f32.mrb[0].mxu0
  %v3658 = vadd.f32 0.0, %v3657
  %v3659 = vpop.f32.mrb[0].mxu0
  %v3660 = vpop.f32.mrb[0].mxu0
  %v3661 = vadd.f32 0.0, %v3660
  %v3662 = vpop.f32.mrb[0].mxu0
  %3663 = vmatprep.mubr.bf16.mxu0 0
  %3664 = vmatmul.mubr.bf16.gmra.mrb[0].mxu0 %v3516
  %v3665 = vpop.f32.mrb[0].mxu0
  %v3666 = vadd.f32 0.0, %v3665
  %v3667 = vpop.f32.mrb[0].mxu0
  %v3668 = vpop.f32.mrb[0].mxu0
  %v3669 = vadd.f32 0.0, %v3668
  %v3670 = vpop.f32.mrb[0].mxu0
  %3671 = vmatprep.mubr.bf16.mxu0 0
  %3672 = vmatmul.mubr.bf16.gmra.mrb[0].mxu0 %v3517
  %v3673 = vpop.f32.mrb[0].mxu0
  %v3674 = vadd.f32 0.0, %v3673
  %v3675 = vpop.f32.mrb[0].mxu0
  %v3676 = vpop.f32.mrb[0].mxu0
  %v3677 = vadd.f32 0.0, %v3676
  %v3678 = vpop.f32.mrb[0].mxu0
  %3679 = vdwg.mxu0
  %v3680 = vadd.f32 %v3478, %v3618
  %v3681 = vadd.f32 %v3479, %v3621
  %v3682 = vadd.f32 %v3480, %v3626
  %v3683 = vadd.f32 %v3481, %v3629
  %v3684 = vadd.f32 %v3482, %v3634
  %v3685 = vadd.f32 %v3483, %v3637
  %v3686 = vadd.f32 %v3484, %v3642
  %v3687 = vadd.f32 %v3485, %v3645
  %v3688 = vadd.f32 %v3486, %v3650
  %v3689 = vadd.f32 %v3487, %v3653
  %v3690 = vadd.f32 %v3488, %v3658
  %v3691 = vadd.f32 %v3489, %v3661
  %v3692 = vadd.f32 %v3490, %v3666
  %v3693 = vadd.f32 %v3491, %v3669
  %v3694 = vadd.f32 %v3492, %v3674
  %v3695 = vadd.f32 %v3493, %v3677
  %v3696 = vld [vmem:[%s2887 + $0x4] sm:$0xff]
  %v3697 = vld [vmem:[%s2887 + $0x14] sm:$0xff]
  %v3698 = vld [vmem:[%s2887 + $0x24] sm:$0xff]
  %v3699 = vld [vmem:[%s2887 + $0x34] sm:$0xff]
  %v3700 = vld [vmem:[%s2887 + $0x44] sm:$0xff]
  %v3701 = vld [vmem:[%s2887 + $0x54] sm:$0xff]
  %v3702 = vld [vmem:[%s2887 + $0x64] sm:$0xff]
  %v3703 = vld [vmem:[%s2887 + $0x74] sm:$0xff]
  %v3704 = vld [vmem:[%s2887 + $0xc4] sm:$0xff]
  %v3705 = vld [vmem:[%s2887 + $0xd4] sm:$0xff]
  %v3706 = vld [vmem:[%s2887 + $0xe4] sm:$0xff]
  %v3707 = vld [vmem:[%s2887 + $0xf4] sm:$0xff]
  %v3708 = vld [vmem:[%s2887 + $0x104] sm:$0xff]
  %v3709 = vld [vmem:[%s2887 + $0x114] sm:$0xff]
  %v3710 = vld [vmem:[%s2887 + $0x124] sm:$0xff]
  %v3711 = vld [vmem:[%s2887 + $0x134] sm:$0xff]
  %v3712 = vpack.c.bf16 %v3697, %v3696
  %v3713 = vpack.c.bf16 %v3699, %v3698
  %v3714 = vpack.c.bf16 %v3701, %v3700
  %v3715 = vpack.c.bf16 %v3703, %v3702
  %v3716 = vpack.c.bf16 %v3705, %v3704
  %v3717 = vpack.c.bf16 %v3707, %v3706
  %v3718 = vpack.c.bf16 %v3709, %v3708
  %v3719 = vpack.c.bf16 %v3711, %v3710
  %s3720 = scalar_lea.vmem %s4, 576
  %v3721 = vld [vmem:[%s3720] sm:$0xf]
  %v3722 = vld [vmem:[%s3720 + $0x4] sm:$0xf]
  %v3723 = vld [vmem:[%s3720 + $0x8] sm:$0xf]
  %v3724 = vld [vmem:[%s3720 + $0xc] sm:$0xf]
  %v3725 = vld [vmem:[%s3720 + $0x10] sm:$0xf]
  %v3726 = vld [vmem:[%s3720 + $0x14] sm:$0xf]
  %v3727 = vld [vmem:[%s3720 + $0x18] sm:$0xf]
  %v3728 = vld [vmem:[%s3720 + $0x1c] sm:$0xf]
  %v3729 = vld [vmem:[%s3720 + $0x20] sm:$0xf]
  %v3730 = vld [vmem:[%s3720 + $0x24] sm:$0xf]
  %v3731 = vld [vmem:[%s3720 + $0x28] sm:$0xf]
  %v3732 = vld [vmem:[%s3720 + $0x2c] sm:$0xf]
  %v3733 = vld [vmem:[%s3720 + $0x30] sm:$0xf]
  %v3734 = vld [vmem:[%s3720 + $0x34] sm:$0xf]
  %v3735 = vld [vmem:[%s3720 + $0x38] sm:$0xf]
  %v3736 = vld [vmem:[%s3720 + $0x3c] sm:$0xf]
  %v3753 = vunpack.c.l.b16 %v3721
  %v3754 = vunpack.c.l.b16 %v3722
  %v3755 = vunpack.c.l.b16 %v3723
  %v3756 = vunpack.c.l.b16 %v3724
  %v3757 = vunpack.c.l.b16 %v3725
  %v3758 = vunpack.c.l.b16 %v3726
  %v3759 = vunpack.c.l.b16 %v3727
  %v3760 = vunpack.c.l.b16 %v3728
  %v3761 = vunpack.c.l.b16 %v3729
  %v3762 = vunpack.c.l.b16 %v3730
  %v3763 = vunpack.c.l.b16 %v3731
  %v3764 = vunpack.c.l.b16 %v3732
  %v3765 = vunpack.c.l.b16 %v3733
  %v3766 = vunpack.c.l.b16 %v3734
  %v3767 = vunpack.c.l.b16 %v3735
  %v3768 = vunpack.c.l.b16 %v3736
  %v3769 = vpack.c.b16 %v3754, %v3753
  %v3770 = vpack.c.b16 %v3756, %v3755
  %v3771 = vpack.c.b16 %v3758, %v3757
  %v3772 = vpack.c.b16 %v3760, %v3759
  %v3773 = vpack.c.b16 %v3762, %v3761
  %v3774 = vpack.c.b16 %v3764, %v3763
  %v3775 = vpack.c.b16 %v3766, %v3765
  %v3776 = vpack.c.b16 %v3768, %v3767
  %3785 = vmatprep.subr.bf16.mxu0 0
  %3786 = vmatpush1.bf16.msra.mxu0 %v3769
  %3787 = vmatprep.subr.bf16.mxu0 0
  %3788 = vmatpush1.bf16.msra.mxu0 %v3770
  %3789 = vmatprep.subr.bf16.mxu0 0
  %3790 = vmatpush1.bf16.msra.mxu0 %v3771
  %3791 = vmatprep.subr.bf16.mxu0 0
  %3792 = vmatpush1.bf16.msra.mxu0 %v3772
  %3793 = vmatprep.subr.bf16.mxu0 0
  %3794 = vmatpush1.bf16.msra.mxu0 %v3773
  %3795 = vmatprep.subr.bf16.mxu0 0
  %3796 = vmatpush1.bf16.msra.mxu0 %v3774
  %3797 = vmatprep.subr.bf16.mxu0 0
  %3798 = vmatpush1.bf16.msra.mxu0 %v3775
  %3799 = vmatprep.subr.bf16.mxu0 0
  %3800 = vmatpush1.bf16.msra.mxu0 %v3776
  %3801 = vmatprep.subr.bf16.mxu0 0
  %3802 = vmatpush1.bf16.msra.mxu0 0
  %3803 = vmatprep.subr.bf16.mxu0 0
  %3804 = vmatpush1.bf16.msra.mxu0 0
  %3805 = vmatprep.subr.bf16.mxu0 0
  %3806 = vmatpush1.bf16.msra.mxu0 0
  %3807 = vmatprep.subr.bf16.mxu0 0
  %3808 = vmatpush1.bf16.msra.mxu0 0
  %3809 = vmatprep.subr.bf16.mxu0 0
  %3810 = vmatpush1.bf16.msra.mxu0 0
  %3811 = vmatprep.subr.bf16.mxu0 0
  %3812 = vmatpush1.bf16.msra.mxu0 0
  %3813 = vmatprep.subr.bf16.mxu0 0
  %3814 = vmatpush1.bf16.msra.mxu0 0
  %3815 = vmatprep.subr.bf16.mxu0 0
  %3816 = vmatpush1.bf16.msra.mxu0 0
  %3817 = vmatprep.mubr.bf16.mxu0 0
  %3818 = vmatmul.mubr.bf16.gmra.mrb[0].mxu0 %v3712
  %v3819 = vpop.f32.mrb[0].mxu0
  %v3820 = vadd.f32 0.0, %v3819
  %v3821 = vpop.f32.mrb[0].mxu0
  %v3822 = vpop.f32.mrb[0].mxu0
  %v3823 = vadd.f32 0.0, %v3822
  %v3824 = vpop.f32.mrb[0].mxu0
  %3825 = vmatprep.mubr.bf16.mxu0 0
  %3826 = vmatmul.mubr.bf16.gmra.mrb[0].mxu0 %v3713
  %v3827 = vpop.f32.mrb[0].mxu0
  %v3828 = vadd.f32 0.0, %v3827
  %v3829 = vpop.f32.mrb[0].mxu0
  %v3830 = vpop.f32.mrb[0].mxu0
  %v3831 = vadd.f32 0.0, %v3830
  %v3832 = vpop.f32.mrb[0].mxu0
  %3833 = vmatprep.mubr.bf16.mxu0 0
  %3834 = vmatmul.mubr.bf16.gmra.mrb[0].mxu0 %v3714
  %v3835 = vpop.f32.mrb[0].mxu0
  %v3836 = vadd.f32 0.0, %v3835
  %v3837 = vpop.f32.mrb[0].mxu0
  %v3838 = vpop.f32.mrb[0].mxu0
  %v3839 = vadd.f32 0.0, %v3838
  %v3840 = vpop.f32.mrb[0].mxu0
  %3841 = vmatprep.mubr.bf16.mxu0 0
  %3842 = vmatmul.mubr.bf16.gmra.mrb[0].mxu0 %v3715
  %v3843 = vpop.f32.mrb[0].mxu0
  %v3844 = vadd.f32 0.0, %v3843
  %v3845 = vpop.f32.mrb[0].mxu0
  %v3846 = vpop.f32.mrb[0].mxu0
  %v3847 = vadd.f32 0.0, %v3846
  %v3848 = vpop.f32.mrb[0].mxu0
  %3849 = vmatprep.mubr.bf16.mxu0 0
  %3850 = vmatmul.mubr.bf16.gmra.mrb[0].mxu0 %v3716
  %v3851 = vpop.f32.mrb[0].mxu0
  %v3852 = vadd.f32 0.0, %v3851
  %v3853 = vpop.f32.mrb[0].mxu0
  %v3854 = vpop.f32.mrb[0].mxu0
  %v3855 = vadd.f32 0.0, %v3854
  %v3856 = vpop.f32.mrb[0].mxu0
  %3857 = vmatprep.mubr.bf16.mxu0 0
  %3858 = vmatmul.mubr.bf16.gmra.mrb[0].mxu0 %v3717
  %v3859 = vpop.f32.mrb[0].mxu0
  %v3860 = vadd.f32 0.0, %v3859
  %v3861 = vpop.f32.mrb[0].mxu0
  %v3862 = vpop.f32.mrb[0].mxu0
  %v3863 = vadd.f32 0.0, %v3862
  %v3864 = vpop.f32.mrb[0].mxu0
  %3865 = vmatprep.mubr.bf16.mxu0 0
  %3866 = vmatmul.mubr.bf16.gmra.mrb[0].mxu0 %v3718
  %v3867 = vpop.f32.mrb[0].mxu0
  %v3868 = vadd.f32 0.0, %v3867
  %v3869 = vpop.f32.mrb[0].mxu0
  %v3870 = vpop.f32.mrb[0].mxu0
  %v3871 = vadd.f32 0.0, %v3870
  %v3872 = vpop.f32.mrb[0].mxu0
  %3873 = vmatprep.mubr.bf16.mxu0 0
  %3874 = vmatmul.mubr.bf16.gmra.mrb[0].mxu0 %v3719
  %v3875 = vpop.f32.mrb[0].mxu0
  %v3876 = vadd.f32 0.0, %v3875
  %v3877 = vpop.f32.mrb[0].mxu0
  %v3878 = vpop.f32.mrb[0].mxu0
  %v3879 = vadd.f32 0.0, %v3878
  %v3880 = vpop.f32.mrb[0].mxu0
  %3881 = vdwg.mxu0
  %v3882 = vadd.f32 %v3680, %v3820
  %v3883 = vadd.f32 %v3681, %v3823
  %v3884 = vadd.f32 %v3682, %v3828
  %v3885 = vadd.f32 %v3683, %v3831
  %v3886 = vadd.f32 %v3684, %v3836
  %v3887 = vadd.f32 %v3685, %v3839
  %v3888 = vadd.f32 %v3686, %v3844
  %v3889 = vadd.f32 %v3687, %v3847
  %v3890 = vadd.f32 %v3688, %v3852
  %v3891 = vadd.f32 %v3689, %v3855
  %v3892 = vadd.f32 %v3690, %v3860
  %v3893 = vadd.f32 %v3691, %v3863
  %v3894 = vadd.f32 %v3692, %v3868
  %v3895 = vadd.f32 %v3693, %v3871
  %v3896 = vadd.f32 %v3694, %v3876
  %v3897 = vadd.f32 %v3695, %v3879
  %s3898 = scalar_lea.vmem [#allocation2], 32
  %v3899 = vld [vmem:[%s3898] sm:$0xff]
  %v3900 = vld [vmem:[%s3898 + $0x10] sm:$0xff]
  %v3901 = vld [vmem:[%s3898 + $0x20] sm:$0xff]
  %v3902 = vld [vmem:[%s3898 + $0x30] sm:$0xff]
  %v3903 = vld [vmem:[%s3898 + $0x40] sm:$0xff]
  %v3904 = vld [vmem:[%s3898 + $0x50] sm:$0xff]
  %v3905 = vld [vmem:[%s3898 + $0x60] sm:$0xff]
  %v3906 = vld [vmem:[%s3898 + $0x70] sm:$0xff]
  %v3907 = vld [vmem:[%s3898 + $0xc0] sm:$0xff]
  %v3908 = vld [vmem:[%s3898 + $0xd0] sm:$0xff]
  %v3909 = vld [vmem:[%s3898 + $0xe0] sm:$0xff]
  %v3910 = vld [vmem:[%s3898 + $0xf0] sm:$0xff]
  %v3911 = vld [vmem:[%s3898 + $0x100] sm:$0xff]
  %v3912 = vld [vmem:[%s3898 + $0x110] sm:$0xff]
  %v3913 = vld [vmem:[%s3898 + $0x120] sm:$0xff]
  %v3914 = vld [vmem:[%s3898 + $0x130] sm:$0xff]
  %v3915 = vpack.c.bf16 %v3900, %v3899
  %v3916 = vpack.c.bf16 %v3902, %v3901
  %v3917 = vpack.c.bf16 %v3904, %v3903
  %v3918 = vpack.c.bf16 %v3906, %v3905
  %v3919 = vpack.c.bf16 %v3908, %v3907
  %v3920 = vpack.c.bf16 %v3910, %v3909
  %v3921 = vpack.c.bf16 %v3912, %v3911
  %v3922 = vpack.c.bf16 %v3914, %v3913
  %s3923 = scalar_lea.vmem %s4, 640
  %v3924 = vld [vmem:[%s3923] sm:$0xf]
  %v3925 = vld [vmem:[%s3923 + $0x4] sm:$0xf]
  %v3926 = vld [vmem:[%s3923 + $0x8] sm:$0xf]
  %v3927 = vld [vmem:[%s3923 + $0xc] sm:$0xf]
  %v3928 = vld [vmem:[%s3923 + $0x10] sm:$0xf]
  %v3929 = vld [vmem:[%s3923 + $0x14] sm:$0xf]
  %v3930 = vld [vmem:[%s3923 + $0x18] sm:$0xf]
  %v3931 = vld [vmem:[%s3923 + $0x1c] sm:$0xf]
  %v3932 = vld [vmem:[%s3923 + $0x20] sm:$0xf]
  %v3933 = vld [vmem:[%s3923 + $0x24] sm:$0xf]
  %v3934 = vld [vmem:[%s3923 + $0x28] sm:$0xf]
  %v3935 = vld [vmem:[%s3923 + $0x2c] sm:$0xf]
  %v3936 = vld [vmem:[%s3923 + $0x30] sm:$0xf]
  %v3937 = vld [vmem:[%s3923 + $0x34] sm:$0xf]
  %v3938 = vld [vmem:[%s3923 + $0x38] sm:$0xf]
  %v3939 = vld [vmem:[%s3923 + $0x3c] sm:$0xf]
  %v3956 = vunpack.c.l.b16 %v3924
  %v3957 = vunpack.c.l.b16 %v3925
  %v3958 = vunpack.c.l.b16 %v3926
  %v3959 = vunpack.c.l.b16 %v3927
  %v3960 = vunpack.c.l.b16 %v3928
  %v3961 = vunpack.c.l.b16 %v3929
  %v3962 = vunpack.c.l.b16 %v3930
  %v3963 = vunpack.c.l.b16 %v3931
  %v3964 = vunpack.c.l.b16 %v3932
  %v3965 = vunpack.c.l.b16 %v3933
  %v3966 = vunpack.c.l.b16 %v3934
  %v3967 = vunpack.c.l.b16 %v3935
  %v3968 = vunpack.c.l.b16 %v3936
  %v3969 = vunpack.c.l.b16 %v3937
  %v3970 = vunpack.c.l.b16 %v3938
  %v3971 = vunpack.c.l.b16 %v3939
  %v3972 = vpack.c.b16 %v3957, %v3956
  %v3973 = vpack.c.b16 %v3959, %v3958
  %v3974 = vpack.c.b16 %v3961, %v3960
  %v3975 = vpack.c.b16 %v3963, %v3962
  %v3976 = vpack.c.b16 %v3965, %v3964
  %v3977 = vpack.c.b16 %v3967, %v3966
  %v3978 = vpack.c.b16 %v3969, %v3968
  %v3979 = vpack.c.b16 %v3971, %v3970
  %3988 = vmatprep.subr.bf16.mxu0 0
  %3989 = vmatpush1.bf16.msra.mxu0 %v3972
  %3990 = vmatprep.subr.bf16.mxu0 0
  %3991 = vmatpush1.bf16.msra.mxu0 %v3973
  %3992 = vmatprep.subr.bf16.mxu0 0
  %3993 = vmatpush1.bf16.msra.mxu0 %v3974
  %3994 = vmatprep.subr.bf16.mxu0 0
  %3995 = vmatpush1.bf16.msra.mxu0 %v3975
  %3996 = vmatprep.subr.bf16.mxu0 0
  %3997 = vmatpush1.bf16.msra.mxu0 %v3976
  %3998 = vmatprep.subr.bf16.mxu0 0
  %3999 = vmatpush1.bf16.msra.mxu0 %v3977
  %4000 = vmatprep.subr.bf16.mxu0 0
  %4001 = vmatpush1.bf16.msra.mxu0 %v3978
  %4002 = vmatprep.subr.bf16.mxu0 0
  %4003 = vmatpush1.bf16.msra.mxu0 %v3979
  %4004 = vmatprep.subr.bf16.mxu0 0
  %4005 = vmatpush1.bf16.msra.mxu0 0
  %4006 = vmatprep.subr.bf16.mxu0 0
  %4007 = vmatpush1.bf16.msra.mxu0 0
  %4008 = vmatprep.subr.bf16.mxu0 0
  %4009 = vmatpush1.bf16.msra.mxu0 0
  %4010 = vmatprep.subr.bf16.mxu0 0
  %4011 = vmatpush1.bf16.msra.mxu0 0
  %4012 = vmatprep.subr.bf16.mxu0 0
  %4013 = vmatpush1.bf16.msra.mxu0 0
  %4014 = vmatprep.subr.bf16.mxu0 0
  %4015 = vmatpush1.bf16.msra.mxu0 0
  %4016 = vmatprep.subr.bf16.mxu0 0
  %4017 = vmatpush1.bf16.msra.mxu0 0
  %4018 = vmatprep.subr.bf16.mxu0 0
  %4019 = vmatpush1.bf16.msra.mxu0 0
  %4020 = vmatprep.mubr.bf16.mxu0 0
  %4021 = vmatmul.mubr.bf16.gmra.mrb[0].mxu0 %v3915
  %v4022 = vpop.f32.mrb[0].mxu0
  %v4023 = vadd.f32 0.0, %v4022
  %v4024 = vpop.f32.mrb[0].mxu0
  %v4025 = vpop.f32.mrb[0].mxu0
  %v4026 = vadd.f32 0.0, %v4025
  %v4027 = vpop.f32.mrb[0].mxu0
  %4028 = vmatprep.mubr.bf16.mxu0 0
  %4029 = vmatmul.mubr.bf16.gmra.mrb[0].mxu0 %v3916
  %v4030 = vpop.f32.mrb[0].mxu0
  %v4031 = vadd.f32 0.0, %v4030
  %v4032 = vpop.f32.mrb[0].mxu0
  %v4033 = vpop.f32.mrb[0].mxu0
  %v4034 = vadd.f32 0.0, %v4033
  %v4035 = vpop.f32.mrb[0].mxu0
  %4036 = vmatprep.mubr.bf16.mxu0 0
  %4037 = vmatmul.mubr.bf16.gmra.mrb[0].mxu0 %v3917
  %v4038 = vpop.f32.mrb[0].mxu0
  %v4039 = vadd.f32 0.0, %v4038
  %v4040 = vpop.f32.mrb[0].mxu0
  %v4041 = vpop.f32.mrb[0].mxu0
  %v4042 = vadd.f32 0.0, %v4041
  %v4043 = vpop.f32.mrb[0].mxu0
  %4044 = vmatprep.mubr.bf16.mxu0 0
  %4045 = vmatmul.mubr.bf16.gmra.mrb[0].mxu0 %v3918
  %v4046 = vpop.f32.mrb[0].mxu0
  %v4047 = vadd.f32 0.0, %v4046
  %v4048 = vpop.f32.mrb[0].mxu0
  %v4049 = vpop.f32.mrb[0].mxu0
  %v4050 = vadd.f32 0.0, %v4049
  %v4051 = vpop.f32.mrb[0].mxu0
  %4052 = vmatprep.mubr.bf16.mxu0 0
  %4053 = vmatmul.mubr.bf16.gmra.mrb[0].mxu0 %v3919
  %v4054 = vpop.f32.mrb[0].mxu0
  %v4055 = vadd.f32 0.0, %v4054
  %v4056 = vpop.f32.mrb[0].mxu0
  %v4057 = vpop.f32.mrb[0].mxu0
  %v4058 = vadd.f32 0.0, %v4057
  %v4059 = vpop.f32.mrb[0].mxu0
  %4060 = vmatprep.mubr.bf16.mxu0 0
  %4061 = vmatmul.mubr.bf16.gmra.mrb[0].mxu0 %v3920
  %v4062 = vpop.f32.mrb[0].mxu0
  %v4063 = vadd.f32 0.0, %v4062
  %v4064 = vpop.f32.mrb[0].mxu0
  %v4065 = vpop.f32.mrb[0].mxu0
  %v4066 = vadd.f32 0.0, %v4065
  %v4067 = vpop.f32.mrb[0].mxu0
  %4068 = vmatprep.mubr.bf16.mxu0 0
  %4069 = vmatmul.mubr.bf16.gmra.mrb[0].mxu0 %v3921
  %v4070 = vpop.f32.mrb[0].mxu0
  %v4071 = vadd.f32 0.0, %v4070
  %v4072 = vpop.f32.mrb[0].mxu0
  %v4073 = vpop.f32.mrb[0].mxu0
  %v4074 = vadd.f32 0.0, %v4073
  %v4075 = vpop.f32.mrb[0].mxu0
  %4076 = vmatprep.mubr.bf16.mxu0 0
  %4077 = vmatmul.mubr.bf16.gmra.mrb[0].mxu0 %v3922
  %v4078 = vpop.f32.mrb[0].mxu0
  %v4079 = vadd.f32 0.0, %v4078
  %v4080 = vpop.f32.mrb[0].mxu0
  %v4081 = vpop.f32.mrb[0].mxu0
  %v4082 = vadd.f32 0.0, %v4081
  %v4083 = vpop.f32.mrb[0].mxu0
  %4084 = vdwg.mxu0
  %v4085 = vadd.f32 %v3882, %v4023
  %v4086 = vadd.f32 %v3883, %v4026
  %v4087 = vadd.f32 %v3884, %v4031
  %v4088 = vadd.f32 %v3885, %v4034
  %v4089 = vadd.f32 %v3886, %v4039
  %v4090 = vadd.f32 %v3887, %v4042
  %v4091 = vadd.f32 %v3888, %v4047
  %v4092 = vadd.f32 %v3889, %v4050
  %v4093 = vadd.f32 %v3890, %v4055
  %v4094 = vadd.f32 %v3891, %v4058
  %v4095 = vadd.f32 %v3892, %v4063
  %v4096 = vadd.f32 %v3893, %v4066
  %v4097 = vadd.f32 %v3894, %v4071
  %v4098 = vadd.f32 %v3895, %v4074
  %v4099 = vadd.f32 %v3896, %v4079
  %v4100 = vadd.f32 %v3897, %v4082
  %v4101 = vld [vmem:[%s3898 + $0x1] sm:$0xff]
  %v4102 = vld [vmem:[%s3898 + $0x11] sm:$0xff]
  %v4103 = vld [vmem:[%s3898 + $0x21] sm:$0xff]
  %v4104 = vld [vmem:[%s3898 + $0x31] sm:$0xff]
  %v4105 = vld [vmem:[%s3898 + $0x41] sm:$0xff]
  %v4106 = vld [vmem:[%s3898 + $0x51] sm:$0xff]
  %v4107 = vld [vmem:[%s3898 + $0x61] sm:$0xff]
  %v4108 = vld [vmem:[%s3898 + $0x71] sm:$0xff]
  %v4109 = vld [vmem:[%s3898 + $0xc1] sm:$0xff]
  %v4110 = vld [vmem:[%s3898 + $0xd1] sm:$0xff]
  %v4111 = vld [vmem:[%s3898 + $0xe1] sm:$0xff]
  %v4112 = vld [vmem:[%s3898 + $0xf1] sm:$0xff]
  %v4113 = vld [vmem:[%s3898 + $0x101] sm:$0xff]
  %v4114 = vld [vmem:[%s3898 + $0x111] sm:$0xff]
  %v4115 = vld [vmem:[%s3898 + $0x121] sm:$0xff]
  %v4116 = vld [vmem:[%s3898 + $0x131] sm:$0xff]
  %v4117 = vpack.c.bf16 %v4102, %v4101
  %v4118 = vpack.c.bf16 %v4104, %v4103
  %v4119 = vpack.c.bf16 %v4106, %v4105
  %v4120 = vpack.c.bf16 %v4108, %v4107
  %v4121 = vpack.c.bf16 %v4110, %v4109
  %v4122 = vpack.c.bf16 %v4112, %v4111
  %v4123 = vpack.c.bf16 %v4114, %v4113
  %v4124 = vpack.c.bf16 %v4116, %v4115
  %s4125 = scalar_lea.vmem %s4, 704
  %v4126 = vld [vmem:[%s4125] sm:$0xf]
  %v4127 = vld [vmem:[%s4125 + $0x4] sm:$0xf]
  %v4128 = vld [vmem:[%s4125 + $0x8] sm:$0xf]
  %v4129 = vld [vmem:[%s4125 + $0xc] sm:$0xf]
  %v4130 = vld [vmem:[%s4125 + $0x10] sm:$0xf]
  %v4131 = vld [vmem:[%s4125 + $0x14] sm:$0xf]
  %v4132 = vld [vmem:[%s4125 + $0x18] sm:$0xf]
  %v4133 = vld [vmem:[%s4125 + $0x1c] sm:$0xf]
  %v4134 = vld [vmem:[%s4125 + $0x20] sm:$0xf]
  %v4135 = vld [vmem:[%s4125 + $0x24] sm:$0xf]
  %v4136 = vld [vmem:[%s4125 + $0x28] sm:$0xf]
  %v4137 = vld [vmem:[%s4125 + $0x2c] sm:$0xf]
  %v4138 = vld [vmem:[%s4125 + $0x30] sm:$0xf]
  %v4139 = vld [vmem:[%s4125 + $0x34] sm:$0xf]
  %v4140 = vld [vmem:[%s4125 + $0x38] sm:$0xf]
  %v4141 = vld [vmem:[%s4125 + $0x3c] sm:$0xf]
  %v4158 = vunpack.c.l.b16 %v4126
  %v4159 = vunpack.c.l.b16 %v4127
  %v4160 = vunpack.c.l.b16 %v4128
  %v4161 = vunpack.c.l.b16 %v4129
  %v4162 = vunpack.c.l.b16 %v4130
  %v4163 = vunpack.c.l.b16 %v4131
  %v4164 = vunpack.c.l.b16 %v4132
  %v4165 = vunpack.c.l.b16 %v4133
  %v4166 = vunpack.c.l.b16 %v4134
  %v4167 = vunpack.c.l.b16 %v4135
  %v4168 = vunpack.c.l.b16 %v4136
  %v4169 = vunpack.c.l.b16 %v4137
  %v4170 = vunpack.c.l.b16 %v4138
  %v4171 = vunpack.c.l.b16 %v4139
  %v4172 = vunpack.c.l.b16 %v4140
  %v4173 = vunpack.c.l.b16 %v4141
  %v4174 = vpack.c.b16 %v4159, %v4158
  %v4175 = vpack.c.b16 %v4161, %v4160
  %v4176 = vpack.c.b16 %v4163, %v4162
  %v4177 = vpack.c.b16 %v4165, %v4164
  %v4178 = vpack.c.b16 %v4167, %v4166
  %v4179 = vpack.c.b16 %v4169, %v4168
  %v4180 = vpack.c.b16 %v4171, %v4170
  %v4181 = vpack.c.b16 %v4173, %v4172
  %4190 = vmatprep.subr.bf16.mxu0 0
  %4191 = vmatpush1.bf16.msra.mxu0 %v4174
  %4192 = vmatprep.subr.bf16.mxu0 0
  %4193 = vmatpush1.bf16.msra.mxu0 %v4175
  %4194 = vmatprep.subr.bf16.mxu0 0
  %4195 = vmatpush1.bf16.msra.mxu0 %v4176
  %4196 = vmatprep.subr.bf16.mxu0 0
  %4197 = vmatpush1.bf16.msra.mxu0 %v4177
  %4198 = vmatprep.subr.bf16.mxu0 0
  %4199 = vmatpush1.bf16.msra.mxu0 %v4178
  %4200 = vmatprep.subr.bf16.mxu0 0
  %4201 = vmatpush1.bf16.msra.mxu0 %v4179
  %4202 = vmatprep.subr.bf16.mxu0 0
  %4203 = vmatpush1.bf16.msra.mxu0 %v4180
  %4204 = vmatprep.subr.bf16.mxu0 0
  %4205 = vmatpush1.bf16.msra.mxu0 %v4181
  %4206 = vmatprep.subr.bf16.mxu0 0
  %4207 = vmatpush1.bf16.msra.mxu0 0
  %4208 = vmatprep.subr.bf16.mxu0 0
  %4209 = vmatpush1.bf16.msra.mxu0 0
  %4210 = vmatprep.subr.bf16.mxu0 0
  %4211 = vmatpush1.bf16.msra.mxu0 0
  %4212 = vmatprep.subr.bf16.mxu0 0
  %4213 = vmatpush1.bf16.msra.mxu0 0
  %4214 = vmatprep.subr.bf16.mxu0 0
  %4215 = vmatpush1.bf16.msra.mxu0 0
  %4216 = vmatprep.subr.bf16.mxu0 0
  %4217 = vmatpush1.bf16.msra.mxu0 0
  %4218 = vmatprep.subr.bf16.mxu0 0
  %4219 = vmatpush1.bf16.msra.mxu0 0
  %4220 = vmatprep.subr.bf16.mxu0 0
  %4221 = vmatpush1.bf16.msra.mxu0 0
  %4222 = vmatprep.mubr.bf16.mxu0 0
  %4223 = vmatmul.mubr.bf16.gmra.mrb[0].mxu0 %v4117
  %v4224 = vpop.f32.mrb[0].mxu0
  %v4225 = vadd.f32 0.0, %v4224
  %v4226 = vpop.f32.mrb[0].mxu0
  %v4227 = vpop.f32.mrb[0].mxu0
  %v4228 = vadd.f32 0.0, %v4227
  %v4229 = vpop.f32.mrb[0].mxu0
  %4230 = vmatprep.mubr.bf16.mxu0 0
  %4231 = vmatmul.mubr.bf16.gmra.mrb[0].mxu0 %v4118
  %v4232 = vpop.f32.mrb[0].mxu0
  %v4233 = vadd.f32 0.0, %v4232
  %v4234 = vpop.f32.mrb[0].mxu0
  %v4235 = vpop.f32.mrb[0].mxu0
  %v4236 = vadd.f32 0.0, %v4235
  %v4237 = vpop.f32.mrb[0].mxu0
  %4238 = vmatprep.mubr.bf16.mxu0 0
  %4239 = vmatmul.mubr.bf16.gmra.mrb[0].mxu0 %v4119
  %v4240 = vpop.f32.mrb[0].mxu0
  %v4241 = vadd.f32 0.0, %v4240
  %v4242 = vpop.f32.mrb[0].mxu0
  %v4243 = vpop.f32.mrb[0].mxu0
  %v4244 = vadd.f32 0.0, %v4243
  %v4245 = vpop.f32.mrb[0].mxu0
  %4246 = vmatprep.mubr.bf16.mxu0 0
  %4247 = vmatmul.mubr.bf16.gmra.mrb[0].mxu0 %v4120
  %v4248 = vpop.f32.mrb[0].mxu0
  %v4249 = vadd.f32 0.0, %v4248
  %v4250 = vpop.f32.mrb[0].mxu0
  %v4251 = vpop.f32.mrb[0].mxu0
  %v4252 = vadd.f32 0.0, %v4251
  %v4253 = vpop.f32.mrb[0].mxu0
  %4254 = vmatprep.mubr.bf16.mxu0 0
  %4255 = vmatmul.mubr.bf16.gmra.mrb[0].mxu0 %v4121
  %v4256 = vpop.f32.mrb[0].mxu0
  %v4257 = vadd.f32 0.0, %v4256
  %v4258 = vpop.f32.mrb[0].mxu0
  %v4259 = vpop.f32.mrb[0].mxu0
  %v4260 = vadd.f32 0.0, %v4259
  %v4261 = vpop.f32.mrb[0].mxu0
  %4262 = vmatprep.mubr.bf16.mxu0 0
  %4263 = vmatmul.mubr.bf16.gmra.mrb[0].mxu0 %v4122
  %v4264 = vpop.f32.mrb[0].mxu0
  %v4265 = vadd.f32 0.0, %v4264
  %v4266 = vpop.f32.mrb[0].mxu0
  %v4267 = vpop.f32.mrb[0].mxu0
  %v4268 = vadd.f32 0.0, %v4267
  %v4269 = vpop.f32.mrb[0].mxu0
  %4270 = vmatprep.mubr.bf16.mxu0 0
  %4271 = vmatmul.mubr.bf16.gmra.mrb[0].mxu0 %v4123
  %v4272 = vpop.f32.mrb[0].mxu0
  %v4273 = vadd.f32 0.0, %v4272
  %v4274 = vpop.f32.mrb[0].mxu0
  %v4275 = vpop.f32.mrb[0].mxu0
  %v4276 = vadd.f32 0.0, %v4275
  %v4277 = vpop.f32.mrb[0].mxu0
  %4278 = vmatprep.mubr.bf16.mxu0 0
  %4279 = vmatmul.mubr.bf16.gmra.mrb[0].mxu0 %v4124
  %v4280 = vpop.f32.mrb[0].mxu0
  %v4281 = vadd.f32 0.0, %v4280
  %v4282 = vpop.f32.mrb[0].mxu0
  %v4283 = vpop.f32.mrb[0].mxu0
  %v4284 = vadd.f32 0.0, %v4283
  %v4285 = vpop.f32.mrb[0].mxu0
  %4286 = vdwg.mxu0
  %v4287 = vadd.f32 %v4085, %v4225
  %v4288 = vadd.f32 %v4086, %v4228
  %v4289 = vadd.f32 %v4087, %v4233
  %v4290 = vadd.f32 %v4088, %v4236
  %v4291 = vadd.f32 %v4089, %v4241
  %v4292 = vadd.f32 %v4090, %v4244
  %v4293 = vadd.f32 %v4091, %v4249
  %v4294 = vadd.f32 %v4092, %v4252
  %v4295 = vadd.f32 %v4093, %v4257
  %v4296 = vadd.f32 %v4094, %v4260
  %v4297 = vadd.f32 %v4095, %v4265
  %v4298 = vadd.f32 %v4096, %v4268
  %v4299 = vadd.f32 %v4097, %v4273
  %v4300 = vadd.f32 %v4098, %v4276
  %v4301 = vadd.f32 %v4099, %v4281
  %v4302 = vadd.f32 %v4100, %v4284
  %v4303 = vld [vmem:[%s3898 + $0x2] sm:$0xff]
  %v4304 = vld [vmem:[%s3898 + $0x12] sm:$0xff]
  %v4305 = vld [vmem:[%s3898 + $0x22] sm:$0xff]
  %v4306 = vld [vmem:[%s3898 + $0x32] sm:$0xff]
  %v4307 = vld [vmem:[%s3898 + $0x42] sm:$0xff]
  %v4308 = vld [vmem:[%s3898 + $0x52] sm:$0xff]
  %v4309 = vld [vmem:[%s3898 + $0x62] sm:$0xff]
  %v4310 = vld [vmem:[%s3898 + $0x72] sm:$0xff]
  %v4311 = vld [vmem:[%s3898 + $0xc2] sm:$0xff]
  %v4312 = vld [vmem:[%s3898 + $0xd2] sm:$0xff]
  %v4313 = vld [vmem:[%s3898 + $0xe2] sm:$0xff]
  %v4314 = vld [vmem:[%s3898 + $0xf2] sm:$0xff]
  %v4315 = vld [vmem:[%s3898 + $0x102] sm:$0xff]
  %v4316 = vld [vmem:[%s3898 + $0x112] sm:$0xff]
  %v4317 = vld [vmem:[%s3898 + $0x122] sm:$0xff]
  %v4318 = vld [vmem:[%s3898 + $0x132] sm:$0xff]
  %v4319 = vpack.c.bf16 %v4304, %v4303
  %v4320 = vpack.c.bf16 %v4306, %v4305
  %v4321 = vpack.c.bf16 %v4308, %v4307
  %v4322 = vpack.c.bf16 %v4310, %v4309
  %v4323 = vpack.c.bf16 %v4312, %v4311
  %v4324 = vpack.c.bf16 %v4314, %v4313
  %v4325 = vpack.c.bf16 %v4316, %v4315
  %v4326 = vpack.c.bf16 %v4318, %v4317
  %s4327 = scalar_lea.vmem %s4, 768
  %v4328 = vld [vmem:[%s4327] sm:$0xf]
  %v4329 = vld [vmem:[%s4327 + $0x4] sm:$0xf]
  %v4330 = vld [vmem:[%s4327 + $0x8] sm:$0xf]
  %v4331 = vld [vmem:[%s4327 + $0xc] sm:$0xf]
  %v4332 = vld [vmem:[%s4327 + $0x10] sm:$0xf]
  %v4333 = vld [vmem:[%s4327 + $0x14] sm:$0xf]
  %v4334 = vld [vmem:[%s4327 + $0x18] sm:$0xf]
  %v4335 = vld [vmem:[%s4327 + $0x1c] sm:$0xf]
  %v4336 = vld [vmem:[%s4327 + $0x20] sm:$0xf]
  %v4337 = vld [vmem:[%s4327 + $0x24] sm:$0xf]
  %v4338 = vld [vmem:[%s4327 + $0x28] sm:$0xf]
  %v4339 = vld [vmem:[%s4327 + $0x2c] sm:$0xf]
  %v4340 = vld [vmem:[%s4327 + $0x30] sm:$0xf]
  %v4341 = vld [vmem:[%s4327 + $0x34] sm:$0xf]
  %v4342 = vld [vmem:[%s4327 + $0x38] sm:$0xf]
  %v4343 = vld [vmem:[%s4327 + $0x3c] sm:$0xf]
  %v4360 = vunpack.c.l.b16 %v4328
  %v4361 = vunpack.c.l.b16 %v4329
  %v4362 = vunpack.c.l.b16 %v4330
  %v4363 = vunpack.c.l.b16 %v4331
  %v4364 = vunpack.c.l.b16 %v4332
  %v4365 = vunpack.c.l.b16 %v4333
  %v4366 = vunpack.c.l.b16 %v4334
  %v4367 = vunpack.c.l.b16 %v4335
  %v4368 = vunpack.c.l.b16 %v4336
  %v4369 = vunpack.c.l.b16 %v4337
  %v4370 = vunpack.c.l.b16 %v4338
  %v4371 = vunpack.c.l.b16 %v4339
  %v4372 = vunpack.c.l.b16 %v4340
  %v4373 = vunpack.c.l.b16 %v4341
  %v4374 = vunpack.c.l.b16 %v4342
  %v4375 = vunpack.c.l.b16 %v4343
  %v4376 = vpack.c.b16 %v4361, %v4360
  %v4377 = vpack.c.b16 %v4363, %v4362
  %v4378 = vpack.c.b16 %v4365, %v4364
  %v4379 = vpack.c.b16 %v4367, %v4366
  %v4380 = vpack.c.b16 %v4369, %v4368
  %v4381 = vpack.c.b16 %v4371, %v4370
  %v4382 = vpack.c.b16 %v4373, %v4372
  %v4383 = vpack.c.b16 %v4375, %v4374
  %4392 = vmatprep.subr.bf16.mxu0 0
  %4393 = vmatpush1.bf16.msra.mxu0 %v4376
  %4394 = vmatprep.subr.bf16.mxu0 0
  %4395 = vmatpush1.bf16.msra.mxu0 %v4377
  %4396 = vmatprep.subr.bf16.mxu0 0
  %4397 = vmatpush1.bf16.msra.mxu0 %v4378
  %4398 = vmatprep.subr.bf16.mxu0 0
  %4399 = vmatpush1.bf16.msra.mxu0 %v4379
  %4400 = vmatprep.subr.bf16.mxu0 0
  %4401 = vmatpush1.bf16.msra.mxu0 %v4380
  %4402 = vmatprep.subr.bf16.mxu0 0
  %4403 = vmatpush1.bf16.msra.mxu0 %v4381
  %4404 = vmatprep.subr.bf16.mxu0 0
  %4405 = vmatpush1.bf16.msra.mxu0 %v4382
  %4406 = vmatprep.subr.bf16.mxu0 0
  %4407 = vmatpush1.bf16.msra.mxu0 %v4383
  %4408 = vmatprep.subr.bf16.mxu0 0
  %4409 = vmatpush1.bf16.msra.mxu0 0
  %4410 = vmatprep.subr.bf16.mxu0 0
  %4411 = vmatpush1.bf16.msra.mxu0 0
  %4412 = vmatprep.subr.bf16.mxu0 0
  %4413 = vmatpush1.bf16.msra.mxu0 0
  %4414 = vmatprep.subr.bf16.mxu0 0
  %4415 = vmatpush1.bf16.msra.mxu0 0
  %4416 = vmatprep.subr.bf16.mxu0 0
  %4417 = vmatpush1.bf16.msra.mxu0 0
  %4418 = vmatprep.subr.bf16.mxu0 0
  %4419 = vmatpush1.bf16.msra.mxu0 0
  %4420 = vmatprep.subr.bf16.mxu0 0
  %4421 = vmatpush1.bf16.msra.mxu0 0
  %4422 = vmatprep.subr.bf16.mxu0 0
  %4423 = vmatpush1.bf16.msra.mxu0 0
  %4424 = vmatprep.mubr.bf16.mxu0 0
  %4425 = vmatmul.mubr.bf16.gmra.mrb[0].mxu0 %v4319
  %v4426 = vpop.f32.mrb[0].mxu0
  %v4427 = vadd.f32 0.0, %v4426
  %v4428 = vpop.f32.mrb[0].mxu0
  %v4429 = vpop.f32.mrb[0].mxu0
  %v4430 = vadd.f32 0.0, %v4429
  %v4431 = vpop.f32.mrb[0].mxu0
  %4432 = vmatprep.mubr.bf16.mxu0 0
  %4433 = vmatmul.mubr.bf16.gmra.mrb[0].mxu0 %v4320
  %v4434 = vpop.f32.mrb[0].mxu0
  %v4435 = vadd.f32 0.0, %v4434
  %v4436 = vpop.f32.mrb[0].mxu0
  %v4437 = vpop.f32.mrb[0].mxu0
  %v4438 = vadd.f32 0.0, %v4437
  %v4439 = vpop.f32.mrb[0].mxu0
  %4440 = vmatprep.mubr.bf16.mxu0 0
  %4441 = vmatmul.mubr.bf16.gmra.mrb[0].mxu0 %v4321
  %v4442 = vpop.f32.mrb[0].mxu0
  %v4443 = vadd.f32 0.0, %v4442
  %v4444 = vpop.f32.mrb[0].mxu0
  %v4445 = vpop.f32.mrb[0].mxu0
  %v4446 = vadd.f32 0.0, %v4445
  %v4447 = vpop.f32.mrb[0].mxu0
  %4448 = vmatprep.mubr.bf16.mxu0 0
  %4449 = vmatmul.mubr.bf16.gmra.mrb[0].mxu0 %v4322
  %v4450 = vpop.f32.mrb[0].mxu0
  %v4451 = vadd.f32 0.0, %v4450
  %v4452 = vpop.f32.mrb[0].mxu0
  %v4453 = vpop.f32.mrb[0].mxu0
  %v4454 = vadd.f32 0.0, %v4453
  %v4455 = vpop.f32.mrb[0].mxu0
  %4456 = vmatprep.mubr.bf16.mxu0 0
  %4457 = vmatmul.mubr.bf16.gmra.mrb[0].mxu0 %v4323
  %v4458 = vpop.f32.mrb[0].mxu0
  %v4459 = vadd.f32 0.0, %v4458
  %v4460 = vpop.f32.mrb[0].mxu0
  %v4461 = vpop.f32.mrb[0].mxu0
  %v4462 = vadd.f32 0.0, %v4461
  %v4463 = vpop.f32.mrb[0].mxu0
  %4464 = vmatprep.mubr.bf16.mxu0 0
  %4465 = vmatmul.mubr.bf16.gmra.mrb[0].mxu0 %v4324
  %v4466 = vpop.f32.mrb[0].mxu0
  %v4467 = vadd.f32 0.0, %v4466
  %v4468 = vpop.f32.mrb[0].mxu0
  %v4469 = vpop.f32.mrb[0].mxu0
  %v4470 = vadd.f32 0.0, %v4469
  %v4471 = vpop.f32.mrb[0].mxu0
  %4472 = vmatprep.mubr.bf16.mxu0 0
  %4473 = vmatmul.mubr.bf16.gmra.mrb[0].mxu0 %v4325
  %v4474 = vpop.f32.mrb[0].mxu0
  %v4475 = vadd.f32 0.0, %v4474
  %v4476 = vpop.f32.mrb[0].mxu0
  %v4477 = vpop.f32.mrb[0].mxu0
  %v4478 = vadd.f32 0.0, %v4477
  %v4479 = vpop.f32.mrb[0].mxu0
  %4480 = vmatprep.mubr.bf16.mxu0 0
  %4481 = vmatmul.mubr.bf16.gmra.mrb[0].mxu0 %v4326
  %v4482 = vpop.f32.mrb[0].mxu0
  %v4483 = vadd.f32 0.0, %v4482
  %v4484 = vpop.f32.mrb[0].mxu0
  %v4485 = vpop.f32.mrb[0].mxu0
  %v4486 = vadd.f32 0.0, %v4485
  %v4487 = vpop.f32.mrb[0].mxu0
  %4488 = vdwg.mxu0
  %v4489 = vadd.f32 %v4287, %v4427
  %v4490 = vadd.f32 %v4288, %v4430
  %v4491 = vadd.f32 %v4289, %v4435
  %v4492 = vadd.f32 %v4290, %v4438
  %v4493 = vadd.f32 %v4291, %v4443
  %v4494 = vadd.f32 %v4292, %v4446
  %v4495 = vadd.f32 %v4293, %v4451
  %v4496 = vadd.f32 %v4294, %v4454
  %v4497 = vadd.f32 %v4295, %v4459
  %v4498 = vadd.f32 %v4296, %v4462
  %v4499 = vadd.f32 %v4297, %v4467
  %v4500 = vadd.f32 %v4298, %v4470
  %v4501 = vadd.f32 %v4299, %v4475
  %v4502 = vadd.f32 %v4300, %v4478
  %v4503 = vadd.f32 %v4301, %v4483
  %v4504 = vadd.f32 %v4302, %v4486
  %v4505 = vld [vmem:[%s3898 + $0x3] sm:$0xff]
  %v4506 = vld [vmem:[%s3898 + $0x13] sm:$0xff]
  %v4507 = vld [vmem:[%s3898 + $0x23] sm:$0xff]
  %v4508 = vld [vmem:[%s3898 + $0x33] sm:$0xff]
  %v4509 = vld [vmem:[%s3898 + $0x43] sm:$0xff]
  %v4510 = vld [vmem:[%s3898 + $0x53] sm:$0xff]
  %v4511 = vld [vmem:[%s3898 + $0x63] sm:$0xff]
  %v4512 = vld [vmem:[%s3898 + $0x73] sm:$0xff]
  %v4513 = vld [vmem:[%s3898 + $0xc3] sm:$0xff]
  %v4514 = vld [vmem:[%s3898 + $0xd3] sm:$0xff]
  %v4515 = vld [vmem:[%s3898 + $0xe3] sm:$0xff]
  %v4516 = vld [vmem:[%s3898 + $0xf3] sm:$0xff]
  %v4517 = vld [vmem:[%s3898 + $0x103] sm:$0xff]
  %v4518 = vld [vmem:[%s3898 + $0x113] sm:$0xff]
  %v4519 = vld [vmem:[%s3898 + $0x123] sm:$0xff]
  %v4520 = vld [vmem:[%s3898 + $0x133] sm:$0xff]
  %v4521 = vpack.c.bf16 %v4506, %v4505
  %v4522 = vpack.c.bf16 %v4508, %v4507
  %v4523 = vpack.c.bf16 %v4510, %v4509
  %v4524 = vpack.c.bf16 %v4512, %v4511
  %v4525 = vpack.c.bf16 %v4514, %v4513
  %v4526 = vpack.c.bf16 %v4516, %v4515
  %v4527 = vpack.c.bf16 %v4518, %v4517
  %v4528 = vpack.c.bf16 %v4520, %v4519
  %s4529 = scalar_lea.vmem %s4, 832
  %v4530 = vld [vmem:[%s4529] sm:$0xf]
  %v4531 = vld [vmem:[%s4529 + $0x4] sm:$0xf]
  %v4532 = vld [vmem:[%s4529 + $0x8] sm:$0xf]
  %v4533 = vld [vmem:[%s4529 + $0xc] sm:$0xf]
  %v4534 = vld [vmem:[%s4529 + $0x10] sm:$0xf]
  %v4535 = vld [vmem:[%s4529 + $0x14] sm:$0xf]
  %v4536 = vld [vmem:[%s4529 + $0x18] sm:$0xf]
  %v4537 = vld [vmem:[%s4529 + $0x1c] sm:$0xf]
  %v4538 = vld [vmem:[%s4529 + $0x20] sm:$0xf]
  %v4539 = vld [vmem:[%s4529 + $0x24] sm:$0xf]
  %v4540 = vld [vmem:[%s4529 + $0x28] sm:$0xf]
  %v4541 = vld [vmem:[%s4529 + $0x2c] sm:$0xf]
  %v4542 = vld [vmem:[%s4529 + $0x30] sm:$0xf]
  %v4543 = vld [vmem:[%s4529 + $0x34] sm:$0xf]
  %v4544 = vld [vmem:[%s4529 + $0x38] sm:$0xf]
  %v4545 = vld [vmem:[%s4529 + $0x3c] sm:$0xf]
  %v4562 = vunpack.c.l.b16 %v4530
  %v4563 = vunpack.c.l.b16 %v4531
  %v4564 = vunpack.c.l.b16 %v4532
  %v4565 = vunpack.c.l.b16 %v4533
  %v4566 = vunpack.c.l.b16 %v4534
  %v4567 = vunpack.c.l.b16 %v4535
  %v4568 = vunpack.c.l.b16 %v4536
  %v4569 = vunpack.c.l.b16 %v4537
  %v4570 = vunpack.c.l.b16 %v4538
  %v4571 = vunpack.c.l.b16 %v4539
  %v4572 = vunpack.c.l.b16 %v4540
  %v4573 = vunpack.c.l.b16 %v4541
  %v4574 = vunpack.c.l.b16 %v4542
  %v4575 = vunpack.c.l.b16 %v4543
  %v4576 = vunpack.c.l.b16 %v4544
  %v4577 = vunpack.c.l.b16 %v4545
  %v4578 = vpack.c.b16 %v4563, %v4562
  %v4579 = vpack.c.b16 %v4565, %v4564
  %v4580 = vpack.c.b16 %v4567, %v4566
  %v4581 = vpack.c.b16 %v4569, %v4568
  %v4582 = vpack.c.b16 %v4571, %v4570
  %v4583 = vpack.c.b16 %v4573, %v4572
  %v4584 = vpack.c.b16 %v4575, %v4574
  %v4585 = vpack.c.b16 %v4577, %v4576
  %4594 = vmatprep.subr.bf16.mxu0 0
  %4595 = vmatpush1.bf16.msra.mxu0 %v4578
  %4596 = vmatprep.subr.bf16.mxu0 0
  %4597 = vmatpush1.bf16.msra.mxu0 %v4579
  %4598 = vmatprep.subr.bf16.mxu0 0
  %4599 = vmatpush1.bf16.msra.mxu0 %v4580
  %4600 = vmatprep.subr.bf16.mxu0 0
  %4601 = vmatpush1.bf16.msra.mxu0 %v4581
  %4602 = vmatprep.subr.bf16.mxu0 0
  %4603 = vmatpush1.bf16.msra.mxu0 %v4582
  %4604 = vmatprep.subr.bf16.mxu0 0
  %4605 = vmatpush1.bf16.msra.mxu0 %v4583
  %4606 = vmatprep.subr.bf16.mxu0 0
  %4607 = vmatpush1.bf16.msra.mxu0 %v4584
  %4608 = vmatprep.subr.bf16.mxu0 0
  %4609 = vmatpush1.bf16.msra.mxu0 %v4585
  %4610 = vmatprep.subr.bf16.mxu0 0
  %4611 = vmatpush1.bf16.msra.mxu0 0
  %4612 = vmatprep.subr.bf16.mxu0 0
  %4613 = vmatpush1.bf16.msra.mxu0 0
  %4614 = vmatprep.subr.bf16.mxu0 0
  %4615 = vmatpush1.bf16.msra.mxu0 0
  %4616 = vmatprep.subr.bf16.mxu0 0
  %4617 = vmatpush1.bf16.msra.mxu0 0
  %4618 = vmatprep.subr.bf16.mxu0 0
  %4619 = vmatpush1.bf16.msra.mxu0 0
  %4620 = vmatprep.subr.bf16.mxu0 0
  %4621 = vmatpush1.bf16.msra.mxu0 0
  %4622 = vmatprep.subr.bf16.mxu0 0
  %4623 = vmatpush1.bf16.msra.mxu0 0
  %4624 = vmatprep.subr.bf16.mxu0 0
  %4625 = vmatpush1.bf16.msra.mxu0 0
  %4626 = vmatprep.mubr.bf16.mxu0 0
  %4627 = vmatmul.mubr.bf16.gmra.mrb[0].mxu0 %v4521
  %v4628 = vpop.f32.mrb[0].mxu0
  %v4629 = vadd.f32 0.0, %v4628
  %v4630 = vpop.f32.mrb[0].mxu0
  %v4631 = vpop.f32.mrb[0].mxu0
  %v4632 = vadd.f32 0.0, %v4631
  %v4633 = vpop.f32.mrb[0].mxu0
  %4634 = vmatprep.mubr.bf16.mxu0 0
  %4635 = vmatmul.mubr.bf16.gmra.mrb[0].mxu0 %v4522
  %v4636 = vpop.f32.mrb[0].mxu0
  %v4637 = vadd.f32 0.0, %v4636
  %v4638 = vpop.f32.mrb[0].mxu0
  %v4639 = vpop.f32.mrb[0].mxu0
  %v4640 = vadd.f32 0.0, %v4639
  %v4641 = vpop.f32.mrb[0].mxu0
  %4642 = vmatprep.mubr.bf16.mxu0 0
  %4643 = vmatmul.mubr.bf16.gmra.mrb[0].mxu0 %v4523
  %v4644 = vpop.f32.mrb[0].mxu0
  %v4645 = vadd.f32 0.0, %v4644
  %v4646 = vpop.f32.mrb[0].mxu0
  %v4647 = vpop.f32.mrb[0].mxu0
  %v4648 = vadd.f32 0.0, %v4647
  %v4649 = vpop.f32.mrb[0].mxu0
  %4650 = vmatprep.mubr.bf16.mxu0 0
  %4651 = vmatmul.mubr.bf16.gmra.mrb[0].mxu0 %v4524
  %v4652 = vpop.f32.mrb[0].mxu0
  %v4653 = vadd.f32 0.0, %v4652
  %v4654 = vpop.f32.mrb[0].mxu0
  %v4655 = vpop.f32.mrb[0].mxu0
  %v4656 = vadd.f32 0.0, %v4655
  %v4657 = vpop.f32.mrb[0].mxu0
  %4658 = vmatprep.mubr.bf16.mxu0 0
  %4659 = vmatmul.mubr.bf16.gmra.mrb[0].mxu0 %v4525
  %v4660 = vpop.f32.mrb[0].mxu0
  %v4661 = vadd.f32 0.0, %v4660
  %v4662 = vpop.f32.mrb[0].mxu0
  %v4663 = vpop.f32.mrb[0].mxu0
  %v4664 = vadd.f32 0.0, %v4663
  %v4665 = vpop.f32.mrb[0].mxu0
  %4666 = vmatprep.mubr.bf16.mxu0 0
  %4667 = vmatmul.mubr.bf16.gmra.mrb[0].mxu0 %v4526
  %v4668 = vpop.f32.mrb[0].mxu0
  %v4669 = vadd.f32 0.0, %v4668
  %v4670 = vpop.f32.mrb[0].mxu0
  %v4671 = vpop.f32.mrb[0].mxu0
  %v4672 = vadd.f32 0.0, %v4671
  %v4673 = vpop.f32.mrb[0].mxu0
  %4674 = vmatprep.mubr.bf16.mxu0 0
  %4675 = vmatmul.mubr.bf16.gmra.mrb[0].mxu0 %v4527
  %v4676 = vpop.f32.mrb[0].mxu0
  %v4677 = vadd.f32 0.0, %v4676
  %v4678 = vpop.f32.mrb[0].mxu0
  %v4679 = vpop.f32.mrb[0].mxu0
  %v4680 = vadd.f32 0.0, %v4679
  %v4681 = vpop.f32.mrb[0].mxu0
  %4682 = vmatprep.mubr.bf16.mxu0 0
  %4683 = vmatmul.mubr.bf16.gmra.mrb[0].mxu0 %v4528
  %v4684 = vpop.f32.mrb[0].mxu0
  %v4685 = vadd.f32 0.0, %v4684
  %v4686 = vpop.f32.mrb[0].mxu0
  %v4687 = vpop.f32.mrb[0].mxu0
  %v4688 = vadd.f32 0.0, %v4687
  %v4689 = vpop.f32.mrb[0].mxu0
  %4690 = vdwg.mxu0
  %v4691 = vadd.f32 %v4489, %v4629
  %v4692 = vadd.f32 %v4490, %v4632
  %v4693 = vadd.f32 %v4491, %v4637
  %v4694 = vadd.f32 %v4492, %v4640
  %v4695 = vadd.f32 %v4493, %v4645
  %v4696 = vadd.f32 %v4494, %v4648
  %v4697 = vadd.f32 %v4495, %v4653
  %v4698 = vadd.f32 %v4496, %v4656
  %v4699 = vadd.f32 %v4497, %v4661
  %v4700 = vadd.f32 %v4498, %v4664
  %v4701 = vadd.f32 %v4499, %v4669
  %v4702 = vadd.f32 %v4500, %v4672
  %v4703 = vadd.f32 %v4501, %v4677
  %v4704 = vadd.f32 %v4502, %v4680
  %v4705 = vadd.f32 %v4503, %v4685
  %v4706 = vadd.f32 %v4504, %v4688
  %v4707 = vld [vmem:[%s3898 + $0x4] sm:$0xff]
  %v4708 = vld [vmem:[%s3898 + $0x14] sm:$0xff]
  %v4709 = vld [vmem:[%s3898 + $0x24] sm:$0xff]
  %v4710 = vld [vmem:[%s3898 + $0x34] sm:$0xff]
  %v4711 = vld [vmem:[%s3898 + $0x44] sm:$0xff]
  %v4712 = vld [vmem:[%s3898 + $0x54] sm:$0xff]
  %v4713 = vld [vmem:[%s3898 + $0x64] sm:$0xff]
  %v4714 = vld [vmem:[%s3898 + $0x74] sm:$0xff]
  %v4715 = vld [vmem:[%s3898 + $0xc4] sm:$0xff]
  %v4716 = vld [vmem:[%s3898 + $0xd4] sm:$0xff]
  %v4717 = vld [vmem:[%s3898 + $0xe4] sm:$0xff]
  %v4718 = vld [vmem:[%s3898 + $0xf4] sm:$0xff]
  %v4719 = vld [vmem:[%s3898 + $0x104] sm:$0xff]
  %v4720 = vld [vmem:[%s3898 + $0x114] sm:$0xff]
  %v4721 = vld [vmem:[%s3898 + $0x124] sm:$0xff]
  %v4722 = vld [vmem:[%s3898 + $0x134] sm:$0xff]
  %v4723 = vpack.c.bf16 %v4708, %v4707
  %v4724 = vpack.c.bf16 %v4710, %v4709
  %v4725 = vpack.c.bf16 %v4712, %v4711
  %v4726 = vpack.c.bf16 %v4714, %v4713
  %v4727 = vpack.c.bf16 %v4716, %v4715
  %v4728 = vpack.c.bf16 %v4718, %v4717
  %v4729 = vpack.c.bf16 %v4720, %v4719
  %v4730 = vpack.c.bf16 %v4722, %v4721
  %s4731 = scalar_lea.vmem %s4, 896
  %v4732 = vld [vmem:[%s4731] sm:$0xf]
  %v4733 = vld [vmem:[%s4731 + $0x4] sm:$0xf]
  %v4734 = vld [vmem:[%s4731 + $0x8] sm:$0xf]
  %v4735 = vld [vmem:[%s4731 + $0xc] sm:$0xf]
  %v4736 = vld [vmem:[%s4731 + $0x10] sm:$0xf]
  %v4737 = vld [vmem:[%s4731 + $0x14] sm:$0xf]
  %v4738 = vld [vmem:[%s4731 + $0x18] sm:$0xf]
  %v4739 = vld [vmem:[%s4731 + $0x1c] sm:$0xf]
  %v4740 = vld [vmem:[%s4731 + $0x20] sm:$0xf]
  %v4741 = vld [vmem:[%s4731 + $0x24] sm:$0xf]
  %v4742 = vld [vmem:[%s4731 + $0x28] sm:$0xf]
  %v4743 = vld [vmem:[%s4731 + $0x2c] sm:$0xf]
  %v4744 = vld [vmem:[%s4731 + $0x30] sm:$0xf]
  %v4745 = vld [vmem:[%s4731 + $0x34] sm:$0xf]
  %v4746 = vld [vmem:[%s4731 + $0x38] sm:$0xf]
  %v4747 = vld [vmem:[%s4731 + $0x3c] sm:$0xf]
  %v4764 = vunpack.c.l.b16 %v4732
  %v4765 = vunpack.c.l.b16 %v4733
  %v4766 = vunpack.c.l.b16 %v4734
  %v4767 = vunpack.c.l.b16 %v4735
  %v4768 = vunpack.c.l.b16 %v4736
  %v4769 = vunpack.c.l.b16 %v4737
  %v4770 = vunpack.c.l.b16 %v4738
  %v4771 = vunpack.c.l.b16 %v4739
  %v4772 = vunpack.c.l.b16 %v4740
  %v4773 = vunpack.c.l.b16 %v4741
  %v4774 = vunpack.c.l.b16 %v4742
  %v4775 = vunpack.c.l.b16 %v4743
  %v4776 = vunpack.c.l.b16 %v4744
  %v4777 = vunpack.c.l.b16 %v4745
  %v4778 = vunpack.c.l.b16 %v4746
  %v4779 = vunpack.c.l.b16 %v4747
  %v4780 = vpack.c.b16 %v4765, %v4764
  %v4781 = vpack.c.b16 %v4767, %v4766
  %v4782 = vpack.c.b16 %v4769, %v4768
  %v4783 = vpack.c.b16 %v4771, %v4770
  %v4784 = vpack.c.b16 %v4773, %v4772
  %v4785 = vpack.c.b16 %v4775, %v4774
  %v4786 = vpack.c.b16 %v4777, %v4776
  %v4787 = vpack.c.b16 %v4779, %v4778
  %4796 = vmatprep.subr.bf16.mxu0 0
  %4797 = vmatpush1.bf16.msra.mxu0 %v4780
  %4798 = vmatprep.subr.bf16.mxu0 0
  %4799 = vmatpush1.bf16.msra.mxu0 %v4781
  %4800 = vmatprep.subr.bf16.mxu0 0
  %4801 = vmatpush1.bf16.msra.mxu0 %v4782
  %4802 = vmatprep.subr.bf16.mxu0 0
  %4803 = vmatpush1.bf16.msra.mxu0 %v4783
  %4804 = vmatprep.subr.bf16.mxu0 0
  %4805 = vmatpush1.bf16.msra.mxu0 %v4784
  %4806 = vmatprep.subr.bf16.mxu0 0
  %4807 = vmatpush1.bf16.msra.mxu0 %v4785
  %4808 = vmatprep.subr.bf16.mxu0 0
  %4809 = vmatpush1.bf16.msra.mxu0 %v4786
  %4810 = vmatprep.subr.bf16.mxu0 0
  %4811 = vmatpush1.bf16.msra.mxu0 %v4787
  %4812 = vmatprep.subr.bf16.mxu0 0
  %4813 = vmatpush1.bf16.msra.mxu0 0
  %4814 = vmatprep.subr.bf16.mxu0 0
  %4815 = vmatpush1.bf16.msra.mxu0 0
  %4816 = vmatprep.subr.bf16.mxu0 0
  %4817 = vmatpush1.bf16.msra.mxu0 0
  %4818 = vmatprep.subr.bf16.mxu0 0
  %4819 = vmatpush1.bf16.msra.mxu0 0
  %4820 = vmatprep.subr.bf16.mxu0 0
  %4821 = vmatpush1.bf16.msra.mxu0 0
  %4822 = vmatprep.subr.bf16.mxu0 0
  %4823 = vmatpush1.bf16.msra.mxu0 0
  %4824 = vmatprep.subr.bf16.mxu0 0
  %4825 = vmatpush1.bf16.msra.mxu0 0
  %4826 = vmatprep.subr.bf16.mxu0 0
  %4827 = vmatpush1.bf16.msra.mxu0 0
  %4828 = vmatprep.mubr.bf16.mxu0 0
  %4829 = vmatmul.mubr.bf16.gmra.mrb[0].mxu0 %v4723
  %v4830 = vpop.f32.mrb[0].mxu0
  %v4831 = vadd.f32 0.0, %v4830
  %v4832 = vpop.f32.mrb[0].mxu0
  %v4833 = vpop.f32.mrb[0].mxu0
  %v4834 = vadd.f32 0.0, %v4833
  %v4835 = vpop.f32.mrb[0].mxu0
  %4836 = vmatprep.mubr.bf16.mxu0 0
  %4837 = vmatmul.mubr.bf16.gmra.mrb[0].mxu0 %v4724
  %v4838 = vpop.f32.mrb[0].mxu0
  %v4839 = vadd.f32 0.0, %v4838
  %v4840 = vpop.f32.mrb[0].mxu0
  %v4841 = vpop.f32.mrb[0].mxu0
  %v4842 = vadd.f32 0.0, %v4841
  %v4843 = vpop.f32.mrb[0].mxu0
  %4844 = vmatprep.mubr.bf16.mxu0 0
  %4845 = vmatmul.mubr.bf16.gmra.mrb[0].mxu0 %v4725
  %v4846 = vpop.f32.mrb[0].mxu0
  %v4847 = vadd.f32 0.0, %v4846
  %v4848 = vpop.f32.mrb[0].mxu0
  %v4849 = vpop.f32.mrb[0].mxu0
  %v4850 = vadd.f32 0.0, %v4849
  %v4851 = vpop.f32.mrb[0].mxu0
  %4852 = vmatprep.mubr.bf16.mxu0 0
  %4853 = vmatmul.mubr.bf16.gmra.mrb[0].mxu0 %v4726
  %v4854 = vpop.f32.mrb[0].mxu0
  %v4855 = vadd.f32 0.0, %v4854
  %v4856 = vpop.f32.mrb[0].mxu0
  %v4857 = vpop.f32.mrb[0].mxu0
  %v4858 = vadd.f32 0.0, %v4857
  %v4859 = vpop.f32.mrb[0].mxu0
  %4860 = vmatprep.mubr.bf16.mxu0 0
  %4861 = vmatmul.mubr.bf16.gmra.mrb[0].mxu0 %v4727
  %v4862 = vpop.f32.mrb[0].mxu0
  %v4863 = vadd.f32 0.0, %v4862
  %v4864 = vpop.f32.mrb[0].mxu0
  %v4865 = vpop.f32.mrb[0].mxu0
  %v4866 = vadd.f32 0.0, %v4865
  %v4867 = vpop.f32.mrb[0].mxu0
  %4868 = vmatprep.mubr.bf16.mxu0 0
  %4869 = vmatmul.mubr.bf16.gmra.mrb[0].mxu0 %v4728
  %v4870 = vpop.f32.mrb[0].mxu0
  %v4871 = vadd.f32 0.0, %v4870
  %v4872 = vpop.f32.mrb[0].mxu0
  %v4873 = vpop.f32.mrb[0].mxu0
  %v4874 = vadd.f32 0.0, %v4873
  %v4875 = vpop.f32.mrb[0].mxu0
  %4876 = vmatprep.mubr.bf16.mxu0 0
  %4877 = vmatmul.mubr.bf16.gmra.mrb[0].mxu0 %v4729
  %v4878 = vpop.f32.mrb[0].mxu0
  %v4879 = vadd.f32 0.0, %v4878
  %v4880 = vpop.f32.mrb[0].mxu0
  %v4881 = vpop.f32.mrb[0].mxu0
  %v4882 = vadd.f32 0.0, %v4881
  %v4883 = vpop.f32.mrb[0].mxu0
  %4884 = vmatprep.mubr.bf16.mxu0 0
  %4885 = vmatmul.mubr.bf16.gmra.mrb[0].mxu0 %v4730
  %v4886 = vpop.f32.mrb[0].mxu0
  %v4887 = vadd.f32 0.0, %v4886
  %v4888 = vpop.f32.mrb[0].mxu0
  %v4889 = vpop.f32.mrb[0].mxu0
  %v4890 = vadd.f32 0.0, %v4889
  %v4891 = vpop.f32.mrb[0].mxu0
  %4892 = vdwg.mxu0
  %v4893 = vadd.f32 %v4691, %v4831
  %v4894 = vadd.f32 %v4692, %v4834
  %v4895 = vadd.f32 %v4693, %v4839
  %v4896 = vadd.f32 %v4694, %v4842
  %v4897 = vadd.f32 %v4695, %v4847
  %v4898 = vadd.f32 %v4696, %v4850
  %v4899 = vadd.f32 %v4697, %v4855
  %v4900 = vadd.f32 %v4698, %v4858
  %v4901 = vadd.f32 %v4699, %v4863
  %v4902 = vadd.f32 %v4700, %v4866
  %v4903 = vadd.f32 %v4701, %v4871
  %v4904 = vadd.f32 %v4702, %v4874
  %v4905 = vadd.f32 %v4703, %v4879
  %v4906 = vadd.f32 %v4704, %v4882
  %v4907 = vadd.f32 %v4705, %v4887
  %v4908 = vadd.f32 %v4706, %v4890
  %s4909 = scalar_lea.vmem [#allocation2], 48
  %v4910 = vld [vmem:[%s4909] sm:$0xff]
  %v4911 = vld [vmem:[%s4909 + $0x10] sm:$0xff]
  %v4912 = vld [vmem:[%s4909 + $0x20] sm:$0xff]
  %v4913 = vld [vmem:[%s4909 + $0x30] sm:$0xff]
  %v4914 = vld [vmem:[%s4909 + $0x40] sm:$0xff]
  %v4915 = vld [vmem:[%s4909 + $0x50] sm:$0xff]
  %v4916 = vld [vmem:[%s4909 + $0x60] sm:$0xff]
  %v4917 = vld [vmem:[%s4909 + $0x70] sm:$0xff]
  %v4918 = vld [vmem:[%s4909 + $0xc0] sm:$0xff]
  %v4919 = vld [vmem:[%s4909 + $0xd0] sm:$0xff]
  %v4920 = vld [vmem:[%s4909 + $0xe0] sm:$0xff]
  %v4921 = vld [vmem:[%s4909 + $0xf0] sm:$0xff]
  %v4922 = vld [vmem:[%s4909 + $0x100] sm:$0xff]
  %v4923 = vld [vmem:[%s4909 + $0x110] sm:$0xff]
  %v4924 = vld [vmem:[%s4909 + $0x120] sm:$0xff]
  %v4925 = vld [vmem:[%s4909 + $0x130] sm:$0xff]
  %v4926 = vpack.c.bf16 %v4911, %v4910
  %v4927 = vpack.c.bf16 %v4913, %v4912
  %v4928 = vpack.c.bf16 %v4915, %v4914
  %v4929 = vpack.c.bf16 %v4917, %v4916
  %v4930 = vpack.c.bf16 %v4919, %v4918
  %v4931 = vpack.c.bf16 %v4921, %v4920
  %v4932 = vpack.c.bf16 %v4923, %v4922
  %v4933 = vpack.c.bf16 %v4925, %v4924
  %s4934 = scalar_lea.vmem %s4, 960
  %v4935 = vld [vmem:[%s4934] sm:$0xf]
  %v4936 = vld [vmem:[%s4934 + $0x4] sm:$0xf]
  %v4937 = vld [vmem:[%s4934 + $0x8] sm:$0xf]
  %v4938 = vld [vmem:[%s4934 + $0xc] sm:$0xf]
  %v4939 = vld [vmem:[%s4934 + $0x10] sm:$0xf]
  %v4940 = vld [vmem:[%s4934 + $0x14] sm:$0xf]
  %v4941 = vld [vmem:[%s4934 + $0x18] sm:$0xf]
  %v4942 = vld [vmem:[%s4934 + $0x1c] sm:$0xf]
  %v4943 = vld [vmem:[%s4934 + $0x20] sm:$0xf]
  %v4944 = vld [vmem:[%s4934 + $0x24] sm:$0xf]
  %v4945 = vld [vmem:[%s4934 + $0x28] sm:$0xf]
  %v4946 = vld [vmem:[%s4934 + $0x2c] sm:$0xf]
  %v4947 = vld [vmem:[%s4934 + $0x30] sm:$0xf]
  %v4948 = vld [vmem:[%s4934 + $0x34] sm:$0xf]
  %v4949 = vld [vmem:[%s4934 + $0x38] sm:$0xf]
  %v4950 = vld [vmem:[%s4934 + $0x3c] sm:$0xf]
  %v4967 = vunpack.c.l.b16 %v4935
  %v4968 = vunpack.c.l.b16 %v4936
  %v4969 = vunpack.c.l.b16 %v4937
  %v4970 = vunpack.c.l.b16 %v4938
  %v4971 = vunpack.c.l.b16 %v4939
  %v4972 = vunpack.c.l.b16 %v4940
  %v4973 = vunpack.c.l.b16 %v4941
  %v4974 = vunpack.c.l.b16 %v4942
  %v4975 = vunpack.c.l.b16 %v4943
  %v4976 = vunpack.c.l.b16 %v4944
  %v4977 = vunpack.c.l.b16 %v4945
  %v4978 = vunpack.c.l.b16 %v4946
  %v4979 = vunpack.c.l.b16 %v4947
  %v4980 = vunpack.c.l.b16 %v4948
  %v4981 = vunpack.c.l.b16 %v4949
  %v4982 = vunpack.c.l.b16 %v4950
  %v4983 = vpack.c.b16 %v4968, %v4967
  %v4984 = vpack.c.b16 %v4970, %v4969
  %v4985 = vpack.c.b16 %v4972, %v4971
  %v4986 = vpack.c.b16 %v4974, %v4973
  %v4987 = vpack.c.b16 %v4976, %v4975
  %v4988 = vpack.c.b16 %v4978, %v4977
  %v4989 = vpack.c.b16 %v4980, %v4979
  %v4990 = vpack.c.b16 %v4982, %v4981
  %4999 = vmatprep.subr.bf16.mxu0 0
  %5000 = vmatpush1.bf16.msra.mxu0 %v4983
  %5001 = vmatprep.subr.bf16.mxu0 0
  %5002 = vmatpush1.bf16.msra.mxu0 %v4984
  %5003 = vmatprep.subr.bf16.mxu0 0
  %5004 = vmatpush1.bf16.msra.mxu0 %v4985
  %5005 = vmatprep.subr.bf16.mxu0 0
  %5006 = vmatpush1.bf16.msra.mxu0 %v4986
  %5007 = vmatprep.subr.bf16.mxu0 0
  %5008 = vmatpush1.bf16.msra.mxu0 %v4987
  %5009 = vmatprep.subr.bf16.mxu0 0
  %5010 = vmatpush1.bf16.msra.mxu0 %v4988
  %5011 = vmatprep.subr.bf16.mxu0 0
  %5012 = vmatpush1.bf16.msra.mxu0 %v4989
  %5013 = vmatprep.subr.bf16.mxu0 0
  %5014 = vmatpush1.bf16.msra.mxu0 %v4990
  %5015 = vmatprep.subr.bf16.mxu0 0
  %5016 = vmatpush1.bf16.msra.mxu0 0
  %5017 = vmatprep.subr.bf16.mxu0 0
  %5018 = vmatpush1.bf16.msra.mxu0 0
  %5019 = vmatprep.subr.bf16.mxu0 0
  %5020 = vmatpush1.bf16.msra.mxu0 0
  %5021 = vmatprep.subr.bf16.mxu0 0
  %5022 = vmatpush1.bf16.msra.mxu0 0
  %5023 = vmatprep.subr.bf16.mxu0 0
  %5024 = vmatpush1.bf16.msra.mxu0 0
  %5025 = vmatprep.subr.bf16.mxu0 0
  %5026 = vmatpush1.bf16.msra.mxu0 0
  %5027 = vmatprep.subr.bf16.mxu0 0
  %5028 = vmatpush1.bf16.msra.mxu0 0
  %5029 = vmatprep.subr.bf16.mxu0 0
  %5030 = vmatpush1.bf16.msra.mxu0 0
  %5031 = vmatprep.mubr.bf16.mxu0 0
  %5032 = vmatmul.mubr.bf16.gmra.mrb[0].mxu0 %v4926
  %v5033 = vpop.f32.mrb[0].mxu0
  %v5034 = vadd.f32 0.0, %v5033
  %v5035 = vpop.f32.mrb[0].mxu0
  %v5036 = vpop.f32.mrb[0].mxu0
  %v5037 = vadd.f32 0.0, %v5036
  %v5038 = vpop.f32.mrb[0].mxu0
  %5039 = vmatprep.mubr.bf16.mxu0 0
  %5040 = vmatmul.mubr.bf16.gmra.mrb[0].mxu0 %v4927
  %v5041 = vpop.f32.mrb[0].mxu0
  %v5042 = vadd.f32 0.0, %v5041
  %v5043 = vpop.f32.mrb[0].mxu0
  %v5044 = vpop.f32.mrb[0].mxu0
  %v5045 = vadd.f32 0.0, %v5044
  %v5046 = vpop.f32.mrb[0].mxu0
  %5047 = vmatprep.mubr.bf16.mxu0 0
  %5048 = vmatmul.mubr.bf16.gmra.mrb[0].mxu0 %v4928
  %v5049 = vpop.f32.mrb[0].mxu0
  %v5050 = vadd.f32 0.0, %v5049
  %v5051 = vpop.f32.mrb[0].mxu0
  %v5052 = vpop.f32.mrb[0].mxu0
  %v5053 = vadd.f32 0.0, %v5052
  %v5054 = vpop.f32.mrb[0].mxu0
  %5055 = vmatprep.mubr.bf16.mxu0 0
  %5056 = vmatmul.mubr.bf16.gmra.mrb[0].mxu0 %v4929
  %v5057 = vpop.f32.mrb[0].mxu0
  %v5058 = vadd.f32 0.0, %v5057
  %v5059 = vpop.f32.mrb[0].mxu0
  %v5060 = vpop.f32.mrb[0].mxu0
  %v5061 = vadd.f32 0.0, %v5060
  %v5062 = vpop.f32.mrb[0].mxu0
  %5063 = vmatprep.mubr.bf16.mxu0 0
  %5064 = vmatmul.mubr.bf16.gmra.mrb[0].mxu0 %v4930
  %v5065 = vpop.f32.mrb[0].mxu0
  %v5066 = vadd.f32 0.0, %v5065
  %v5067 = vpop.f32.mrb[0].mxu0
  %v5068 = vpop.f32.mrb[0].mxu0
  %v5069 = vadd.f32 0.0, %v5068
  %v5070 = vpop.f32.mrb[0].mxu0
  %5071 = vmatprep.mubr.bf16.mxu0 0
  %5072 = vmatmul.mubr.bf16.gmra.mrb[0].mxu0 %v4931
  %v5073 = vpop.f32.mrb[0].mxu0
  %v5074 = vadd.f32 0.0, %v5073
  %v5075 = vpop.f32.mrb[0].mxu0
  %v5076 = vpop.f32.mrb[0].mxu0
  %v5077 = vadd.f32 0.0, %v5076
  %v5078 = vpop.f32.mrb[0].mxu0
  %5079 = vmatprep.mubr.bf16.mxu0 0
  %5080 = vmatmul.mubr.bf16.gmra.mrb[0].mxu0 %v4932
  %v5081 = vpop.f32.mrb[0].mxu0
  %v5082 = vadd.f32 0.0, %v5081
  %v5083 = vpop.f32.mrb[0].mxu0
  %v5084 = vpop.f32.mrb[0].mxu0
  %v5085 = vadd.f32 0.0, %v5084
  %v5086 = vpop.f32.mrb[0].mxu0
  %5087 = vmatprep.mubr.bf16.mxu0 0
  %5088 = vmatmul.mubr.bf16.gmra.mrb[0].mxu0 %v4933
  %v5089 = vpop.f32.mrb[0].mxu0
  %v5090 = vadd.f32 0.0, %v5089
  %v5091 = vpop.f32.mrb[0].mxu0
  %v5092 = vpop.f32.mrb[0].mxu0
  %v5093 = vadd.f32 0.0, %v5092
  %v5094 = vpop.f32.mrb[0].mxu0
  %5095 = vdwg.mxu0
  %v5096 = vadd.f32 %v4893, %v5034
  %v5097 = vadd.f32 %v4894, %v5037
  %v5098 = vadd.f32 %v4895, %v5042
  %v5099 = vadd.f32 %v4896, %v5045
  %v5100 = vadd.f32 %v4897, %v5050
  %v5101 = vadd.f32 %v4898, %v5053
  %v5102 = vadd.f32 %v4899, %v5058
  %v5103 = vadd.f32 %v4900, %v5061
  %v5104 = vadd.f32 %v4901, %v5066
  %v5105 = vadd.f32 %v4902, %v5069
  %v5106 = vadd.f32 %v4903, %v5074
  %v5107 = vadd.f32 %v4904, %v5077
  %v5108 = vadd.f32 %v4905, %v5082
  %v5109 = vadd.f32 %v4906, %v5085
  %v5110 = vadd.f32 %v4907, %v5090
  %v5111 = vadd.f32 %v4908, %v5093
  %v5112 = vld [vmem:[%s4909 + $0x1] sm:$0xff]
  %v5113 = vld [vmem:[%s4909 + $0x11] sm:$0xff]
  %v5114 = vld [vmem:[%s4909 + $0x21] sm:$0xff]
  %v5115 = vld [vmem:[%s4909 + $0x31] sm:$0xff]
  %v5116 = vld [vmem:[%s4909 + $0x41] sm:$0xff]
  %v5117 = vld [vmem:[%s4909 + $0x51] sm:$0xff]
  %v5118 = vld [vmem:[%s4909 + $0x61] sm:$0xff]
  %v5119 = vld [vmem:[%s4909 + $0x71] sm:$0xff]
  %v5120 = vld [vmem:[%s4909 + $0xc1] sm:$0xff]
  %v5121 = vld [vmem:[%s4909 + $0xd1] sm:$0xff]
  %v5122 = vld [vmem:[%s4909 + $0xe1] sm:$0xff]
  %v5123 = vld [vmem:[%s4909 + $0xf1] sm:$0xff]
  %v5124 = vld [vmem:[%s4909 + $0x101] sm:$0xff]
  %v5125 = vld [vmem:[%s4909 + $0x111] sm:$0xff]
  %v5126 = vld [vmem:[%s4909 + $0x121] sm:$0xff]
  %v5127 = vld [vmem:[%s4909 + $0x131] sm:$0xff]
  %v5128 = vpack.c.bf16 %v5113, %v5112
  %v5129 = vpack.c.bf16 %v5115, %v5114
  %v5130 = vpack.c.bf16 %v5117, %v5116
  %v5131 = vpack.c.bf16 %v5119, %v5118
  %v5132 = vpack.c.bf16 %v5121, %v5120
  %v5133 = vpack.c.bf16 %v5123, %v5122
  %v5134 = vpack.c.bf16 %v5125, %v5124
  %v5135 = vpack.c.bf16 %v5127, %v5126
  %s5136 = scalar_lea.vmem %s4, 1024
  %v5137 = vld [vmem:[%s5136] sm:$0xf]
  %v5138 = vld [vmem:[%s5136 + $0x4] sm:$0xf]
  %v5139 = vld [vmem:[%s5136 + $0x8] sm:$0xf]
  %v5140 = vld [vmem:[%s5136 + $0xc] sm:$0xf]
  %v5141 = vld [vmem:[%s5136 + $0x10] sm:$0xf]
  %v5142 = vld [vmem:[%s5136 + $0x14] sm:$0xf]
  %v5143 = vld [vmem:[%s5136 + $0x18] sm:$0xf]
  %v5144 = vld [vmem:[%s5136 + $0x1c] sm:$0xf]
  %v5145 = vld [vmem:[%s5136 + $0x20] sm:$0xf]
  %v5146 = vld [vmem:[%s5136 + $0x24] sm:$0xf]
  %v5147 = vld [vmem:[%s5136 + $0x28] sm:$0xf]
  %v5148 = vld [vmem:[%s5136 + $0x2c] sm:$0xf]
  %v5149 = vld [vmem:[%s5136 + $0x30] sm:$0xf]
  %v5150 = vld [vmem:[%s5136 + $0x34] sm:$0xf]
  %v5151 = vld [vmem:[%s5136 + $0x38] sm:$0xf]
  %v5152 = vld [vmem:[%s5136 + $0x3c] sm:$0xf]
  %v5169 = vunpack.c.l.b16 %v5137
  %v5170 = vunpack.c.l.b16 %v5138
  %v5171 = vunpack.c.l.b16 %v5139
  %v5172 = vunpack.c.l.b16 %v5140
  %v5173 = vunpack.c.l.b16 %v5141
  %v5174 = vunpack.c.l.b16 %v5142
  %v5175 = vunpack.c.l.b16 %v5143
  %v5176 = vunpack.c.l.b16 %v5144
  %v5177 = vunpack.c.l.b16 %v5145
  %v5178 = vunpack.c.l.b16 %v5146
  %v5179 = vunpack.c.l.b16 %v5147
  %v5180 = vunpack.c.l.b16 %v5148
  %v5181 = vunpack.c.l.b16 %v5149
  %v5182 = vunpack.c.l.b16 %v5150
  %v5183 = vunpack.c.l.b16 %v5151
  %v5184 = vunpack.c.l.b16 %v5152
  %v5185 = vpack.c.b16 %v5170, %v5169
  %v5186 = vpack.c.b16 %v5172, %v5171
  %v5187 = vpack.c.b16 %v5174, %v5173
  %v5188 = vpack.c.b16 %v5176, %v5175
  %v5189 = vpack.c.b16 %v5178, %v5177
  %v5190 = vpack.c.b16 %v5180, %v5179
  %v5191 = vpack.c.b16 %v5182, %v5181
  %v5192 = vpack.c.b16 %v5184, %v5183
  %5201 = vmatprep.subr.bf16.mxu0 0
  %5202 = vmatpush1.bf16.msra.mxu0 %v5185
  %5203 = vmatprep.subr.bf16.mxu0 0
  %5204 = vmatpush1.bf16.msra.mxu0 %v5186
  %5205 = vmatprep.subr.bf16.mxu0 0
  %5206 = vmatpush1.bf16.msra.mxu0 %v5187
  %5207 = vmatprep.subr.bf16.mxu0 0
  %5208 = vmatpush1.bf16.msra.mxu0 %v5188
  %5209 = vmatprep.subr.bf16.mxu0 0
  %5210 = vmatpush1.bf16.msra.mxu0 %v5189
  %5211 = vmatprep.subr.bf16.mxu0 0
  %5212 = vmatpush1.bf16.msra.mxu0 %v5190
  %5213 = vmatprep.subr.bf16.mxu0 0
  %5214 = vmatpush1.bf16.msra.mxu0 %v5191
  %5215 = vmatprep.subr.bf16.mxu0 0
  %5216 = vmatpush1.bf16.msra.mxu0 %v5192
  %5217 = vmatprep.subr.bf16.mxu0 0
  %5218 = vmatpush1.bf16.msra.mxu0 0
  %5219 = vmatprep.subr.bf16.mxu0 0
  %5220 = vmatpush1.bf16.msra.mxu0 0
  %5221 = vmatprep.subr.bf16.mxu0 0
  %5222 = vmatpush1.bf16.msra.mxu0 0
  %5223 = vmatprep.subr.bf16.mxu0 0
  %5224 = vmatpush1.bf16.msra.mxu0 0
  %5225 = vmatprep.subr.bf16.mxu0 0
  %5226 = vmatpush1.bf16.msra.mxu0 0
  %5227 = vmatprep.subr.bf16.mxu0 0
  %5228 = vmatpush1.bf16.msra.mxu0 0
  %5229 = vmatprep.subr.bf16.mxu0 0
  %5230 = vmatpush1.bf16.msra.mxu0 0
  %5231 = vmatprep.subr.bf16.mxu0 0
  %5232 = vmatpush1.bf16.msra.mxu0 0
  %5233 = vmatprep.mubr.bf16.mxu0 0
  %5234 = vmatmul.mubr.bf16.gmra.mrb[0].mxu0 %v5128
  %v5235 = vpop.f32.mrb[0].mxu0
  %v5236 = vadd.f32 0.0, %v5235
  %v5237 = vpop.f32.mrb[0].mxu0
  %v5238 = vpop.f32.mrb[0].mxu0
  %v5239 = vadd.f32 0.0, %v5238
  %v5240 = vpop.f32.mrb[0].mxu0
  %5241 = vmatprep.mubr.bf16.mxu0 0
  %5242 = vmatmul.mubr.bf16.gmra.mrb[0].mxu0 %v5129
  %v5243 = vpop.f32.mrb[0].mxu0
  %v5244 = vadd.f32 0.0, %v5243
  %v5245 = vpop.f32.mrb[0].mxu0
  %v5246 = vpop.f32.mrb[0].mxu0
  %v5247 = vadd.f32 0.0, %v5246
  %v5248 = vpop.f32.mrb[0].mxu0
  %5249 = vmatprep.mubr.bf16.mxu0 0
  %5250 = vmatmul.mubr.bf16.gmra.mrb[0].mxu0 %v5130
  %v5251 = vpop.f32.mrb[0].mxu0
  %v5252 = vadd.f32 0.0, %v5251
  %v5253 = vpop.f32.mrb[0].mxu0
  %v5254 = vpop.f32.mrb[0].mxu0
  %v5255 = vadd.f32 0.0, %v5254
  %v5256 = vpop.f32.mrb[0].mxu0
  %5257 = vmatprep.mubr.bf16.mxu0 0
  %5258 = vmatmul.mubr.bf16.gmra.mrb[0].mxu0 %v5131
  %v5259 = vpop.f32.mrb[0].mxu0
  %v5260 = vadd.f32 0.0, %v5259
  %v5261 = vpop.f32.mrb[0].mxu0
  %v5262 = vpop.f32.mrb[0].mxu0
  %v5263 = vadd.f32 0.0, %v5262
  %v5264 = vpop.f32.mrb[0].mxu0
  %5265 = vmatprep.mubr.bf16.mxu0 0
  %5266 = vmatmul.mubr.bf16.gmra.mrb[0].mxu0 %v5132
  %v5267 = vpop.f32.mrb[0].mxu0
  %v5268 = vadd.f32 0.0, %v5267
  %v5269 = vpop.f32.mrb[0].mxu0
  %v5270 = vpop.f32.mrb[0].mxu0
  %v5271 = vadd.f32 0.0, %v5270
  %v5272 = vpop.f32.mrb[0].mxu0
  %5273 = vmatprep.mubr.bf16.mxu0 0
  %5274 = vmatmul.mubr.bf16.gmra.mrb[0].mxu0 %v5133
  %v5275 = vpop.f32.mrb[0].mxu0
  %v5276 = vadd.f32 0.0, %v5275
  %v5277 = vpop.f32.mrb[0].mxu0
  %v5278 = vpop.f32.mrb[0].mxu0
  %v5279 = vadd.f32 0.0, %v5278
  %v5280 = vpop.f32.mrb[0].mxu0
  %5281 = vmatprep.mubr.bf16.mxu0 0
  %5282 = vmatmul.mubr.bf16.gmra.mrb[0].mxu0 %v5134
  %v5283 = vpop.f32.mrb[0].mxu0
  %v5284 = vadd.f32 0.0, %v5283
  %v5285 = vpop.f32.mrb[0].mxu0
  %v5286 = vpop.f32.mrb[0].mxu0
  %v5287 = vadd.f32 0.0, %v5286
  %v5288 = vpop.f32.mrb[0].mxu0
  %5289 = vmatprep.mubr.bf16.mxu0 0
  %5290 = vmatmul.mubr.bf16.gmra.mrb[0].mxu0 %v5135
  %v5291 = vpop.f32.mrb[0].mxu0
  %v5292 = vadd.f32 0.0, %v5291
  %v5293 = vpop.f32.mrb[0].mxu0
  %v5294 = vpop.f32.mrb[0].mxu0
  %v5295 = vadd.f32 0.0, %v5294
  %v5296 = vpop.f32.mrb[0].mxu0
  %5297 = vdwg.mxu0
  %v5298 = vadd.f32 %v5096, %v5236
  %v5299 = vadd.f32 %v5097, %v5239
  %v5300 = vadd.f32 %v5098, %v5244
  %v5301 = vadd.f32 %v5099, %v5247
  %v5302 = vadd.f32 %v5100, %v5252
  %v5303 = vadd.f32 %v5101, %v5255
  %v5304 = vadd.f32 %v5102, %v5260
  %v5305 = vadd.f32 %v5103, %v5263
  %v5306 = vadd.f32 %v5104, %v5268
  %v5307 = vadd.f32 %v5105, %v5271
  %v5308 = vadd.f32 %v5106, %v5276
  %v5309 = vadd.f32 %v5107, %v5279
  %v5310 = vadd.f32 %v5108, %v5284
  %v5311 = vadd.f32 %v5109, %v5287
  %v5312 = vadd.f32 %v5110, %v5292
  %v5313 = vadd.f32 %v5111, %v5295
  %v5314 = vld [vmem:[%s4909 + $0x2] sm:$0xff]
  %v5315 = vld [vmem:[%s4909 + $0x12] sm:$0xff]
  %v5316 = vld [vmem:[%s4909 + $0x22] sm:$0xff]
  %v5317 = vld [vmem:[%s4909 + $0x32] sm:$0xff]
  %v5318 = vld [vmem:[%s4909 + $0x42] sm:$0xff]
  %v5319 = vld [vmem:[%s4909 + $0x52] sm:$0xff]
  %v5320 = vld [vmem:[%s4909 + $0x62] sm:$0xff]
  %v5321 = vld [vmem:[%s4909 + $0x72] sm:$0xff]
  %v5322 = vld [vmem:[%s4909 + $0xc2] sm:$0xff]
  %v5323 = vld [vmem:[%s4909 + $0xd2] sm:$0xff]
  %v5324 = vld [vmem:[%s4909 + $0xe2] sm:$0xff]
  %v5325 = vld [vmem:[%s4909 + $0xf2] sm:$0xff]
  %v5326 = vld [vmem:[%s4909 + $0x102] sm:$0xff]
  %v5327 = vld [vmem:[%s4909 + $0x112] sm:$0xff]
  %v5328 = vld [vmem:[%s4909 + $0x122] sm:$0xff]
  %v5329 = vld [vmem:[%s4909 + $0x132] sm:$0xff]
  %v5330 = vpack.c.bf16 %v5315, %v5314
  %v5331 = vpack.c.bf16 %v5317, %v5316
  %v5332 = vpack.c.bf16 %v5319, %v5318
  %v5333 = vpack.c.bf16 %v5321, %v5320
  %v5334 = vpack.c.bf16 %v5323, %v5322
  %v5335 = vpack.c.bf16 %v5325, %v5324
  %v5336 = vpack.c.bf16 %v5327, %v5326
  %v5337 = vpack.c.bf16 %v5329, %v5328
  %s5338 = scalar_lea.vmem %s4, 1088
  %v5339 = vld [vmem:[%s5338] sm:$0xf]
  %v5340 = vld [vmem:[%s5338 + $0x4] sm:$0xf]
  %v5341 = vld [vmem:[%s5338 + $0x8] sm:$0xf]
  %v5342 = vld [vmem:[%s5338 + $0xc] sm:$0xf]
  %v5343 = vld [vmem:[%s5338 + $0x10] sm:$0xf]
  %v5344 = vld [vmem:[%s5338 + $0x14] sm:$0xf]
  %v5345 = vld [vmem:[%s5338 + $0x18] sm:$0xf]
  %v5346 = vld [vmem:[%s5338 + $0x1c] sm:$0xf]
  %v5347 = vld [vmem:[%s5338 + $0x20] sm:$0xf]
  %v5348 = vld [vmem:[%s5338 + $0x24] sm:$0xf]
  %v5349 = vld [vmem:[%s5338 + $0x28] sm:$0xf]
  %v5350 = vld [vmem:[%s5338 + $0x2c] sm:$0xf]
  %v5351 = vld [vmem:[%s5338 + $0x30] sm:$0xf]
  %v5352 = vld [vmem:[%s5338 + $0x34] sm:$0xf]
  %v5353 = vld [vmem:[%s5338 + $0x38] sm:$0xf]
  %v5354 = vld [vmem:[%s5338 + $0x3c] sm:$0xf]
  %v5371 = vunpack.c.l.b16 %v5339
  %v5372 = vunpack.c.l.b16 %v5340
  %v5373 = vunpack.c.l.b16 %v5341
  %v5374 = vunpack.c.l.b16 %v5342
  %v5375 = vunpack.c.l.b16 %v5343
  %v5376 = vunpack.c.l.b16 %v5344
  %v5377 = vunpack.c.l.b16 %v5345
  %v5378 = vunpack.c.l.b16 %v5346
  %v5379 = vunpack.c.l.b16 %v5347
  %v5380 = vunpack.c.l.b16 %v5348
  %v5381 = vunpack.c.l.b16 %v5349
  %v5382 = vunpack.c.l.b16 %v5350
  %v5383 = vunpack.c.l.b16 %v5351
  %v5384 = vunpack.c.l.b16 %v5352
  %v5385 = vunpack.c.l.b16 %v5353
  %v5386 = vunpack.c.l.b16 %v5354
  %v5387 = vpack.c.b16 %v5372, %v5371
  %v5388 = vpack.c.b16 %v5374, %v5373
  %v5389 = vpack.c.b16 %v5376, %v5375
  %v5390 = vpack.c.b16 %v5378, %v5377
  %v5391 = vpack.c.b16 %v5380, %v5379
  %v5392 = vpack.c.b16 %v5382, %v5381
  %v5393 = vpack.c.b16 %v5384, %v5383
  %v5394 = vpack.c.b16 %v5386, %v5385
  %5403 = vmatprep.subr.bf16.mxu0 0
  %5404 = vmatpush1.bf16.msra.mxu0 %v5387
  %5405 = vmatprep.subr.bf16.mxu0 0
  %5406 = vmatpush1.bf16.msra.mxu0 %v5388
  %5407 = vmatprep.subr.bf16.mxu0 0
  %5408 = vmatpush1.bf16.msra.mxu0 %v5389
  %5409 = vmatprep.subr.bf16.mxu0 0
  %5410 = vmatpush1.bf16.msra.mxu0 %v5390
  %5411 = vmatprep.subr.bf16.mxu0 0
  %5412 = vmatpush1.bf16.msra.mxu0 %v5391
  %5413 = vmatprep.subr.bf16.mxu0 0
  %5414 = vmatpush1.bf16.msra.mxu0 %v5392
  %5415 = vmatprep.subr.bf16.mxu0 0
  %5416 = vmatpush1.bf16.msra.mxu0 %v5393
  %5417 = vmatprep.subr.bf16.mxu0 0
  %5418 = vmatpush1.bf16.msra.mxu0 %v5394
  %5419 = vmatprep.subr.bf16.mxu0 0
  %5420 = vmatpush1.bf16.msra.mxu0 0
  %5421 = vmatprep.subr.bf16.mxu0 0
  %5422 = vmatpush1.bf16.msra.mxu0 0
  %5423 = vmatprep.subr.bf16.mxu0 0
  %5424 = vmatpush1.bf16.msra.mxu0 0
  %5425 = vmatprep.subr.bf16.mxu0 0
  %5426 = vmatpush1.bf16.msra.mxu0 0
  %5427 = vmatprep.subr.bf16.mxu0 0
  %5428 = vmatpush1.bf16.msra.mxu0 0
  %5429 = vmatprep.subr.bf16.mxu0 0
  %5430 = vmatpush1.bf16.msra.mxu0 0
  %5431 = vmatprep.subr.bf16.mxu0 0
  %5432 = vmatpush1.bf16.msra.mxu0 0
  %5433 = vmatprep.subr.bf16.mxu0 0
  %5434 = vmatpush1.bf16.msra.mxu0 0
  %5435 = vmatprep.mubr.bf16.mxu0 0
  %5436 = vmatmul.mubr.bf16.gmra.mrb[0].mxu0 %v5330
  %v5437 = vpop.f32.mrb[0].mxu0
  %v5438 = vadd.f32 0.0, %v5437
  %v5439 = vpop.f32.mrb[0].mxu0
  %v5440 = vpop.f32.mrb[0].mxu0
  %v5441 = vadd.f32 0.0, %v5440
  %v5442 = vpop.f32.mrb[0].mxu0
  %5443 = vmatprep.mubr.bf16.mxu0 0
  %5444 = vmatmul.mubr.bf16.gmra.mrb[0].mxu0 %v5331
  %v5445 = vpop.f32.mrb[0].mxu0
  %v5446 = vadd.f32 0.0, %v5445
  %v5447 = vpop.f32.mrb[0].mxu0
  %v5448 = vpop.f32.mrb[0].mxu0
  %v5449 = vadd.f32 0.0, %v5448
  %v5450 = vpop.f32.mrb[0].mxu0
  %5451 = vmatprep.mubr.bf16.mxu0 0
  %5452 = vmatmul.mubr.bf16.gmra.mrb[0].mxu0 %v5332
  %v5453 = vpop.f32.mrb[0].mxu0
  %v5454 = vadd.f32 0.0, %v5453
  %v5455 = vpop.f32.mrb[0].mxu0
  %v5456 = vpop.f32.mrb[0].mxu0
  %v5457 = vadd.f32 0.0, %v5456
  %v5458 = vpop.f32.mrb[0].mxu0
  %5459 = vmatprep.mubr.bf16.mxu0 0
  %5460 = vmatmul.mubr.bf16.gmra.mrb[0].mxu0 %v5333
  %v5461 = vpop.f32.mrb[0].mxu0
  %v5462 = vadd.f32 0.0, %v5461
  %v5463 = vpop.f32.mrb[0].mxu0
  %v5464 = vpop.f32.mrb[0].mxu0
  %v5465 = vadd.f32 0.0, %v5464
  %v5466 = vpop.f32.mrb[0].mxu0
  %5467 = vmatprep.mubr.bf16.mxu0 0
  %5468 = vmatmul.mubr.bf16.gmra.mrb[0].mxu0 %v5334
  %v5469 = vpop.f32.mrb[0].mxu0
  %v5470 = vadd.f32 0.0, %v5469
  %v5471 = vpop.f32.mrb[0].mxu0
  %v5472 = vpop.f32.mrb[0].mxu0
  %v5473 = vadd.f32 0.0, %v5472
  %v5474 = vpop.f32.mrb[0].mxu0
  %5475 = vmatprep.mubr.bf16.mxu0 0
  %5476 = vmatmul.mubr.bf16.gmra.mrb[0].mxu0 %v5335
  %v5477 = vpop.f32.mrb[0].mxu0
  %v5478 = vadd.f32 0.0, %v5477
  %v5479 = vpop.f32.mrb[0].mxu0
  %v5480 = vpop.f32.mrb[0].mxu0
  %v5481 = vadd.f32 0.0, %v5480
  %v5482 = vpop.f32.mrb[0].mxu0
  %5483 = vmatprep.mubr.bf16.mxu0 0
  %5484 = vmatmul.mubr.bf16.gmra.mrb[0].mxu0 %v5336
  %v5485 = vpop.f32.mrb[0].mxu0
  %v5486 = vadd.f32 0.0, %v5485
  %v5487 = vpop.f32.mrb[0].mxu0
  %v5488 = vpop.f32.mrb[0].mxu0
  %v5489 = vadd.f32 0.0, %v5488
  %v5490 = vpop.f32.mrb[0].mxu0
  %5491 = vmatprep.mubr.bf16.mxu0 0
  %5492 = vmatmul.mubr.bf16.gmra.mrb[0].mxu0 %v5337
  %v5493 = vpop.f32.mrb[0].mxu0
  %v5494 = vadd.f32 0.0, %v5493
  %v5495 = vpop.f32.mrb[0].mxu0
  %v5496 = vpop.f32.mrb[0].mxu0
  %v5497 = vadd.f32 0.0, %v5496
  %v5498 = vpop.f32.mrb[0].mxu0
  %5499 = vdwg.mxu0
  %v5500 = vadd.f32 %v5298, %v5438
  %v5501 = vadd.f32 %v5299, %v5441
  %v5502 = vadd.f32 %v5300, %v5446
  %v5503 = vadd.f32 %v5301, %v5449
  %v5504 = vadd.f32 %v5302, %v5454
  %v5505 = vadd.f32 %v5303, %v5457
  %v5506 = vadd.f32 %v5304, %v5462
  %v5507 = vadd.f32 %v5305, %v5465
  %v5508 = vadd.f32 %v5306, %v5470
  %v5509 = vadd.f32 %v5307, %v5473
  %v5510 = vadd.f32 %v5308, %v5478
  %v5511 = vadd.f32 %v5309, %v5481
  %v5512 = vadd.f32 %v5310, %v5486
  %v5513 = vadd.f32 %v5311, %v5489
  %v5514 = vadd.f32 %v5312, %v5494
  %v5515 = vadd.f32 %v5313, %v5497
  %v5516 = vld [vmem:[%s4909 + $0x3] sm:$0xff]
  %v5517 = vld [vmem:[%s4909 + $0x13] sm:$0xff]
  %v5518 = vld [vmem:[%s4909 + $0x23] sm:$0xff]
  %v5519 = vld [vmem:[%s4909 + $0x33] sm:$0xff]
  %v5520 = vld [vmem:[%s4909 + $0x43] sm:$0xff]
  %v5521 = vld [vmem:[%s4909 + $0x53] sm:$0xff]
  %v5522 = vld [vmem:[%s4909 + $0x63] sm:$0xff]
  %v5523 = vld [vmem:[%s4909 + $0x73] sm:$0xff]
  %v5524 = vld [vmem:[%s4909 + $0xc3] sm:$0xff]
  %v5525 = vld [vmem:[%s4909 + $0xd3] sm:$0xff]
  %v5526 = vld [vmem:[%s4909 + $0xe3] sm:$0xff]
  %v5527 = vld [vmem:[%s4909 + $0xf3] sm:$0xff]
  %v5528 = vld [vmem:[%s4909 + $0x103] sm:$0xff]
  %v5529 = vld [vmem:[%s4909 + $0x113] sm:$0xff]
  %v5530 = vld [vmem:[%s4909 + $0x123] sm:$0xff]
  %v5531 = vld [vmem:[%s4909 + $0x133] sm:$0xff]
  %v5532 = vpack.c.bf16 %v5517, %v5516
  %v5533 = vpack.c.bf16 %v5519, %v5518
  %v5534 = vpack.c.bf16 %v5521, %v5520
  %v5535 = vpack.c.bf16 %v5523, %v5522
  %v5536 = vpack.c.bf16 %v5525, %v5524
  %v5537 = vpack.c.bf16 %v5527, %v5526
  %v5538 = vpack.c.bf16 %v5529, %v5528
  %v5539 = vpack.c.bf16 %v5531, %v5530
  %s5540 = scalar_lea.vmem %s4, 1152
  %v5541 = vld [vmem:[%s5540] sm:$0xf]
  %v5542 = vld [vmem:[%s5540 + $0x4] sm:$0xf]
  %v5543 = vld [vmem:[%s5540 + $0x8] sm:$0xf]
  %v5544 = vld [vmem:[%s5540 + $0xc] sm:$0xf]
  %v5545 = vld [vmem:[%s5540 + $0x10] sm:$0xf]
  %v5546 = vld [vmem:[%s5540 + $0x14] sm:$0xf]
  %v5547 = vld [vmem:[%s5540 + $0x18] sm:$0xf]
  %v5548 = vld [vmem:[%s5540 + $0x1c] sm:$0xf]
  %v5549 = vld [vmem:[%s5540 + $0x20] sm:$0xf]
  %v5550 = vld [vmem:[%s5540 + $0x24] sm:$0xf]
  %v5551 = vld [vmem:[%s5540 + $0x28] sm:$0xf]
  %v5552 = vld [vmem:[%s5540 + $0x2c] sm:$0xf]
  %v5553 = vld [vmem:[%s5540 + $0x30] sm:$0xf]
  %v5554 = vld [vmem:[%s5540 + $0x34] sm:$0xf]
  %v5555 = vld [vmem:[%s5540 + $0x38] sm:$0xf]
  %v5556 = vld [vmem:[%s5540 + $0x3c] sm:$0xf]
  %v5573 = vunpack.c.l.b16 %v5541
  %v5574 = vunpack.c.l.b16 %v5542
  %v5575 = vunpack.c.l.b16 %v5543
  %v5576 = vunpack.c.l.b16 %v5544
  %v5577 = vunpack.c.l.b16 %v5545
  %v5578 = vunpack.c.l.b16 %v5546
  %v5579 = vunpack.c.l.b16 %v5547
  %v5580 = vunpack.c.l.b16 %v5548
  %v5581 = vunpack.c.l.b16 %v5549
  %v5582 = vunpack.c.l.b16 %v5550
  %v5583 = vunpack.c.l.b16 %v5551
  %v5584 = vunpack.c.l.b16 %v5552
  %v5585 = vunpack.c.l.b16 %v5553
  %v5586 = vunpack.c.l.b16 %v5554
  %v5587 = vunpack.c.l.b16 %v5555
  %v5588 = vunpack.c.l.b16 %v5556
  %v5589 = vpack.c.b16 %v5574, %v5573
  %v5590 = vpack.c.b16 %v5576, %v5575
  %v5591 = vpack.c.b16 %v5578, %v5577
  %v5592 = vpack.c.b16 %v5580, %v5579
  %v5593 = vpack.c.b16 %v5582, %v5581
  %v5594 = vpack.c.b16 %v5584, %v5583
  %v5595 = vpack.c.b16 %v5586, %v5585
  %v5596 = vpack.c.b16 %v5588, %v5587
  %5605 = vmatprep.subr.bf16.mxu0 0
  %5606 = vmatpush1.bf16.msra.mxu0 %v5589
  %5607 = vmatprep.subr.bf16.mxu0 0
  %5608 = vmatpush1.bf16.msra.mxu0 %v5590
  %5609 = vmatprep.subr.bf16.mxu0 0
  %5610 = vmatpush1.bf16.msra.mxu0 %v5591
  %5611 = vmatprep.subr.bf16.mxu0 0
  %5612 = vmatpush1.bf16.msra.mxu0 %v5592
  %5613 = vmatprep.subr.bf16.mxu0 0
  %5614 = vmatpush1.bf16.msra.mxu0 %v5593
  %5615 = vmatprep.subr.bf16.mxu0 0
  %5616 = vmatpush1.bf16.msra.mxu0 %v5594
  %5617 = vmatprep.subr.bf16.mxu0 0
  %5618 = vmatpush1.bf16.msra.mxu0 %v5595
  %5619 = vmatprep.subr.bf16.mxu0 0
  %5620 = vmatpush1.bf16.msra.mxu0 %v5596
  %5621 = vmatprep.subr.bf16.mxu0 0
  %5622 = vmatpush1.bf16.msra.mxu0 0
  %5623 = vmatprep.subr.bf16.mxu0 0
  %5624 = vmatpush1.bf16.msra.mxu0 0
  %5625 = vmatprep.subr.bf16.mxu0 0
  %5626 = vmatpush1.bf16.msra.mxu0 0
  %5627 = vmatprep.subr.bf16.mxu0 0
  %5628 = vmatpush1.bf16.msra.mxu0 0
  %5629 = vmatprep.subr.bf16.mxu0 0
  %5630 = vmatpush1.bf16.msra.mxu0 0
  %5631 = vmatprep.subr.bf16.mxu0 0
  %5632 = vmatpush1.bf16.msra.mxu0 0
  %5633 = vmatprep.subr.bf16.mxu0 0
  %5634 = vmatpush1.bf16.msra.mxu0 0
  %5635 = vmatprep.subr.bf16.mxu0 0
  %5636 = vmatpush1.bf16.msra.mxu0 0
  %5637 = vmatprep.mubr.bf16.mxu0 0
  %5638 = vmatmul.mubr.bf16.gmra.mrb[0].mxu0 %v5532
  %v5639 = vpop.f32.mrb[0].mxu0
  %v5640 = vadd.f32 0.0, %v5639
  %v5641 = vpop.f32.mrb[0].mxu0
  %v5642 = vpop.f32.mrb[0].mxu0
  %v5643 = vadd.f32 0.0, %v5642
  %v5644 = vpop.f32.mrb[0].mxu0
  %5645 = vmatprep.mubr.bf16.mxu0 0
  %5646 = vmatmul.mubr.bf16.gmra.mrb[0].mxu0 %v5533
  %v5647 = vpop.f32.mrb[0].mxu0
  %v5648 = vadd.f32 0.0, %v5647
  %v5649 = vpop.f32.mrb[0].mxu0
  %v5650 = vpop.f32.mrb[0].mxu0
  %v5651 = vadd.f32 0.0, %v5650
  %v5652 = vpop.f32.mrb[0].mxu0
  %5653 = vmatprep.mubr.bf16.mxu0 0
  %5654 = vmatmul.mubr.bf16.gmra.mrb[0].mxu0 %v5534
  %v5655 = vpop.f32.mrb[0].mxu0
  %v5656 = vadd.f32 0.0, %v5655
  %v5657 = vpop.f32.mrb[0].mxu0
  %v5658 = vpop.f32.mrb[0].mxu0
  %v5659 = vadd.f32 0.0, %v5658
  %v5660 = vpop.f32.mrb[0].mxu0
  %5661 = vmatprep.mubr.bf16.mxu0 0
  %5662 = vmatmul.mubr.bf16.gmra.mrb[0].mxu0 %v5535
  %v5663 = vpop.f32.mrb[0].mxu0
  %v5664 = vadd.f32 0.0, %v5663
  %v5665 = vpop.f32.mrb[0].mxu0
  %v5666 = vpop.f32.mrb[0].mxu0
  %v5667 = vadd.f32 0.0, %v5666
  %v5668 = vpop.f32.mrb[0].mxu0
  %5669 = vmatprep.mubr.bf16.mxu0 0
  %5670 = vmatmul.mubr.bf16.gmra.mrb[0].mxu0 %v5536
  %v5671 = vpop.f32.mrb[0].mxu0
  %v5672 = vadd.f32 0.0, %v5671
  %v5673 = vpop.f32.mrb[0].mxu0
  %v5674 = vpop.f32.mrb[0].mxu0
  %v5675 = vadd.f32 0.0, %v5674
  %v5676 = vpop.f32.mrb[0].mxu0
  %5677 = vmatprep.mubr.bf16.mxu0 0
  %5678 = vmatmul.mubr.bf16.gmra.mrb[0].mxu0 %v5537
  %v5679 = vpop.f32.mrb[0].mxu0
  %v5680 = vadd.f32 0.0, %v5679
  %v5681 = vpop.f32.mrb[0].mxu0
  %v5682 = vpop.f32.mrb[0].mxu0
  %v5683 = vadd.f32 0.0, %v5682
  %v5684 = vpop.f32.mrb[0].mxu0
  %5685 = vmatprep.mubr.bf16.mxu0 0
  %5686 = vmatmul.mubr.bf16.gmra.mrb[0].mxu0 %v5538
  %v5687 = vpop.f32.mrb[0].mxu0
  %v5688 = vadd.f32 0.0, %v5687
  %v5689 = vpop.f32.mrb[0].mxu0
  %v5690 = vpop.f32.mrb[0].mxu0
  %v5691 = vadd.f32 0.0, %v5690
  %v5692 = vpop.f32.mrb[0].mxu0
  %5693 = vmatprep.mubr.bf16.mxu0 0
  %5694 = vmatmul.mubr.bf16.gmra.mrb[0].mxu0 %v5539
  %v5695 = vpop.f32.mrb[0].mxu0
  %v5696 = vadd.f32 0.0, %v5695
  %v5697 = vpop.f32.mrb[0].mxu0
  %v5698 = vpop.f32.mrb[0].mxu0
  %v5699 = vadd.f32 0.0, %v5698
  %v5700 = vpop.f32.mrb[0].mxu0
  %5701 = vdwg.mxu0
  %v5702 = vadd.f32 %v5500, %v5640
  %v5703 = vadd.f32 %v5501, %v5643
  %v5704 = vadd.f32 %v5502, %v5648
  %v5705 = vadd.f32 %v5503, %v5651
  %v5706 = vadd.f32 %v5504, %v5656
  %v5707 = vadd.f32 %v5505, %v5659
  %v5708 = vadd.f32 %v5506, %v5664
  %v5709 = vadd.f32 %v5507, %v5667
  %v5710 = vadd.f32 %v5508, %v5672
  %v5711 = vadd.f32 %v5509, %v5675
  %v5712 = vadd.f32 %v5510, %v5680
  %v5713 = vadd.f32 %v5511, %v5683
  %v5714 = vadd.f32 %v5512, %v5688
  %v5715 = vadd.f32 %v5513, %v5691
  %v5716 = vadd.f32 %v5514, %v5696
  %v5717 = vadd.f32 %v5515, %v5699
  %v5718 = vld [vmem:[%s4909 + $0x4] sm:$0xff]
  %v5719 = vld [vmem:[%s4909 + $0x14] sm:$0xff]
  %v5720 = vld [vmem:[%s4909 + $0x24] sm:$0xff]
  %v5721 = vld [vmem:[%s4909 + $0x34] sm:$0xff]
  %v5722 = vld [vmem:[%s4909 + $0x44] sm:$0xff]
  %v5723 = vld [vmem:[%s4909 + $0x54] sm:$0xff]
  %v5724 = vld [vmem:[%s4909 + $0x64] sm:$0xff]
  %v5725 = vld [vmem:[%s4909 + $0x74] sm:$0xff]
  %v5726 = vld [vmem:[%s4909 + $0xc4] sm:$0xff]
  %v5727 = vld [vmem:[%s4909 + $0xd4] sm:$0xff]
  %v5728 = vld [vmem:[%s4909 + $0xe4] sm:$0xff]
  %v5729 = vld [vmem:[%s4909 + $0xf4] sm:$0xff]
  %v5730 = vld [vmem:[%s4909 + $0x104] sm:$0xff]
  %v5731 = vld [vmem:[%s4909 + $0x114] sm:$0xff]
  %v5732 = vld [vmem:[%s4909 + $0x124] sm:$0xff]
  %v5733 = vld [vmem:[%s4909 + $0x134] sm:$0xff]
  %v5734 = vpack.c.bf16 %v5719, %v5718
  %v5735 = vpack.c.bf16 %v5721, %v5720
  %v5736 = vpack.c.bf16 %v5723, %v5722
  %v5737 = vpack.c.bf16 %v5725, %v5724
  %v5738 = vpack.c.bf16 %v5727, %v5726
  %v5739 = vpack.c.bf16 %v5729, %v5728
  %v5740 = vpack.c.bf16 %v5731, %v5730
  %v5741 = vpack.c.bf16 %v5733, %v5732
  %s5742 = scalar_lea.vmem %s4, 1216
  %v5743 = vld [vmem:[%s5742] sm:$0xf]
  %v5744 = vld [vmem:[%s5742 + $0x4] sm:$0xf]
  %v5745 = vld [vmem:[%s5742 + $0x8] sm:$0xf]
  %v5746 = vld [vmem:[%s5742 + $0xc] sm:$0xf]
  %v5747 = vld [vmem:[%s5742 + $0x10] sm:$0xf]
  %v5748 = vld [vmem:[%s5742 + $0x14] sm:$0xf]
  %v5749 = vld [vmem:[%s5742 + $0x18] sm:$0xf]
  %v5750 = vld [vmem:[%s5742 + $0x1c] sm:$0xf]
  %v5751 = vld [vmem:[%s5742 + $0x20] sm:$0xf]
  %v5752 = vld [vmem:[%s5742 + $0x24] sm:$0xf]
  %v5753 = vld [vmem:[%s5742 + $0x28] sm:$0xf]
  %v5754 = vld [vmem:[%s5742 + $0x2c] sm:$0xf]
  %v5755 = vld [vmem:[%s5742 + $0x30] sm:$0xf]
  %v5756 = vld [vmem:[%s5742 + $0x34] sm:$0xf]
  %v5757 = vld [vmem:[%s5742 + $0x38] sm:$0xf]
  %v5758 = vld [vmem:[%s5742 + $0x3c] sm:$0xf]
  %v5775 = vunpack.c.l.b16 %v5743
  %v5776 = vunpack.c.l.b16 %v5744
  %v5777 = vunpack.c.l.b16 %v5745
  %v5778 = vunpack.c.l.b16 %v5746
  %v5779 = vunpack.c.l.b16 %v5747
  %v5780 = vunpack.c.l.b16 %v5748
  %v5781 = vunpack.c.l.b16 %v5749
  %v5782 = vunpack.c.l.b16 %v5750
  %v5783 = vunpack.c.l.b16 %v5751
  %v5784 = vunpack.c.l.b16 %v5752
  %v5785 = vunpack.c.l.b16 %v5753
  %v5786 = vunpack.c.l.b16 %v5754
  %v5787 = vunpack.c.l.b16 %v5755
  %v5788 = vunpack.c.l.b16 %v5756
  %v5789 = vunpack.c.l.b16 %v5757
  %v5790 = vunpack.c.l.b16 %v5758
  %v5791 = vpack.c.b16 %v5776, %v5775
  %v5792 = vpack.c.b16 %v5778, %v5777
  %v5793 = vpack.c.b16 %v5780, %v5779
  %v5794 = vpack.c.b16 %v5782, %v5781
  %v5795 = vpack.c.b16 %v5784, %v5783
  %v5796 = vpack.c.b16 %v5786, %v5785
  %v5797 = vpack.c.b16 %v5788, %v5787
  %v5798 = vpack.c.b16 %v5790, %v5789
  %5807 = vmatprep.subr.bf16.mxu0 0
  %5808 = vmatpush1.bf16.msra.mxu0 %v5791
  %5809 = vmatprep.subr.bf16.mxu0 0
  %5810 = vmatpush1.bf16.msra.mxu0 %v5792
  %5811 = vmatprep.subr.bf16.mxu0 0
  %5812 = vmatpush1.bf16.msra.mxu0 %v5793
  %5813 = vmatprep.subr.bf16.mxu0 0
  %5814 = vmatpush1.bf16.msra.mxu0 %v5794
  %5815 = vmatprep.subr.bf16.mxu0 0
  %5816 = vmatpush1.bf16.msra.mxu0 %v5795
  %5817 = vmatprep.subr.bf16.mxu0 0
  %5818 = vmatpush1.bf16.msra.mxu0 %v5796
  %5819 = vmatprep.subr.bf16.mxu0 0
  %5820 = vmatpush1.bf16.msra.mxu0 %v5797
  %5821 = vmatprep.subr.bf16.mxu0 0
  %5822 = vmatpush1.bf16.msra.mxu0 %v5798
  %5823 = vmatprep.subr.bf16.mxu0 0
  %5824 = vmatpush1.bf16.msra.mxu0 0
  %5825 = vmatprep.subr.bf16.mxu0 0
  %5826 = vmatpush1.bf16.msra.mxu0 0
  %5827 = vmatprep.subr.bf16.mxu0 0
  %5828 = vmatpush1.bf16.msra.mxu0 0
  %5829 = vmatprep.subr.bf16.mxu0 0
  %5830 = vmatpush1.bf16.msra.mxu0 0
  %5831 = vmatprep.subr.bf16.mxu0 0
  %5832 = vmatpush1.bf16.msra.mxu0 0
  %5833 = vmatprep.subr.bf16.mxu0 0
  %5834 = vmatpush1.bf16.msra.mxu0 0
  %5835 = vmatprep.subr.bf16.mxu0 0
  %5836 = vmatpush1.bf16.msra.mxu0 0
  %5837 = vmatprep.subr.bf16.mxu0 0
  %5838 = vmatpush1.bf16.msra.mxu0 0
  %5839 = vmatprep.mubr.bf16.mxu0 0
  %5840 = vmatmul.mubr.bf16.gmra.mrb[0].mxu0 %v5734
  %v5841 = vpop.f32.mrb[0].mxu0
  %v5842 = vadd.f32 0.0, %v5841
  %v5843 = vpop.f32.mrb[0].mxu0
  %v5844 = vpop.f32.mrb[0].mxu0
  %v5845 = vadd.f32 0.0, %v5844
  %v5846 = vpop.f32.mrb[0].mxu0
  %5847 = vmatprep.mubr.bf16.mxu0 0
  %5848 = vmatmul.mubr.bf16.gmra.mrb[0].mxu0 %v5735
  %v5849 = vpop.f32.mrb[0].mxu0
  %v5850 = vadd.f32 0.0, %v5849
  %v5851 = vpop.f32.mrb[0].mxu0
  %v5852 = vpop.f32.mrb[0].mxu0
  %v5853 = vadd.f32 0.0, %v5852
  %v5854 = vpop.f32.mrb[0].mxu0
  %5855 = vmatprep.mubr.bf16.mxu0 0
  %5856 = vmatmul.mubr.bf16.gmra.mrb[0].mxu0 %v5736
  %v5857 = vpop.f32.mrb[0].mxu0
  %v5858 = vadd.f32 0.0, %v5857
  %v5859 = vpop.f32.mrb[0].mxu0
  %v5860 = vpop.f32.mrb[0].mxu0
  %v5861 = vadd.f32 0.0, %v5860
  %v5862 = vpop.f32.mrb[0].mxu0
  %5863 = vmatprep.mubr.bf16.mxu0 0
  %5864 = vmatmul.mubr.bf16.gmra.mrb[0].mxu0 %v5737
  %v5865 = vpop.f32.mrb[0].mxu0
  %v5866 = vadd.f32 0.0, %v5865
  %v5867 = vpop.f32.mrb[0].mxu0
  %v5868 = vpop.f32.mrb[0].mxu0
  %v5869 = vadd.f32 0.0, %v5868
  %v5870 = vpop.f32.mrb[0].mxu0
  %5871 = vmatprep.mubr.bf16.mxu0 0
  %5872 = vmatmul.mubr.bf16.gmra.mrb[0].mxu0 %v5738
  %v5873 = vpop.f32.mrb[0].mxu0
  %v5874 = vadd.f32 0.0, %v5873
  %v5875 = vpop.f32.mrb[0].mxu0
  %v5876 = vpop.f32.mrb[0].mxu0
  %v5877 = vadd.f32 0.0, %v5876
  %v5878 = vpop.f32.mrb[0].mxu0
  %5879 = vmatprep.mubr.bf16.mxu0 0
  %5880 = vmatmul.mubr.bf16.gmra.mrb[0].mxu0 %v5739
  %v5881 = vpop.f32.mrb[0].mxu0
  %v5882 = vadd.f32 0.0, %v5881
  %v5883 = vpop.f32.mrb[0].mxu0
  %v5884 = vpop.f32.mrb[0].mxu0
  %v5885 = vadd.f32 0.0, %v5884
  %v5886 = vpop.f32.mrb[0].mxu0
  %5887 = vmatprep.mubr.bf16.mxu0 0
  %5888 = vmatmul.mubr.bf16.gmra.mrb[0].mxu0 %v5740
  %v5889 = vpop.f32.mrb[0].mxu0
  %v5890 = vadd.f32 0.0, %v5889
  %v5891 = vpop.f32.mrb[0].mxu0
  %v5892 = vpop.f32.mrb[0].mxu0
  %v5893 = vadd.f32 0.0, %v5892
  %v5894 = vpop.f32.mrb[0].mxu0
  %5895 = vmatprep.mubr.bf16.mxu0 0
  %5896 = vmatmul.mubr.bf16.gmra.mrb[0].mxu0 %v5741
  %v5897 = vpop.f32.mrb[0].mxu0
  %v5898 = vadd.f32 0.0, %v5897
  %v5899 = vpop.f32.mrb[0].mxu0
  %v5900 = vpop.f32.mrb[0].mxu0
  %v5901 = vadd.f32 0.0, %v5900
  %v5902 = vpop.f32.mrb[0].mxu0
  %5903 = vdwg.mxu0
  %v5904 = vadd.f32 %v5702, %v5842
  %v5905 = vadd.f32 %v5703, %v5845
  %v5906 = vadd.f32 %v5704, %v5850
  %v5907 = vadd.f32 %v5705, %v5853
  %v5908 = vadd.f32 %v5706, %v5858
  %v5909 = vadd.f32 %v5707, %v5861
  %v5910 = vadd.f32 %v5708, %v5866
  %v5911 = vadd.f32 %v5709, %v5869
  %v5912 = vadd.f32 %v5710, %v5874
  %v5913 = vadd.f32 %v5711, %v5877
  %v5914 = vadd.f32 %v5712, %v5882
  %v5915 = vadd.f32 %v5713, %v5885
  %v5916 = vadd.f32 %v5714, %v5890
  %v5917 = vadd.f32 %v5715, %v5893
  %v5918 = vadd.f32 %v5716, %v5898
  %v5919 = vadd.f32 %v5717, %v5901
  %s5920 = scalar_lea.vmem [#allocation2], 64
  %v5921 = vld [vmem:[%s5920] sm:$0xff]
  %v5922 = vld [vmem:[%s5920 + $0x10] sm:$0xff]
  %v5923 = vld [vmem:[%s5920 + $0x20] sm:$0xff]
  %v5924 = vld [vmem:[%s5920 + $0x30] sm:$0xff]
  %v5925 = vld [vmem:[%s5920 + $0x40] sm:$0xff]
  %v5926 = vld [vmem:[%s5920 + $0x50] sm:$0xff]
  %v5927 = vld [vmem:[%s5920 + $0x60] sm:$0xff]
  %v5928 = vld [vmem:[%s5920 + $0x70] sm:$0xff]
  %v5929 = vld [vmem:[%s5920 + $0xc0] sm:$0xff]
  %v5930 = vld [vmem:[%s5920 + $0xd0] sm:$0xff]
  %v5931 = vld [vmem:[%s5920 + $0xe0] sm:$0xff]
  %v5932 = vld [vmem:[%s5920 + $0xf0] sm:$0xff]
  %v5933 = vld [vmem:[%s5920 + $0x100] sm:$0xff]
  %v5934 = vld [vmem:[%s5920 + $0x110] sm:$0xff]
  %v5935 = vld [vmem:[%s5920 + $0x120] sm:$0xff]
  %v5936 = vld [vmem:[%s5920 + $0x130] sm:$0xff]
  %v5937 = vpack.c.bf16 %v5922, %v5921
  %v5938 = vpack.c.bf16 %v5924, %v5923
  %v5939 = vpack.c.bf16 %v5926, %v5925
  %v5940 = vpack.c.bf16 %v5928, %v5927
  %v5941 = vpack.c.bf16 %v5930, %v5929
  %v5942 = vpack.c.bf16 %v5932, %v5931
  %v5943 = vpack.c.bf16 %v5934, %v5933
  %v5944 = vpack.c.bf16 %v5936, %v5935
  %s5945 = scalar_lea.vmem %s4, 1280
  %v5946 = vld [vmem:[%s5945] sm:$0xf]
  %v5947 = vld [vmem:[%s5945 + $0x4] sm:$0xf]
  %v5948 = vld [vmem:[%s5945 + $0x8] sm:$0xf]
  %v5949 = vld [vmem:[%s5945 + $0xc] sm:$0xf]
  %v5950 = vld [vmem:[%s5945 + $0x10] sm:$0xf]
  %v5951 = vld [vmem:[%s5945 + $0x14] sm:$0xf]
  %v5952 = vld [vmem:[%s5945 + $0x18] sm:$0xf]
  %v5953 = vld [vmem:[%s5945 + $0x1c] sm:$0xf]
  %v5954 = vld [vmem:[%s5945 + $0x20] sm:$0xf]
  %v5955 = vld [vmem:[%s5945 + $0x24] sm:$0xf]
  %v5956 = vld [vmem:[%s5945 + $0x28] sm:$0xf]
  %v5957 = vld [vmem:[%s5945 + $0x2c] sm:$0xf]
  %v5958 = vld [vmem:[%s5945 + $0x30] sm:$0xf]
  %v5959 = vld [vmem:[%s5945 + $0x34] sm:$0xf]
  %v5960 = vld [vmem:[%s5945 + $0x38] sm:$0xf]
  %v5961 = vld [vmem:[%s5945 + $0x3c] sm:$0xf]
  %v5978 = vunpack.c.l.b16 %v5946
  %v5979 = vunpack.c.l.b16 %v5947
  %v5980 = vunpack.c.l.b16 %v5948
  %v5981 = vunpack.c.l.b16 %v5949
  %v5982 = vunpack.c.l.b16 %v5950
  %v5983 = vunpack.c.l.b16 %v5951
  %v5984 = vunpack.c.l.b16 %v5952
  %v5985 = vunpack.c.l.b16 %v5953
  %v5986 = vunpack.c.l.b16 %v5954
  %v5987 = vunpack.c.l.b16 %v5955
  %v5988 = vunpack.c.l.b16 %v5956
  %v5989 = vunpack.c.l.b16 %v5957
  %v5990 = vunpack.c.l.b16 %v5958
  %v5991 = vunpack.c.l.b16 %v5959
  %v5992 = vunpack.c.l.b16 %v5960
  %v5993 = vunpack.c.l.b16 %v5961
  %v5994 = vpack.c.b16 %v5979, %v5978
  %v5995 = vpack.c.b16 %v5981, %v5980
  %v5996 = vpack.c.b16 %v5983, %v5982
  %v5997 = vpack.c.b16 %v5985, %v5984
  %v5998 = vpack.c.b16 %v5987, %v5986
  %v5999 = vpack.c.b16 %v5989, %v5988
  %v6000 = vpack.c.b16 %v5991, %v5990
  %v6001 = vpack.c.b16 %v5993, %v5992
  %6010 = vmatprep.subr.bf16.mxu0 0
  %6011 = vmatpush1.bf16.msra.mxu0 %v5994
  %6012 = vmatprep.subr.bf16.mxu0 0
  %6013 = vmatpush1.bf16.msra.mxu0 %v5995
  %6014 = vmatprep.subr.bf16.mxu0 0
  %6015 = vmatpush1.bf16.msra.mxu0 %v5996
  %6016 = vmatprep.subr.bf16.mxu0 0
  %6017 = vmatpush1.bf16.msra.mxu0 %v5997
  %6018 = vmatprep.subr.bf16.mxu0 0
  %6019 = vmatpush1.bf16.msra.mxu0 %v5998
  %6020 = vmatprep.subr.bf16.mxu0 0
  %6021 = vmatpush1.bf16.msra.mxu0 %v5999
  %6022 = vmatprep.subr.bf16.mxu0 0
  %6023 = vmatpush1.bf16.msra.mxu0 %v6000
  %6024 = vmatprep.subr.bf16.mxu0 0
  %6025 = vmatpush1.bf16.msra.mxu0 %v6001
  %6026 = vmatprep.subr.bf16.mxu0 0
  %6027 = vmatpush1.bf16.msra.mxu0 0
  %6028 = vmatprep.subr.bf16.mxu0 0
  %6029 = vmatpush1.bf16.msra.mxu0 0
  %6030 = vmatprep.subr.bf16.mxu0 0
  %6031 = vmatpush1.bf16.msra.mxu0 0
  %6032 = vmatprep.subr.bf16.mxu0 0
  %6033 = vmatpush1.bf16.msra.mxu0 0
  %6034 = vmatprep.subr.bf16.mxu0 0
  %6035 = vmatpush1.bf16.msra.mxu0 0
  %6036 = vmatprep.subr.bf16.mxu0 0
  %6037 = vmatpush1.bf16.msra.mxu0 0
  %6038 = vmatprep.subr.bf16.mxu0 0
  %6039 = vmatpush1.bf16.msra.mxu0 0
  %6040 = vmatprep.subr.bf16.mxu0 0
  %6041 = vmatpush1.bf16.msra.mxu0 0
  %6042 = vmatprep.mubr.bf16.mxu0 0
  %6043 = vmatmul.mubr.bf16.gmra.mrb[0].mxu0 %v5937
  %v6044 = vpop.f32.mrb[0].mxu0
  %v6045 = vadd.f32 0.0, %v6044
  %v6046 = vpop.f32.mrb[0].mxu0
  %v6047 = vpop.f32.mrb[0].mxu0
  %v6048 = vadd.f32 0.0, %v6047
  %v6049 = vpop.f32.mrb[0].mxu0
  %6050 = vmatprep.mubr.bf16.mxu0 0
  %6051 = vmatmul.mubr.bf16.gmra.mrb[0].mxu0 %v5938
  %v6052 = vpop.f32.mrb[0].mxu0
  %v6053 = vadd.f32 0.0, %v6052
  %v6054 = vpop.f32.mrb[0].mxu0
  %v6055 = vpop.f32.mrb[0].mxu0
  %v6056 = vadd.f32 0.0, %v6055
  %v6057 = vpop.f32.mrb[0].mxu0
  %6058 = vmatprep.mubr.bf16.mxu0 0
  %6059 = vmatmul.mubr.bf16.gmra.mrb[0].mxu0 %v5939
  %v6060 = vpop.f32.mrb[0].mxu0
  %v6061 = vadd.f32 0.0, %v6060
  %v6062 = vpop.f32.mrb[0].mxu0
  %v6063 = vpop.f32.mrb[0].mxu0
  %v6064 = vadd.f32 0.0, %v6063
  %v6065 = vpop.f32.mrb[0].mxu0
  %6066 = vmatprep.mubr.bf16.mxu0 0
  %6067 = vmatmul.mubr.bf16.gmra.mrb[0].mxu0 %v5940
  %v6068 = vpop.f32.mrb[0].mxu0
  %v6069 = vadd.f32 0.0, %v6068
  %v6070 = vpop.f32.mrb[0].mxu0
  %v6071 = vpop.f32.mrb[0].mxu0
  %v6072 = vadd.f32 0.0, %v6071
  %v6073 = vpop.f32.mrb[0].mxu0
  %6074 = vmatprep.mubr.bf16.mxu0 0
  %6075 = vmatmul.mubr.bf16.gmra.mrb[0].mxu0 %v5941
  %v6076 = vpop.f32.mrb[0].mxu0
  %v6077 = vadd.f32 0.0, %v6076
  %v6078 = vpop.f32.mrb[0].mxu0
  %v6079 = vpop.f32.mrb[0].mxu0
  %v6080 = vadd.f32 0.0, %v6079
  %v6081 = vpop.f32.mrb[0].mxu0
  %6082 = vmatprep.mubr.bf16.mxu0 0
  %6083 = vmatmul.mubr.bf16.gmra.mrb[0].mxu0 %v5942
  %v6084 = vpop.f32.mrb[0].mxu0
  %v6085 = vadd.f32 0.0, %v6084
  %v6086 = vpop.f32.mrb[0].mxu0
  %v6087 = vpop.f32.mrb[0].mxu0
  %v6088 = vadd.f32 0.0, %v6087
  %v6089 = vpop.f32.mrb[0].mxu0
  %6090 = vmatprep.mubr.bf16.mxu0 0
  %6091 = vmatmul.mubr.bf16.gmra.mrb[0].mxu0 %v5943
  %v6092 = vpop.f32.mrb[0].mxu0
  %v6093 = vadd.f32 0.0, %v6092
  %v6094 = vpop.f32.mrb[0].mxu0
  %v6095 = vpop.f32.mrb[0].mxu0
  %v6096 = vadd.f32 0.0, %v6095
  %v6097 = vpop.f32.mrb[0].mxu0
  %6098 = vmatprep.mubr.bf16.mxu0 0
  %6099 = vmatmul.mubr.bf16.gmra.mrb[0].mxu0 %v5944
  %v6100 = vpop.f32.mrb[0].mxu0
  %v6101 = vadd.f32 0.0, %v6100
  %v6102 = vpop.f32.mrb[0].mxu0
  %v6103 = vpop.f32.mrb[0].mxu0
  %v6104 = vadd.f32 0.0, %v6103
  %v6105 = vpop.f32.mrb[0].mxu0
  %6106 = vdwg.mxu0
  %v6107 = vadd.f32 %v5904, %v6045
  %v6108 = vadd.f32 %v5905, %v6048
  %v6109 = vadd.f32 %v5906, %v6053
  %v6110 = vadd.f32 %v5907, %v6056
  %v6111 = vadd.f32 %v5908, %v6061
  %v6112 = vadd.f32 %v5909, %v6064
  %v6113 = vadd.f32 %v5910, %v6069
  %v6114 = vadd.f32 %v5911, %v6072
  %v6115 = vadd.f32 %v5912, %v6077
  %v6116 = vadd.f32 %v5913, %v6080
  %v6117 = vadd.f32 %v5914, %v6085
  %v6118 = vadd.f32 %v5915, %v6088
  %v6119 = vadd.f32 %v5916, %v6093
  %v6120 = vadd.f32 %v5917, %v6096
  %v6121 = vadd.f32 %v5918, %v6101
  %v6122 = vadd.f32 %v5919, %v6104
  %v6123 = vld [vmem:[%s5920 + $0x1] sm:$0xff]
  %v6124 = vld [vmem:[%s5920 + $0x11] sm:$0xff]
  %v6125 = vld [vmem:[%s5920 + $0x21] sm:$0xff]
  %v6126 = vld [vmem:[%s5920 + $0x31] sm:$0xff]
  %v6127 = vld [vmem:[%s5920 + $0x41] sm:$0xff]
  %v6128 = vld [vmem:[%s5920 + $0x51] sm:$0xff]
  %v6129 = vld [vmem:[%s5920 + $0x61] sm:$0xff]
  %v6130 = vld [vmem:[%s5920 + $0x71] sm:$0xff]
  %v6131 = vld [vmem:[%s5920 + $0xc1] sm:$0xff]
  %v6132 = vld [vmem:[%s5920 + $0xd1] sm:$0xff]
  %v6133 = vld [vmem:[%s5920 + $0xe1] sm:$0xff]
  %v6134 = vld [vmem:[%s5920 + $0xf1] sm:$0xff]
  %v6135 = vld [vmem:[%s5920 + $0x101] sm:$0xff]
  %v6136 = vld [vmem:[%s5920 + $0x111] sm:$0xff]
  %v6137 = vld [vmem:[%s5920 + $0x121] sm:$0xff]
  %v6138 = vld [vmem:[%s5920 + $0x131] sm:$0xff]
  %v6139 = vpack.c.bf16 %v6124, %v6123
  %v6140 = vpack.c.bf16 %v6126, %v6125
  %v6141 = vpack.c.bf16 %v6128, %v6127
  %v6142 = vpack.c.bf16 %v6130, %v6129
  %v6143 = vpack.c.bf16 %v6132, %v6131
  %v6144 = vpack.c.bf16 %v6134, %v6133
  %v6145 = vpack.c.bf16 %v6136, %v6135
  %v6146 = vpack.c.bf16 %v6138, %v6137
  %s6147 = scalar_lea.vmem %s4, 1344
  %v6148 = vld [vmem:[%s6147] sm:$0xf]
  %v6149 = vld [vmem:[%s6147 + $0x4] sm:$0xf]
  %v6150 = vld [vmem:[%s6147 + $0x8] sm:$0xf]
  %v6151 = vld [vmem:[%s6147 + $0xc] sm:$0xf]
  %v6152 = vld [vmem:[%s6147 + $0x10] sm:$0xf]
  %v6153 = vld [vmem:[%s6147 + $0x14] sm:$0xf]
  %v6154 = vld [vmem:[%s6147 + $0x18] sm:$0xf]
  %v6155 = vld [vmem:[%s6147 + $0x1c] sm:$0xf]
  %v6156 = vld [vmem:[%s6147 + $0x20] sm:$0xf]
  %v6157 = vld [vmem:[%s6147 + $0x24] sm:$0xf]
  %v6158 = vld [vmem:[%s6147 + $0x28] sm:$0xf]
  %v6159 = vld [vmem:[%s6147 + $0x2c] sm:$0xf]
  %v6160 = vld [vmem:[%s6147 + $0x30] sm:$0xf]
  %v6161 = vld [vmem:[%s6147 + $0x34] sm:$0xf]
  %v6162 = vld [vmem:[%s6147 + $0x38] sm:$0xf]
  %v6163 = vld [vmem:[%s6147 + $0x3c] sm:$0xf]
  %v6180 = vunpack.c.l.b16 %v6148
  %v6181 = vunpack.c.l.b16 %v6149
  %v6182 = vunpack.c.l.b16 %v6150
  %v6183 = vunpack.c.l.b16 %v6151
  %v6184 = vunpack.c.l.b16 %v6152
  %v6185 = vunpack.c.l.b16 %v6153
  %v6186 = vunpack.c.l.b16 %v6154
  %v6187 = vunpack.c.l.b16 %v6155
  %v6188 = vunpack.c.l.b16 %v6156
  %v6189 = vunpack.c.l.b16 %v6157
  %v6190 = vunpack.c.l.b16 %v6158
  %v6191 = vunpack.c.l.b16 %v6159
  %v6192 = vunpack.c.l.b16 %v6160
  %v6193 = vunpack.c.l.b16 %v6161
  %v6194 = vunpack.c.l.b16 %v6162
  %v6195 = vunpack.c.l.b16 %v6163
  %v6196 = vpack.c.b16 %v6181, %v6180
  %v6197 = vpack.c.b16 %v6183, %v6182
  %v6198 = vpack.c.b16 %v6185, %v6184
  %v6199 = vpack.c.b16 %v6187, %v6186
  %v6200 = vpack.c.b16 %v6189, %v6188
  %v6201 = vpack.c.b16 %v6191, %v6190
  %v6202 = vpack.c.b16 %v6193, %v6192
  %v6203 = vpack.c.b16 %v6195, %v6194
  %6212 = vmatprep.subr.bf16.mxu0 0
  %6213 = vmatpush1.bf16.msra.mxu0 %v6196
  %6214 = vmatprep.subr.bf16.mxu0 0
  %6215 = vmatpush1.bf16.msra.mxu0 %v6197
  %6216 = vmatprep.subr.bf16.mxu0 0
  %6217 = vmatpush1.bf16.msra.mxu0 %v6198
  %6218 = vmatprep.subr.bf16.mxu0 0
  %6219 = vmatpush1.bf16.msra.mxu0 %v6199
  %6220 = vmatprep.subr.bf16.mxu0 0
  %6221 = vmatpush1.bf16.msra.mxu0 %v6200
  %6222 = vmatprep.subr.bf16.mxu0 0
  %6223 = vmatpush1.bf16.msra.mxu0 %v6201
  %6224 = vmatprep.subr.bf16.mxu0 0
  %6225 = vmatpush1.bf16.msra.mxu0 %v6202
  %6226 = vmatprep.subr.bf16.mxu0 0
  %6227 = vmatpush1.bf16.msra.mxu0 %v6203
  %6228 = vmatprep.subr.bf16.mxu0 0
  %6229 = vmatpush1.bf16.msra.mxu0 0
  %6230 = vmatprep.subr.bf16.mxu0 0
  %6231 = vmatpush1.bf16.msra.mxu0 0
  %6232 = vmatprep.subr.bf16.mxu0 0
  %6233 = vmatpush1.bf16.msra.mxu0 0
  %6234 = vmatprep.subr.bf16.mxu0 0
  %6235 = vmatpush1.bf16.msra.mxu0 0
  %6236 = vmatprep.subr.bf16.mxu0 0
  %6237 = vmatpush1.bf16.msra.mxu0 0
  %6238 = vmatprep.subr.bf16.mxu0 0
  %6239 = vmatpush1.bf16.msra.mxu0 0
  %6240 = vmatprep.subr.bf16.mxu0 0
  %6241 = vmatpush1.bf16.msra.mxu0 0
  %6242 = vmatprep.subr.bf16.mxu0 0
  %6243 = vmatpush1.bf16.msra.mxu0 0
  %6244 = vmatprep.mubr.bf16.mxu0 0
  %6245 = vmatmul.mubr.bf16.gmra.mrb[0].mxu0 %v6139
  %v6246 = vpop.f32.mrb[0].mxu0
  %v6247 = vadd.f32 0.0, %v6246
  %v6248 = vpop.f32.mrb[0].mxu0
  %v6249 = vpop.f32.mrb[0].mxu0
  %v6250 = vadd.f32 0.0, %v6249
  %v6251 = vpop.f32.mrb[0].mxu0
  %6252 = vmatprep.mubr.bf16.mxu0 0
  %6253 = vmatmul.mubr.bf16.gmra.mrb[0].mxu0 %v6140
  %v6254 = vpop.f32.mrb[0].mxu0
  %v6255 = vadd.f32 0.0, %v6254
  %v6256 = vpop.f32.mrb[0].mxu0
  %v6257 = vpop.f32.mrb[0].mxu0
  %v6258 = vadd.f32 0.0, %v6257
  %v6259 = vpop.f32.mrb[0].mxu0
  %6260 = vmatprep.mubr.bf16.mxu0 0
  %6261 = vmatmul.mubr.bf16.gmra.mrb[0].mxu0 %v6141
  %v6262 = vpop.f32.mrb[0].mxu0
  %v6263 = vadd.f32 0.0, %v6262
  %v6264 = vpop.f32.mrb[0].mxu0
  %v6265 = vpop.f32.mrb[0].mxu0
  %v6266 = vadd.f32 0.0, %v6265
  %v6267 = vpop.f32.mrb[0].mxu0
  %6268 = vmatprep.mubr.bf16.mxu0 0
  %6269 = vmatmul.mubr.bf16.gmra.mrb[0].mxu0 %v6142
  %v6270 = vpop.f32.mrb[0].mxu0
  %v6271 = vadd.f32 0.0, %v6270
  %v6272 = vpop.f32.mrb[0].mxu0
  %v6273 = vpop.f32.mrb[0].mxu0
  %v6274 = vadd.f32 0.0, %v6273
  %v6275 = vpop.f32.mrb[0].mxu0
  %6276 = vmatprep.mubr.bf16.mxu0 0
  %6277 = vmatmul.mubr.bf16.gmra.mrb[0].mxu0 %v6143
  %v6278 = vpop.f32.mrb[0].mxu0
  %v6279 = vadd.f32 0.0, %v6278
  %v6280 = vpop.f32.mrb[0].mxu0
  %v6281 = vpop.f32.mrb[0].mxu0
  %v6282 = vadd.f32 0.0, %v6281
  %v6283 = vpop.f32.mrb[0].mxu0
  %6284 = vmatprep.mubr.bf16.mxu0 0
  %6285 = vmatmul.mubr.bf16.gmra.mrb[0].mxu0 %v6144
  %v6286 = vpop.f32.mrb[0].mxu0
  %v6287 = vadd.f32 0.0, %v6286
  %v6288 = vpop.f32.mrb[0].mxu0
  %v6289 = vpop.f32.mrb[0].mxu0
  %v6290 = vadd.f32 0.0, %v6289
  %v6291 = vpop.f32.mrb[0].mxu0
  %6292 = vmatprep.mubr.bf16.mxu0 0
  %6293 = vmatmul.mubr.bf16.gmra.mrb[0].mxu0 %v6145
  %v6294 = vpop.f32.mrb[0].mxu0
  %v6295 = vadd.f32 0.0, %v6294
  %v6296 = vpop.f32.mrb[0].mxu0
  %v6297 = vpop.f32.mrb[0].mxu0
  %v6298 = vadd.f32 0.0, %v6297
  %v6299 = vpop.f32.mrb[0].mxu0
  %6300 = vmatprep.mubr.bf16.mxu0 0
  %6301 = vmatmul.mubr.bf16.gmra.mrb[0].mxu0 %v6146
  %v6302 = vpop.f32.mrb[0].mxu0
  %v6303 = vadd.f32 0.0, %v6302
  %v6304 = vpop.f32.mrb[0].mxu0
  %v6305 = vpop.f32.mrb[0].mxu0
  %v6306 = vadd.f32 0.0, %v6305
  %v6307 = vpop.f32.mrb[0].mxu0
  %6308 = vdwg.mxu0
  %v6309 = vadd.f32 %v6107, %v6247
  %v6310 = vadd.f32 %v6108, %v6250
  %v6311 = vadd.f32 %v6109, %v6255
  %v6312 = vadd.f32 %v6110, %v6258
  %v6313 = vadd.f32 %v6111, %v6263
  %v6314 = vadd.f32 %v6112, %v6266
  %v6315 = vadd.f32 %v6113, %v6271
  %v6316 = vadd.f32 %v6114, %v6274
  %v6317 = vadd.f32 %v6115, %v6279
  %v6318 = vadd.f32 %v6116, %v6282
  %v6319 = vadd.f32 %v6117, %v6287
  %v6320 = vadd.f32 %v6118, %v6290
  %v6321 = vadd.f32 %v6119, %v6295
  %v6322 = vadd.f32 %v6120, %v6298
  %v6323 = vadd.f32 %v6121, %v6303
  %v6324 = vadd.f32 %v6122, %v6306
  %v6325 = vld [vmem:[%s5920 + $0x2] sm:$0xff]
  %v6326 = vld [vmem:[%s5920 + $0x12] sm:$0xff]
  %v6327 = vld [vmem:[%s5920 + $0x22] sm:$0xff]
  %v6328 = vld [vmem:[%s5920 + $0x32] sm:$0xff]
  %v6329 = vld [vmem:[%s5920 + $0x42] sm:$0xff]
  %v6330 = vld [vmem:[%s5920 + $0x52] sm:$0xff]
  %v6331 = vld [vmem:[%s5920 + $0x62] sm:$0xff]
  %v6332 = vld [vmem:[%s5920 + $0x72] sm:$0xff]
  %v6333 = vld [vmem:[%s5920 + $0xc2] sm:$0xff]
  %v6334 = vld [vmem:[%s5920 + $0xd2] sm:$0xff]
  %v6335 = vld [vmem:[%s5920 + $0xe2] sm:$0xff]
  %v6336 = vld [vmem:[%s5920 + $0xf2] sm:$0xff]
  %v6337 = vld [vmem:[%s5920 + $0x102] sm:$0xff]
  %v6338 = vld [vmem:[%s5920 + $0x112] sm:$0xff]
  %v6339 = vld [vmem:[%s5920 + $0x122] sm:$0xff]
  %v6340 = vld [vmem:[%s5920 + $0x132] sm:$0xff]
  %v6341 = vpack.c.bf16 %v6326, %v6325
  %v6342 = vpack.c.bf16 %v6328, %v6327
  %v6343 = vpack.c.bf16 %v6330, %v6329
  %v6344 = vpack.c.bf16 %v6332, %v6331
  %v6345 = vpack.c.bf16 %v6334, %v6333
  %v6346 = vpack.c.bf16 %v6336, %v6335
  %v6347 = vpack.c.bf16 %v6338, %v6337
  %v6348 = vpack.c.bf16 %v6340, %v6339
  %s6349 = scalar_lea.vmem %s4, 1408
  %v6350 = vld [vmem:[%s6349] sm:$0xf]
  %v6351 = vld [vmem:[%s6349 + $0x4] sm:$0xf]
  %v6352 = vld [vmem:[%s6349 + $0x8] sm:$0xf]
  %v6353 = vld [vmem:[%s6349 + $0xc] sm:$0xf]
  %v6354 = vld [vmem:[%s6349 + $0x10] sm:$0xf]
  %v6355 = vld [vmem:[%s6349 + $0x14] sm:$0xf]
  %v6356 = vld [vmem:[%s6349 + $0x18] sm:$0xf]
  %v6357 = vld [vmem:[%s6349 + $0x1c] sm:$0xf]
  %v6358 = vld [vmem:[%s6349 + $0x20] sm:$0xf]
  %v6359 = vld [vmem:[%s6349 + $0x24] sm:$0xf]
  %v6360 = vld [vmem:[%s6349 + $0x28] sm:$0xf]
  %v6361 = vld [vmem:[%s6349 + $0x2c] sm:$0xf]
  %v6362 = vld [vmem:[%s6349 + $0x30] sm:$0xf]
  %v6363 = vld [vmem:[%s6349 + $0x34] sm:$0xf]
  %v6364 = vld [vmem:[%s6349 + $0x38] sm:$0xf]
  %v6365 = vld [vmem:[%s6349 + $0x3c] sm:$0xf]
  %v6382 = vunpack.c.l.b16 %v6350
  %v6383 = vunpack.c.l.b16 %v6351
  %v6384 = vunpack.c.l.b16 %v6352
  %v6385 = vunpack.c.l.b16 %v6353
  %v6386 = vunpack.c.l.b16 %v6354
  %v6387 = vunpack.c.l.b16 %v6355
  %v6388 = vunpack.c.l.b16 %v6356
  %v6389 = vunpack.c.l.b16 %v6357
  %v6390 = vunpack.c.l.b16 %v6358
  %v6391 = vunpack.c.l.b16 %v6359
  %v6392 = vunpack.c.l.b16 %v6360
  %v6393 = vunpack.c.l.b16 %v6361
  %v6394 = vunpack.c.l.b16 %v6362
  %v6395 = vunpack.c.l.b16 %v6363
  %v6396 = vunpack.c.l.b16 %v6364
  %v6397 = vunpack.c.l.b16 %v6365
  %v6398 = vpack.c.b16 %v6383, %v6382
  %v6399 = vpack.c.b16 %v6385, %v6384
  %v6400 = vpack.c.b16 %v6387, %v6386
  %v6401 = vpack.c.b16 %v6389, %v6388
  %v6402 = vpack.c.b16 %v6391, %v6390
  %v6403 = vpack.c.b16 %v6393, %v6392
  %v6404 = vpack.c.b16 %v6395, %v6394
  %v6405 = vpack.c.b16 %v6397, %v6396
  %6414 = vmatprep.subr.bf16.mxu0 0
  %6415 = vmatpush1.bf16.msra.mxu0 %v6398
  %6416 = vmatprep.subr.bf16.mxu0 0
  %6417 = vmatpush1.bf16.msra.mxu0 %v6399
  %6418 = vmatprep.subr.bf16.mxu0 0
  %6419 = vmatpush1.bf16.msra.mxu0 %v6400
  %6420 = vmatprep.subr.bf16.mxu0 0
  %6421 = vmatpush1.bf16.msra.mxu0 %v6401
  %6422 = vmatprep.subr.bf16.mxu0 0
  %6423 = vmatpush1.bf16.msra.mxu0 %v6402
  %6424 = vmatprep.subr.bf16.mxu0 0
  %6425 = vmatpush1.bf16.msra.mxu0 %v6403
  %6426 = vmatprep.subr.bf16.mxu0 0
  %6427 = vmatpush1.bf16.msra.mxu0 %v6404
  %6428 = vmatprep.subr.bf16.mxu0 0
  %6429 = vmatpush1.bf16.msra.mxu0 %v6405
  %6430 = vmatprep.subr.bf16.mxu0 0
  %6431 = vmatpush1.bf16.msra.mxu0 0
  %6432 = vmatprep.subr.bf16.mxu0 0
  %6433 = vmatpush1.bf16.msra.mxu0 0
  %6434 = vmatprep.subr.bf16.mxu0 0
  %6435 = vmatpush1.bf16.msra.mxu0 0
  %6436 = vmatprep.subr.bf16.mxu0 0
  %6437 = vmatpush1.bf16.msra.mxu0 0
  %6438 = vmatprep.subr.bf16.mxu0 0
  %6439 = vmatpush1.bf16.msra.mxu0 0
  %6440 = vmatprep.subr.bf16.mxu0 0
  %6441 = vmatpush1.bf16.msra.mxu0 0
  %6442 = vmatprep.subr.bf16.mxu0 0
  %6443 = vmatpush1.bf16.msra.mxu0 0
  %6444 = vmatprep.subr.bf16.mxu0 0
  %6445 = vmatpush1.bf16.msra.mxu0 0
  %6446 = vmatprep.mubr.bf16.mxu0 0
  %6447 = vmatmul.mubr.bf16.gmra.mrb[0].mxu0 %v6341
  %v6448 = vpop.f32.mrb[0].mxu0
  %v6449 = vadd.f32 0.0, %v6448
  %v6450 = vpop.f32.mrb[0].mxu0
  %v6451 = vpop.f32.mrb[0].mxu0
  %v6452 = vadd.f32 0.0, %v6451
  %v6453 = vpop.f32.mrb[0].mxu0
  %6454 = vmatprep.mubr.bf16.mxu0 0
  %6455 = vmatmul.mubr.bf16.gmra.mrb[0].mxu0 %v6342
  %v6456 = vpop.f32.mrb[0].mxu0
  %v6457 = vadd.f32 0.0, %v6456
  %v6458 = vpop.f32.mrb[0].mxu0
  %v6459 = vpop.f32.mrb[0].mxu0
  %v6460 = vadd.f32 0.0, %v6459
  %v6461 = vpop.f32.mrb[0].mxu0
  %6462 = vmatprep.mubr.bf16.mxu0 0
  %6463 = vmatmul.mubr.bf16.gmra.mrb[0].mxu0 %v6343
  %v6464 = vpop.f32.mrb[0].mxu0
  %v6465 = vadd.f32 0.0, %v6464
  %v6466 = vpop.f32.mrb[0].mxu0
  %v6467 = vpop.f32.mrb[0].mxu0
  %v6468 = vadd.f32 0.0, %v6467
  %v6469 = vpop.f32.mrb[0].mxu0
  %6470 = vmatprep.mubr.bf16.mxu0 0
  %6471 = vmatmul.mubr.bf16.gmra.mrb[0].mxu0 %v6344
  %v6472 = vpop.f32.mrb[0].mxu0
  %v6473 = vadd.f32 0.0, %v6472
  %v6474 = vpop.f32.mrb[0].mxu0
  %v6475 = vpop.f32.mrb[0].mxu0
  %v6476 = vadd.f32 0.0, %v6475
  %v6477 = vpop.f32.mrb[0].mxu0
  %6478 = vmatprep.mubr.bf16.mxu0 0
  %6479 = vmatmul.mubr.bf16.gmra.mrb[0].mxu0 %v6345
  %v6480 = vpop.f32.mrb[0].mxu0
  %v6481 = vadd.f32 0.0, %v6480
  %v6482 = vpop.f32.mrb[0].mxu0
  %v6483 = vpop.f32.mrb[0].mxu0
  %v6484 = vadd.f32 0.0, %v6483
  %v6485 = vpop.f32.mrb[0].mxu0
  %6486 = vmatprep.mubr.bf16.mxu0 0
  %6487 = vmatmul.mubr.bf16.gmra.mrb[0].mxu0 %v6346
  %v6488 = vpop.f32.mrb[0].mxu0
  %v6489 = vadd.f32 0.0, %v6488
  %v6490 = vpop.f32.mrb[0].mxu0
  %v6491 = vpop.f32.mrb[0].mxu0
  %v6492 = vadd.f32 0.0, %v6491
  %v6493 = vpop.f32.mrb[0].mxu0
  %6494 = vmatprep.mubr.bf16.mxu0 0
  %6495 = vmatmul.mubr.bf16.gmra.mrb[0].mxu0 %v6347
  %v6496 = vpop.f32.mrb[0].mxu0
  %v6497 = vadd.f32 0.0, %v6496
  %v6498 = vpop.f32.mrb[0].mxu0
  %v6499 = vpop.f32.mrb[0].mxu0
  %v6500 = vadd.f32 0.0, %v6499
  %v6501 = vpop.f32.mrb[0].mxu0
  %6502 = vmatprep.mubr.bf16.mxu0 0
  %6503 = vmatmul.mubr.bf16.gmra.mrb[0].mxu0 %v6348
  %v6504 = vpop.f32.mrb[0].mxu0
  %v6505 = vadd.f32 0.0, %v6504
  %v6506 = vpop.f32.mrb[0].mxu0
  %v6507 = vpop.f32.mrb[0].mxu0
  %v6508 = vadd.f32 0.0, %v6507
  %v6509 = vpop.f32.mrb[0].mxu0
  %6510 = vdwg.mxu0
  %v6511 = vadd.f32 %v6309, %v6449
  %v6512 = vadd.f32 %v6310, %v6452
  %v6513 = vadd.f32 %v6311, %v6457
  %v6514 = vadd.f32 %v6312, %v6460
  %v6515 = vadd.f32 %v6313, %v6465
  %v6516 = vadd.f32 %v6314, %v6468
  %v6517 = vadd.f32 %v6315, %v6473
  %v6518 = vadd.f32 %v6316, %v6476
  %v6519 = vadd.f32 %v6317, %v6481
  %v6520 = vadd.f32 %v6318, %v6484
  %v6521 = vadd.f32 %v6319, %v6489
  %v6522 = vadd.f32 %v6320, %v6492
  %v6523 = vadd.f32 %v6321, %v6497
  %v6524 = vadd.f32 %v6322, %v6500
  %v6525 = vadd.f32 %v6323, %v6505
  %v6526 = vadd.f32 %v6324, %v6508
  %v6527 = vld [vmem:[%s5920 + $0x3] sm:$0xff]
  %v6528 = vld [vmem:[%s5920 + $0x13] sm:$0xff]
  %v6529 = vld [vmem:[%s5920 + $0x23] sm:$0xff]
  %v6530 = vld [vmem:[%s5920 + $0x33] sm:$0xff]
  %v6531 = vld [vmem:[%s5920 + $0x43] sm:$0xff]
  %v6532 = vld [vmem:[%s5920 + $0x53] sm:$0xff]
  %v6533 = vld [vmem:[%s5920 + $0x63] sm:$0xff]
  %v6534 = vld [vmem:[%s5920 + $0x73] sm:$0xff]
  %v6535 = vld [vmem:[%s5920 + $0xc3] sm:$0xff]
  %v6536 = vld [vmem:[%s5920 + $0xd3] sm:$0xff]
  %v6537 = vld [vmem:[%s5920 + $0xe3] sm:$0xff]
  %v6538 = vld [vmem:[%s5920 + $0xf3] sm:$0xff]
  %v6539 = vld [vmem:[%s5920 + $0x103] sm:$0xff]
  %v6540 = vld [vmem:[%s5920 + $0x113] sm:$0xff]
  %v6541 = vld [vmem:[%s5920 + $0x123] sm:$0xff]
  %v6542 = vld [vmem:[%s5920 + $0x133] sm:$0xff]
  %v6543 = vpack.c.bf16 %v6528, %v6527
  %v6544 = vpack.c.bf16 %v6530, %v6529
  %v6545 = vpack.c.bf16 %v6532, %v6531
  %v6546 = vpack.c.bf16 %v6534, %v6533
  %v6547 = vpack.c.bf16 %v6536, %v6535
  %v6548 = vpack.c.bf16 %v6538, %v6537
  %v6549 = vpack.c.bf16 %v6540, %v6539
  %v6550 = vpack.c.bf16 %v6542, %v6541
  %s6551 = scalar_lea.vmem %s4, 1472
  %v6552 = vld [vmem:[%s6551] sm:$0xf]
  %v6553 = vld [vmem:[%s6551 + $0x4] sm:$0xf]
  %v6554 = vld [vmem:[%s6551 + $0x8] sm:$0xf]
  %v6555 = vld [vmem:[%s6551 + $0xc] sm:$0xf]
  %v6556 = vld [vmem:[%s6551 + $0x10] sm:$0xf]
  %v6557 = vld [vmem:[%s6551 + $0x14] sm:$0xf]
  %v6558 = vld [vmem:[%s6551 + $0x18] sm:$0xf]
  %v6559 = vld [vmem:[%s6551 + $0x1c] sm:$0xf]
  %v6560 = vld [vmem:[%s6551 + $0x20] sm:$0xf]
  %v6561 = vld [vmem:[%s6551 + $0x24] sm:$0xf]
  %v6562 = vld [vmem:[%s6551 + $0x28] sm:$0xf]
  %v6563 = vld [vmem:[%s6551 + $0x2c] sm:$0xf]
  %v6564 = vld [vmem:[%s6551 + $0x30] sm:$0xf]
  %v6565 = vld [vmem:[%s6551 + $0x34] sm:$0xf]
  %v6566 = vld [vmem:[%s6551 + $0x38] sm:$0xf]
  %v6567 = vld [vmem:[%s6551 + $0x3c] sm:$0xf]
  %v6584 = vunpack.c.l.b16 %v6552
  %v6585 = vunpack.c.l.b16 %v6553
  %v6586 = vunpack.c.l.b16 %v6554
  %v6587 = vunpack.c.l.b16 %v6555
  %v6588 = vunpack.c.l.b16 %v6556
  %v6589 = vunpack.c.l.b16 %v6557
  %v6590 = vunpack.c.l.b16 %v6558
  %v6591 = vunpack.c.l.b16 %v6559
  %v6592 = vunpack.c.l.b16 %v6560
  %v6593 = vunpack.c.l.b16 %v6561
  %v6594 = vunpack.c.l.b16 %v6562
  %v6595 = vunpack.c.l.b16 %v6563
  %v6596 = vunpack.c.l.b16 %v6564
  %v6597 = vunpack.c.l.b16 %v6565
  %v6598 = vunpack.c.l.b16 %v6566
  %v6599 = vunpack.c.l.b16 %v6567
  %v6600 = vpack.c.b16 %v6585, %v6584
  %v6601 = vpack.c.b16 %v6587, %v6586
  %v6602 = vpack.c.b16 %v6589, %v6588
  %v6603 = vpack.c.b16 %v6591, %v6590
  %v6604 = vpack.c.b16 %v6593, %v6592
  %v6605 = vpack.c.b16 %v6595, %v6594
  %v6606 = vpack.c.b16 %v6597, %v6596
  %v6607 = vpack.c.b16 %v6599, %v6598
  %6616 = vmatprep.subr.bf16.mxu0 0
  %6617 = vmatpush1.bf16.msra.mxu0 %v6600
  %6618 = vmatprep.subr.bf16.mxu0 0
  %6619 = vmatpush1.bf16.msra.mxu0 %v6601
  %6620 = vmatprep.subr.bf16.mxu0 0
  %6621 = vmatpush1.bf16.msra.mxu0 %v6602
  %6622 = vmatprep.subr.bf16.mxu0 0
  %6623 = vmatpush1.bf16.msra.mxu0 %v6603
  %6624 = vmatprep.subr.bf16.mxu0 0
  %6625 = vmatpush1.bf16.msra.mxu0 %v6604
  %6626 = vmatprep.subr.bf16.mxu0 0
  %6627 = vmatpush1.bf16.msra.mxu0 %v6605
  %6628 = vmatprep.subr.bf16.mxu0 0
  %6629 = vmatpush1.bf16.msra.mxu0 %v6606
  %6630 = vmatprep.subr.bf16.mxu0 0
  %6631 = vmatpush1.bf16.msra.mxu0 %v6607
  %6632 = vmatprep.subr.bf16.mxu0 0
  %6633 = vmatpush1.bf16.msra.mxu0 0
  %6634 = vmatprep.subr.bf16.mxu0 0
  %6635 = vmatpush1.bf16.msra.mxu0 0
  %6636 = vmatprep.subr.bf16.mxu0 0
  %6637 = vmatpush1.bf16.msra.mxu0 0
  %6638 = vmatprep.subr.bf16.mxu0 0
  %6639 = vmatpush1.bf16.msra.mxu0 0
  %6640 = vmatprep.subr.bf16.mxu0 0
  %6641 = vmatpush1.bf16.msra.mxu0 0
  %6642 = vmatprep.subr.bf16.mxu0 0
  %6643 = vmatpush1.bf16.msra.mxu0 0
  %6644 = vmatprep.subr.bf16.mxu0 0
  %6645 = vmatpush1.bf16.msra.mxu0 0
  %6646 = vmatprep.subr.bf16.mxu0 0
  %6647 = vmatpush1.bf16.msra.mxu0 0
  %6648 = vmatprep.mubr.bf16.mxu0 0
  %6649 = vmatmul.mubr.bf16.gmra.mrb[0].mxu0 %v6543
  %v6650 = vpop.f32.mrb[0].mxu0
  %v6651 = vadd.f32 0.0, %v6650
  %v6652 = vpop.f32.mrb[0].mxu0
  %v6653 = vpop.f32.mrb[0].mxu0
  %v6654 = vadd.f32 0.0, %v6653
  %v6655 = vpop.f32.mrb[0].mxu0
  %6656 = vmatprep.mubr.bf16.mxu0 0
  %6657 = vmatmul.mubr.bf16.gmra.mrb[0].mxu0 %v6544
  %v6658 = vpop.f32.mrb[0].mxu0
  %v6659 = vadd.f32 0.0, %v6658
  %v6660 = vpop.f32.mrb[0].mxu0
  %v6661 = vpop.f32.mrb[0].mxu0
  %v6662 = vadd.f32 0.0, %v6661
  %v6663 = vpop.f32.mrb[0].mxu0
  %6664 = vmatprep.mubr.bf16.mxu0 0
  %6665 = vmatmul.mubr.bf16.gmra.mrb[0].mxu0 %v6545
  %v6666 = vpop.f32.mrb[0].mxu0
  %v6667 = vadd.f32 0.0, %v6666
  %v6668 = vpop.f32.mrb[0].mxu0
  %v6669 = vpop.f32.mrb[0].mxu0
  %v6670 = vadd.f32 0.0, %v6669
  %v6671 = vpop.f32.mrb[0].mxu0
  %6672 = vmatprep.mubr.bf16.mxu0 0
  %6673 = vmatmul.mubr.bf16.gmra.mrb[0].mxu0 %v6546
  %v6674 = vpop.f32.mrb[0].mxu0
  %v6675 = vadd.f32 0.0, %v6674
  %v6676 = vpop.f32.mrb[0].mxu0
  %v6677 = vpop.f32.mrb[0].mxu0
  %v6678 = vadd.f32 0.0, %v6677
  %v6679 = vpop.f32.mrb[0].mxu0
  %6680 = vmatprep.mubr.bf16.mxu0 0
  %6681 = vmatmul.mubr.bf16.gmra.mrb[0].mxu0 %v6547
  %v6682 = vpop.f32.mrb[0].mxu0
  %v6683 = vadd.f32 0.0, %v6682
  %v6684 = vpop.f32.mrb[0].mxu0
  %v6685 = vpop.f32.mrb[0].mxu0
  %v6686 = vadd.f32 0.0, %v6685
  %v6687 = vpop.f32.mrb[0].mxu0
  %6688 = vmatprep.mubr.bf16.mxu0 0
  %6689 = vmatmul.mubr.bf16.gmra.mrb[0].mxu0 %v6548
  %v6690 = vpop.f32.mrb[0].mxu0
  %v6691 = vadd.f32 0.0, %v6690
  %v6692 = vpop.f32.mrb[0].mxu0
  %v6693 = vpop.f32.mrb[0].mxu0
  %v6694 = vadd.f32 0.0, %v6693
  %v6695 = vpop.f32.mrb[0].mxu0
  %6696 = vmatprep.mubr.bf16.mxu0 0
  %6697 = vmatmul.mubr.bf16.gmra.mrb[0].mxu0 %v6549
  %v6698 = vpop.f32.mrb[0].mxu0
  %v6699 = vadd.f32 0.0, %v6698
  %v6700 = vpop.f32.mrb[0].mxu0
  %v6701 = vpop.f32.mrb[0].mxu0
  %v6702 = vadd.f32 0.0, %v6701
  %v6703 = vpop.f32.mrb[0].mxu0
  %6704 = vmatprep.mubr.bf16.mxu0 0
  %6705 = vmatmul.mubr.bf16.gmra.mrb[0].mxu0 %v6550
  %v6706 = vpop.f32.mrb[0].mxu0
  %v6707 = vadd.f32 0.0, %v6706
  %v6708 = vpop.f32.mrb[0].mxu0
  %v6709 = vpop.f32.mrb[0].mxu0
  %v6710 = vadd.f32 0.0, %v6709
  %v6711 = vpop.f32.mrb[0].mxu0
  %6712 = vdwg.mxu0
  %v6713 = vadd.f32 %v6511, %v6651
  %v6714 = vadd.f32 %v6512, %v6654
  %v6715 = vadd.f32 %v6513, %v6659
  %v6716 = vadd.f32 %v6514, %v6662
  %v6717 = vadd.f32 %v6515, %v6667
  %v6718 = vadd.f32 %v6516, %v6670
  %v6719 = vadd.f32 %v6517, %v6675
  %v6720 = vadd.f32 %v6518, %v6678
  %v6721 = vadd.f32 %v6519, %v6683
  %v6722 = vadd.f32 %v6520, %v6686
  %v6723 = vadd.f32 %v6521, %v6691
  %v6724 = vadd.f32 %v6522, %v6694
  %v6725 = vadd.f32 %v6523, %v6699
  %v6726 = vadd.f32 %v6524, %v6702
  %v6727 = vadd.f32 %v6525, %v6707
  %v6728 = vadd.f32 %v6526, %v6710
  %v6729 = vld [vmem:[%s5920 + $0x4] sm:$0xff]
  %v6730 = vld [vmem:[%s5920 + $0x14] sm:$0xff]
  %v6731 = vld [vmem:[%s5920 + $0x24] sm:$0xff]
  %v6732 = vld [vmem:[%s5920 + $0x34] sm:$0xff]
  %v6733 = vld [vmem:[%s5920 + $0x44] sm:$0xff]
  %v6734 = vld [vmem:[%s5920 + $0x54] sm:$0xff]
  %v6735 = vld [vmem:[%s5920 + $0x64] sm:$0xff]
  %v6736 = vld [vmem:[%s5920 + $0x74] sm:$0xff]
  %v6737 = vld [vmem:[%s5920 + $0xc4] sm:$0xff]
  %v6738 = vld [vmem:[%s5920 + $0xd4] sm:$0xff]
  %v6739 = vld [vmem:[%s5920 + $0xe4] sm:$0xff]
  %v6740 = vld [vmem:[%s5920 + $0xf4] sm:$0xff]
  %v6741 = vld [vmem:[%s5920 + $0x104] sm:$0xff]
  %v6742 = vld [vmem:[%s5920 + $0x114] sm:$0xff]
  %v6743 = vld [vmem:[%s5920 + $0x124] sm:$0xff]
  %v6744 = vld [vmem:[%s5920 + $0x134] sm:$0xff]
  %v6745 = vpack.c.bf16 %v6730, %v6729
  %v6746 = vpack.c.bf16 %v6732, %v6731
  %v6747 = vpack.c.bf16 %v6734, %v6733
  %v6748 = vpack.c.bf16 %v6736, %v6735
  %v6749 = vpack.c.bf16 %v6738, %v6737
  %v6750 = vpack.c.bf16 %v6740, %v6739
  %v6751 = vpack.c.bf16 %v6742, %v6741
  %v6752 = vpack.c.bf16 %v6744, %v6743
  %s6753 = scalar_lea.vmem %s4, 1536
  %v6754 = vld [vmem:[%s6753] sm:$0xf]
  %v6755 = vld [vmem:[%s6753 + $0x4] sm:$0xf]
  %v6756 = vld [vmem:[%s6753 + $0x8] sm:$0xf]
  %v6757 = vld [vmem:[%s6753 + $0xc] sm:$0xf]
  %v6758 = vld [vmem:[%s6753 + $0x10] sm:$0xf]
  %v6759 = vld [vmem:[%s6753 + $0x14] sm:$0xf]
  %v6760 = vld [vmem:[%s6753 + $0x18] sm:$0xf]
  %v6761 = vld [vmem:[%s6753 + $0x1c] sm:$0xf]
  %v6762 = vld [vmem:[%s6753 + $0x20] sm:$0xf]
  %v6763 = vld [vmem:[%s6753 + $0x24] sm:$0xf]
  %v6764 = vld [vmem:[%s6753 + $0x28] sm:$0xf]
  %v6765 = vld [vmem:[%s6753 + $0x2c] sm:$0xf]
  %v6766 = vld [vmem:[%s6753 + $0x30] sm:$0xf]
  %v6767 = vld [vmem:[%s6753 + $0x34] sm:$0xf]
  %v6768 = vld [vmem:[%s6753 + $0x38] sm:$0xf]
  %v6769 = vld [vmem:[%s6753 + $0x3c] sm:$0xf]
  %v6786 = vunpack.c.l.b16 %v6754
  %v6787 = vunpack.c.l.b16 %v6755
  %v6788 = vunpack.c.l.b16 %v6756
  %v6789 = vunpack.c.l.b16 %v6757
  %v6790 = vunpack.c.l.b16 %v6758
  %v6791 = vunpack.c.l.b16 %v6759
  %v6792 = vunpack.c.l.b16 %v6760
  %v6793 = vunpack.c.l.b16 %v6761
  %v6794 = vunpack.c.l.b16 %v6762
  %v6795 = vunpack.c.l.b16 %v6763
  %v6796 = vunpack.c.l.b16 %v6764
  %v6797 = vunpack.c.l.b16 %v6765
  %v6798 = vunpack.c.l.b16 %v6766
  %v6799 = vunpack.c.l.b16 %v6767
  %v6800 = vunpack.c.l.b16 %v6768
  %v6801 = vunpack.c.l.b16 %v6769
  %v6802 = vpack.c.b16 %v6787, %v6786
  %v6803 = vpack.c.b16 %v6789, %v6788
  %v6804 = vpack.c.b16 %v6791, %v6790
  %v6805 = vpack.c.b16 %v6793, %v6792
  %v6806 = vpack.c.b16 %v6795, %v6794
  %v6807 = vpack.c.b16 %v6797, %v6796
  %v6808 = vpack.c.b16 %v6799, %v6798
  %v6809 = vpack.c.b16 %v6801, %v6800
  %6818 = vmatprep.subr.bf16.mxu0 0
  %6819 = vmatpush1.bf16.msra.mxu0 %v6802
  %6820 = vmatprep.subr.bf16.mxu0 0
  %6821 = vmatpush1.bf16.msra.mxu0 %v6803
  %6822 = vmatprep.subr.bf16.mxu0 0
  %6823 = vmatpush1.bf16.msra.mxu0 %v6804
  %6824 = vmatprep.subr.bf16.mxu0 0
  %6825 = vmatpush1.bf16.msra.mxu0 %v6805
  %6826 = vmatprep.subr.bf16.mxu0 0
  %6827 = vmatpush1.bf16.msra.mxu0 %v6806
  %6828 = vmatprep.subr.bf16.mxu0 0
  %6829 = vmatpush1.bf16.msra.mxu0 %v6807
  %6830 = vmatprep.subr.bf16.mxu0 0
  %6831 = vmatpush1.bf16.msra.mxu0 %v6808
  %6832 = vmatprep.subr.bf16.mxu0 0
  %6833 = vmatpush1.bf16.msra.mxu0 %v6809
  %6834 = vmatprep.subr.bf16.mxu0 0
  %6835 = vmatpush1.bf16.msra.mxu0 0
  %6836 = vmatprep.subr.bf16.mxu0 0
  %6837 = vmatpush1.bf16.msra.mxu0 0
  %6838 = vmatprep.subr.bf16.mxu0 0
  %6839 = vmatpush1.bf16.msra.mxu0 0
  %6840 = vmatprep.subr.bf16.mxu0 0
  %6841 = vmatpush1.bf16.msra.mxu0 0
  %6842 = vmatprep.subr.bf16.mxu0 0
  %6843 = vmatpush1.bf16.msra.mxu0 0
  %6844 = vmatprep.subr.bf16.mxu0 0
  %6845 = vmatpush1.bf16.msra.mxu0 0
  %6846 = vmatprep.subr.bf16.mxu0 0
  %6847 = vmatpush1.bf16.msra.mxu0 0
  %6848 = vmatprep.subr.bf16.mxu0 0
  %6849 = vmatpush1.bf16.msra.mxu0 0
  %6850 = vmatprep.mubr.bf16.mxu0 0
  %6851 = vmatmul.mubr.bf16.gmra.mrb[0].mxu0 %v6745
  %v6852 = vpop.f32.mrb[0].mxu0
  %v6853 = vadd.f32 0.0, %v6852
  %v6854 = vpop.f32.mrb[0].mxu0
  %v6855 = vpop.f32.mrb[0].mxu0
  %v6856 = vadd.f32 0.0, %v6855
  %v6857 = vpop.f32.mrb[0].mxu0
  %6858 = vmatprep.mubr.bf16.mxu0 0
  %6859 = vmatmul.mubr.bf16.gmra.mrb[0].mxu0 %v6746
  %v6860 = vpop.f32.mrb[0].mxu0
  %v6861 = vadd.f32 0.0, %v6860
  %v6862 = vpop.f32.mrb[0].mxu0
  %v6863 = vpop.f32.mrb[0].mxu0
  %v6864 = vadd.f32 0.0, %v6863
  %v6865 = vpop.f32.mrb[0].mxu0
  %6866 = vmatprep.mubr.bf16.mxu0 0
  %6867 = vmatmul.mubr.bf16.gmra.mrb[0].mxu0 %v6747
  %v6868 = vpop.f32.mrb[0].mxu0
  %v6869 = vadd.f32 0.0, %v6868
  %v6870 = vpop.f32.mrb[0].mxu0
  %v6871 = vpop.f32.mrb[0].mxu0
  %v6872 = vadd.f32 0.0, %v6871
  %v6873 = vpop.f32.mrb[0].mxu0
  %6874 = vmatprep.mubr.bf16.mxu0 0
  %6875 = vmatmul.mubr.bf16.gmra.mrb[0].mxu0 %v6748
  %v6876 = vpop.f32.mrb[0].mxu0
  %v6877 = vadd.f32 0.0, %v6876
  %v6878 = vpop.f32.mrb[0].mxu0
  %v6879 = vpop.f32.mrb[0].mxu0
  %v6880 = vadd.f32 0.0, %v6879
  %v6881 = vpop.f32.mrb[0].mxu0
  %6882 = vmatprep.mubr.bf16.mxu0 0
  %6883 = vmatmul.mubr.bf16.gmra.mrb[0].mxu0 %v6749
  %v6884 = vpop.f32.mrb[0].mxu0
  %v6885 = vadd.f32 0.0, %v6884
  %v6886 = vpop.f32.mrb[0].mxu0
  %v6887 = vpop.f32.mrb[0].mxu0
  %v6888 = vadd.f32 0.0, %v6887
  %v6889 = vpop.f32.mrb[0].mxu0
  %6890 = vmatprep.mubr.bf16.mxu0 0
  %6891 = vmatmul.mubr.bf16.gmra.mrb[0].mxu0 %v6750
  %v6892 = vpop.f32.mrb[0].mxu0
  %v6893 = vadd.f32 0.0, %v6892
  %v6894 = vpop.f32.mrb[0].mxu0
  %v6895 = vpop.f32.mrb[0].mxu0
  %v6896 = vadd.f32 0.0, %v6895
  %v6897 = vpop.f32.mrb[0].mxu0
  %6898 = vmatprep.mubr.bf16.mxu0 0
  %6899 = vmatmul.mubr.bf16.gmra.mrb[0].mxu0 %v6751
  %v6900 = vpop.f32.mrb[0].mxu0
  %v6901 = vadd.f32 0.0, %v6900
  %v6902 = vpop.f32.mrb[0].mxu0
  %v6903 = vpop.f32.mrb[0].mxu0
  %v6904 = vadd.f32 0.0, %v6903
  %v6905 = vpop.f32.mrb[0].mxu0
  %6906 = vmatprep.mubr.bf16.mxu0 0
  %6907 = vmatmul.mubr.bf16.gmra.mrb[0].mxu0 %v6752
  %v6908 = vpop.f32.mrb[0].mxu0
  %v6909 = vadd.f32 0.0, %v6908
  %v6910 = vpop.f32.mrb[0].mxu0
  %v6911 = vpop.f32.mrb[0].mxu0
  %v6912 = vadd.f32 0.0, %v6911
  %v6913 = vpop.f32.mrb[0].mxu0
  %6914 = vdwg.mxu0
  %v6915 = vadd.f32 %v6713, %v6853
  %v6916 = vadd.f32 %v6714, %v6856
  %v6917 = vadd.f32 %v6715, %v6861
  %v6918 = vadd.f32 %v6716, %v6864
  %v6919 = vadd.f32 %v6717, %v6869
  %v6920 = vadd.f32 %v6718, %v6872
  %v6921 = vadd.f32 %v6719, %v6877
  %v6922 = vadd.f32 %v6720, %v6880
  %v6923 = vadd.f32 %v6721, %v6885
  %v6924 = vadd.f32 %v6722, %v6888
  %v6925 = vadd.f32 %v6723, %v6893
  %v6926 = vadd.f32 %v6724, %v6896
  %v6927 = vadd.f32 %v6725, %v6901
  %v6928 = vadd.f32 %v6726, %v6904
  %v6929 = vadd.f32 %v6727, %v6909
  %v6930 = vadd.f32 %v6728, %v6912
  %v6931 = vld [vmem:[%s5] sm:$0x1]
  %v6933 = vlaneseq
  %v6934 = vshrl.u32 %v6933, 7
  %v6935 = vsub.s32 0, %v6934
  %v6936 = vrot.slane %v6931, %v6935
  %v6938 = vadd.f32 %v6915, %v6936
  %v6939 = vadd.f32 %v6916, %v6936
  %v6940 = vadd.f32 %v6917, %v6936
  %v6941 = vadd.f32 %v6918, %v6936
  %v6942 = vadd.f32 %v6919, %v6936
  %v6943 = vadd.f32 %v6920, %v6936
  %v6944 = vadd.f32 %v6921, %v6936
  %v6945 = vadd.f32 %v6922, %v6936
  %v6946 = vmax.f32 %v6938, %v6939
  %v6947 = vmax.f32 %v6940, %v6941
  %v6948 = vmax.f32 %v6942, %v6943
  %v6949 = vmax.f32 %v6944, %v6945
  %v6954 = vrot.slane %v6946, 1
  %v6955 = vrot.slane %v6947, 1
  %v6956 = vrot.slane %v6948, 1
  %v6957 = vrot.slane %v6949, 1
  %v6962 = vmax.f32 %v6946, %v6954
  %v6963 = vmax.f32 %v6947, %v6955
  %v6964 = vmax.f32 %v6948, %v6956
  %v6965 = vmax.f32 %v6949, %v6957
  %v6966 = vmax.f32 %v6962, 0.0
  %v6967 = vmax.f32 %v6963, 0.0
  %v6968 = vmax.f32 %v6964, 0.0
  %v6969 = vmax.f32 %v6965, 0.0
  %6970 = vst [vmem:[%s6] sm:$0x1] %v6966
  %6971 = vst [vmem:[%s6 + $0x4] sm:$0x1] %v6967
  %6972 = vst [vmem:[%s6 + $0x8] sm:$0x1] %v6968
  %6973 = vst [vmem:[%s6 + $0xc] sm:$0x1] %v6969
  %6974 = vst [vmem:[%s6 - $0x1] sm:$0x4] %v6966
  %6975 = vst [vmem:[%s6 + $0x3] sm:$0x4] %v6967
  %6976 = vst [vmem:[%s6 + $0x7] sm:$0x4] %v6968
  %6977 = vst [vmem:[%s6 + $0xb] sm:$0x4] %v6969
  %6978 = vst [vmem:[%s6 - $0x2] sm:$0x10] %v6966
  %6979 = vst [vmem:[%s6 + $0x2] sm:$0x10] %v6967
  %6980 = vst [vmem:[%s6 + $0x6] sm:$0x10] %v6968
  %6981 = vst [vmem:[%s6 + $0xa] sm:$0x10] %v6969
  %6982 = vst [vmem:[%s6 - $0x3] sm:$0x40] %v6966
  %6983 = vst [vmem:[%s6 + $0x1] sm:$0x40] %v6967
  %6984 = vst [vmem:[%s6 + $0x5] sm:$0x40] %v6968
  %6985 = vst [vmem:[%s6 + $0x9] sm:$0x40] %v6969
  %v6986 = vld [vmem:[%s5] sm:$0x1]
  %v6988 = vlaneseq
  %v6989 = vshrl.u32 %v6988, 7
  %v6990 = vsub.s32 0, %v6989
  %v6991 = vrot.slane %v6986, %v6990
  %v6993 = vadd.f32 %v6923, %v6991
  %v6994 = vadd.f32 %v6924, %v6991
  %v6995 = vadd.f32 %v6925, %v6991
  %v6996 = vadd.f32 %v6926, %v6991
  %v6997 = vadd.f32 %v6927, %v6991
  %v6998 = vadd.f32 %v6928, %v6991
  %v6999 = vadd.f32 %v6929, %v6991
  %v7000 = vadd.f32 %v6930, %v6991
  %v7001 = vmax.f32 %v6993, %v6994
  %v7002 = vmax.f32 %v6995, %v6996
  %v7003 = vmax.f32 %v6997, %v6998
  %v7004 = vmax.f32 %v6999, %v7000
  %v7009 = vrot.slane %v7001, 1
  %v7010 = vrot.slane %v7002, 1
  %v7011 = vrot.slane %v7003, 1
  %v7012 = vrot.slane %v7004, 1
  %v7017 = vmax.f32 %v7001, %v7009
  %v7018 = vmax.f32 %v7002, %v7010
  %v7019 = vmax.f32 %v7003, %v7011
  %v7020 = vmax.f32 %v7004, %v7012
  %v7021 = vmax.f32 %v7017, 0.0
  %v7022 = vmax.f32 %v7018, 0.0
  %v7023 = vmax.f32 %v7019, 0.0
  %v7024 = vmax.f32 %v7020, 0.0
  %s7025 = scalar_lea.vmem %s6, 16
  %7026 = vst [vmem:[%s7025] sm:$0x1] %v7021
  %7027 = vst [vmem:[%s7025 + $0x4] sm:$0x1] %v7022
  %7028 = vst [vmem:[%s7025 + $0x8] sm:$0x1] %v7023
  %7029 = vst [vmem:[%s7025 + $0xc] sm:$0x1] %v7024
  %7030 = vst [vmem:[%s7025 - $0x1] sm:$0x4] %v7021
  %7031 = vst [vmem:[%s7025 + $0x3] sm:$0x4] %v7022
  %7032 = vst [vmem:[%s7025 + $0x7] sm:$0x4] %v7023
  %7033 = vst [vmem:[%s7025 + $0xb] sm:$0x4] %v7024
  %7034 = vst [vmem:[%s7025 - $0x2] sm:$0x10] %v7021
  %7035 = vst [vmem:[%s7025 + $0x2] sm:$0x10] %v7022
  %7036 = vst [vmem:[%s7025 + $0x6] sm:$0x10] %v7023
  %7037 = vst [vmem:[%s7025 + $0xa] sm:$0x10] %v7024
  %7038 = vst [vmem:[%s7025 - $0x3] sm:$0x40] %v7021
  %7039 = vst [vmem:[%s7025 + $0x1] sm:$0x40] %v7022
  %7040 = vst [vmem:[%s7025 + $0x5] sm:$0x40] %v7023
  %7041 = vst [vmem:[%s7025 + $0x9] sm:$0x40] %v7024
  // Predicated region
  $region26: #{feature_extractor_mnist.1} parent=0 // pred_check
    _
  $region27: #{feature_extractor_mnist.1} parent=0 // pred_check_branch
    %7043 = sbr.rel (0) target = $region29
  $region28: #{feature_extractor_mnist.1} parent=0 // pred_region
    _
  $region29: #{feature_extractor_mnist.1} parent=0 // pred_fallthru
    _
  // Predicated region
  $region30: #{feature_extractor_mnist.1} parent=0 // pred_check
    _
  $region31: #{feature_extractor_mnist.1} parent=0 // pred_check_branch
    %7045 = sbr.rel (0) target = $region33
  $region32: #{feature_extractor_mnist.1} parent=0 // pred_region
    _
  $region33: #{feature_extractor_mnist.1} parent=0 // pred_fallthru
    _

</llo_original>
